<compile_context>
chip_gen: v6e
topology: v6e:2x2x1
jax: 0.10.0
libtpu: 0.0.40
codegen_flags: <defaults>
</compile_context>

<pallas_src>
import jax
import jax.numpy as jnp
from jax.experimental import pallas as pl
from jax.experimental.pallas import tpu as pltpu


# ---------------------------------------------------------------------------
# Fused LeNet kernel: one grid step processes BN samples entirely in VMEM.
# ---------------------------------------------------------------------------
def _lenet_kernel(xh_ref, band1_ref, b1t_ref, band2_ref, b2t_ref,
                  wf1_ref, bf1_ref, wf2_ref, bf2_ref, out_ref):
    f32 = jnp.float32
    bn = xh_ref.shape[2]            # samples per grid step (multiple of 8)
    kw1 = xh_ref.shape[3]           # Cin * 28 (conv1 contraction width)

    # ---- conv1 (banded MXU matmuls) + bias + ReLU + 2x2 max-pool -----------
    # band1[i1] is (Cin*28, 512); its two 256-lane halves are the even / odd
    # output-column (W) parities with lanes = pw*20 + co (pw < 12).
    # xh[r, t] holds image row 4*t + r, so the rows needed for pooled-row
    # parity q, conv-row parity e1 and kernel row i1 are one contiguous slice.
    p1 = []                                              # q = 0, 1 streams
    for q in range(2):
        m = None
        for e1 in range(2):
            acc = None
            for i1 in range(5):
                c = 2 * q + e1 + i1                      # input-row offset
                lhs = xh_ref[c % 4, c // 4:c // 4 + 6, :, :].reshape(6 * bn, kw1)
                d = jnp.dot(lhs, band1_ref[i1], preferred_element_type=f32)
                acc = d if acc is None else acc + d
            m = acc if m is None else jnp.maximum(m, acc)   # H-direction pool
        m = jnp.maximum(m[:, 0:256], m[:, 256:512])         # W-direction pool
        p1.append(jnp.maximum(m + b1t_ref[...], 0.0))       # bias + ReLU
        # p1[q][u*bn + n, pw*20 + co] == pool1[n, co, ph=2u+q, pw]

    # ---- conv2 (banded MXU matmuls, K=256) + bias + ReLU + 2x2 max-pool -----
    # band2[i2] is (256, 512): rows = pw*20 + ci, column halves = even / odd
    # output-column parities with lanes = pw2*50 + c2.
    m2 = None
    for e2 in range(2):
        acc = None
        for i2 in range(5):
            c = e2 + i2
            lhs = p1[c % 2][(c // 2) * bn:(c // 2 + 4) * bn, :]   # (4*bn, 256)
            d = jnp.dot(lhs, band2_ref[i2], preferred_element_type=f32)
            acc = d if acc is None else acc + d
        m2 = acc if m2 is None else jnp.maximum(m2, acc)          # H pool
    m2 = jnp.maximum(m2[:, 0:256], m2[:, 256:512])                # W pool
    p2 = jnp.maximum(m2 + b2t_ref[...], 0.0)                      # (4*bn, 256)
    # p2[v*bn + n, pw2*50 + c2] == pool2[n, c2, ph2=v, pw2]

    # ---- fc1 + ReLU (4 dots of K=256, summed; matches torch.flatten order) --
    h = bf1_ref[...]
    for v in range(4):                                   # v = pooled H index
        h = h + jnp.dot(p2[v * bn:(v + 1) * bn, :], wf1_ref[v],
                        preferred_element_type=f32)
    h = jnp.maximum(h, 0.0)                              # (bn, 500)

    # ---- fc2 + stable log_softmax (classes padded to 128 lanes) -------------
    logits = jnp.dot(h, wf2_ref[...], preferred_element_type=f32) + bf2_ref[...]
    mx = jnp.max(logits, axis=-1, keepdims=True)
    sh = logits - mx
    lse = jnp.log(jnp.sum(jnp.exp(sh), axis=-1, keepdims=True))
    out_ref[...] = sh - lse                              # full (BN,128) store


# ---------------------------------------------------------------------------
# One-off weight repacking (tiny, plain XLA ops inside the jitted wrapper).
# ---------------------------------------------------------------------------
def _pack_params(params):
    f32 = jnp.float32
    C1, Cin = params["w1"].shape[0], params["w1"].shape[1]
    C2 = params["w2"].shape[0]
    HID = params["wf1"].shape[0]
    CLS = params["wf2"].shape[0]
    assert (C1, C2, HID) == (20, 50, 500) and params["wf1"].shape[1] == 800
    KW1 = Cin * 28

    # conv1 band: band1[i1, ci*28+w, we*256 + pw*20 + co] = w1[co, ci, i1, j],
    # j = w - (2*pw + we), valid for 0 <= j < 5 and pw < 12 (rest = 0).
    w1t = jnp.transpose(params["w1"], (2, 3, 1, 0)).astype(f32)   # (i1, j, ci, co)
    row = jnp.arange(KW1)
    ci1, wv = row // 28, row % 28
    col = jnp.arange(512)
    we, rem = col // 256, col % 256
    pw, co = rem // 20, rem % 20
    j = wv[:, None] - (2 * pw + we)[None, :]
    valid = (j >= 0) & (j < 5) & (rem < 240)[None, :]
    band1 = jnp.where(valid[None],
                      w1t[:, jnp.clip(j, 0, 4), ci1[:, None], co[None, :]], 0.0)

    b1t = jnp.where(jnp.arange(256) < 240,
                    params["b1"][jnp.arange(256) % 20], 0.0).reshape(1, 256).astype(f32)

    # conv2 band: band2[i2, pw*20+ci, we2*256 + pw2*50 + c2] = w2[c2, ci, i2, j2],
    # j2 = pw - (2*pw2 + we2), valid for 0 <= j2 < 5, pw < 12, pw2 < 4.
    w2t = jnp.transpose(params["w2"], (2, 3, 1, 0)).astype(f32)   # (i2, j2, ci, c2)
    row2 = jnp.arange(256)
    pwr, ci2 = row2 // 20, row2 % 20
    col2 = jnp.arange(512)
    we2, rem2 = col2 // 256, col2 % 256
    pw2, c2 = rem2 // 50, rem2 % 50
    j2 = pwr[:, None] - (2 * pw2 + we2)[None, :]
    valid2 = (j2 >= 0) & (j2 < 5) & (row2 < 240)[:, None] & (rem2 < 200)[None, :]
    band2 = jnp.where(valid2[None],
                      w2t[:, jnp.clip(j2, 0, 4), ci2[:, None], c2[None, :]], 0.0)

    b2t = jnp.where(jnp.arange(256) < 200,
                    params["b2"][jnp.arange(256) % 50], 0.0).reshape(1, 256).astype(f32)

    # fc1: wf1p[ph2, pw2*50 + c2, f] = wf1[f, c2*16 + ph2*4 + pw2] (flatten order).
    wf1t = jnp.transpose(params["wf1"].reshape(HID, C2, 4, 4), (2, 3, 1, 0))
    wf1p = jnp.pad(wf1t.reshape(4, 4 * C2, HID),
                   ((0, 0), (0, 256 - 4 * C2), (0, 0))).astype(f32)
    bf1p = params["bf1"].reshape(1, HID).astype(f32)

    # fc2: pad classes to 128 lanes; padded logits get a huge negative bias so
    # they vanish from the log_softmax.
    wf2p = jnp.zeros((HID, 128), f32).at[:, :CLS].set(
        jnp.transpose(params["wf2"]).astype(f32))
    bf2p = jnp.full((1, 128), -1e9, f32).at[0, :CLS].set(params["bf2"].astype(f32))

    return band1, b1t, band2, b2t, wf1p, bf1p, wf2p, bf2p


# ---------------------------------------------------------------------------
# Wrapper: cheap layout prep + single pallas_call.
# ---------------------------------------------------------------------------
@jax.jit
def lenet_forward(x, params):
    N, Cin, H, W = x.shape
    assert (H, W) == (28, 28), "fc1 in_features=800 requires 28x28 inputs"
    CLS = params["wf2"].shape[0]
    assert CLS <= 128
    KW1 = Cin * 28

    band1, b1t, band2, b2t, wf1p, bf1p, wf2p, bf2p = _pack_params(params)

    # Samples per grid step: multiple of 8 (sublane-dense stores and aligned
    # row slices), capped at 32 to keep in-flight activations modest.
    BN = max(8, min(32, ((N + 7) // 8) * 8))
    G = (N + BN - 1) // BN
    N_pad = G * BN

    # Input prep (no im2col inflation): NCHW -> (H, N, Cin*W), then residue-4
    # split of the 28 image rows so every conv1 row access is contiguous.
    x_p = jnp.pad(x.astype(jnp.float32), ((0, N_pad - N), (0, 0), (0, 0), (0, 0)))
    xt = jnp.transpose(x_p, (2, 0, 1, 3)).reshape(28, N_pad, KW1)
    xh = jnp.stack([xt[r::4] for r in range(4)], axis=0)   # (4, 7, N_pad, Cin*28)

    def const_spec(shape):
        return pl.BlockSpec(shape, lambda g, _s=len(shape): (0,) * _s)

    out = pl.pallas_call(
        _lenet_kernel,
        out_shape=jax.ShapeDtypeStruct((N_pad, 128), jnp.float32),
        grid=(G,),
        in_specs=[
            pl.BlockSpec((4, 7, BN, KW1), lambda g: (0, 0, g, 0)),
            const_spec(band1.shape), const_spec(b1t.shape),
            const_spec(band2.shape), const_spec(b2t.shape),
            const_spec(wf1p.shape), const_spec(bf1p.shape),
            const_spec(wf2p.shape), const_spec(bf2p.shape),
        ],
        out_specs=pl.BlockSpec((BN, 128), lambda g: (g, 0)),
        compiler_params=pltpu.CompilerParams(
            dimension_semantics=("parallel",),    # batch blocks across TCs (v7x)
        ),
    )(xh, band1, b1t, band2, b2t, wf1p, bf1p, wf2p, bf2p)

    return out[:N, :CLS]


# ---------------------------------------------------------------------------
# Pure-JAX reference (correctness check only)
# ---------------------------------------------------------------------------
def lenet_reference(x, params):
    hi = jax.lax.Precision.HIGHEST
    dn = ("NCHW", "OIHW", "NCHW")
    y = jax.lax.conv_general_dilated(x, params["w1"], (1, 1), "VALID",
                                     dimension_numbers=dn, precision=hi)
    y = jnp.maximum(y + params["b1"][None, :, None, None], 0.0)
    y = jax.lax.reduce_window(y, -jnp.inf, jax.lax.max,
                              (1, 1, 2, 2), (1, 1, 2, 2), "VALID")
    y = jax.lax.conv_general_dilated(y, params["w2"], (1, 1), "VALID",
                                     dimension_numbers=dn, precision=hi)
    y = jnp.maximum(y + params["b2"][None, :, None, None], 0.0)
    y = jax.lax.reduce_window(y, -jnp.inf, jax.lax.max,
                              (1, 1, 2, 2), (1, 1, 2, 2), "VALID")
    f = y.reshape(y.shape[0], -1)
    h = jnp.maximum(jnp.dot(f, params["wf1"].T, precision=hi) + params["bf1"], 0.0)
    logits = jnp.dot(h, params["wf2"].T, precision=hi) + params["bf2"]
    return jax.nn.log_softmax(logits, axis=-1)


if __name__ == "__main__":
    num_channels, classes, batch = 1, 10, 2
    key = jax.random.PRNGKey(0)
    keys = jax.random.split(key, 9)

    def init(k, shape, fan_in):
        bound = 1.0 / float(fan_in) ** 0.5
        return jax.random.uniform(k, shape, jnp.float32, -bound, bound)

    x = jax.random.normal(keys[0], (batch, num_channels, 28, 28), jnp.float32)
    params = {
        "w1": init(keys[1], (20, num_channels, 5, 5), num_channels * 25),
        "b1": init(keys[2], (20,), num_channels * 25),
        "w2": init(keys[3], (50, 20, 5, 5), 20 * 25),
        "b2": init(keys[4], (50,), 20 * 25),
        "wf1": init(keys[5], (500, 800), 800),
        "bf1": init(keys[6], (500,), 800),
        "wf2": init(keys[7], (classes, 500), 500),
        "bf2": init(keys[8], (classes,), 500),
    }

    out = jax.block_until_ready(lenet_forward(x, params))

    assert out.shape == (batch, classes)
    assert out.dtype == jnp.float32
    # log-softmax rows must (approximately) sum to 1 after exponentiation
    assert jnp.allclose(jnp.sum(jnp.exp(out), axis=1), 1.0, atol=1e-4)
    # match the pure-JAX reference forward pass
    ref = lenet_reference(x, params)
    max_err = float(jnp.max(jnp.abs(out - ref)))
    assert jnp.allclose(out, ref, atol=5e-3, rtol=5e-3), max_err
    print("KERNEL_OK")
</pallas_src>

<mosaic_0001>
module attributes {stable_mosaic.version = 11 : i64} {
  func.func @_lenet_kernel(%arg0: i32, %arg1: memref<4x7x8x28xf32, #tpu.memory_space<vmem>>, %arg2: memref<5x28x512xf32, #tpu.memory_space<vmem>>, %arg3: memref<1x256xf32, #tpu.memory_space<vmem>>, %arg4: memref<5x256x512xf32, #tpu.memory_space<vmem>>, %arg5: memref<1x256xf32, #tpu.memory_space<vmem>>, %arg6: memref<4x256x500xf32, #tpu.memory_space<vmem>>, %arg7: memref<1x500xf32, #tpu.memory_space<vmem>>, %arg8: memref<500x128xf32, #tpu.memory_space<vmem>>, %arg9: memref<1x128xf32, #tpu.memory_space<vmem>>, %arg10: memref<8x128xf32, #tpu.memory_space<vmem>>) attributes {dimension_semantics = [#tpu.dimension_semantics<parallel>], iteration_bounds = array<i64: 1>, scalar_prefetch = 0 : i64, scratch_operands = 0 : i64, tpu.core_type = #tpu.core_type<tc>, window_params = [{transform_indices = @transform_0, window_bounds = array<i64: 4, 7, 8, 28>}, {pipeline_mode = #tpu.pipeline_mode<synchronous>, transform_indices = @transform_1, window_bounds = array<i64: 5, 28, 512>}, {pipeline_mode = #tpu.pipeline_mode<synchronous>, transform_indices = @transform_2, window_bounds = array<i64: 1, 256>}, {pipeline_mode = #tpu.pipeline_mode<synchronous>, transform_indices = @transform_3, window_bounds = array<i64: 5, 256, 512>}, {pipeline_mode = #tpu.pipeline_mode<synchronous>, transform_indices = @transform_4, window_bounds = array<i64: 1, 256>}, {pipeline_mode = #tpu.pipeline_mode<synchronous>, transform_indices = @transform_5, window_bounds = array<i64: 4, 256, 500>}, {pipeline_mode = #tpu.pipeline_mode<synchronous>, transform_indices = @transform_6, window_bounds = array<i64: 1, 500>}, {pipeline_mode = #tpu.pipeline_mode<synchronous>, transform_indices = @transform_7, window_bounds = array<i64: 500, 128>}, {pipeline_mode = #tpu.pipeline_mode<synchronous>, transform_indices = @transform_8, window_bounds = array<i64: 1, 128>}, {transform_indices = @transform_9, window_bounds = array<i64: 8, 128>}]} {
    %c0 = arith.constant 0 : index
    %c0_0 = arith.constant 0 : index
    %c0_1 = arith.constant 0 : index
    %c0_2 = arith.constant 0 : index
    %0 = vector.load %arg1[%c0, %c0_0, %c0_1, %c0_2] : memref<4x7x8x28xf32, #tpu.memory_space<vmem>>, vector<1x6x8x28xf32>
    %1 = vector.shape_cast %0 : vector<1x6x8x28xf32> to vector<6x8x28xf32>
    %2 = vector.shape_cast %1 : vector<6x8x28xf32> to vector<48x28xf32>
    %c0_3 = arith.constant 0 : index
    %c0_4 = arith.constant 0 : index
    %c0_5 = arith.constant 0 : index
    %3 = vector.load %arg2[%c0_3, %c0_4, %c0_5] : memref<5x28x512xf32, #tpu.memory_space<vmem>>, vector<1x28x512xf32>
    %4 = vector.shape_cast %3 : vector<1x28x512xf32> to vector<28x512xf32>
    %cst = arith.constant dense<0.000000e+00> : vector<48x512xf32>
    %5 = tpu.matmul %2, %4, %cst {dimension_numbers = #tpu.dot_dimension_numbers<[1], [0], [0], [1], [0, 0, 1, 1], [], []>} : vector<48x28xf32>, vector<28x512xf32>, vector<48x512xf32> -> vector<48x512xf32>
    %c1 = arith.constant 1 : index
    %c0_6 = arith.constant 0 : index
    %c0_7 = arith.constant 0 : index
    %c0_8 = arith.constant 0 : index
    %6 = vector.load %arg1[%c1, %c0_6, %c0_7, %c0_8] : memref<4x7x8x28xf32, #tpu.memory_space<vmem>>, vector<1x6x8x28xf32>
    %7 = vector.shape_cast %6 : vector<1x6x8x28xf32> to vector<6x8x28xf32>
    %8 = vector.shape_cast %7 : vector<6x8x28xf32> to vector<48x28xf32>
    %c1_9 = arith.constant 1 : index
    %c0_10 = arith.constant 0 : index
    %c0_11 = arith.constant 0 : index
    %9 = vector.load %arg2[%c1_9, %c0_10, %c0_11] : memref<5x28x512xf32, #tpu.memory_space<vmem>>, vector<1x28x512xf32>
    %10 = vector.shape_cast %9 : vector<1x28x512xf32> to vector<28x512xf32>
    %cst_12 = arith.constant dense<0.000000e+00> : vector<48x512xf32>
    %11 = tpu.matmul %8, %10, %cst_12 {dimension_numbers = #tpu.dot_dimension_numbers<[1], [0], [0], [1], [0, 0, 1, 1], [], []>} : vector<48x28xf32>, vector<28x512xf32>, vector<48x512xf32> -> vector<48x512xf32>
    %12 = arith.addf %5, %11 : vector<48x512xf32>
    %c2 = arith.constant 2 : index
    %c0_13 = arith.constant 0 : index
    %c0_14 = arith.constant 0 : index
    %c0_15 = arith.constant 0 : index
    %13 = vector.load %arg1[%c2, %c0_13, %c0_14, %c0_15] : memref<4x7x8x28xf32, #tpu.memory_space<vmem>>, vector<1x6x8x28xf32>
    %14 = vector.shape_cast %13 : vector<1x6x8x28xf32> to vector<6x8x28xf32>
    %15 = vector.shape_cast %14 : vector<6x8x28xf32> to vector<48x28xf32>
    %c2_16 = arith.constant 2 : index
    %c0_17 = arith.constant 0 : index
    %c0_18 = arith.constant 0 : index
    %16 = vector.load %arg2[%c2_16, %c0_17, %c0_18] : memref<5x28x512xf32, #tpu.memory_space<vmem>>, vector<1x28x512xf32>
    %17 = vector.shape_cast %16 : vector<1x28x512xf32> to vector<28x512xf32>
    %cst_19 = arith.constant dense<0.000000e+00> : vector<48x512xf32>
    %18 = tpu.matmul %15, %17, %cst_19 {dimension_numbers = #tpu.dot_dimension_numbers<[1], [0], [0], [1], [0, 0, 1, 1], [], []>} : vector<48x28xf32>, vector<28x512xf32>, vector<48x512xf32> -> vector<48x512xf32>
    %19 = arith.addf %12, %18 : vector<48x512xf32>
    %c3 = arith.constant 3 : index
    %c0_20 = arith.constant 0 : index
    %c0_21 = arith.constant 0 : index
    %c0_22 = arith.constant 0 : index
    %20 = vector.load %arg1[%c3, %c0_20, %c0_21, %c0_22] : memref<4x7x8x28xf32, #tpu.memory_space<vmem>>, vector<1x6x8x28xf32>
    %21 = vector.shape_cast %20 : vector<1x6x8x28xf32> to vector<6x8x28xf32>
    %22 = vector.shape_cast %21 : vector<6x8x28xf32> to vector<48x28xf32>
    %c3_23 = arith.constant 3 : index
    %c0_24 = arith.constant 0 : index
    %c0_25 = arith.constant 0 : index
    %23 = vector.load %arg2[%c3_23, %c0_24, %c0_25] : memref<5x28x512xf32, #tpu.memory_space<vmem>>, vector<1x28x512xf32>
    %24 = vector.shape_cast %23 : vector<1x28x512xf32> to vector<28x512xf32>
    %cst_26 = arith.constant dense<0.000000e+00> : vector<48x512xf32>
    %25 = tpu.matmul %22, %24, %cst_26 {dimension_numbers = #tpu.dot_dimension_numbers<[1], [0], [0], [1], [0, 0, 1, 1], [], []>} : vector<48x28xf32>, vector<28x512xf32>, vector<48x512xf32> -> vector<48x512xf32>
    %26 = arith.addf %19, %25 : vector<48x512xf32>
    %c0_27 = arith.constant 0 : index
    %c1_28 = arith.constant 1 : index
    %c0_29 = arith.constant 0 : index
    %c0_30 = arith.constant 0 : index
    %27 = vector.load %arg1[%c0_27, %c1_28, %c0_29, %c0_30] : memref<4x7x8x28xf32, #tpu.memory_space<vmem>>, vector<1x6x8x28xf32>
    %28 = vector.shape_cast %27 : vector<1x6x8x28xf32> to vector<6x8x28xf32>
    %29 = vector.shape_cast %28 : vector<6x8x28xf32> to vector<48x28xf32>
    %c4 = arith.constant 4 : index
    %c0_31 = arith.constant 0 : index
    %c0_32 = arith.constant 0 : index
    %30 = vector.load %arg2[%c4, %c0_31, %c0_32] : memref<5x28x512xf32, #tpu.memory_space<vmem>>, vector<1x28x512xf32>
    %31 = vector.shape_cast %30 : vector<1x28x512xf32> to vector<28x512xf32>
    %cst_33 = arith.constant dense<0.000000e+00> : vector<48x512xf32>
    %32 = tpu.matmul %29, %31, %cst_33 {dimension_numbers = #tpu.dot_dimension_numbers<[1], [0], [0], [1], [0, 0, 1, 1], [], []>} : vector<48x28xf32>, vector<28x512xf32>, vector<48x512xf32> -> vector<48x512xf32>
    %33 = arith.addf %26, %32 : vector<48x512xf32>
    %c1_34 = arith.constant 1 : index
    %c0_35 = arith.constant 0 : index
    %c0_36 = arith.constant 0 : index
    %c0_37 = arith.constant 0 : index
    %34 = vector.load %arg1[%c1_34, %c0_35, %c0_36, %c0_37] : memref<4x7x8x28xf32, #tpu.memory_space<vmem>>, vector<1x6x8x28xf32>
    %35 = vector.shape_cast %34 : vector<1x6x8x28xf32> to vector<6x8x28xf32>
    %36 = vector.shape_cast %35 : vector<6x8x28xf32> to vector<48x28xf32>
    %c0_38 = arith.constant 0 : index
    %c0_39 = arith.constant 0 : index
    %c0_40 = arith.constant 0 : index
    %37 = vector.load %arg2[%c0_38, %c0_39, %c0_40] : memref<5x28x512xf32, #tpu.memory_space<vmem>>, vector<1x28x512xf32>
    %38 = vector.shape_cast %37 : vector<1x28x512xf32> to vector<28x512xf32>
    %cst_41 = arith.constant dense<0.000000e+00> : vector<48x512xf32>
    %39 = tpu.matmul %36, %38, %cst_41 {dimension_numbers = #tpu.dot_dimension_numbers<[1], [0], [0], [1], [0, 0, 1, 1], [], []>} : vector<48x28xf32>, vector<28x512xf32>, vector<48x512xf32> -> vector<48x512xf32>
    %c2_42 = arith.constant 2 : index
    %c0_43 = arith.constant 0 : index
    %c0_44 = arith.constant 0 : index
    %c0_45 = arith.constant 0 : index
    %40 = vector.load %arg1[%c2_42, %c0_43, %c0_44, %c0_45] : memref<4x7x8x28xf32, #tpu.memory_space<vmem>>, vector<1x6x8x28xf32>
    %41 = vector.shape_cast %40 : vector<1x6x8x28xf32> to vector<6x8x28xf32>
    %42 = vector.shape_cast %41 : vector<6x8x28xf32> to vector<48x28xf32>
    %c1_46 = arith.constant 1 : index
    %c0_47 = arith.constant 0 : index
    %c0_48 = arith.constant 0 : index
    %43 = vector.load %arg2[%c1_46, %c0_47, %c0_48] : memref<5x28x512xf32, #tpu.memory_space<vmem>>, vector<1x28x512xf32>
    %44 = vector.shape_cast %43 : vector<1x28x512xf32> to vector<28x512xf32>
    %cst_49 = arith.constant dense<0.000000e+00> : vector<48x512xf32>
    %45 = tpu.matmul %42, %44, %cst_49 {dimension_numbers = #tpu.dot_dimension_numbers<[1], [0], [0], [1], [0, 0, 1, 1], [], []>} : vector<48x28xf32>, vector<28x512xf32>, vector<48x512xf32> -> vector<48x512xf32>
    %46 = arith.addf %39, %45 : vector<48x512xf32>
    %c3_50 = arith.constant 3 : index
    %c0_51 = arith.constant 0 : index
    %c0_52 = arith.constant 0 : index
    %c0_53 = arith.constant 0 : index
    %47 = vector.load %arg1[%c3_50, %c0_51, %c0_52, %c0_53] : memref<4x7x8x28xf32, #tpu.memory_space<vmem>>, vector<1x6x8x28xf32>
    %48 = vector.shape_cast %47 : vector<1x6x8x28xf32> to vector<6x8x28xf32>
    %49 = vector.shape_cast %48 : vector<6x8x28xf32> to vector<48x28xf32>
    %c2_54 = arith.constant 2 : index
    %c0_55 = arith.constant 0 : index
    %c0_56 = arith.constant 0 : index
    %50 = vector.load %arg2[%c2_54, %c0_55, %c0_56] : memref<5x28x512xf32, #tpu.memory_space<vmem>>, vector<1x28x512xf32>
    %51 = vector.shape_cast %50 : vector<1x28x512xf32> to vector<28x512xf32>
    %cst_57 = arith.constant dense<0.000000e+00> : vector<48x512xf32>
    %52 = tpu.matmul %49, %51, %cst_57 {dimension_numbers = #tpu.dot_dimension_numbers<[1], [0], [0], [1], [0, 0, 1, 1], [], []>} : vector<48x28xf32>, vector<28x512xf32>, vector<48x512xf32> -> vector<48x512xf32>
    %53 = arith.addf %46, %52 : vector<48x512xf32>
    %c0_58 = arith.constant 0 : index
    %c1_59 = arith.constant 1 : index
    %c0_60 = arith.constant 0 : index
    %c0_61 = arith.constant 0 : index
    %54 = vector.load %arg1[%c0_58, %c1_59, %c0_60, %c0_61] : memref<4x7x8x28xf32, #tpu.memory_space<vmem>>, vector<1x6x8x28xf32>
    %55 = vector.shape_cast %54 : vector<1x6x8x28xf32> to vector<6x8x28xf32>
    %56 = vector.shape_cast %55 : vector<6x8x28xf32> to vector<48x28xf32>
    %c3_62 = arith.constant 3 : index
    %c0_63 = arith.constant 0 : index
    %c0_64 = arith.constant 0 : index
    %57 = vector.load %arg2[%c3_62, %c0_63, %c0_64] : memref<5x28x512xf32, #tpu.memory_space<vmem>>, vector<1x28x512xf32>
    %58 = vector.shape_cast %57 : vector<1x28x512xf32> to vector<28x512xf32>
    %cst_65 = arith.constant dense<0.000000e+00> : vector<48x512xf32>
    %59 = tpu.matmul %56, %58, %cst_65 {dimension_numbers = #tpu.dot_dimension_numbers<[1], [0], [0], [1], [0, 0, 1, 1], [], []>} : vector<48x28xf32>, vector<28x512xf32>, vector<48x512xf32> -> vector<48x512xf32>
    %60 = arith.addf %53, %59 : vector<48x512xf32>
    %c1_66 = arith.constant 1 : index
    %c1_67 = arith.constant 1 : index
    %c0_68 = arith.constant 0 : index
    %c0_69 = arith.constant 0 : index
    %61 = vector.load %arg1[%c1_66, %c1_67, %c0_68, %c0_69] : memref<4x7x8x28xf32, #tpu.memory_space<vmem>>, vector<1x6x8x28xf32>
    %62 = vector.shape_cast %61 : vector<1x6x8x28xf32> to vector<6x8x28xf32>
    %63 = vector.shape_cast %62 : vector<6x8x28xf32> to vector<48x28xf32>
    %c4_70 = arith.constant 4 : index
    %c0_71 = arith.constant 0 : index
    %c0_72 = arith.constant 0 : index
    %64 = vector.load %arg2[%c4_70, %c0_71, %c0_72] : memref<5x28x512xf32, #tpu.memory_space<vmem>>, vector<1x28x512xf32>
    %65 = vector.shape_cast %64 : vector<1x28x512xf32> to vector<28x512xf32>
    %cst_73 = arith.constant dense<0.000000e+00> : vector<48x512xf32>
    %66 = tpu.matmul %63, %65, %cst_73 {dimension_numbers = #tpu.dot_dimension_numbers<[1], [0], [0], [1], [0, 0, 1, 1], [], []>} : vector<48x28xf32>, vector<28x512xf32>, vector<48x512xf32> -> vector<48x512xf32>
    %67 = arith.addf %60, %66 : vector<48x512xf32>
    %68 = arith.maximumf %33, %67 : vector<48x512xf32>
    %69 = vector.extract_strided_slice %68 {offsets = [0, 0], sizes = [48, 256], strides = [1, 1]} : vector<48x512xf32> to vector<48x256xf32>
    %70 = vector.extract_strided_slice %68 {offsets = [0, 256], sizes = [48, 256], strides = [1, 1]} : vector<48x512xf32> to vector<48x256xf32>
    %71 = arith.maximumf %69, %70 : vector<48x256xf32>
    %c0_74 = arith.constant 0 : index
    %c0_75 = arith.constant 0 : index
    %72 = vector.load %arg3[%c0_74, %c0_75] : memref<1x256xf32, #tpu.memory_space<vmem>>, vector<1x256xf32>
    %73 = vector.broadcast %72 : vector<1x256xf32> to vector<48x256xf32>
    %74 = arith.addf %71, %73 : vector<48x256xf32>
    %cst_76 = arith.constant 0.000000e+00 : f32
    %75 = vector.broadcast %cst_76 : f32 to vector<48x256xf32>
    %76 = arith.maximumf %74, %75 : vector<48x256xf32>
    %c2_77 = arith.constant 2 : index
    %c0_78 = arith.constant 0 : index
    %c0_79 = arith.constant 0 : index
    %c0_80 = arith.constant 0 : index
    %77 = vector.load %arg1[%c2_77, %c0_78, %c0_79, %c0_80] : memref<4x7x8x28xf32, #tpu.memory_space<vmem>>, vector<1x6x8x28xf32>
    %78 = vector.shape_cast %77 : vector<1x6x8x28xf32> to vector<6x8x28xf32>
    %79 = vector.shape_cast %78 : vector<6x8x28xf32> to vector<48x28xf32>
    %c0_81 = arith.constant 0 : index
    %c0_82 = arith.constant 0 : index
    %c0_83 = arith.constant 0 : index
    %80 = vector.load %arg2[%c0_81, %c0_82, %c0_83] : memref<5x28x512xf32, #tpu.memory_space<vmem>>, vector<1x28x512xf32>
    %81 = vector.shape_cast %80 : vector<1x28x512xf32> to vector<28x512xf32>
    %cst_84 = arith.constant dense<0.000000e+00> : vector<48x512xf32>
    %82 = tpu.matmul %79, %81, %cst_84 {dimension_numbers = #tpu.dot_dimension_numbers<[1], [0], [0], [1], [0, 0, 1, 1], [], []>} : vector<48x28xf32>, vector<28x512xf32>, vector<48x512xf32> -> vector<48x512xf32>
    %c3_85 = arith.constant 3 : index
    %c0_86 = arith.constant 0 : index
    %c0_87 = arith.constant 0 : index
    %c0_88 = arith.constant 0 : index
    %83 = vector.load %arg1[%c3_85, %c0_86, %c0_87, %c0_88] : memref<4x7x8x28xf32, #tpu.memory_space<vmem>>, vector<1x6x8x28xf32>
    %84 = vector.shape_cast %83 : vector<1x6x8x28xf32> to vector<6x8x28xf32>
    %85 = vector.shape_cast %84 : vector<6x8x28xf32> to vector<48x28xf32>
    %c1_89 = arith.constant 1 : index
    %c0_90 = arith.constant 0 : index
    %c0_91 = arith.constant 0 : index
    %86 = vector.load %arg2[%c1_89, %c0_90, %c0_91] : memref<5x28x512xf32, #tpu.memory_space<vmem>>, vector<1x28x512xf32>
    %87 = vector.shape_cast %86 : vector<1x28x512xf32> to vector<28x512xf32>
    %cst_92 = arith.constant dense<0.000000e+00> : vector<48x512xf32>
    %88 = tpu.matmul %85, %87, %cst_92 {dimension_numbers = #tpu.dot_dimension_numbers<[1], [0], [0], [1], [0, 0, 1, 1], [], []>} : vector<48x28xf32>, vector<28x512xf32>, vector<48x512xf32> -> vector<48x512xf32>
    %89 = arith.addf %82, %88 : vector<48x512xf32>
    %c0_93 = arith.constant 0 : index
    %c1_94 = arith.constant 1 : index
    %c0_95 = arith.constant 0 : index
    %c0_96 = arith.constant 0 : index
    %90 = vector.load %arg1[%c0_93, %c1_94, %c0_95, %c0_96] : memref<4x7x8x28xf32, #tpu.memory_space<vmem>>, vector<1x6x8x28xf32>
    %91 = vector.shape_cast %90 : vector<1x6x8x28xf32> to vector<6x8x28xf32>
    %92 = vector.shape_cast %91 : vector<6x8x28xf32> to vector<48x28xf32>
    %c2_97 = arith.constant 2 : index
    %c0_98 = arith.constant 0 : index
    %c0_99 = arith.constant 0 : index
    %93 = vector.load %arg2[%c2_97, %c0_98, %c0_99] : memref<5x28x512xf32, #tpu.memory_space<vmem>>, vector<1x28x512xf32>
    %94 = vector.shape_cast %93 : vector<1x28x512xf32> to vector<28x512xf32>
    %cst_100 = arith.constant dense<0.000000e+00> : vector<48x512xf32>
    %95 = tpu.matmul %92, %94, %cst_100 {dimension_numbers = #tpu.dot_dimension_numbers<[1], [0], [0], [1], [0, 0, 1, 1], [], []>} : vector<48x28xf32>, vector<28x512xf32>, vector<48x512xf32> -> vector<48x512xf32>
    %96 = arith.addf %89, %95 : vector<48x512xf32>
    %c1_101 = arith.constant 1 : index
    %c1_102 = arith.constant 1 : index
    %c0_103 = arith.constant 0 : index
    %c0_104 = arith.constant 0 : index
    %97 = vector.load %arg1[%c1_101, %c1_102, %c0_103, %c0_104] : memref<4x7x8x28xf32, #tpu.memory_space<vmem>>, vector<1x6x8x28xf32>
    %98 = vector.shape_cast %97 : vector<1x6x8x28xf32> to vector<6x8x28xf32>
    %99 = vector.shape_cast %98 : vector<6x8x28xf32> to vector<48x28xf32>
    %c3_105 = arith.constant 3 : index
    %c0_106 = arith.constant 0 : index
    %c0_107 = arith.constant 0 : index
    %100 = vector.load %arg2[%c3_105, %c0_106, %c0_107] : memref<5x28x512xf32, #tpu.memory_space<vmem>>, vector<1x28x512xf32>
    %101 = vector.shape_cast %100 : vector<1x28x512xf32> to vector<28x512xf32>
    %cst_108 = arith.constant dense<0.000000e+00> : vector<48x512xf32>
    %102 = tpu.matmul %99, %101, %cst_108 {dimension_numbers = #tpu.dot_dimension_numbers<[1], [0], [0], [1], [0, 0, 1, 1], [], []>} : vector<48x28xf32>, vector<28x512xf32>, vector<48x512xf32> -> vector<48x512xf32>
    %103 = arith.addf %96, %102 : vector<48x512xf32>
    %c2_109 = arith.constant 2 : index
    %c1_110 = arith.constant 1 : index
    %c0_111 = arith.constant 0 : index
    %c0_112 = arith.constant 0 : index
    %104 = vector.load %arg1[%c2_109, %c1_110, %c0_111, %c0_112] : memref<4x7x8x28xf32, #tpu.memory_space<vmem>>, vector<1x6x8x28xf32>
    %105 = vector.shape_cast %104 : vector<1x6x8x28xf32> to vector<6x8x28xf32>
    %106 = vector.shape_cast %105 : vector<6x8x28xf32> to vector<48x28xf32>
    %c4_113 = arith.constant 4 : index
    %c0_114 = arith.constant 0 : index
    %c0_115 = arith.constant 0 : index
    %107 = vector.load %arg2[%c4_113, %c0_114, %c0_115] : memref<5x28x512xf32, #tpu.memory_space<vmem>>, vector<1x28x512xf32>
    %108 = vector.shape_cast %107 : vector<1x28x512xf32> to vector<28x512xf32>
    %cst_116 = arith.constant dense<0.000000e+00> : vector<48x512xf32>
    %109 = tpu.matmul %106, %108, %cst_116 {dimension_numbers = #tpu.dot_dimension_numbers<[1], [0], [0], [1], [0, 0, 1, 1], [], []>} : vector<48x28xf32>, vector<28x512xf32>, vector<48x512xf32> -> vector<48x512xf32>
    %110 = arith.addf %103, %109 : vector<48x512xf32>
    %c3_117 = arith.constant 3 : index
    %c0_118 = arith.constant 0 : index
    %c0_119 = arith.constant 0 : index
    %c0_120 = arith.constant 0 : index
    %111 = vector.load %arg1[%c3_117, %c0_118, %c0_119, %c0_120] : memref<4x7x8x28xf32, #tpu.memory_space<vmem>>, vector<1x6x8x28xf32>
    %112 = vector.shape_cast %111 : vector<1x6x8x28xf32> to vector<6x8x28xf32>
    %113 = vector.shape_cast %112 : vector<6x8x28xf32> to vector<48x28xf32>
    %c0_121 = arith.constant 0 : index
    %c0_122 = arith.constant 0 : index
    %c0_123 = arith.constant 0 : index
    %114 = vector.load %arg2[%c0_121, %c0_122, %c0_123] : memref<5x28x512xf32, #tpu.memory_space<vmem>>, vector<1x28x512xf32>
    %115 = vector.shape_cast %114 : vector<1x28x512xf32> to vector<28x512xf32>
    %cst_124 = arith.constant dense<0.000000e+00> : vector<48x512xf32>
    %116 = tpu.matmul %113, %115, %cst_124 {dimension_numbers = #tpu.dot_dimension_numbers<[1], [0], [0], [1], [0, 0, 1, 1], [], []>} : vector<48x28xf32>, vector<28x512xf32>, vector<48x512xf32> -> vector<48x512xf32>
    %c0_125 = arith.constant 0 : index
    %c1_126 = arith.constant 1 : index
    %c0_127 = arith.constant 0 : index
    %c0_128 = arith.constant 0 : index
    %117 = vector.load %arg1[%c0_125, %c1_126, %c0_127, %c0_128] : memref<4x7x8x28xf32, #tpu.memory_space<vmem>>, vector<1x6x8x28xf32>
    %118 = vector.shape_cast %117 : vector<1x6x8x28xf32> to vector<6x8x28xf32>
    %119 = vector.shape_cast %118 : vector<6x8x28xf32> to vector<48x28xf32>
    %c1_129 = arith.constant 1 : index
    %c0_130 = arith.constant 0 : index
    %c0_131 = arith.constant 0 : index
    %120 = vector.load %arg2[%c1_129, %c0_130, %c0_131] : memref<5x28x512xf32, #tpu.memory_space<vmem>>, vector<1x28x512xf32>
    %121 = vector.shape_cast %120 : vector<1x28x512xf32> to vector<28x512xf32>
    %cst_132 = arith.constant dense<0.000000e+00> : vector<48x512xf32>
    %122 = tpu.matmul %119, %121, %cst_132 {dimension_numbers = #tpu.dot_dimension_numbers<[1], [0], [0], [1], [0, 0, 1, 1], [], []>} : vector<48x28xf32>, vector<28x512xf32>, vector<48x512xf32> -> vector<48x512xf32>
    %123 = arith.addf %116, %122 : vector<48x512xf32>
    %c1_133 = arith.constant 1 : index
    %c1_134 = arith.constant 1 : index
    %c0_135 = arith.constant 0 : index
    %c0_136 = arith.constant 0 : index
    %124 = vector.load %arg1[%c1_133, %c1_134, %c0_135, %c0_136] : memref<4x7x8x28xf32, #tpu.memory_space<vmem>>, vector<1x6x8x28xf32>
    %125 = vector.shape_cast %124 : vector<1x6x8x28xf32> to vector<6x8x28xf32>
    %126 = vector.shape_cast %125 : vector<6x8x28xf32> to vector<48x28xf32>
    %c2_137 = arith.constant 2 : index
    %c0_138 = arith.constant 0 : index
    %c0_139 = arith.constant 0 : index
    %127 = vector.load %arg2[%c2_137, %c0_138, %c0_139] : memref<5x28x512xf32, #tpu.memory_space<vmem>>, vector<1x28x512xf32>
    %128 = vector.shape_cast %127 : vector<1x28x512xf32> to vector<28x512xf32>
    %cst_140 = arith.constant dense<0.000000e+00> : vector<48x512xf32>
    %129 = tpu.matmul %126, %128, %cst_140 {dimension_numbers = #tpu.dot_dimension_numbers<[1], [0], [0], [1], [0, 0, 1, 1], [], []>} : vector<48x28xf32>, vector<28x512xf32>, vector<48x512xf32> -> vector<48x512xf32>
    %130 = arith.addf %123, %129 : vector<48x512xf32>
    %c2_141 = arith.constant 2 : index
    %c1_142 = arith.constant 1 : index
    %c0_143 = arith.constant 0 : index
    %c0_144 = arith.constant 0 : index
    %131 = vector.load %arg1[%c2_141, %c1_142, %c0_143, %c0_144] : memref<4x7x8x28xf32, #tpu.memory_space<vmem>>, vector<1x6x8x28xf32>
    %132 = vector.shape_cast %131 : vector<1x6x8x28xf32> to vector<6x8x28xf32>
    %133 = vector.shape_cast %132 : vector<6x8x28xf32> to vector<48x28xf32>
    %c3_145 = arith.constant 3 : index
    %c0_146 = arith.constant 0 : index
    %c0_147 = arith.constant 0 : index
    %134 = vector.load %arg2[%c3_145, %c0_146, %c0_147] : memref<5x28x512xf32, #tpu.memory_space<vmem>>, vector<1x28x512xf32>
    %135 = vector.shape_cast %134 : vector<1x28x512xf32> to vector<28x512xf32>
    %cst_148 = arith.constant dense<0.000000e+00> : vector<48x512xf32>
    %136 = tpu.matmul %133, %135, %cst_148 {dimension_numbers = #tpu.dot_dimension_numbers<[1], [0], [0], [1], [0, 0, 1, 1], [], []>} : vector<48x28xf32>, vector<28x512xf32>, vector<48x512xf32> -> vector<48x512xf32>
    %137 = arith.addf %130, %136 : vector<48x512xf32>
    %c3_149 = arith.constant 3 : index
    %c1_150 = arith.constant 1 : index
    %c0_151 = arith.constant 0 : index
    %c0_152 = arith.constant 0 : index
    %138 = vector.load %arg1[%c3_149, %c1_150, %c0_151, %c0_152] : memref<4x7x8x28xf32, #tpu.memory_space<vmem>>, vector<1x6x8x28xf32>
    %139 = vector.shape_cast %138 : vector<1x6x8x28xf32> to vector<6x8x28xf32>
    %140 = vector.shape_cast %139 : vector<6x8x28xf32> to vector<48x28xf32>
    %c4_153 = arith.constant 4 : index
    %c0_154 = arith.constant 0 : index
    %c0_155 = arith.constant 0 : index
    %141 = vector.load %arg2[%c4_153, %c0_154, %c0_155] : memref<5x28x512xf32, #tpu.memory_space<vmem>>, vector<1x28x512xf32>
    %142 = vector.shape_cast %141 : vector<1x28x512xf32> to vector<28x512xf32>
    %cst_156 = arith.constant dense<0.000000e+00> : vector<48x512xf32>
    %143 = tpu.matmul %140, %142, %cst_156 {dimension_numbers = #tpu.dot_dimension_numbers<[1], [0], [0], [1], [0, 0, 1, 1], [], []>} : vector<48x28xf32>, vector<28x512xf32>, vector<48x512xf32> -> vector<48x512xf32>
    %144 = arith.addf %137, %143 : vector<48x512xf32>
    %145 = arith.maximumf %110, %144 : vector<48x512xf32>
    %146 = vector.extract_strided_slice %145 {offsets = [0, 0], sizes = [48, 256], strides = [1, 1]} : vector<48x512xf32> to vector<48x256xf32>
    %147 = vector.extract_strided_slice %145 {offsets = [0, 256], sizes = [48, 256], strides = [1, 1]} : vector<48x512xf32> to vector<48x256xf32>
    %148 = arith.maximumf %146, %147 : vector<48x256xf32>
    %c0_157 = arith.constant 0 : index
    %c0_158 = arith.constant 0 : index
    %149 = vector.load %arg3[%c0_157, %c0_158] : memref<1x256xf32, #tpu.memory_space<vmem>>, vector<1x256xf32>
    %150 = vector.broadcast %149 : vector<1x256xf32> to vector<48x256xf32>
    %151 = arith.addf %148, %150 : vector<48x256xf32>
    %cst_159 = arith.constant 0.000000e+00 : f32
    %152 = vector.broadcast %cst_159 : f32 to vector<48x256xf32>
    %153 = arith.maximumf %151, %152 : vector<48x256xf32>
    %154 = vector.extract_strided_slice %76 {offsets = [0, 0], sizes = [32, 256], strides = [1, 1]} : vector<48x256xf32> to vector<32x256xf32>
    %c0_160 = arith.constant 0 : index
    %c0_161 = arith.constant 0 : index
    %c0_162 = arith.constant 0 : index
    %155 = vector.load %arg4[%c0_160, %c0_161, %c0_162] : memref<5x256x512xf32, #tpu.memory_space<vmem>>, vector<1x256x512xf32>
    %156 = vector.shape_cast %155 : vector<1x256x512xf32> to vector<256x512xf32>
    %cst_163 = arith.constant dense<0.000000e+00> : vector<32x512xf32>
    %157 = tpu.matmul %154, %156, %cst_163 {dimension_numbers = #tpu.dot_dimension_numbers<[1], [0], [0], [1], [0, 0, 1, 1], [], []>} : vector<32x256xf32>, vector<256x512xf32>, vector<32x512xf32> -> vector<32x512xf32>
    %158 = vector.extract_strided_slice %153 {offsets = [0, 0], sizes = [32, 256], strides = [1, 1]} : vector<48x256xf32> to vector<32x256xf32>
    %c1_164 = arith.constant 1 : index
    %c0_165 = arith.constant 0 : index
    %c0_166 = arith.constant 0 : index
    %159 = vector.load %arg4[%c1_164, %c0_165, %c0_166] : memref<5x256x512xf32, #tpu.memory_space<vmem>>, vector<1x256x512xf32>
    %160 = vector.shape_cast %159 : vector<1x256x512xf32> to vector<256x512xf32>
    %cst_167 = arith.constant dense<0.000000e+00> : vector<32x512xf32>
    %161 = tpu.matmul %158, %160, %cst_167 {dimension_numbers = #tpu.dot_dimension_numbers<[1], [0], [0], [1], [0, 0, 1, 1], [], []>} : vector<32x256xf32>, vector<256x512xf32>, vector<32x512xf32> -> vector<32x512xf32>
    %162 = arith.addf %157, %161 : vector<32x512xf32>
    %163 = vector.extract_strided_slice %76 {offsets = [8, 0], sizes = [32, 256], strides = [1, 1]} : vector<48x256xf32> to vector<32x256xf32>
    %c2_168 = arith.constant 2 : index
    %c0_169 = arith.constant 0 : index
    %c0_170 = arith.constant 0 : index
    %164 = vector.load %arg4[%c2_168, %c0_169, %c0_170] : memref<5x256x512xf32, #tpu.memory_space<vmem>>, vector<1x256x512xf32>
    %165 = vector.shape_cast %164 : vector<1x256x512xf32> to vector<256x512xf32>
    %cst_171 = arith.constant dense<0.000000e+00> : vector<32x512xf32>
    %166 = tpu.matmul %163, %165, %cst_171 {dimension_numbers = #tpu.dot_dimension_numbers<[1], [0], [0], [1], [0, 0, 1, 1], [], []>} : vector<32x256xf32>, vector<256x512xf32>, vector<32x512xf32> -> vector<32x512xf32>
    %167 = arith.addf %162, %166 : vector<32x512xf32>
    %168 = vector.extract_strided_slice %153 {offsets = [8, 0], sizes = [32, 256], strides = [1, 1]} : vector<48x256xf32> to vector<32x256xf32>
    %c3_172 = arith.constant 3 : index
    %c0_173 = arith.constant 0 : index
    %c0_174 = arith.constant 0 : index
    %169 = vector.load %arg4[%c3_172, %c0_173, %c0_174] : memref<5x256x512xf32, #tpu.memory_space<vmem>>, vector<1x256x512xf32>
    %170 = vector.shape_cast %169 : vector<1x256x512xf32> to vector<256x512xf32>
    %cst_175 = arith.constant dense<0.000000e+00> : vector<32x512xf32>
    %171 = tpu.matmul %168, %170, %cst_175 {dimension_numbers = #tpu.dot_dimension_numbers<[1], [0], [0], [1], [0, 0, 1, 1], [], []>} : vector<32x256xf32>, vector<256x512xf32>, vector<32x512xf32> -> vector<32x512xf32>
    %172 = arith.addf %167, %171 : vector<32x512xf32>
    %173 = vector.extract_strided_slice %76 {offsets = [16, 0], sizes = [32, 256], strides = [1, 1]} : vector<48x256xf32> to vector<32x256xf32>
    %c4_176 = arith.constant 4 : index
    %c0_177 = arith.constant 0 : index
    %c0_178 = arith.constant 0 : index
    %174 = vector.load %arg4[%c4_176, %c0_177, %c0_178] : memref<5x256x512xf32, #tpu.memory_space<vmem>>, vector<1x256x512xf32>
    %175 = vector.shape_cast %174 : vector<1x256x512xf32> to vector<256x512xf32>
    %cst_179 = arith.constant dense<0.000000e+00> : vector<32x512xf32>
    %176 = tpu.matmul %173, %175, %cst_179 {dimension_numbers = #tpu.dot_dimension_numbers<[1], [0], [0], [1], [0, 0, 1, 1], [], []>} : vector<32x256xf32>, vector<256x512xf32>, vector<32x512xf32> -> vector<32x512xf32>
    %177 = arith.addf %172, %176 : vector<32x512xf32>
    %178 = vector.extract_strided_slice %153 {offsets = [0, 0], sizes = [32, 256], strides = [1, 1]} : vector<48x256xf32> to vector<32x256xf32>
    %c0_180 = arith.constant 0 : index
    %c0_181 = arith.constant 0 : index
    %c0_182 = arith.constant 0 : index
    %179 = vector.load %arg4[%c0_180, %c0_181, %c0_182] : memref<5x256x512xf32, #tpu.memory_space<vmem>>, vector<1x256x512xf32>
    %180 = vector.shape_cast %179 : vector<1x256x512xf32> to vector<256x512xf32>
    %cst_183 = arith.constant dense<0.000000e+00> : vector<32x512xf32>
    %181 = tpu.matmul %178, %180, %cst_183 {dimension_numbers = #tpu.dot_dimension_numbers<[1], [0], [0], [1], [0, 0, 1, 1], [], []>} : vector<32x256xf32>, vector<256x512xf32>, vector<32x512xf32> -> vector<32x512xf32>
    %182 = vector.extract_strided_slice %76 {offsets = [8, 0], sizes = [32, 256], strides = [1, 1]} : vector<48x256xf32> to vector<32x256xf32>
    %c1_184 = arith.constant 1 : index
    %c0_185 = arith.constant 0 : index
    %c0_186 = arith.constant 0 : index
    %183 = vector.load %arg4[%c1_184, %c0_185, %c0_186] : memref<5x256x512xf32, #tpu.memory_space<vmem>>, vector<1x256x512xf32>
    %184 = vector.shape_cast %183 : vector<1x256x512xf32> to vector<256x512xf32>
    %cst_187 = arith.constant dense<0.000000e+00> : vector<32x512xf32>
    %185 = tpu.matmul %182, %184, %cst_187 {dimension_numbers = #tpu.dot_dimension_numbers<[1], [0], [0], [1], [0, 0, 1, 1], [], []>} : vector<32x256xf32>, vector<256x512xf32>, vector<32x512xf32> -> vector<32x512xf32>
    %186 = arith.addf %181, %185 : vector<32x512xf32>
    %187 = vector.extract_strided_slice %153 {offsets = [8, 0], sizes = [32, 256], strides = [1, 1]} : vector<48x256xf32> to vector<32x256xf32>
    %c2_188 = arith.constant 2 : index
    %c0_189 = arith.constant 0 : index
    %c0_190 = arith.constant 0 : index
    %188 = vector.load %arg4[%c2_188, %c0_189, %c0_190] : memref<5x256x512xf32, #tpu.memory_space<vmem>>, vector<1x256x512xf32>
    %189 = vector.shape_cast %188 : vector<1x256x512xf32> to vector<256x512xf32>
    %cst_191 = arith.constant dense<0.000000e+00> : vector<32x512xf32>
    %190 = tpu.matmul %187, %189, %cst_191 {dimension_numbers = #tpu.dot_dimension_numbers<[1], [0], [0], [1], [0, 0, 1, 1], [], []>} : vector<32x256xf32>, vector<256x512xf32>, vector<32x512xf32> -> vector<32x512xf32>
    %191 = arith.addf %186, %190 : vector<32x512xf32>
    %192 = vector.extract_strided_slice %76 {offsets = [16, 0], sizes = [32, 256], strides = [1, 1]} : vector<48x256xf32> to vector<32x256xf32>
    %c3_192 = arith.constant 3 : index
    %c0_193 = arith.constant 0 : index
    %c0_194 = arith.constant 0 : index
    %193 = vector.load %arg4[%c3_192, %c0_193, %c0_194] : memref<5x256x512xf32, #tpu.memory_space<vmem>>, vector<1x256x512xf32>
    %194 = vector.shape_cast %193 : vector<1x256x512xf32> to vector<256x512xf32>
    %cst_195 = arith.constant dense<0.000000e+00> : vector<32x512xf32>
    %195 = tpu.matmul %192, %194, %cst_195 {dimension_numbers = #tpu.dot_dimension_numbers<[1], [0], [0], [1], [0, 0, 1, 1], [], []>} : vector<32x256xf32>, vector<256x512xf32>, vector<32x512xf32> -> vector<32x512xf32>
    %196 = arith.addf %191, %195 : vector<32x512xf32>
    %197 = vector.extract_strided_slice %153 {offsets = [16, 0], sizes = [32, 256], strides = [1, 1]} : vector<48x256xf32> to vector<32x256xf32>
    %c4_196 = arith.constant 4 : index
    %c0_197 = arith.constant 0 : index
    %c0_198 = arith.constant 0 : index
    %198 = vector.load %arg4[%c4_196, %c0_197, %c0_198] : memref<5x256x512xf32, #tpu.memory_space<vmem>>, vector<1x256x512xf32>
    %199 = vector.shape_cast %198 : vector<1x256x512xf32> to vector<256x512xf32>
    %cst_199 = arith.constant dense<0.000000e+00> : vector<32x512xf32>
    %200 = tpu.matmul %197, %199, %cst_199 {dimension_numbers = #tpu.dot_dimension_numbers<[1], [0], [0], [1], [0, 0, 1, 1], [], []>} : vector<32x256xf32>, vector<256x512xf32>, vector<32x512xf32> -> vector<32x512xf32>
    %201 = arith.addf %196, %200 : vector<32x512xf32>
    %202 = arith.maximumf %177, %201 : vector<32x512xf32>
    %203 = vector.extract_strided_slice %202 {offsets = [0, 0], sizes = [32, 256], strides = [1, 1]} : vector<32x512xf32> to vector<32x256xf32>
    %204 = vector.extract_strided_slice %202 {offsets = [0, 256], sizes = [32, 256], strides = [1, 1]} : vector<32x512xf32> to vector<32x256xf32>
    %205 = arith.maximumf %203, %204 : vector<32x256xf32>
    %c0_200 = arith.constant 0 : index
    %c0_201 = arith.constant 0 : index
    %206 = vector.load %arg5[%c0_200, %c0_201] : memref<1x256xf32, #tpu.memory_space<vmem>>, vector<1x256xf32>
    %207 = vector.broadcast %206 : vector<1x256xf32> to vector<32x256xf32>
    %208 = arith.addf %205, %207 : vector<32x256xf32>
    %cst_202 = arith.constant 0.000000e+00 : f32
    %209 = vector.broadcast %cst_202 : f32 to vector<32x256xf32>
    %210 = arith.maximumf %208, %209 : vector<32x256xf32>
    %c0_203 = arith.constant 0 : index
    %c0_204 = arith.constant 0 : index
    %211 = vector.load %arg7[%c0_203, %c0_204] : memref<1x500xf32, #tpu.memory_space<vmem>>, vector<1x500xf32>
    %212 = vector.extract_strided_slice %210 {offsets = [0, 0], sizes = [8, 256], strides = [1, 1]} : vector<32x256xf32> to vector<8x256xf32>
    %c0_205 = arith.constant 0 : index
    %c0_206 = arith.constant 0 : index
    %c0_207 = arith.constant 0 : index
    %213 = vector.load %arg6[%c0_205, %c0_206, %c0_207] : memref<4x256x500xf32, #tpu.memory_space<vmem>>, vector<1x256x500xf32>
    %214 = vector.shape_cast %213 : vector<1x256x500xf32> to vector<256x500xf32>
    %cst_208 = arith.constant dense<0.000000e+00> : vector<8x500xf32>
    %215 = tpu.matmul %212, %214, %cst_208 {dimension_numbers = #tpu.dot_dimension_numbers<[1], [0], [0], [1], [0, 0, 1, 1], [], []>} : vector<8x256xf32>, vector<256x500xf32>, vector<8x500xf32> -> vector<8x500xf32>
    %216 = vector.broadcast %211 : vector<1x500xf32> to vector<8x500xf32>
    %217 = arith.addf %216, %215 : vector<8x500xf32>
    %218 = vector.extract_strided_slice %210 {offsets = [8, 0], sizes = [8, 256], strides = [1, 1]} : vector<32x256xf32> to vector<8x256xf32>
    %c1_209 = arith.constant 1 : index
    %c0_210 = arith.constant 0 : index
    %c0_211 = arith.constant 0 : index
    %219 = vector.load %arg6[%c1_209, %c0_210, %c0_211] : memref<4x256x500xf32, #tpu.memory_space<vmem>>, vector<1x256x500xf32>
    %220 = vector.shape_cast %219 : vector<1x256x500xf32> to vector<256x500xf32>
    %cst_212 = arith.constant dense<0.000000e+00> : vector<8x500xf32>
    %221 = tpu.matmul %218, %220, %cst_212 {dimension_numbers = #tpu.dot_dimension_numbers<[1], [0], [0], [1], [0, 0, 1, 1], [], []>} : vector<8x256xf32>, vector<256x500xf32>, vector<8x500xf32> -> vector<8x500xf32>
    %222 = arith.addf %217, %221 : vector<8x500xf32>
    %223 = vector.extract_strided_slice %210 {offsets = [16, 0], sizes = [8, 256], strides = [1, 1]} : vector<32x256xf32> to vector<8x256xf32>
    %c2_213 = arith.constant 2 : index
    %c0_214 = arith.constant 0 : index
    %c0_215 = arith.constant 0 : index
    %224 = vector.load %arg6[%c2_213, %c0_214, %c0_215] : memref<4x256x500xf32, #tpu.memory_space<vmem>>, vector<1x256x500xf32>
    %225 = vector.shape_cast %224 : vector<1x256x500xf32> to vector<256x500xf32>
    %cst_216 = arith.constant dense<0.000000e+00> : vector<8x500xf32>
    %226 = tpu.matmul %223, %225, %cst_216 {dimension_numbers = #tpu.dot_dimension_numbers<[1], [0], [0], [1], [0, 0, 1, 1], [], []>} : vector<8x256xf32>, vector<256x500xf32>, vector<8x500xf32> -> vector<8x500xf32>
    %227 = arith.addf %222, %226 : vector<8x500xf32>
    %228 = vector.extract_strided_slice %210 {offsets = [24, 0], sizes = [8, 256], strides = [1, 1]} : vector<32x256xf32> to vector<8x256xf32>
    %c3_217 = arith.constant 3 : index
    %c0_218 = arith.constant 0 : index
    %c0_219 = arith.constant 0 : index
    %229 = vector.load %arg6[%c3_217, %c0_218, %c0_219] : memref<4x256x500xf32, #tpu.memory_space<vmem>>, vector<1x256x500xf32>
    %230 = vector.shape_cast %229 : vector<1x256x500xf32> to vector<256x500xf32>
    %cst_220 = arith.constant dense<0.000000e+00> : vector<8x500xf32>
    %231 = tpu.matmul %228, %230, %cst_220 {dimension_numbers = #tpu.dot_dimension_numbers<[1], [0], [0], [1], [0, 0, 1, 1], [], []>} : vector<8x256xf32>, vector<256x500xf32>, vector<8x500xf32> -> vector<8x500xf32>
    %232 = arith.addf %227, %231 : vector<8x500xf32>
    %cst_221 = arith.constant 0.000000e+00 : f32
    %233 = vector.broadcast %cst_221 : f32 to vector<8x500xf32>
    %234 = arith.maximumf %232, %233 : vector<8x500xf32>
    %c0_222 = arith.constant 0 : index
    %c0_223 = arith.constant 0 : index
    %235 = vector.load %arg8[%c0_222, %c0_223] : memref<500x128xf32, #tpu.memory_space<vmem>>, vector<500x128xf32>
    %cst_224 = arith.constant dense<0.000000e+00> : vector<8x128xf32>
    %236 = tpu.matmul %234, %235, %cst_224 {dimension_numbers = #tpu.dot_dimension_numbers<[1], [0], [0], [1], [0, 0, 1, 1], [], []>} : vector<8x500xf32>, vector<500x128xf32>, vector<8x128xf32> -> vector<8x128xf32>
    %c0_225 = arith.constant 0 : index
    %c0_226 = arith.constant 0 : index
    %237 = vector.load %arg9[%c0_225, %c0_226] : memref<1x128xf32, #tpu.memory_space<vmem>>, vector<1x128xf32>
    %238 = vector.broadcast %237 : vector<1x128xf32> to vector<8x128xf32>
    %239 = arith.addf %236, %238 : vector<8x128xf32>
    %cst_227 = arith.constant dense<0xFF800000> : vector<8xf32>
    %240 = vector.multi_reduction <maximumf>, %239, %cst_227 [1] : vector<8x128xf32> to vector<8xf32>
    %241 = vector.shape_cast %240 : vector<8xf32> to vector<8x1xf32>
    %242 = vector.broadcast %241 : vector<8x1xf32> to vector<8x128xf32>
    %243 = arith.subf %239, %242 : vector<8x128xf32>
    %244 = math.exp %243 : vector<8x128xf32>
    %cst_228 = arith.constant dense<0.000000e+00> : vector<8xf32>
    %245 = vector.multi_reduction <add>, %244, %cst_228 [1] : vector<8x128xf32> to vector<8xf32>
    %246 = vector.shape_cast %245 : vector<8xf32> to vector<8x1xf32>
    %247 = math.log %246 : vector<8x1xf32>
    %248 = vector.broadcast %247 : vector<8x1xf32> to vector<8x128xf32>
    %249 = arith.subf %243, %248 : vector<8x128xf32>
    %c0_229 = arith.constant 0 : index
    %c0_230 = arith.constant 0 : index
    %250 = vector.load %arg10[%c0_229, %c0_230] : memref<8x128xf32, #tpu.memory_space<vmem>>, vector<8x128xf32>
    tpu.vector_store %arg10[%c0_229, %c0_230], %249 {strides = array<i32>} : memref<8x128xf32, #tpu.memory_space<vmem>>, vector<8x128xf32>,
    return
  }
  func.func @transform_0(%arg0: i32) -> (i32, i32, i32, i32) {
    %c0_i32 = arith.constant 0 : i32
    %c0_i32_0 = arith.constant 0 : i32
    %c0_i32_1 = arith.constant 0 : i32
    %c0_i32_2 = arith.constant 0 : i32
    return %c0_i32, %c0_i32_0, %arg0, %c0_i32_1 : i32, i32, i32, i32
  }
  func.func @transform_1(%arg0: i32) -> (i32, i32, i32) {
    %c0_i32 = arith.constant 0 : i32
    %c0_i32_0 = arith.constant 0 : i32
    %c0_i32_1 = arith.constant 0 : i32
    %c0_i32_2 = arith.constant 0 : i32
    return %c0_i32, %c0_i32_0, %c0_i32_1 : i32, i32, i32
  }
  func.func @transform_2(%arg0: i32) -> (i32, i32) {
    %c0_i32 = arith.constant 0 : i32
    %c0_i32_0 = arith.constant 0 : i32
    %c0_i32_1 = arith.constant 0 : i32
    return %c0_i32, %c0_i32_0 : i32, i32
  }
  func.func @transform_3(%arg0: i32) -> (i32, i32, i32) {
    %c0_i32 = arith.constant 0 : i32
    %c0_i32_0 = arith.constant 0 : i32
    %c0_i32_1 = arith.constant 0 : i32
    %c0_i32_2 = arith.constant 0 : i32
    return %c0_i32, %c0_i32_0, %c0_i32_1 : i32, i32, i32
  }
  func.func @transform_4(%arg0: i32) -> (i32, i32) {
    %c0_i32 = arith.constant 0 : i32
    %c0_i32_0 = arith.constant 0 : i32
    %c0_i32_1 = arith.constant 0 : i32
    return %c0_i32, %c0_i32_0 : i32, i32
  }
  func.func @transform_5(%arg0: i32) -> (i32, i32, i32) {
    %c0_i32 = arith.constant 0 : i32
    %c0_i32_0 = arith.constant 0 : i32
    %c0_i32_1 = arith.constant 0 : i32
    %c0_i32_2 = arith.constant 0 : i32
    return %c0_i32, %c0_i32_0, %c0_i32_1 : i32, i32, i32
  }
  func.func @transform_6(%arg0: i32) -> (i32, i32) {
    %c0_i32 = arith.constant 0 : i32
    %c0_i32_0 = arith.constant 0 : i32
    %c0_i32_1 = arith.constant 0 : i32
    return %c0_i32, %c0_i32_0 : i32, i32
  }
  func.func @transform_7(%arg0: i32) -> (i32, i32) {
    %c0_i32 = arith.constant 0 : i32
    %c0_i32_0 = arith.constant 0 : i32
    %c0_i32_1 = arith.constant 0 : i32
    return %c0_i32, %c0_i32_0 : i32, i32
  }
  func.func @transform_8(%arg0: i32) -> (i32, i32) {
    %c0_i32 = arith.constant 0 : i32
    %c0_i32_0 = arith.constant 0 : i32
    %c0_i32_1 = arith.constant 0 : i32
    return %c0_i32, %c0_i32_0 : i32, i32
  }
  func.func @transform_9(%arg0: i32) -> (i32, i32) {
    %c0_i32 = arith.constant 0 : i32
    %c0_i32_0 = arith.constant 0 : i32
    return %arg0, %c0_i32 : i32, i32
  }
}

</mosaic_0001>

<llo_original>
// kernel: lenet_forward.1
$region0: #{lenet_forward.1}
  #allocation0 [shape = 'u32[]', space=smem, size = 0x4, offset = 0x4, fixed_abs, tag = 'smem constant byte address 0x4 - core index']
  #allocation1 [shape = 'u32[144,128]{1,0:T(1,128)}', space=vmem, size = 0x12000, scoped, tag = 'internal scratch']
  %s0 = inlined_call_operand.vmem [shape: f32[4,7,8,28], index: 0, kind: input, shape index: {}]
  %s1 = inlined_call_operand.vmem [shape: f32[5,28,512], index: 1, kind: input, shape index: {}]
  %s2 = inlined_call_operand.vmem [shape: f32[1,256], index: 2, kind: input, shape index: {}]
  %s3 = inlined_call_operand.vmem [shape: f32[5,256,512], index: 3, kind: input, shape index: {}]
  %s4 = inlined_call_operand.vmem [shape: f32[1,256], index: 4, kind: input, shape index: {}]
  %s5 = inlined_call_operand.vmem [shape: f32[4,256,500], index: 5, kind: input, shape index: {}]
  %s6 = inlined_call_operand.vmem [shape: f32[1,500], index: 6, kind: input, shape index: {}]
  %s7 = inlined_call_operand.vmem [shape: f32[500,128], index: 7, kind: input, shape index: {}]
  %s8 = inlined_call_operand.vmem [shape: f32[1,128], index: 8, kind: input, shape index: {}]
  %s9 = inlined_call_operand.vmem [shape: f32[8,128], index: 9, kind: output, shape index: {}]
  %s10 = sld [smem:[#allocation0]]
  $region46: #{lenet_forward.1} parent=0
    _
  %s12 = ssub.s32 1, %s10
  %s13 = scalar_select 0, %s12, %s10
  // Predicated region
  $region2: #{lenet_forward.1} parent=0 // pred_check
    _
  $region3: #{lenet_forward.1} parent=0 // pred_check_branch
    %15 = sbr.rel (0) target = $region5
  $region4: #{lenet_forward.1} parent=0 // pred_region
    _
  $region5: #{lenet_forward.1} parent=0 // pred_fallthru
    _
  // Predicated region
  $region6: #{lenet_forward.1} parent=0 // pred_check
    _
  $region7: #{lenet_forward.1} parent=0 // pred_check_branch
    %17 = sbr.rel (0) target = $region9
  $region8: #{lenet_forward.1} parent=0 // pred_region
    _
  $region9: #{lenet_forward.1} parent=0 // pred_fallthru
    _
  // Predicated region
  $region10: #{lenet_forward.1} parent=0 // pred_check
    _
  $region11: #{lenet_forward.1} parent=0 // pred_check_branch
    %19 = sbr.rel (0) target = $region13
  $region12: #{lenet_forward.1} parent=0 // pred_region
    _
  $region13: #{lenet_forward.1} parent=0 // pred_fallthru
    _
  // Predicated region
  $region14: #{lenet_forward.1} parent=0 // pred_check
    _
  $region15: #{lenet_forward.1} parent=0 // pred_check_branch
    %21 = sbr.rel (0) target = $region17
  $region16: #{lenet_forward.1} parent=0 // pred_region
    _
  $region17: #{lenet_forward.1} parent=0 // pred_fallthru
    _
  // Predicated region
  $region18: #{lenet_forward.1} parent=0 // pred_check
    _
  $region19: #{lenet_forward.1} parent=0 // pred_check_branch
    %23 = sbr.rel (0) target = $region21
  $region20: #{lenet_forward.1} parent=0 // pred_region
    _
  $region21: #{lenet_forward.1} parent=0 // pred_fallthru
    _
  // Predicated region
  $region22: #{lenet_forward.1} parent=0 // pred_check
    _
  $region23: #{lenet_forward.1} parent=0 // pred_check_branch
    %25 = sbr.rel (0) target = $region25
  $region24: #{lenet_forward.1} parent=0 // pred_region
    _
  $region25: #{lenet_forward.1} parent=0 // pred_fallthru
    _
  // Predicated region
  $region26: #{lenet_forward.1} parent=0 // pred_check
    _
  $region27: #{lenet_forward.1} parent=0 // pred_check_branch
    %27 = sbr.rel (0) target = $region29
  $region28: #{lenet_forward.1} parent=0 // pred_region
    _
  $region29: #{lenet_forward.1} parent=0 // pred_fallthru
    _
  // Predicated region
  $region30: #{lenet_forward.1} parent=0 // pred_check
    _
  $region31: #{lenet_forward.1} parent=0 // pred_check_branch
    %29 = sbr.rel (0) target = $region33
  $region32: #{lenet_forward.1} parent=0 // pred_region
    _
  $region33: #{lenet_forward.1} parent=0 // pred_fallthru
    _
  // Predicated region
  $region34: #{lenet_forward.1} parent=0 // pred_check
    _
  $region35: #{lenet_forward.1} parent=0 // pred_check_branch
    %31 = sbr.rel (0) target = $region37
  $region36: #{lenet_forward.1} parent=0 // pred_region
    _
  $region37: #{lenet_forward.1} parent=0 // pred_fallthru
    _
  %v32 = vld [vmem:[%s0] sm:$0xff]
  %v33 = vld [vmem:[%s0 + $0x8] sm:$0xff]
  %v34 = vld [vmem:[%s0 + $0x10] sm:$0xff]
  %v35 = vld [vmem:[%s0 + $0x18] sm:$0xff]
  %v36 = vld [vmem:[%s0 + $0x20] sm:$0xff]
  %v37 = vld [vmem:[%s0 + $0x28] sm:$0xff]
  %v38 = vld [vmem:[%s1] sm:$0xff]
  %v39 = vld [vmem:[%s1 + $0x8] sm:$0xff]
  %v40 = vld [vmem:[%s1 + $0x10] sm:$0xff]
  %v41 = vld [vmem:[%s1 + $0x18] sm:$0xff]
  %v42 = vld [vmem:[%s1 + $0x20] sm:$0xff]
  %v43 = vld [vmem:[%s1 + $0x28] sm:$0xff]
  %v44 = vld [vmem:[%s1 + $0x30] sm:$0xff]
  %v45 = vld [vmem:[%s1 + $0x38] sm:$0xff]
  %v46 = vld [vmem:[%s1 + $0x40] sm:$0xff]
  %v47 = vld [vmem:[%s1 + $0x48] sm:$0xff]
  %v48 = vld [vmem:[%s1 + $0x50] sm:$0xff]
  %v49 = vld [vmem:[%s1 + $0x58] sm:$0xff]
  %v50 = vld [vmem:[%s1 + $0x60] sm:$0xf]
  %v51 = vld [vmem:[%s1 + $0x68] sm:$0xf]
  %v52 = vld [vmem:[%s1 + $0x70] sm:$0xf]
  %v53 = vld [vmem:[%s1 + $0x78] sm:$0xf]
  %s54 = scalar_lea.vmem %s0, 56
  %v55 = vld [vmem:[%s54] sm:$0xff]
  %v56 = vld [vmem:[%s54 + $0x8] sm:$0xff]
  %v57 = vld [vmem:[%s54 + $0x10] sm:$0xff]
  %v58 = vld [vmem:[%s54 + $0x18] sm:$0xff]
  %v59 = vld [vmem:[%s54 + $0x20] sm:$0xff]
  %v60 = vld [vmem:[%s54 + $0x28] sm:$0xff]
  %s61 = scalar_lea.vmem %s1, 128
  %v62 = vld [vmem:[%s61] sm:$0xff]
  %v63 = vld [vmem:[%s61 + $0x8] sm:$0xff]
  %v64 = vld [vmem:[%s61 + $0x10] sm:$0xff]
  %v65 = vld [vmem:[%s61 + $0x18] sm:$0xff]
  %v66 = vld [vmem:[%s61 + $0x20] sm:$0xff]
  %v67 = vld [vmem:[%s61 + $0x28] sm:$0xff]
  %v68 = vld [vmem:[%s61 + $0x30] sm:$0xff]
  %v69 = vld [vmem:[%s61 + $0x38] sm:$0xff]
  %v70 = vld [vmem:[%s61 + $0x40] sm:$0xff]
  %v71 = vld [vmem:[%s61 + $0x48] sm:$0xff]
  %v72 = vld [vmem:[%s61 + $0x50] sm:$0xff]
  %v73 = vld [vmem:[%s61 + $0x58] sm:$0xff]
  %v74 = vld [vmem:[%s61 + $0x60] sm:$0xf]
  %v75 = vld [vmem:[%s61 + $0x68] sm:$0xf]
  %v76 = vld [vmem:[%s61 + $0x70] sm:$0xf]
  %v77 = vld [vmem:[%s61 + $0x78] sm:$0xf]
  %vm78 = vcmask 228352
  %v80 = vsel %vm78, %v55, 0
  %v83 = vsel %vm78, %v56, 0
  %v86 = vsel %vm78, %v57, 0
  %v89 = vsel %vm78, %v58, 0
  %v92 = vsel %vm78, %v59, 0
  %v95 = vsel %vm78, %v60, 0
  %vm97 = vcmask 1043456
  %v99 = vsel %vm97, %v74, 0
  %v102 = vsel %vm97, %v75, 0
  %v105 = vsel %vm97, %v76, 0
  %v108 = vsel %vm97, %v77, 0
  %110 = vmatprep.subr.mxu0 0.0
  %111 = vmatpush1.msra.mxu0 0.0
  %112 = vmatprep.subr.mxu0 0.0
  %113 = vmatpush1.msra.mxu0 0.0
  %114 = vmatprep.subr.mxu0 0.0
  %115 = vmatpush1.msra.mxu0 0.0
  %116 = vmatprep.subr.mxu0 0.0
  %117 = vmatpush1.msra.mxu0 0.0
  %118 = vmatprep.subr.mxu0 0.0
  %119 = vmatpush1.msra.mxu0 0.0
  %120 = vmatprep.subr.mxu0 0.0
  %121 = vmatpush1.msra.mxu0 0.0
  %122 = vmatprep.subr.mxu0 0.0
  %123 = vmatpush1.msra.mxu0 0.0
  %124 = vmatprep.subr.mxu0 0.0
  %125 = vmatpush1.msra.mxu0 0.0
  %126 = vmatprep.subr.mxu0 0.0
  %127 = vmatpush1.msra.mxu0 0.0
  %128 = vmatprep.subr.mxu0 0.0
  %129 = vmatpush1.msra.mxu0 0.0
  %130 = vmatprep.subr.mxu0 0.0
  %131 = vmatpush1.msra.mxu0 0.0
  %132 = vmatprep.subr.mxu0 0.0
  %133 = vmatpush1.msra.mxu0 0.0
  %134 = vmatprep.subr.mxu0 %v102
  %135 = vmatpush1.msra.mxu0 %v99
  %136 = vmatprep.subr.mxu0 %v71
  %137 = vmatpush1.msra.mxu0 %v70
  %138 = vmatprep.subr.mxu0 %v67
  %139 = vmatpush1.msra.mxu0 %v66
  %140 = vmatprep.subr.mxu0 %v63
  %141 = vmatpush1.msra.mxu0 %v62
  %142 = vmatprep.subr.mxu0 0.0
  %143 = vmatpush2.msra.mxu0 0.0
  %144 = vmatprep.subr.mxu0 0.0
  %145 = vmatpush2.msra.mxu0 0.0
  %146 = vmatprep.subr.mxu0 0.0
  %147 = vmatpush2.msra.mxu0 0.0
  %148 = vmatprep.subr.mxu0 0.0
  %149 = vmatpush2.msra.mxu0 0.0
  %150 = vmatprep.subr.mxu0 0.0
  %151 = vmatpush2.msra.mxu0 0.0
  %152 = vmatprep.subr.mxu0 0.0
  %153 = vmatpush2.msra.mxu0 0.0
  %154 = vmatprep.subr.mxu0 0.0
  %155 = vmatpush2.msra.mxu0 0.0
  %156 = vmatprep.subr.mxu0 0.0
  %157 = vmatpush2.msra.mxu0 0.0
  %158 = vmatprep.subr.mxu0 0.0
  %159 = vmatpush2.msra.mxu0 0.0
  %160 = vmatprep.subr.mxu0 0.0
  %161 = vmatpush2.msra.mxu0 0.0
  %162 = vmatprep.subr.mxu0 0.0
  %163 = vmatpush2.msra.mxu0 0.0
  %164 = vmatprep.subr.mxu0 0.0
  %165 = vmatpush2.msra.mxu0 0.0
  %166 = vmatprep.subr.mxu0 0.0
  %167 = vmatpush2.msra.mxu0 0.0
  %168 = vmatprep.subr.mxu0 0.0
  %169 = vmatpush2.msra.mxu0 0.0
  %170 = vmatprep.subr.mxu0 0.0
  %171 = vmatpush2.msra.mxu0 0.0
  %172 = vmatprep.subr.mxu0 0.0
  %173 = vmatpush2.msra.mxu0 0.0
  %174 = vmatprep.mubr.f32.mxu0 0.0
  %175 = vmatmul.mubr.f32.gmra.mxu0 %v80
  %v176 = vpop.f32.mrf.mxu0
  %v177 = vadd.f32 0.0, %v176
  %v178 = vpop.f32.mrf.mxu0
  %v179 = vadd.f32 0.0, %v178
  %180 = vmatprep.mubr.f32.mxu0 0.0
  %181 = vmatmul.mubr.f32.gmra.mxu0 %v83
  %v182 = vpop.f32.mrf.mxu0
  %v183 = vadd.f32 0.0, %v182
  %v184 = vpop.f32.mrf.mxu0
  %v185 = vadd.f32 0.0, %v184
  %186 = vmatprep.mubr.f32.mxu0 0.0
  %187 = vmatmul.mubr.f32.gmra.mxu0 %v86
  %v188 = vpop.f32.mrf.mxu0
  %v189 = vadd.f32 0.0, %v188
  %v190 = vpop.f32.mrf.mxu0
  %v191 = vadd.f32 0.0, %v190
  %192 = vmatprep.mubr.f32.mxu0 0.0
  %193 = vmatmul.mubr.f32.gmra.mxu0 %v89
  %v194 = vpop.f32.mrf.mxu0
  %v195 = vadd.f32 0.0, %v194
  %v196 = vpop.f32.mrf.mxu0
  %v197 = vadd.f32 0.0, %v196
  %198 = vmatprep.mubr.f32.mxu0 0.0
  %199 = vmatmul.mubr.f32.gmra.mxu0 %v92
  %v200 = vpop.f32.mrf.mxu0
  %v201 = vadd.f32 0.0, %v200
  %v202 = vpop.f32.mrf.mxu0
  %v203 = vadd.f32 0.0, %v202
  %204 = vmatprep.mubr.f32.mxu0 0.0
  %205 = vmatmul.mubr.f32.gmra.mxu0 %v95
  %v206 = vpop.f32.mrf.mxu0
  %v207 = vadd.f32 0.0, %v206
  %v208 = vpop.f32.mrf.mxu0
  %v209 = vadd.f32 0.0, %v208
  %210 = vdwg.mxu0
  %211 = vmatprep.subr.mxu0 0.0
  %212 = vmatpush1.msra.mxu0 0.0
  %213 = vmatprep.subr.mxu0 0.0
  %214 = vmatpush1.msra.mxu0 0.0
  %215 = vmatprep.subr.mxu0 0.0
  %216 = vmatpush1.msra.mxu0 0.0
  %217 = vmatprep.subr.mxu0 0.0
  %218 = vmatpush1.msra.mxu0 0.0
  %219 = vmatprep.subr.mxu0 0.0
  %220 = vmatpush1.msra.mxu0 0.0
  %221 = vmatprep.subr.mxu0 0.0
  %222 = vmatpush1.msra.mxu0 0.0
  %223 = vmatprep.subr.mxu0 0.0
  %224 = vmatpush1.msra.mxu0 0.0
  %225 = vmatprep.subr.mxu0 0.0
  %226 = vmatpush1.msra.mxu0 0.0
  %227 = vmatprep.subr.mxu0 0.0
  %228 = vmatpush1.msra.mxu0 0.0
  %229 = vmatprep.subr.mxu0 0.0
  %230 = vmatpush1.msra.mxu0 0.0
  %231 = vmatprep.subr.mxu0 0.0
  %232 = vmatpush1.msra.mxu0 0.0
  %233 = vmatprep.subr.mxu0 0.0
  %234 = vmatpush1.msra.mxu0 0.0
  %235 = vmatprep.subr.mxu0 %v108
  %236 = vmatpush1.msra.mxu0 %v105
  %237 = vmatprep.subr.mxu0 %v73
  %238 = vmatpush1.msra.mxu0 %v72
  %239 = vmatprep.subr.mxu0 %v69
  %240 = vmatpush1.msra.mxu0 %v68
  %241 = vmatprep.subr.mxu0 %v65
  %242 = vmatpush1.msra.mxu0 %v64
  %243 = vmatprep.subr.mxu0 0.0
  %244 = vmatpush2.msra.mxu0 0.0
  %245 = vmatprep.subr.mxu0 0.0
  %246 = vmatpush2.msra.mxu0 0.0
  %247 = vmatprep.subr.mxu0 0.0
  %248 = vmatpush2.msra.mxu0 0.0
  %249 = vmatprep.subr.mxu0 0.0
  %250 = vmatpush2.msra.mxu0 0.0
  %251 = vmatprep.subr.mxu0 0.0
  %252 = vmatpush2.msra.mxu0 0.0
  %253 = vmatprep.subr.mxu0 0.0
  %254 = vmatpush2.msra.mxu0 0.0
  %255 = vmatprep.subr.mxu0 0.0
  %256 = vmatpush2.msra.mxu0 0.0
  %257 = vmatprep.subr.mxu0 0.0
  %258 = vmatpush2.msra.mxu0 0.0
  %259 = vmatprep.subr.mxu0 0.0
  %260 = vmatpush2.msra.mxu0 0.0
  %261 = vmatprep.subr.mxu0 0.0
  %262 = vmatpush2.msra.mxu0 0.0
  %263 = vmatprep.subr.mxu0 0.0
  %264 = vmatpush2.msra.mxu0 0.0
  %265 = vmatprep.subr.mxu0 0.0
  %266 = vmatpush2.msra.mxu0 0.0
  %267 = vmatprep.subr.mxu0 0.0
  %268 = vmatpush2.msra.mxu0 0.0
  %269 = vmatprep.subr.mxu0 0.0
  %270 = vmatpush2.msra.mxu0 0.0
  %271 = vmatprep.subr.mxu0 0.0
  %272 = vmatpush2.msra.mxu0 0.0
  %273 = vmatprep.subr.mxu0 0.0
  %274 = vmatpush2.msra.mxu0 0.0
  %275 = vmatprep.mubr.f32.mxu0 0.0
  %276 = vmatmul.mubr.f32.gmra.mxu0 %v80
  %v277 = vpop.f32.mrf.mxu0
  %v278 = vadd.f32 0.0, %v277
  %v279 = vpop.f32.mrf.mxu0
  %v280 = vadd.f32 0.0, %v279
  %281 = vmatprep.mubr.f32.mxu0 0.0
  %282 = vmatmul.mubr.f32.gmra.mxu0 %v83
  %v283 = vpop.f32.mrf.mxu0
  %v284 = vadd.f32 0.0, %v283
  %v285 = vpop.f32.mrf.mxu0
  %v286 = vadd.f32 0.0, %v285
  %287 = vmatprep.mubr.f32.mxu0 0.0
  %288 = vmatmul.mubr.f32.gmra.mxu0 %v86
  %v289 = vpop.f32.mrf.mxu0
  %v290 = vadd.f32 0.0, %v289
  %v291 = vpop.f32.mrf.mxu0
  %v292 = vadd.f32 0.0, %v291
  %293 = vmatprep.mubr.f32.mxu0 0.0
  %294 = vmatmul.mubr.f32.gmra.mxu0 %v89
  %v295 = vpop.f32.mrf.mxu0
  %v296 = vadd.f32 0.0, %v295
  %v297 = vpop.f32.mrf.mxu0
  %v298 = vadd.f32 0.0, %v297
  %299 = vmatprep.mubr.f32.mxu0 0.0
  %300 = vmatmul.mubr.f32.gmra.mxu0 %v92
  %v301 = vpop.f32.mrf.mxu0
  %v302 = vadd.f32 0.0, %v301
  %v303 = vpop.f32.mrf.mxu0
  %v304 = vadd.f32 0.0, %v303
  %305 = vmatprep.mubr.f32.mxu0 0.0
  %306 = vmatmul.mubr.f32.gmra.mxu0 %v95
  %v307 = vpop.f32.mrf.mxu0
  %v308 = vadd.f32 0.0, %v307
  %v309 = vpop.f32.mrf.mxu0
  %v310 = vadd.f32 0.0, %v309
  %311 = vdwg.mxu0
  %v313 = vsel %vm78, %v32, 0
  %v316 = vsel %vm78, %v33, 0
  %v319 = vsel %vm78, %v34, 0
  %v322 = vsel %vm78, %v35, 0
  %v325 = vsel %vm78, %v36, 0
  %v328 = vsel %vm78, %v37, 0
  %v331 = vsel %vm97, %v50, 0
  %v334 = vsel %vm97, %v51, 0
  %v337 = vsel %vm97, %v52, 0
  %v340 = vsel %vm97, %v53, 0
  %342 = vmatprep.subr.mxu0 0.0
  %343 = vmatpush1.msra.mxu0 0.0
  %344 = vmatprep.subr.mxu0 0.0
  %345 = vmatpush1.msra.mxu0 0.0
  %346 = vmatprep.subr.mxu0 0.0
  %347 = vmatpush1.msra.mxu0 0.0
  %348 = vmatprep.subr.mxu0 0.0
  %349 = vmatpush1.msra.mxu0 0.0
  %350 = vmatprep.subr.mxu0 0.0
  %351 = vmatpush1.msra.mxu0 0.0
  %352 = vmatprep.subr.mxu0 0.0
  %353 = vmatpush1.msra.mxu0 0.0
  %354 = vmatprep.subr.mxu0 0.0
  %355 = vmatpush1.msra.mxu0 0.0
  %356 = vmatprep.subr.mxu0 0.0
  %357 = vmatpush1.msra.mxu0 0.0
  %358 = vmatprep.subr.mxu0 0.0
  %359 = vmatpush1.msra.mxu0 0.0
  %360 = vmatprep.subr.mxu0 0.0
  %361 = vmatpush1.msra.mxu0 0.0
  %362 = vmatprep.subr.mxu0 0.0
  %363 = vmatpush1.msra.mxu0 0.0
  %364 = vmatprep.subr.mxu0 0.0
  %365 = vmatpush1.msra.mxu0 0.0
  %366 = vmatprep.subr.mxu0 %v334
  %367 = vmatpush1.msra.mxu0 %v331
  %368 = vmatprep.subr.mxu0 %v47
  %369 = vmatpush1.msra.mxu0 %v46
  %370 = vmatprep.subr.mxu0 %v43
  %371 = vmatpush1.msra.mxu0 %v42
  %372 = vmatprep.subr.mxu0 %v39
  %373 = vmatpush1.msra.mxu0 %v38
  %374 = vmatprep.subr.mxu0 0.0
  %375 = vmatpush2.msra.mxu0 0.0
  %376 = vmatprep.subr.mxu0 0.0
  %377 = vmatpush2.msra.mxu0 0.0
  %378 = vmatprep.subr.mxu0 0.0
  %379 = vmatpush2.msra.mxu0 0.0
  %380 = vmatprep.subr.mxu0 0.0
  %381 = vmatpush2.msra.mxu0 0.0
  %382 = vmatprep.subr.mxu0 0.0
  %383 = vmatpush2.msra.mxu0 0.0
  %384 = vmatprep.subr.mxu0 0.0
  %385 = vmatpush2.msra.mxu0 0.0
  %386 = vmatprep.subr.mxu0 0.0
  %387 = vmatpush2.msra.mxu0 0.0
  %388 = vmatprep.subr.mxu0 0.0
  %389 = vmatpush2.msra.mxu0 0.0
  %390 = vmatprep.subr.mxu0 0.0
  %391 = vmatpush2.msra.mxu0 0.0
  %392 = vmatprep.subr.mxu0 0.0
  %393 = vmatpush2.msra.mxu0 0.0
  %394 = vmatprep.subr.mxu0 0.0
  %395 = vmatpush2.msra.mxu0 0.0
  %396 = vmatprep.subr.mxu0 0.0
  %397 = vmatpush2.msra.mxu0 0.0
  %398 = vmatprep.subr.mxu0 0.0
  %399 = vmatpush2.msra.mxu0 0.0
  %400 = vmatprep.subr.mxu0 0.0
  %401 = vmatpush2.msra.mxu0 0.0
  %402 = vmatprep.subr.mxu0 0.0
  %403 = vmatpush2.msra.mxu0 0.0
  %404 = vmatprep.subr.mxu0 0.0
  %405 = vmatpush2.msra.mxu0 0.0
  %406 = vmatprep.mubr.f32.mxu0 0.0
  %407 = vmatmul.mubr.f32.gmra.mxu0 %v313
  %v408 = vpop.f32.mrf.mxu0
  %v409 = vadd.f32 %v177, %v408
  %v410 = vpop.f32.mrf.mxu0
  %v411 = vadd.f32 %v179, %v410
  %412 = vmatprep.mubr.f32.mxu0 0.0
  %413 = vmatmul.mubr.f32.gmra.mxu0 %v316
  %v414 = vpop.f32.mrf.mxu0
  %v415 = vadd.f32 %v183, %v414
  %v416 = vpop.f32.mrf.mxu0
  %v417 = vadd.f32 %v185, %v416
  %418 = vmatprep.mubr.f32.mxu0 0.0
  %419 = vmatmul.mubr.f32.gmra.mxu0 %v319
  %v420 = vpop.f32.mrf.mxu0
  %v421 = vadd.f32 %v189, %v420
  %v422 = vpop.f32.mrf.mxu0
  %v423 = vadd.f32 %v191, %v422
  %424 = vmatprep.mubr.f32.mxu0 0.0
  %425 = vmatmul.mubr.f32.gmra.mxu0 %v322
  %v426 = vpop.f32.mrf.mxu0
  %v427 = vadd.f32 %v195, %v426
  %v428 = vpop.f32.mrf.mxu0
  %v429 = vadd.f32 %v197, %v428
  %430 = vmatprep.mubr.f32.mxu0 0.0
  %431 = vmatmul.mubr.f32.gmra.mxu0 %v325
  %v432 = vpop.f32.mrf.mxu0
  %v433 = vadd.f32 %v201, %v432
  %v434 = vpop.f32.mrf.mxu0
  %v435 = vadd.f32 %v203, %v434
  %436 = vmatprep.mubr.f32.mxu0 0.0
  %437 = vmatmul.mubr.f32.gmra.mxu0 %v328
  %v438 = vpop.f32.mrf.mxu0
  %v439 = vadd.f32 %v207, %v438
  %v440 = vpop.f32.mrf.mxu0
  %v441 = vadd.f32 %v209, %v440
  %442 = vdwg.mxu0
  %443 = vmatprep.subr.mxu0 0.0
  %444 = vmatpush1.msra.mxu0 0.0
  %445 = vmatprep.subr.mxu0 0.0
  %446 = vmatpush1.msra.mxu0 0.0
  %447 = vmatprep.subr.mxu0 0.0
  %448 = vmatpush1.msra.mxu0 0.0
  %449 = vmatprep.subr.mxu0 0.0
  %450 = vmatpush1.msra.mxu0 0.0
  %451 = vmatprep.subr.mxu0 0.0
  %452 = vmatpush1.msra.mxu0 0.0
  %453 = vmatprep.subr.mxu0 0.0
  %454 = vmatpush1.msra.mxu0 0.0
  %455 = vmatprep.subr.mxu0 0.0
  %456 = vmatpush1.msra.mxu0 0.0
  %457 = vmatprep.subr.mxu0 0.0
  %458 = vmatpush1.msra.mxu0 0.0
  %459 = vmatprep.subr.mxu0 0.0
  %460 = vmatpush1.msra.mxu0 0.0
  %461 = vmatprep.subr.mxu0 0.0
  %462 = vmatpush1.msra.mxu0 0.0
  %463 = vmatprep.subr.mxu0 0.0
  %464 = vmatpush1.msra.mxu0 0.0
  %465 = vmatprep.subr.mxu0 0.0
  %466 = vmatpush1.msra.mxu0 0.0
  %467 = vmatprep.subr.mxu0 %v340
  %468 = vmatpush1.msra.mxu0 %v337
  %469 = vmatprep.subr.mxu0 %v49
  %470 = vmatpush1.msra.mxu0 %v48
  %471 = vmatprep.subr.mxu0 %v45
  %472 = vmatpush1.msra.mxu0 %v44
  %473 = vmatprep.subr.mxu0 %v41
  %474 = vmatpush1.msra.mxu0 %v40
  %475 = vmatprep.subr.mxu0 0.0
  %476 = vmatpush2.msra.mxu0 0.0
  %477 = vmatprep.subr.mxu0 0.0
  %478 = vmatpush2.msra.mxu0 0.0
  %479 = vmatprep.subr.mxu0 0.0
  %480 = vmatpush2.msra.mxu0 0.0
  %481 = vmatprep.subr.mxu0 0.0
  %482 = vmatpush2.msra.mxu0 0.0
  %483 = vmatprep.subr.mxu0 0.0
  %484 = vmatpush2.msra.mxu0 0.0
  %485 = vmatprep.subr.mxu0 0.0
  %486 = vmatpush2.msra.mxu0 0.0
  %487 = vmatprep.subr.mxu0 0.0
  %488 = vmatpush2.msra.mxu0 0.0
  %489 = vmatprep.subr.mxu0 0.0
  %490 = vmatpush2.msra.mxu0 0.0
  %491 = vmatprep.subr.mxu0 0.0
  %492 = vmatpush2.msra.mxu0 0.0
  %493 = vmatprep.subr.mxu0 0.0
  %494 = vmatpush2.msra.mxu0 0.0
  %495 = vmatprep.subr.mxu0 0.0
  %496 = vmatpush2.msra.mxu0 0.0
  %497 = vmatprep.subr.mxu0 0.0
  %498 = vmatpush2.msra.mxu0 0.0
  %499 = vmatprep.subr.mxu0 0.0
  %500 = vmatpush2.msra.mxu0 0.0
  %501 = vmatprep.subr.mxu0 0.0
  %502 = vmatpush2.msra.mxu0 0.0
  %503 = vmatprep.subr.mxu0 0.0
  %504 = vmatpush2.msra.mxu0 0.0
  %505 = vmatprep.subr.mxu0 0.0
  %506 = vmatpush2.msra.mxu0 0.0
  %507 = vmatprep.mubr.f32.mxu0 0.0
  %508 = vmatmul.mubr.f32.gmra.mxu0 %v313
  %v509 = vpop.f32.mrf.mxu0
  %v510 = vadd.f32 %v278, %v509
  %v511 = vpop.f32.mrf.mxu0
  %v512 = vadd.f32 %v280, %v511
  %513 = vmatprep.mubr.f32.mxu0 0.0
  %514 = vmatmul.mubr.f32.gmra.mxu0 %v316
  %v515 = vpop.f32.mrf.mxu0
  %v516 = vadd.f32 %v284, %v515
  %v517 = vpop.f32.mrf.mxu0
  %v518 = vadd.f32 %v286, %v517
  %519 = vmatprep.mubr.f32.mxu0 0.0
  %520 = vmatmul.mubr.f32.gmra.mxu0 %v319
  %v521 = vpop.f32.mrf.mxu0
  %v522 = vadd.f32 %v290, %v521
  %v523 = vpop.f32.mrf.mxu0
  %v524 = vadd.f32 %v292, %v523
  %525 = vmatprep.mubr.f32.mxu0 0.0
  %526 = vmatmul.mubr.f32.gmra.mxu0 %v322
  %v527 = vpop.f32.mrf.mxu0
  %v528 = vadd.f32 %v296, %v527
  %v529 = vpop.f32.mrf.mxu0
  %v530 = vadd.f32 %v298, %v529
  %531 = vmatprep.mubr.f32.mxu0 0.0
  %532 = vmatmul.mubr.f32.gmra.mxu0 %v325
  %v533 = vpop.f32.mrf.mxu0
  %v534 = vadd.f32 %v302, %v533
  %v535 = vpop.f32.mrf.mxu0
  %v536 = vadd.f32 %v304, %v535
  %537 = vmatprep.mubr.f32.mxu0 0.0
  %538 = vmatmul.mubr.f32.gmra.mxu0 %v328
  %v539 = vpop.f32.mrf.mxu0
  %v540 = vadd.f32 %v308, %v539
  %v541 = vpop.f32.mrf.mxu0
  %v542 = vadd.f32 %v310, %v541
  %543 = vdwg.mxu0
  %s544 = scalar_lea.vmem %s0, 112
  %v545 = vld [vmem:[%s544] sm:$0xff]
  %v546 = vld [vmem:[%s544 + $0x8] sm:$0xff]
  %v547 = vld [vmem:[%s544 + $0x10] sm:$0xff]
  %v548 = vld [vmem:[%s544 + $0x18] sm:$0xff]
  %v549 = vld [vmem:[%s544 + $0x20] sm:$0xff]
  %v550 = vld [vmem:[%s544 + $0x28] sm:$0xff]
  %s551 = scalar_lea.vmem %s1, 256
  %v552 = vld [vmem:[%s551] sm:$0xff]
  %v553 = vld [vmem:[%s551 + $0x8] sm:$0xff]
  %v554 = vld [vmem:[%s551 + $0x10] sm:$0xff]
  %v555 = vld [vmem:[%s551 + $0x18] sm:$0xff]
  %v556 = vld [vmem:[%s551 + $0x20] sm:$0xff]
  %v557 = vld [vmem:[%s551 + $0x28] sm:$0xff]
  %v558 = vld [vmem:[%s551 + $0x30] sm:$0xff]
  %v559 = vld [vmem:[%s551 + $0x38] sm:$0xff]
  %v560 = vld [vmem:[%s551 + $0x40] sm:$0xff]
  %v561 = vld [vmem:[%s551 + $0x48] sm:$0xff]
  %v562 = vld [vmem:[%s551 + $0x50] sm:$0xff]
  %v563 = vld [vmem:[%s551 + $0x58] sm:$0xff]
  %v564 = vld [vmem:[%s551 + $0x60] sm:$0xf]
  %v565 = vld [vmem:[%s551 + $0x68] sm:$0xf]
  %v566 = vld [vmem:[%s551 + $0x70] sm:$0xf]
  %v567 = vld [vmem:[%s551 + $0x78] sm:$0xf]
  %v569 = vsel %vm78, %v545, 0
  %v572 = vsel %vm78, %v546, 0
  %v575 = vsel %vm78, %v547, 0
  %v578 = vsel %vm78, %v548, 0
  %v581 = vsel %vm78, %v549, 0
  %v584 = vsel %vm78, %v550, 0
  %v587 = vsel %vm97, %v564, 0
  %v590 = vsel %vm97, %v565, 0
  %v593 = vsel %vm97, %v566, 0
  %v596 = vsel %vm97, %v567, 0
  %598 = vmatprep.subr.mxu0 0.0
  %599 = vmatpush1.msra.mxu0 0.0
  %600 = vmatprep.subr.mxu0 0.0
  %601 = vmatpush1.msra.mxu0 0.0
  %602 = vmatprep.subr.mxu0 0.0
  %603 = vmatpush1.msra.mxu0 0.0
  %604 = vmatprep.subr.mxu0 0.0
  %605 = vmatpush1.msra.mxu0 0.0
  %606 = vmatprep.subr.mxu0 0.0
  %607 = vmatpush1.msra.mxu0 0.0
  %608 = vmatprep.subr.mxu0 0.0
  %609 = vmatpush1.msra.mxu0 0.0
  %610 = vmatprep.subr.mxu0 0.0
  %611 = vmatpush1.msra.mxu0 0.0
  %612 = vmatprep.subr.mxu0 0.0
  %613 = vmatpush1.msra.mxu0 0.0
  %614 = vmatprep.subr.mxu0 0.0
  %615 = vmatpush1.msra.mxu0 0.0
  %616 = vmatprep.subr.mxu0 0.0
  %617 = vmatpush1.msra.mxu0 0.0
  %618 = vmatprep.subr.mxu0 0.0
  %619 = vmatpush1.msra.mxu0 0.0
  %620 = vmatprep.subr.mxu0 0.0
  %621 = vmatpush1.msra.mxu0 0.0
  %622 = vmatprep.subr.mxu0 %v590
  %623 = vmatpush1.msra.mxu0 %v587
  %624 = vmatprep.subr.mxu0 %v561
  %625 = vmatpush1.msra.mxu0 %v560
  %626 = vmatprep.subr.mxu0 %v557
  %627 = vmatpush1.msra.mxu0 %v556
  %628 = vmatprep.subr.mxu0 %v553
  %629 = vmatpush1.msra.mxu0 %v552
  %630 = vmatprep.subr.mxu0 0.0
  %631 = vmatpush2.msra.mxu0 0.0
  %632 = vmatprep.subr.mxu0 0.0
  %633 = vmatpush2.msra.mxu0 0.0
  %634 = vmatprep.subr.mxu0 0.0
  %635 = vmatpush2.msra.mxu0 0.0
  %636 = vmatprep.subr.mxu0 0.0
  %637 = vmatpush2.msra.mxu0 0.0
  %638 = vmatprep.subr.mxu0 0.0
  %639 = vmatpush2.msra.mxu0 0.0
  %640 = vmatprep.subr.mxu0 0.0
  %641 = vmatpush2.msra.mxu0 0.0
  %642 = vmatprep.subr.mxu0 0.0
  %643 = vmatpush2.msra.mxu0 0.0
  %644 = vmatprep.subr.mxu0 0.0
  %645 = vmatpush2.msra.mxu0 0.0
  %646 = vmatprep.subr.mxu0 0.0
  %647 = vmatpush2.msra.mxu0 0.0
  %648 = vmatprep.subr.mxu0 0.0
  %649 = vmatpush2.msra.mxu0 0.0
  %650 = vmatprep.subr.mxu0 0.0
  %651 = vmatpush2.msra.mxu0 0.0
  %652 = vmatprep.subr.mxu0 0.0
  %653 = vmatpush2.msra.mxu0 0.0
  %654 = vmatprep.subr.mxu0 0.0
  %655 = vmatpush2.msra.mxu0 0.0
  %656 = vmatprep.subr.mxu0 0.0
  %657 = vmatpush2.msra.mxu0 0.0
  %658 = vmatprep.subr.mxu0 0.0
  %659 = vmatpush2.msra.mxu0 0.0
  %660 = vmatprep.subr.mxu0 0.0
  %661 = vmatpush2.msra.mxu0 0.0
  %662 = vmatprep.mubr.f32.mxu0 0.0
  %663 = vmatmul.mubr.f32.gmra.mxu0 %v569
  %v664 = vpop.f32.mrf.mxu0
  %v665 = vadd.f32 0.0, %v664
  %v666 = vpop.f32.mrf.mxu0
  %v667 = vadd.f32 0.0, %v666
  %668 = vmatprep.mubr.f32.mxu0 0.0
  %669 = vmatmul.mubr.f32.gmra.mxu0 %v572
  %v670 = vpop.f32.mrf.mxu0
  %v671 = vadd.f32 0.0, %v670
  %v672 = vpop.f32.mrf.mxu0
  %v673 = vadd.f32 0.0, %v672
  %674 = vmatprep.mubr.f32.mxu0 0.0
  %675 = vmatmul.mubr.f32.gmra.mxu0 %v575
  %v676 = vpop.f32.mrf.mxu0
  %v677 = vadd.f32 0.0, %v676
  %v678 = vpop.f32.mrf.mxu0
  %v679 = vadd.f32 0.0, %v678
  %680 = vmatprep.mubr.f32.mxu0 0.0
  %681 = vmatmul.mubr.f32.gmra.mxu0 %v578
  %v682 = vpop.f32.mrf.mxu0
  %v683 = vadd.f32 0.0, %v682
  %v684 = vpop.f32.mrf.mxu0
  %v685 = vadd.f32 0.0, %v684
  %686 = vmatprep.mubr.f32.mxu0 0.0
  %687 = vmatmul.mubr.f32.gmra.mxu0 %v581
  %v688 = vpop.f32.mrf.mxu0
  %v689 = vadd.f32 0.0, %v688
  %v690 = vpop.f32.mrf.mxu0
  %v691 = vadd.f32 0.0, %v690
  %692 = vmatprep.mubr.f32.mxu0 0.0
  %693 = vmatmul.mubr.f32.gmra.mxu0 %v584
  %v694 = vpop.f32.mrf.mxu0
  %v695 = vadd.f32 0.0, %v694
  %v696 = vpop.f32.mrf.mxu0
  %v697 = vadd.f32 0.0, %v696
  %698 = vdwg.mxu0
  %699 = vmatprep.subr.mxu0 0.0
  %700 = vmatpush1.msra.mxu0 0.0
  %701 = vmatprep.subr.mxu0 0.0
  %702 = vmatpush1.msra.mxu0 0.0
  %703 = vmatprep.subr.mxu0 0.0
  %704 = vmatpush1.msra.mxu0 0.0
  %705 = vmatprep.subr.mxu0 0.0
  %706 = vmatpush1.msra.mxu0 0.0
  %707 = vmatprep.subr.mxu0 0.0
  %708 = vmatpush1.msra.mxu0 0.0
  %709 = vmatprep.subr.mxu0 0.0
  %710 = vmatpush1.msra.mxu0 0.0
  %711 = vmatprep.subr.mxu0 0.0
  %712 = vmatpush1.msra.mxu0 0.0
  %713 = vmatprep.subr.mxu0 0.0
  %714 = vmatpush1.msra.mxu0 0.0
  %715 = vmatprep.subr.mxu0 0.0
  %716 = vmatpush1.msra.mxu0 0.0
  %717 = vmatprep.subr.mxu0 0.0
  %718 = vmatpush1.msra.mxu0 0.0
  %719 = vmatprep.subr.mxu0 0.0
  %720 = vmatpush1.msra.mxu0 0.0
  %721 = vmatprep.subr.mxu0 0.0
  %722 = vmatpush1.msra.mxu0 0.0
  %723 = vmatprep.subr.mxu0 %v596
  %724 = vmatpush1.msra.mxu0 %v593
  %725 = vmatprep.subr.mxu0 %v563
  %726 = vmatpush1.msra.mxu0 %v562
  %727 = vmatprep.subr.mxu0 %v559
  %728 = vmatpush1.msra.mxu0 %v558
  %729 = vmatprep.subr.mxu0 %v555
  %730 = vmatpush1.msra.mxu0 %v554
  %731 = vmatprep.subr.mxu0 0.0
  %732 = vmatpush2.msra.mxu0 0.0
  %733 = vmatprep.subr.mxu0 0.0
  %734 = vmatpush2.msra.mxu0 0.0
  %735 = vmatprep.subr.mxu0 0.0
  %736 = vmatpush2.msra.mxu0 0.0
  %737 = vmatprep.subr.mxu0 0.0
  %738 = vmatpush2.msra.mxu0 0.0
  %739 = vmatprep.subr.mxu0 0.0
  %740 = vmatpush2.msra.mxu0 0.0
  %741 = vmatprep.subr.mxu0 0.0
  %742 = vmatpush2.msra.mxu0 0.0
  %743 = vmatprep.subr.mxu0 0.0
  %744 = vmatpush2.msra.mxu0 0.0
  %745 = vmatprep.subr.mxu0 0.0
  %746 = vmatpush2.msra.mxu0 0.0
  %747 = vmatprep.subr.mxu0 0.0
  %748 = vmatpush2.msra.mxu0 0.0
  %749 = vmatprep.subr.mxu0 0.0
  %750 = vmatpush2.msra.mxu0 0.0
  %751 = vmatprep.subr.mxu0 0.0
  %752 = vmatpush2.msra.mxu0 0.0
  %753 = vmatprep.subr.mxu0 0.0
  %754 = vmatpush2.msra.mxu0 0.0
  %755 = vmatprep.subr.mxu0 0.0
  %756 = vmatpush2.msra.mxu0 0.0
  %757 = vmatprep.subr.mxu0 0.0
  %758 = vmatpush2.msra.mxu0 0.0
  %759 = vmatprep.subr.mxu0 0.0
  %760 = vmatpush2.msra.mxu0 0.0
  %761 = vmatprep.subr.mxu0 0.0
  %762 = vmatpush2.msra.mxu0 0.0
  %763 = vmatprep.mubr.f32.mxu0 0.0
  %764 = vmatmul.mubr.f32.gmra.mxu0 %v569
  %v765 = vpop.f32.mrf.mxu0
  %v766 = vadd.f32 0.0, %v765
  %v767 = vpop.f32.mrf.mxu0
  %v768 = vadd.f32 0.0, %v767
  %769 = vmatprep.mubr.f32.mxu0 0.0
  %770 = vmatmul.mubr.f32.gmra.mxu0 %v572
  %v771 = vpop.f32.mrf.mxu0
  %v772 = vadd.f32 0.0, %v771
  %v773 = vpop.f32.mrf.mxu0
  %v774 = vadd.f32 0.0, %v773
  %775 = vmatprep.mubr.f32.mxu0 0.0
  %776 = vmatmul.mubr.f32.gmra.mxu0 %v575
  %v777 = vpop.f32.mrf.mxu0
  %v778 = vadd.f32 0.0, %v777
  %v779 = vpop.f32.mrf.mxu0
  %v780 = vadd.f32 0.0, %v779
  %781 = vmatprep.mubr.f32.mxu0 0.0
  %782 = vmatmul.mubr.f32.gmra.mxu0 %v578
  %v783 = vpop.f32.mrf.mxu0
  %v784 = vadd.f32 0.0, %v783
  %v785 = vpop.f32.mrf.mxu0
  %v786 = vadd.f32 0.0, %v785
  %787 = vmatprep.mubr.f32.mxu0 0.0
  %788 = vmatmul.mubr.f32.gmra.mxu0 %v581
  %v789 = vpop.f32.mrf.mxu0
  %v790 = vadd.f32 0.0, %v789
  %v791 = vpop.f32.mrf.mxu0
  %v792 = vadd.f32 0.0, %v791
  %793 = vmatprep.mubr.f32.mxu0 0.0
  %794 = vmatmul.mubr.f32.gmra.mxu0 %v584
  %v795 = vpop.f32.mrf.mxu0
  %v796 = vadd.f32 0.0, %v795
  %v797 = vpop.f32.mrf.mxu0
  %v798 = vadd.f32 0.0, %v797
  %799 = vdwg.mxu0
  %v800 = vadd.f32 %v409, %v665
  %v801 = vadd.f32 %v411, %v667
  %v802 = vadd.f32 %v510, %v766
  %v803 = vadd.f32 %v512, %v768
  %v804 = vadd.f32 %v415, %v671
  %v805 = vadd.f32 %v417, %v673
  %v806 = vadd.f32 %v516, %v772
  %v807 = vadd.f32 %v518, %v774
  %v808 = vadd.f32 %v421, %v677
  %v809 = vadd.f32 %v423, %v679
  %v810 = vadd.f32 %v522, %v778
  %v811 = vadd.f32 %v524, %v780
  %v812 = vadd.f32 %v427, %v683
  %v813 = vadd.f32 %v429, %v685
  %v814 = vadd.f32 %v528, %v784
  %v815 = vadd.f32 %v530, %v786
  %v816 = vadd.f32 %v433, %v689
  %v817 = vadd.f32 %v435, %v691
  %v818 = vadd.f32 %v534, %v790
  %v819 = vadd.f32 %v536, %v792
  %v820 = vadd.f32 %v439, %v695
  %v821 = vadd.f32 %v441, %v697
  %v822 = vadd.f32 %v540, %v796
  %v823 = vadd.f32 %v542, %v798
  %s824 = scalar_lea.vmem %s0, 168
  %v825 = vld [vmem:[%s824] sm:$0xff]
  %v826 = vld [vmem:[%s824 + $0x8] sm:$0xff]
  %v827 = vld [vmem:[%s824 + $0x10] sm:$0xff]
  %v828 = vld [vmem:[%s824 + $0x18] sm:$0xff]
  %v829 = vld [vmem:[%s824 + $0x20] sm:$0xff]
  %v830 = vld [vmem:[%s824 + $0x28] sm:$0xff]
  %s831 = scalar_lea.vmem %s1, 384
  %v832 = vld [vmem:[%s831] sm:$0xff]
  %v833 = vld [vmem:[%s831 + $0x8] sm:$0xff]
  %v834 = vld [vmem:[%s831 + $0x10] sm:$0xff]
  %v835 = vld [vmem:[%s831 + $0x18] sm:$0xff]
  %v836 = vld [vmem:[%s831 + $0x20] sm:$0xff]
  %v837 = vld [vmem:[%s831 + $0x28] sm:$0xff]
  %v838 = vld [vmem:[%s831 + $0x30] sm:$0xff]
  %v839 = vld [vmem:[%s831 + $0x38] sm:$0xff]
  %v840 = vld [vmem:[%s831 + $0x40] sm:$0xff]
  %v841 = vld [vmem:[%s831 + $0x48] sm:$0xff]
  %v842 = vld [vmem:[%s831 + $0x50] sm:$0xff]
  %v843 = vld [vmem:[%s831 + $0x58] sm:$0xff]
  %v844 = vld [vmem:[%s831 + $0x60] sm:$0xf]
  %v845 = vld [vmem:[%s831 + $0x68] sm:$0xf]
  %v846 = vld [vmem:[%s831 + $0x70] sm:$0xf]
  %v847 = vld [vmem:[%s831 + $0x78] sm:$0xf]
  %v849 = vsel %vm78, %v825, 0
  %v852 = vsel %vm78, %v826, 0
  %v855 = vsel %vm78, %v827, 0
  %v858 = vsel %vm78, %v828, 0
  %v861 = vsel %vm78, %v829, 0
  %v864 = vsel %vm78, %v830, 0
  %v867 = vsel %vm97, %v844, 0
  %v870 = vsel %vm97, %v845, 0
  %v873 = vsel %vm97, %v846, 0
  %v876 = vsel %vm97, %v847, 0
  %878 = vmatprep.subr.mxu0 0.0
  %879 = vmatpush1.msra.mxu0 0.0
  %880 = vmatprep.subr.mxu0 0.0
  %881 = vmatpush1.msra.mxu0 0.0
  %882 = vmatprep.subr.mxu0 0.0
  %883 = vmatpush1.msra.mxu0 0.0
  %884 = vmatprep.subr.mxu0 0.0
  %885 = vmatpush1.msra.mxu0 0.0
  %886 = vmatprep.subr.mxu0 0.0
  %887 = vmatpush1.msra.mxu0 0.0
  %888 = vmatprep.subr.mxu0 0.0
  %889 = vmatpush1.msra.mxu0 0.0
  %890 = vmatprep.subr.mxu0 0.0
  %891 = vmatpush1.msra.mxu0 0.0
  %892 = vmatprep.subr.mxu0 0.0
  %893 = vmatpush1.msra.mxu0 0.0
  %894 = vmatprep.subr.mxu0 0.0
  %895 = vmatpush1.msra.mxu0 0.0
  %896 = vmatprep.subr.mxu0 0.0
  %897 = vmatpush1.msra.mxu0 0.0
  %898 = vmatprep.subr.mxu0 0.0
  %899 = vmatpush1.msra.mxu0 0.0
  %900 = vmatprep.subr.mxu0 0.0
  %901 = vmatpush1.msra.mxu0 0.0
  %902 = vmatprep.subr.mxu0 %v870
  %903 = vmatpush1.msra.mxu0 %v867
  %904 = vmatprep.subr.mxu0 %v841
  %905 = vmatpush1.msra.mxu0 %v840
  %906 = vmatprep.subr.mxu0 %v837
  %907 = vmatpush1.msra.mxu0 %v836
  %908 = vmatprep.subr.mxu0 %v833
  %909 = vmatpush1.msra.mxu0 %v832
  %910 = vmatprep.subr.mxu0 0.0
  %911 = vmatpush2.msra.mxu0 0.0
  %912 = vmatprep.subr.mxu0 0.0
  %913 = vmatpush2.msra.mxu0 0.0
  %914 = vmatprep.subr.mxu0 0.0
  %915 = vmatpush2.msra.mxu0 0.0
  %916 = vmatprep.subr.mxu0 0.0
  %917 = vmatpush2.msra.mxu0 0.0
  %918 = vmatprep.subr.mxu0 0.0
  %919 = vmatpush2.msra.mxu0 0.0
  %920 = vmatprep.subr.mxu0 0.0
  %921 = vmatpush2.msra.mxu0 0.0
  %922 = vmatprep.subr.mxu0 0.0
  %923 = vmatpush2.msra.mxu0 0.0
  %924 = vmatprep.subr.mxu0 0.0
  %925 = vmatpush2.msra.mxu0 0.0
  %926 = vmatprep.subr.mxu0 0.0
  %927 = vmatpush2.msra.mxu0 0.0
  %928 = vmatprep.subr.mxu0 0.0
  %929 = vmatpush2.msra.mxu0 0.0
  %930 = vmatprep.subr.mxu0 0.0
  %931 = vmatpush2.msra.mxu0 0.0
  %932 = vmatprep.subr.mxu0 0.0
  %933 = vmatpush2.msra.mxu0 0.0
  %934 = vmatprep.subr.mxu0 0.0
  %935 = vmatpush2.msra.mxu0 0.0
  %936 = vmatprep.subr.mxu0 0.0
  %937 = vmatpush2.msra.mxu0 0.0
  %938 = vmatprep.subr.mxu0 0.0
  %939 = vmatpush2.msra.mxu0 0.0
  %940 = vmatprep.subr.mxu0 0.0
  %941 = vmatpush2.msra.mxu0 0.0
  %942 = vmatprep.mubr.f32.mxu0 0.0
  %943 = vmatmul.mubr.f32.gmra.mxu0 %v849
  %v944 = vpop.f32.mrf.mxu0
  %v945 = vadd.f32 0.0, %v944
  %v946 = vpop.f32.mrf.mxu0
  %v947 = vadd.f32 0.0, %v946
  %948 = vmatprep.mubr.f32.mxu0 0.0
  %949 = vmatmul.mubr.f32.gmra.mxu0 %v852
  %v950 = vpop.f32.mrf.mxu0
  %v951 = vadd.f32 0.0, %v950
  %v952 = vpop.f32.mrf.mxu0
  %v953 = vadd.f32 0.0, %v952
  %954 = vmatprep.mubr.f32.mxu0 0.0
  %955 = vmatmul.mubr.f32.gmra.mxu0 %v855
  %v956 = vpop.f32.mrf.mxu0
  %v957 = vadd.f32 0.0, %v956
  %v958 = vpop.f32.mrf.mxu0
  %v959 = vadd.f32 0.0, %v958
  %960 = vmatprep.mubr.f32.mxu0 0.0
  %961 = vmatmul.mubr.f32.gmra.mxu0 %v858
  %v962 = vpop.f32.mrf.mxu0
  %v963 = vadd.f32 0.0, %v962
  %v964 = vpop.f32.mrf.mxu0
  %v965 = vadd.f32 0.0, %v964
  %966 = vmatprep.mubr.f32.mxu0 0.0
  %967 = vmatmul.mubr.f32.gmra.mxu0 %v861
  %v968 = vpop.f32.mrf.mxu0
  %v969 = vadd.f32 0.0, %v968
  %v970 = vpop.f32.mrf.mxu0
  %v971 = vadd.f32 0.0, %v970
  %972 = vmatprep.mubr.f32.mxu0 0.0
  %973 = vmatmul.mubr.f32.gmra.mxu0 %v864
  %v974 = vpop.f32.mrf.mxu0
  %v975 = vadd.f32 0.0, %v974
  %v976 = vpop.f32.mrf.mxu0
  %v977 = vadd.f32 0.0, %v976
  %978 = vdwg.mxu0
  %979 = vmatprep.subr.mxu0 0.0
  %980 = vmatpush1.msra.mxu0 0.0
  %981 = vmatprep.subr.mxu0 0.0
  %982 = vmatpush1.msra.mxu0 0.0
  %983 = vmatprep.subr.mxu0 0.0
  %984 = vmatpush1.msra.mxu0 0.0
  %985 = vmatprep.subr.mxu0 0.0
  %986 = vmatpush1.msra.mxu0 0.0
  %987 = vmatprep.subr.mxu0 0.0
  %988 = vmatpush1.msra.mxu0 0.0
  %989 = vmatprep.subr.mxu0 0.0
  %990 = vmatpush1.msra.mxu0 0.0
  %991 = vmatprep.subr.mxu0 0.0
  %992 = vmatpush1.msra.mxu0 0.0
  %993 = vmatprep.subr.mxu0 0.0
  %994 = vmatpush1.msra.mxu0 0.0
  %995 = vmatprep.subr.mxu0 0.0
  %996 = vmatpush1.msra.mxu0 0.0
  %997 = vmatprep.subr.mxu0 0.0
  %998 = vmatpush1.msra.mxu0 0.0
  %999 = vmatprep.subr.mxu0 0.0
  %1000 = vmatpush1.msra.mxu0 0.0
  %1001 = vmatprep.subr.mxu0 0.0
  %1002 = vmatpush1.msra.mxu0 0.0
  %1003 = vmatprep.subr.mxu0 %v876
  %1004 = vmatpush1.msra.mxu0 %v873
  %1005 = vmatprep.subr.mxu0 %v843
  %1006 = vmatpush1.msra.mxu0 %v842
  %1007 = vmatprep.subr.mxu0 %v839
  %1008 = vmatpush1.msra.mxu0 %v838
  %1009 = vmatprep.subr.mxu0 %v835
  %1010 = vmatpush1.msra.mxu0 %v834
  %1011 = vmatprep.subr.mxu0 0.0
  %1012 = vmatpush2.msra.mxu0 0.0
  %1013 = vmatprep.subr.mxu0 0.0
  %1014 = vmatpush2.msra.mxu0 0.0
  %1015 = vmatprep.subr.mxu0 0.0
  %1016 = vmatpush2.msra.mxu0 0.0
  %1017 = vmatprep.subr.mxu0 0.0
  %1018 = vmatpush2.msra.mxu0 0.0
  %1019 = vmatprep.subr.mxu0 0.0
  %1020 = vmatpush2.msra.mxu0 0.0
  %1021 = vmatprep.subr.mxu0 0.0
  %1022 = vmatpush2.msra.mxu0 0.0
  %1023 = vmatprep.subr.mxu0 0.0
  %1024 = vmatpush2.msra.mxu0 0.0
  %1025 = vmatprep.subr.mxu0 0.0
  %1026 = vmatpush2.msra.mxu0 0.0
  %1027 = vmatprep.subr.mxu0 0.0
  %1028 = vmatpush2.msra.mxu0 0.0
  %1029 = vmatprep.subr.mxu0 0.0
  %1030 = vmatpush2.msra.mxu0 0.0
  %1031 = vmatprep.subr.mxu0 0.0
  %1032 = vmatpush2.msra.mxu0 0.0
  %1033 = vmatprep.subr.mxu0 0.0
  %1034 = vmatpush2.msra.mxu0 0.0
  %1035 = vmatprep.subr.mxu0 0.0
  %1036 = vmatpush2.msra.mxu0 0.0
  %1037 = vmatprep.subr.mxu0 0.0
  %1038 = vmatpush2.msra.mxu0 0.0
  %1039 = vmatprep.subr.mxu0 0.0
  %1040 = vmatpush2.msra.mxu0 0.0
  %1041 = vmatprep.subr.mxu0 0.0
  %1042 = vmatpush2.msra.mxu0 0.0
  %1043 = vmatprep.mubr.f32.mxu0 0.0
  %1044 = vmatmul.mubr.f32.gmra.mxu0 %v849
  %v1045 = vpop.f32.mrf.mxu0
  %v1046 = vadd.f32 0.0, %v1045
  %v1047 = vpop.f32.mrf.mxu0
  %v1048 = vadd.f32 0.0, %v1047
  %1049 = vmatprep.mubr.f32.mxu0 0.0
  %1050 = vmatmul.mubr.f32.gmra.mxu0 %v852
  %v1051 = vpop.f32.mrf.mxu0
  %v1052 = vadd.f32 0.0, %v1051
  %v1053 = vpop.f32.mrf.mxu0
  %v1054 = vadd.f32 0.0, %v1053
  %1055 = vmatprep.mubr.f32.mxu0 0.0
  %1056 = vmatmul.mubr.f32.gmra.mxu0 %v855
  %v1057 = vpop.f32.mrf.mxu0
  %v1058 = vadd.f32 0.0, %v1057
  %v1059 = vpop.f32.mrf.mxu0
  %v1060 = vadd.f32 0.0, %v1059
  %1061 = vmatprep.mubr.f32.mxu0 0.0
  %1062 = vmatmul.mubr.f32.gmra.mxu0 %v858
  %v1063 = vpop.f32.mrf.mxu0
  %v1064 = vadd.f32 0.0, %v1063
  %v1065 = vpop.f32.mrf.mxu0
  %v1066 = vadd.f32 0.0, %v1065
  %1067 = vmatprep.mubr.f32.mxu0 0.0
  %1068 = vmatmul.mubr.f32.gmra.mxu0 %v861
  %v1069 = vpop.f32.mrf.mxu0
  %v1070 = vadd.f32 0.0, %v1069
  %v1071 = vpop.f32.mrf.mxu0
  %v1072 = vadd.f32 0.0, %v1071
  %1073 = vmatprep.mubr.f32.mxu0 0.0
  %1074 = vmatmul.mubr.f32.gmra.mxu0 %v864
  %v1075 = vpop.f32.mrf.mxu0
  %v1076 = vadd.f32 0.0, %v1075
  %v1077 = vpop.f32.mrf.mxu0
  %v1078 = vadd.f32 0.0, %v1077
  %1079 = vdwg.mxu0
  %v1080 = vadd.f32 %v800, %v945
  %v1081 = vadd.f32 %v801, %v947
  %v1082 = vadd.f32 %v802, %v1046
  %v1083 = vadd.f32 %v803, %v1048
  %v1084 = vadd.f32 %v804, %v951
  %v1085 = vadd.f32 %v805, %v953
  %v1086 = vadd.f32 %v806, %v1052
  %v1087 = vadd.f32 %v807, %v1054
  %v1088 = vadd.f32 %v808, %v957
  %v1089 = vadd.f32 %v809, %v959
  %v1090 = vadd.f32 %v810, %v1058
  %v1091 = vadd.f32 %v811, %v1060
  %v1092 = vadd.f32 %v812, %v963
  %v1093 = vadd.f32 %v813, %v965
  %v1094 = vadd.f32 %v814, %v1064
  %v1095 = vadd.f32 %v815, %v1066
  %v1096 = vadd.f32 %v816, %v969
  %v1097 = vadd.f32 %v817, %v971
  %v1098 = vadd.f32 %v818, %v1070
  %v1099 = vadd.f32 %v819, %v1072
  %v1100 = vadd.f32 %v820, %v975
  %v1101 = vadd.f32 %v821, %v977
  %v1102 = vadd.f32 %v822, %v1076
  %v1103 = vadd.f32 %v823, %v1078
  %s1104 = scalar_lea.vmem %s0, 8
  %v1105 = vld [vmem:[%s1104] sm:$0xff]
  %v1106 = vld [vmem:[%s1104 + $0x8] sm:$0xff]
  %v1107 = vld [vmem:[%s1104 + $0x10] sm:$0xff]
  %v1108 = vld [vmem:[%s1104 + $0x18] sm:$0xff]
  %v1109 = vld [vmem:[%s1104 + $0x20] sm:$0xff]
  %v1110 = vld [vmem:[%s1104 + $0x28] sm:$0xff]
  %s1111 = scalar_lea.vmem %s1, 512
  %v1112 = vld [vmem:[%s1111] sm:$0xff]
  %v1113 = vld [vmem:[%s1111 + $0x8] sm:$0xff]
  %v1114 = vld [vmem:[%s1111 + $0x10] sm:$0xff]
  %v1115 = vld [vmem:[%s1111 + $0x18] sm:$0xff]
  %v1116 = vld [vmem:[%s1111 + $0x20] sm:$0xff]
  %v1117 = vld [vmem:[%s1111 + $0x28] sm:$0xff]
  %v1118 = vld [vmem:[%s1111 + $0x30] sm:$0xff]
  %v1119 = vld [vmem:[%s1111 + $0x38] sm:$0xff]
  %v1120 = vld [vmem:[%s1111 + $0x40] sm:$0xff]
  %v1121 = vld [vmem:[%s1111 + $0x48] sm:$0xff]
  %v1122 = vld [vmem:[%s1111 + $0x50] sm:$0xff]
  %v1123 = vld [vmem:[%s1111 + $0x58] sm:$0xff]
  %v1124 = vld [vmem:[%s1111 + $0x60] sm:$0xf]
  %v1125 = vld [vmem:[%s1111 + $0x68] sm:$0xf]
  %v1126 = vld [vmem:[%s1111 + $0x70] sm:$0xf]
  %v1127 = vld [vmem:[%s1111 + $0x78] sm:$0xf]
  %v1129 = vsel %vm78, %v1105, 0
  %v1132 = vsel %vm78, %v1106, 0
  %v1135 = vsel %vm78, %v1107, 0
  %v1138 = vsel %vm78, %v1108, 0
  %v1141 = vsel %vm78, %v1109, 0
  %v1144 = vsel %vm78, %v1110, 0
  %v1147 = vsel %vm97, %v1124, 0
  %v1150 = vsel %vm97, %v1125, 0
  %v1153 = vsel %vm97, %v1126, 0
  %v1156 = vsel %vm97, %v1127, 0
  %1158 = vmatprep.subr.mxu0 0.0
  %1159 = vmatpush1.msra.mxu0 0.0
  %1160 = vmatprep.subr.mxu0 0.0
  %1161 = vmatpush1.msra.mxu0 0.0
  %1162 = vmatprep.subr.mxu0 0.0
  %1163 = vmatpush1.msra.mxu0 0.0
  %1164 = vmatprep.subr.mxu0 0.0
  %1165 = vmatpush1.msra.mxu0 0.0
  %1166 = vmatprep.subr.mxu0 0.0
  %1167 = vmatpush1.msra.mxu0 0.0
  %1168 = vmatprep.subr.mxu0 0.0
  %1169 = vmatpush1.msra.mxu0 0.0
  %1170 = vmatprep.subr.mxu0 0.0
  %1171 = vmatpush1.msra.mxu0 0.0
  %1172 = vmatprep.subr.mxu0 0.0
  %1173 = vmatpush1.msra.mxu0 0.0
  %1174 = vmatprep.subr.mxu0 0.0
  %1175 = vmatpush1.msra.mxu0 0.0
  %1176 = vmatprep.subr.mxu0 0.0
  %1177 = vmatpush1.msra.mxu0 0.0
  %1178 = vmatprep.subr.mxu0 0.0
  %1179 = vmatpush1.msra.mxu0 0.0
  %1180 = vmatprep.subr.mxu0 0.0
  %1181 = vmatpush1.msra.mxu0 0.0
  %1182 = vmatprep.subr.mxu0 %v1150
  %1183 = vmatpush1.msra.mxu0 %v1147
  %1184 = vmatprep.subr.mxu0 %v1121
  %1185 = vmatpush1.msra.mxu0 %v1120
  %1186 = vmatprep.subr.mxu0 %v1117
  %1187 = vmatpush1.msra.mxu0 %v1116
  %1188 = vmatprep.subr.mxu0 %v1113
  %1189 = vmatpush1.msra.mxu0 %v1112
  %1190 = vmatprep.subr.mxu0 0.0
  %1191 = vmatpush2.msra.mxu0 0.0
  %1192 = vmatprep.subr.mxu0 0.0
  %1193 = vmatpush2.msra.mxu0 0.0
  %1194 = vmatprep.subr.mxu0 0.0
  %1195 = vmatpush2.msra.mxu0 0.0
  %1196 = vmatprep.subr.mxu0 0.0
  %1197 = vmatpush2.msra.mxu0 0.0
  %1198 = vmatprep.subr.mxu0 0.0
  %1199 = vmatpush2.msra.mxu0 0.0
  %1200 = vmatprep.subr.mxu0 0.0
  %1201 = vmatpush2.msra.mxu0 0.0
  %1202 = vmatprep.subr.mxu0 0.0
  %1203 = vmatpush2.msra.mxu0 0.0
  %1204 = vmatprep.subr.mxu0 0.0
  %1205 = vmatpush2.msra.mxu0 0.0
  %1206 = vmatprep.subr.mxu0 0.0
  %1207 = vmatpush2.msra.mxu0 0.0
  %1208 = vmatprep.subr.mxu0 0.0
  %1209 = vmatpush2.msra.mxu0 0.0
  %1210 = vmatprep.subr.mxu0 0.0
  %1211 = vmatpush2.msra.mxu0 0.0
  %1212 = vmatprep.subr.mxu0 0.0
  %1213 = vmatpush2.msra.mxu0 0.0
  %1214 = vmatprep.subr.mxu0 0.0
  %1215 = vmatpush2.msra.mxu0 0.0
  %1216 = vmatprep.subr.mxu0 0.0
  %1217 = vmatpush2.msra.mxu0 0.0
  %1218 = vmatprep.subr.mxu0 0.0
  %1219 = vmatpush2.msra.mxu0 0.0
  %1220 = vmatprep.subr.mxu0 0.0
  %1221 = vmatpush2.msra.mxu0 0.0
  %1222 = vmatprep.mubr.f32.mxu0 0.0
  %1223 = vmatmul.mubr.f32.gmra.mxu0 %v1129
  %v1224 = vpop.f32.mrf.mxu0
  %v1225 = vadd.f32 0.0, %v1224
  %v1226 = vpop.f32.mrf.mxu0
  %v1227 = vadd.f32 0.0, %v1226
  %1228 = vmatprep.mubr.f32.mxu0 0.0
  %1229 = vmatmul.mubr.f32.gmra.mxu0 %v1132
  %v1230 = vpop.f32.mrf.mxu0
  %v1231 = vadd.f32 0.0, %v1230
  %v1232 = vpop.f32.mrf.mxu0
  %v1233 = vadd.f32 0.0, %v1232
  %1234 = vmatprep.mubr.f32.mxu0 0.0
  %1235 = vmatmul.mubr.f32.gmra.mxu0 %v1135
  %v1236 = vpop.f32.mrf.mxu0
  %v1237 = vadd.f32 0.0, %v1236
  %v1238 = vpop.f32.mrf.mxu0
  %v1239 = vadd.f32 0.0, %v1238
  %1240 = vmatprep.mubr.f32.mxu0 0.0
  %1241 = vmatmul.mubr.f32.gmra.mxu0 %v1138
  %v1242 = vpop.f32.mrf.mxu0
  %v1243 = vadd.f32 0.0, %v1242
  %v1244 = vpop.f32.mrf.mxu0
  %v1245 = vadd.f32 0.0, %v1244
  %1246 = vmatprep.mubr.f32.mxu0 0.0
  %1247 = vmatmul.mubr.f32.gmra.mxu0 %v1141
  %v1248 = vpop.f32.mrf.mxu0
  %v1249 = vadd.f32 0.0, %v1248
  %v1250 = vpop.f32.mrf.mxu0
  %v1251 = vadd.f32 0.0, %v1250
  %1252 = vmatprep.mubr.f32.mxu0 0.0
  %1253 = vmatmul.mubr.f32.gmra.mxu0 %v1144
  %v1254 = vpop.f32.mrf.mxu0
  %v1255 = vadd.f32 0.0, %v1254
  %v1256 = vpop.f32.mrf.mxu0
  %v1257 = vadd.f32 0.0, %v1256
  %1258 = vdwg.mxu0
  %1259 = vmatprep.subr.mxu0 0.0
  %1260 = vmatpush1.msra.mxu0 0.0
  %1261 = vmatprep.subr.mxu0 0.0
  %1262 = vmatpush1.msra.mxu0 0.0
  %1263 = vmatprep.subr.mxu0 0.0
  %1264 = vmatpush1.msra.mxu0 0.0
  %1265 = vmatprep.subr.mxu0 0.0
  %1266 = vmatpush1.msra.mxu0 0.0
  %1267 = vmatprep.subr.mxu0 0.0
  %1268 = vmatpush1.msra.mxu0 0.0
  %1269 = vmatprep.subr.mxu0 0.0
  %1270 = vmatpush1.msra.mxu0 0.0
  %1271 = vmatprep.subr.mxu0 0.0
  %1272 = vmatpush1.msra.mxu0 0.0
  %1273 = vmatprep.subr.mxu0 0.0
  %1274 = vmatpush1.msra.mxu0 0.0
  %1275 = vmatprep.subr.mxu0 0.0
  %1276 = vmatpush1.msra.mxu0 0.0
  %1277 = vmatprep.subr.mxu0 0.0
  %1278 = vmatpush1.msra.mxu0 0.0
  %1279 = vmatprep.subr.mxu0 0.0
  %1280 = vmatpush1.msra.mxu0 0.0
  %1281 = vmatprep.subr.mxu0 0.0
  %1282 = vmatpush1.msra.mxu0 0.0
  %1283 = vmatprep.subr.mxu0 %v1156
  %1284 = vmatpush1.msra.mxu0 %v1153
  %1285 = vmatprep.subr.mxu0 %v1123
  %1286 = vmatpush1.msra.mxu0 %v1122
  %1287 = vmatprep.subr.mxu0 %v1119
  %1288 = vmatpush1.msra.mxu0 %v1118
  %1289 = vmatprep.subr.mxu0 %v1115
  %1290 = vmatpush1.msra.mxu0 %v1114
  %1291 = vmatprep.subr.mxu0 0.0
  %1292 = vmatpush2.msra.mxu0 0.0
  %1293 = vmatprep.subr.mxu0 0.0
  %1294 = vmatpush2.msra.mxu0 0.0
  %1295 = vmatprep.subr.mxu0 0.0
  %1296 = vmatpush2.msra.mxu0 0.0
  %1297 = vmatprep.subr.mxu0 0.0
  %1298 = vmatpush2.msra.mxu0 0.0
  %1299 = vmatprep.subr.mxu0 0.0
  %1300 = vmatpush2.msra.mxu0 0.0
  %1301 = vmatprep.subr.mxu0 0.0
  %1302 = vmatpush2.msra.mxu0 0.0
  %1303 = vmatprep.subr.mxu0 0.0
  %1304 = vmatpush2.msra.mxu0 0.0
  %1305 = vmatprep.subr.mxu0 0.0
  %1306 = vmatpush2.msra.mxu0 0.0
  %1307 = vmatprep.subr.mxu0 0.0
  %1308 = vmatpush2.msra.mxu0 0.0
  %1309 = vmatprep.subr.mxu0 0.0
  %1310 = vmatpush2.msra.mxu0 0.0
  %1311 = vmatprep.subr.mxu0 0.0
  %1312 = vmatpush2.msra.mxu0 0.0
  %1313 = vmatprep.subr.mxu0 0.0
  %1314 = vmatpush2.msra.mxu0 0.0
  %1315 = vmatprep.subr.mxu0 0.0
  %1316 = vmatpush2.msra.mxu0 0.0
  %1317 = vmatprep.subr.mxu0 0.0
  %1318 = vmatpush2.msra.mxu0 0.0
  %1319 = vmatprep.subr.mxu0 0.0
  %1320 = vmatpush2.msra.mxu0 0.0
  %1321 = vmatprep.subr.mxu0 0.0
  %1322 = vmatpush2.msra.mxu0 0.0
  %1323 = vmatprep.mubr.f32.mxu0 0.0
  %1324 = vmatmul.mubr.f32.gmra.mxu0 %v1129
  %v1325 = vpop.f32.mrf.mxu0
  %v1326 = vadd.f32 0.0, %v1325
  %v1327 = vpop.f32.mrf.mxu0
  %v1328 = vadd.f32 0.0, %v1327
  %1329 = vmatprep.mubr.f32.mxu0 0.0
  %1330 = vmatmul.mubr.f32.gmra.mxu0 %v1132
  %v1331 = vpop.f32.mrf.mxu0
  %v1332 = vadd.f32 0.0, %v1331
  %v1333 = vpop.f32.mrf.mxu0
  %v1334 = vadd.f32 0.0, %v1333
  %1335 = vmatprep.mubr.f32.mxu0 0.0
  %1336 = vmatmul.mubr.f32.gmra.mxu0 %v1135
  %v1337 = vpop.f32.mrf.mxu0
  %v1338 = vadd.f32 0.0, %v1337
  %v1339 = vpop.f32.mrf.mxu0
  %v1340 = vadd.f32 0.0, %v1339
  %1341 = vmatprep.mubr.f32.mxu0 0.0
  %1342 = vmatmul.mubr.f32.gmra.mxu0 %v1138
  %v1343 = vpop.f32.mrf.mxu0
  %v1344 = vadd.f32 0.0, %v1343
  %v1345 = vpop.f32.mrf.mxu0
  %v1346 = vadd.f32 0.0, %v1345
  %1347 = vmatprep.mubr.f32.mxu0 0.0
  %1348 = vmatmul.mubr.f32.gmra.mxu0 %v1141
  %v1349 = vpop.f32.mrf.mxu0
  %v1350 = vadd.f32 0.0, %v1349
  %v1351 = vpop.f32.mrf.mxu0
  %v1352 = vadd.f32 0.0, %v1351
  %1353 = vmatprep.mubr.f32.mxu0 0.0
  %1354 = vmatmul.mubr.f32.gmra.mxu0 %v1144
  %v1355 = vpop.f32.mrf.mxu0
  %v1356 = vadd.f32 0.0, %v1355
  %v1357 = vpop.f32.mrf.mxu0
  %v1358 = vadd.f32 0.0, %v1357
  %1359 = vdwg.mxu0
  %v1360 = vadd.f32 %v1080, %v1225
  %v1361 = vadd.f32 %v1081, %v1227
  %v1362 = vadd.f32 %v1082, %v1326
  %v1363 = vadd.f32 %v1083, %v1328
  %v1364 = vadd.f32 %v1084, %v1231
  %v1365 = vadd.f32 %v1085, %v1233
  %v1366 = vadd.f32 %v1086, %v1332
  %v1367 = vadd.f32 %v1087, %v1334
  %v1368 = vadd.f32 %v1088, %v1237
  %v1369 = vadd.f32 %v1089, %v1239
  %v1370 = vadd.f32 %v1090, %v1338
  %v1371 = vadd.f32 %v1091, %v1340
  %v1372 = vadd.f32 %v1092, %v1243
  %v1373 = vadd.f32 %v1093, %v1245
  %v1374 = vadd.f32 %v1094, %v1344
  %v1375 = vadd.f32 %v1095, %v1346
  %v1376 = vadd.f32 %v1096, %v1249
  %v1377 = vadd.f32 %v1097, %v1251
  %v1378 = vadd.f32 %v1098, %v1350
  %v1379 = vadd.f32 %v1099, %v1352
  %v1380 = vadd.f32 %v1100, %v1255
  %v1381 = vadd.f32 %v1101, %v1257
  %v1382 = vadd.f32 %v1102, %v1356
  %v1383 = vadd.f32 %v1103, %v1358
  %1384 = vmatprep.subr.mxu0 0.0
  %1385 = vmatpush1.msra.mxu0 0.0
  %1386 = vmatprep.subr.mxu0 0.0
  %1387 = vmatpush1.msra.mxu0 0.0
  %1388 = vmatprep.subr.mxu0 0.0
  %1389 = vmatpush1.msra.mxu0 0.0
  %1390 = vmatprep.subr.mxu0 0.0
  %1391 = vmatpush1.msra.mxu0 0.0
  %1392 = vmatprep.subr.mxu0 0.0
  %1393 = vmatpush1.msra.mxu0 0.0
  %1394 = vmatprep.subr.mxu0 0.0
  %1395 = vmatpush1.msra.mxu0 0.0
  %1396 = vmatprep.subr.mxu0 0.0
  %1397 = vmatpush1.msra.mxu0 0.0
  %1398 = vmatprep.subr.mxu0 0.0
  %1399 = vmatpush1.msra.mxu0 0.0
  %1400 = vmatprep.subr.mxu0 0.0
  %1401 = vmatpush1.msra.mxu0 0.0
  %1402 = vmatprep.subr.mxu0 0.0
  %1403 = vmatpush1.msra.mxu0 0.0
  %1404 = vmatprep.subr.mxu0 0.0
  %1405 = vmatpush1.msra.mxu0 0.0
  %1406 = vmatprep.subr.mxu0 0.0
  %1407 = vmatpush1.msra.mxu0 0.0
  %1408 = vmatprep.subr.mxu0 %v102
  %1409 = vmatpush1.msra.mxu0 %v99
  %1410 = vmatprep.subr.mxu0 %v71
  %1411 = vmatpush1.msra.mxu0 %v70
  %1412 = vmatprep.subr.mxu0 %v67
  %1413 = vmatpush1.msra.mxu0 %v66
  %1414 = vmatprep.subr.mxu0 %v63
  %1415 = vmatpush1.msra.mxu0 %v62
  %1416 = vmatprep.subr.mxu0 0.0
  %1417 = vmatpush2.msra.mxu0 0.0
  %1418 = vmatprep.subr.mxu0 0.0
  %1419 = vmatpush2.msra.mxu0 0.0
  %1420 = vmatprep.subr.mxu0 0.0
  %1421 = vmatpush2.msra.mxu0 0.0
  %1422 = vmatprep.subr.mxu0 0.0
  %1423 = vmatpush2.msra.mxu0 0.0
  %1424 = vmatprep.subr.mxu0 0.0
  %1425 = vmatpush2.msra.mxu0 0.0
  %1426 = vmatprep.subr.mxu0 0.0
  %1427 = vmatpush2.msra.mxu0 0.0
  %1428 = vmatprep.subr.mxu0 0.0
  %1429 = vmatpush2.msra.mxu0 0.0
  %1430 = vmatprep.subr.mxu0 0.0
  %1431 = vmatpush2.msra.mxu0 0.0
  %1432 = vmatprep.subr.mxu0 0.0
  %1433 = vmatpush2.msra.mxu0 0.0
  %1434 = vmatprep.subr.mxu0 0.0
  %1435 = vmatpush2.msra.mxu0 0.0
  %1436 = vmatprep.subr.mxu0 0.0
  %1437 = vmatpush2.msra.mxu0 0.0
  %1438 = vmatprep.subr.mxu0 0.0
  %1439 = vmatpush2.msra.mxu0 0.0
  %1440 = vmatprep.subr.mxu0 0.0
  %1441 = vmatpush2.msra.mxu0 0.0
  %1442 = vmatprep.subr.mxu0 0.0
  %1443 = vmatpush2.msra.mxu0 0.0
  %1444 = vmatprep.subr.mxu0 0.0
  %1445 = vmatpush2.msra.mxu0 0.0
  %1446 = vmatprep.subr.mxu0 0.0
  %1447 = vmatpush2.msra.mxu0 0.0
  %1448 = vmatprep.mubr.f32.mxu0 0.0
  %1449 = vmatmul.mubr.f32.gmra.mxu0 %v569
  %v1450 = vpop.f32.mrf.mxu0
  %v1451 = vadd.f32 0.0, %v1450
  %v1452 = vpop.f32.mrf.mxu0
  %v1453 = vadd.f32 0.0, %v1452
  %1454 = vmatprep.mubr.f32.mxu0 0.0
  %1455 = vmatmul.mubr.f32.gmra.mxu0 %v572
  %v1456 = vpop.f32.mrf.mxu0
  %v1457 = vadd.f32 0.0, %v1456
  %v1458 = vpop.f32.mrf.mxu0
  %v1459 = vadd.f32 0.0, %v1458
  %1460 = vmatprep.mubr.f32.mxu0 0.0
  %1461 = vmatmul.mubr.f32.gmra.mxu0 %v575
  %v1462 = vpop.f32.mrf.mxu0
  %v1463 = vadd.f32 0.0, %v1462
  %v1464 = vpop.f32.mrf.mxu0
  %v1465 = vadd.f32 0.0, %v1464
  %1466 = vmatprep.mubr.f32.mxu0 0.0
  %1467 = vmatmul.mubr.f32.gmra.mxu0 %v578
  %v1468 = vpop.f32.mrf.mxu0
  %v1469 = vadd.f32 0.0, %v1468
  %v1470 = vpop.f32.mrf.mxu0
  %v1471 = vadd.f32 0.0, %v1470
  %1472 = vmatprep.mubr.f32.mxu0 0.0
  %1473 = vmatmul.mubr.f32.gmra.mxu0 %v581
  %v1474 = vpop.f32.mrf.mxu0
  %v1475 = vadd.f32 0.0, %v1474
  %v1476 = vpop.f32.mrf.mxu0
  %v1477 = vadd.f32 0.0, %v1476
  %1478 = vmatprep.mubr.f32.mxu0 0.0
  %1479 = vmatmul.mubr.f32.gmra.mxu0 %v584
  %v1480 = vpop.f32.mrf.mxu0
  %v1481 = vadd.f32 0.0, %v1480
  %v1482 = vpop.f32.mrf.mxu0
  %v1483 = vadd.f32 0.0, %v1482
  %1484 = vdwg.mxu0
  %1485 = vmatprep.subr.mxu0 0.0
  %1486 = vmatpush1.msra.mxu0 0.0
  %1487 = vmatprep.subr.mxu0 0.0
  %1488 = vmatpush1.msra.mxu0 0.0
  %1489 = vmatprep.subr.mxu0 0.0
  %1490 = vmatpush1.msra.mxu0 0.0
  %1491 = vmatprep.subr.mxu0 0.0
  %1492 = vmatpush1.msra.mxu0 0.0
  %1493 = vmatprep.subr.mxu0 0.0
  %1494 = vmatpush1.msra.mxu0 0.0
  %1495 = vmatprep.subr.mxu0 0.0
  %1496 = vmatpush1.msra.mxu0 0.0
  %1497 = vmatprep.subr.mxu0 0.0
  %1498 = vmatpush1.msra.mxu0 0.0
  %1499 = vmatprep.subr.mxu0 0.0
  %1500 = vmatpush1.msra.mxu0 0.0
  %1501 = vmatprep.subr.mxu0 0.0
  %1502 = vmatpush1.msra.mxu0 0.0
  %1503 = vmatprep.subr.mxu0 0.0
  %1504 = vmatpush1.msra.mxu0 0.0
  %1505 = vmatprep.subr.mxu0 0.0
  %1506 = vmatpush1.msra.mxu0 0.0
  %1507 = vmatprep.subr.mxu0 0.0
  %1508 = vmatpush1.msra.mxu0 0.0
  %1509 = vmatprep.subr.mxu0 %v108
  %1510 = vmatpush1.msra.mxu0 %v105
  %1511 = vmatprep.subr.mxu0 %v73
  %1512 = vmatpush1.msra.mxu0 %v72
  %1513 = vmatprep.subr.mxu0 %v69
  %1514 = vmatpush1.msra.mxu0 %v68
  %1515 = vmatprep.subr.mxu0 %v65
  %1516 = vmatpush1.msra.mxu0 %v64
  %1517 = vmatprep.subr.mxu0 0.0
  %1518 = vmatpush2.msra.mxu0 0.0
  %1519 = vmatprep.subr.mxu0 0.0
  %1520 = vmatpush2.msra.mxu0 0.0
  %1521 = vmatprep.subr.mxu0 0.0
  %1522 = vmatpush2.msra.mxu0 0.0
  %1523 = vmatprep.subr.mxu0 0.0
  %1524 = vmatpush2.msra.mxu0 0.0
  %1525 = vmatprep.subr.mxu0 0.0
  %1526 = vmatpush2.msra.mxu0 0.0
  %1527 = vmatprep.subr.mxu0 0.0
  %1528 = vmatpush2.msra.mxu0 0.0
  %1529 = vmatprep.subr.mxu0 0.0
  %1530 = vmatpush2.msra.mxu0 0.0
  %1531 = vmatprep.subr.mxu0 0.0
  %1532 = vmatpush2.msra.mxu0 0.0
  %1533 = vmatprep.subr.mxu0 0.0
  %1534 = vmatpush2.msra.mxu0 0.0
  %1535 = vmatprep.subr.mxu0 0.0
  %1536 = vmatpush2.msra.mxu0 0.0
  %1537 = vmatprep.subr.mxu0 0.0
  %1538 = vmatpush2.msra.mxu0 0.0
  %1539 = vmatprep.subr.mxu0 0.0
  %1540 = vmatpush2.msra.mxu0 0.0
  %1541 = vmatprep.subr.mxu0 0.0
  %1542 = vmatpush2.msra.mxu0 0.0
  %1543 = vmatprep.subr.mxu0 0.0
  %1544 = vmatpush2.msra.mxu0 0.0
  %1545 = vmatprep.subr.mxu0 0.0
  %1546 = vmatpush2.msra.mxu0 0.0
  %1547 = vmatprep.subr.mxu0 0.0
  %1548 = vmatpush2.msra.mxu0 0.0
  %1549 = vmatprep.mubr.f32.mxu0 0.0
  %1550 = vmatmul.mubr.f32.gmra.mxu0 %v569
  %v1551 = vpop.f32.mrf.mxu0
  %v1552 = vadd.f32 0.0, %v1551
  %v1553 = vpop.f32.mrf.mxu0
  %v1554 = vadd.f32 0.0, %v1553
  %1555 = vmatprep.mubr.f32.mxu0 0.0
  %1556 = vmatmul.mubr.f32.gmra.mxu0 %v572
  %v1557 = vpop.f32.mrf.mxu0
  %v1558 = vadd.f32 0.0, %v1557
  %v1559 = vpop.f32.mrf.mxu0
  %v1560 = vadd.f32 0.0, %v1559
  %1561 = vmatprep.mubr.f32.mxu0 0.0
  %1562 = vmatmul.mubr.f32.gmra.mxu0 %v575
  %v1563 = vpop.f32.mrf.mxu0
  %v1564 = vadd.f32 0.0, %v1563
  %v1565 = vpop.f32.mrf.mxu0
  %v1566 = vadd.f32 0.0, %v1565
  %1567 = vmatprep.mubr.f32.mxu0 0.0
  %1568 = vmatmul.mubr.f32.gmra.mxu0 %v578
  %v1569 = vpop.f32.mrf.mxu0
  %v1570 = vadd.f32 0.0, %v1569
  %v1571 = vpop.f32.mrf.mxu0
  %v1572 = vadd.f32 0.0, %v1571
  %1573 = vmatprep.mubr.f32.mxu0 0.0
  %1574 = vmatmul.mubr.f32.gmra.mxu0 %v581
  %v1575 = vpop.f32.mrf.mxu0
  %v1576 = vadd.f32 0.0, %v1575
  %v1577 = vpop.f32.mrf.mxu0
  %v1578 = vadd.f32 0.0, %v1577
  %1579 = vmatprep.mubr.f32.mxu0 0.0
  %1580 = vmatmul.mubr.f32.gmra.mxu0 %v584
  %v1581 = vpop.f32.mrf.mxu0
  %v1582 = vadd.f32 0.0, %v1581
  %v1583 = vpop.f32.mrf.mxu0
  %v1584 = vadd.f32 0.0, %v1583
  %1585 = vdwg.mxu0
  %1586 = vmatprep.subr.mxu0 0.0
  %1587 = vmatpush1.msra.mxu0 0.0
  %1588 = vmatprep.subr.mxu0 0.0
  %1589 = vmatpush1.msra.mxu0 0.0
  %1590 = vmatprep.subr.mxu0 0.0
  %1591 = vmatpush1.msra.mxu0 0.0
  %1592 = vmatprep.subr.mxu0 0.0
  %1593 = vmatpush1.msra.mxu0 0.0
  %1594 = vmatprep.subr.mxu0 0.0
  %1595 = vmatpush1.msra.mxu0 0.0
  %1596 = vmatprep.subr.mxu0 0.0
  %1597 = vmatpush1.msra.mxu0 0.0
  %1598 = vmatprep.subr.mxu0 0.0
  %1599 = vmatpush1.msra.mxu0 0.0
  %1600 = vmatprep.subr.mxu0 0.0
  %1601 = vmatpush1.msra.mxu0 0.0
  %1602 = vmatprep.subr.mxu0 0.0
  %1603 = vmatpush1.msra.mxu0 0.0
  %1604 = vmatprep.subr.mxu0 0.0
  %1605 = vmatpush1.msra.mxu0 0.0
  %1606 = vmatprep.subr.mxu0 0.0
  %1607 = vmatpush1.msra.mxu0 0.0
  %1608 = vmatprep.subr.mxu0 0.0
  %1609 = vmatpush1.msra.mxu0 0.0
  %1610 = vmatprep.subr.mxu0 %v334
  %1611 = vmatpush1.msra.mxu0 %v331
  %1612 = vmatprep.subr.mxu0 %v47
  %1613 = vmatpush1.msra.mxu0 %v46
  %1614 = vmatprep.subr.mxu0 %v43
  %1615 = vmatpush1.msra.mxu0 %v42
  %1616 = vmatprep.subr.mxu0 %v39
  %1617 = vmatpush1.msra.mxu0 %v38
  %1618 = vmatprep.subr.mxu0 0.0
  %1619 = vmatpush2.msra.mxu0 0.0
  %1620 = vmatprep.subr.mxu0 0.0
  %1621 = vmatpush2.msra.mxu0 0.0
  %1622 = vmatprep.subr.mxu0 0.0
  %1623 = vmatpush2.msra.mxu0 0.0
  %1624 = vmatprep.subr.mxu0 0.0
  %1625 = vmatpush2.msra.mxu0 0.0
  %1626 = vmatprep.subr.mxu0 0.0
  %1627 = vmatpush2.msra.mxu0 0.0
  %1628 = vmatprep.subr.mxu0 0.0
  %1629 = vmatpush2.msra.mxu0 0.0
  %1630 = vmatprep.subr.mxu0 0.0
  %1631 = vmatpush2.msra.mxu0 0.0
  %1632 = vmatprep.subr.mxu0 0.0
  %1633 = vmatpush2.msra.mxu0 0.0
  %1634 = vmatprep.subr.mxu0 0.0
  %1635 = vmatpush2.msra.mxu0 0.0
  %1636 = vmatprep.subr.mxu0 0.0
  %1637 = vmatpush2.msra.mxu0 0.0
  %1638 = vmatprep.subr.mxu0 0.0
  %1639 = vmatpush2.msra.mxu0 0.0
  %1640 = vmatprep.subr.mxu0 0.0
  %1641 = vmatpush2.msra.mxu0 0.0
  %1642 = vmatprep.subr.mxu0 0.0
  %1643 = vmatpush2.msra.mxu0 0.0
  %1644 = vmatprep.subr.mxu0 0.0
  %1645 = vmatpush2.msra.mxu0 0.0
  %1646 = vmatprep.subr.mxu0 0.0
  %1647 = vmatpush2.msra.mxu0 0.0
  %1648 = vmatprep.subr.mxu0 0.0
  %1649 = vmatpush2.msra.mxu0 0.0
  %1650 = vmatprep.mubr.f32.mxu0 0.0
  %1651 = vmatmul.mubr.f32.gmra.mxu0 %v80
  %v1652 = vpop.f32.mrf.mxu0
  %v1653 = vadd.f32 %v1451, %v1652
  %v1654 = vpop.f32.mrf.mxu0
  %v1655 = vadd.f32 %v1453, %v1654
  %1656 = vmatprep.mubr.f32.mxu0 0.0
  %1657 = vmatmul.mubr.f32.gmra.mxu0 %v83
  %v1658 = vpop.f32.mrf.mxu0
  %v1659 = vadd.f32 %v1457, %v1658
  %v1660 = vpop.f32.mrf.mxu0
  %v1661 = vadd.f32 %v1459, %v1660
  %1662 = vmatprep.mubr.f32.mxu0 0.0
  %1663 = vmatmul.mubr.f32.gmra.mxu0 %v86
  %v1664 = vpop.f32.mrf.mxu0
  %v1665 = vadd.f32 %v1463, %v1664
  %v1666 = vpop.f32.mrf.mxu0
  %v1667 = vadd.f32 %v1465, %v1666
  %1668 = vmatprep.mubr.f32.mxu0 0.0
  %1669 = vmatmul.mubr.f32.gmra.mxu0 %v89
  %v1670 = vpop.f32.mrf.mxu0
  %v1671 = vadd.f32 %v1469, %v1670
  %v1672 = vpop.f32.mrf.mxu0
  %v1673 = vadd.f32 %v1471, %v1672
  %1674 = vmatprep.mubr.f32.mxu0 0.0
  %1675 = vmatmul.mubr.f32.gmra.mxu0 %v92
  %v1676 = vpop.f32.mrf.mxu0
  %v1677 = vadd.f32 %v1475, %v1676
  %v1678 = vpop.f32.mrf.mxu0
  %v1679 = vadd.f32 %v1477, %v1678
  %1680 = vmatprep.mubr.f32.mxu0 0.0
  %1681 = vmatmul.mubr.f32.gmra.mxu0 %v95
  %v1682 = vpop.f32.mrf.mxu0
  %v1683 = vadd.f32 %v1481, %v1682
  %v1684 = vpop.f32.mrf.mxu0
  %v1685 = vadd.f32 %v1483, %v1684
  %1686 = vdwg.mxu0
  %1687 = vmatprep.subr.mxu0 0.0
  %1688 = vmatpush1.msra.mxu0 0.0
  %1689 = vmatprep.subr.mxu0 0.0
  %1690 = vmatpush1.msra.mxu0 0.0
  %1691 = vmatprep.subr.mxu0 0.0
  %1692 = vmatpush1.msra.mxu0 0.0
  %1693 = vmatprep.subr.mxu0 0.0
  %1694 = vmatpush1.msra.mxu0 0.0
  %1695 = vmatprep.subr.mxu0 0.0
  %1696 = vmatpush1.msra.mxu0 0.0
  %1697 = vmatprep.subr.mxu0 0.0
  %1698 = vmatpush1.msra.mxu0 0.0
  %1699 = vmatprep.subr.mxu0 0.0
  %1700 = vmatpush1.msra.mxu0 0.0
  %1701 = vmatprep.subr.mxu0 0.0
  %1702 = vmatpush1.msra.mxu0 0.0
  %1703 = vmatprep.subr.mxu0 0.0
  %1704 = vmatpush1.msra.mxu0 0.0
  %1705 = vmatprep.subr.mxu0 0.0
  %1706 = vmatpush1.msra.mxu0 0.0
  %1707 = vmatprep.subr.mxu0 0.0
  %1708 = vmatpush1.msra.mxu0 0.0
  %1709 = vmatprep.subr.mxu0 0.0
  %1710 = vmatpush1.msra.mxu0 0.0
  %1711 = vmatprep.subr.mxu0 %v340
  %1712 = vmatpush1.msra.mxu0 %v337
  %1713 = vmatprep.subr.mxu0 %v49
  %1714 = vmatpush1.msra.mxu0 %v48
  %1715 = vmatprep.subr.mxu0 %v45
  %1716 = vmatpush1.msra.mxu0 %v44
  %1717 = vmatprep.subr.mxu0 %v41
  %1718 = vmatpush1.msra.mxu0 %v40
  %1719 = vmatprep.subr.mxu0 0.0
  %1720 = vmatpush2.msra.mxu0 0.0
  %1721 = vmatprep.subr.mxu0 0.0
  %1722 = vmatpush2.msra.mxu0 0.0
  %1723 = vmatprep.subr.mxu0 0.0
  %1724 = vmatpush2.msra.mxu0 0.0
  %1725 = vmatprep.subr.mxu0 0.0
  %1726 = vmatpush2.msra.mxu0 0.0
  %1727 = vmatprep.subr.mxu0 0.0
  %1728 = vmatpush2.msra.mxu0 0.0
  %1729 = vmatprep.subr.mxu0 0.0
  %1730 = vmatpush2.msra.mxu0 0.0
  %1731 = vmatprep.subr.mxu0 0.0
  %1732 = vmatpush2.msra.mxu0 0.0
  %1733 = vmatprep.subr.mxu0 0.0
  %1734 = vmatpush2.msra.mxu0 0.0
  %1735 = vmatprep.subr.mxu0 0.0
  %1736 = vmatpush2.msra.mxu0 0.0
  %1737 = vmatprep.subr.mxu0 0.0
  %1738 = vmatpush2.msra.mxu0 0.0
  %1739 = vmatprep.subr.mxu0 0.0
  %1740 = vmatpush2.msra.mxu0 0.0
  %1741 = vmatprep.subr.mxu0 0.0
  %1742 = vmatpush2.msra.mxu0 0.0
  %1743 = vmatprep.subr.mxu0 0.0
  %1744 = vmatpush2.msra.mxu0 0.0
  %1745 = vmatprep.subr.mxu0 0.0
  %1746 = vmatpush2.msra.mxu0 0.0
  %1747 = vmatprep.subr.mxu0 0.0
  %1748 = vmatpush2.msra.mxu0 0.0
  %1749 = vmatprep.subr.mxu0 0.0
  %1750 = vmatpush2.msra.mxu0 0.0
  %1751 = vmatprep.mubr.f32.mxu0 0.0
  %1752 = vmatmul.mubr.f32.gmra.mxu0 %v80
  %v1753 = vpop.f32.mrf.mxu0
  %v1754 = vadd.f32 %v1552, %v1753
  %v1755 = vpop.f32.mrf.mxu0
  %v1756 = vadd.f32 %v1554, %v1755
  %1757 = vmatprep.mubr.f32.mxu0 0.0
  %1758 = vmatmul.mubr.f32.gmra.mxu0 %v83
  %v1759 = vpop.f32.mrf.mxu0
  %v1760 = vadd.f32 %v1558, %v1759
  %v1761 = vpop.f32.mrf.mxu0
  %v1762 = vadd.f32 %v1560, %v1761
  %1763 = vmatprep.mubr.f32.mxu0 0.0
  %1764 = vmatmul.mubr.f32.gmra.mxu0 %v86
  %v1765 = vpop.f32.mrf.mxu0
  %v1766 = vadd.f32 %v1564, %v1765
  %v1767 = vpop.f32.mrf.mxu0
  %v1768 = vadd.f32 %v1566, %v1767
  %1769 = vmatprep.mubr.f32.mxu0 0.0
  %1770 = vmatmul.mubr.f32.gmra.mxu0 %v89
  %v1771 = vpop.f32.mrf.mxu0
  %v1772 = vadd.f32 %v1570, %v1771
  %v1773 = vpop.f32.mrf.mxu0
  %v1774 = vadd.f32 %v1572, %v1773
  %1775 = vmatprep.mubr.f32.mxu0 0.0
  %1776 = vmatmul.mubr.f32.gmra.mxu0 %v92
  %v1777 = vpop.f32.mrf.mxu0
  %v1778 = vadd.f32 %v1576, %v1777
  %v1779 = vpop.f32.mrf.mxu0
  %v1780 = vadd.f32 %v1578, %v1779
  %1781 = vmatprep.mubr.f32.mxu0 0.0
  %1782 = vmatmul.mubr.f32.gmra.mxu0 %v95
  %v1783 = vpop.f32.mrf.mxu0
  %v1784 = vadd.f32 %v1582, %v1783
  %v1785 = vpop.f32.mrf.mxu0
  %v1786 = vadd.f32 %v1584, %v1785
  %1787 = vdwg.mxu0
  %1788 = vmatprep.subr.mxu0 0.0
  %1789 = vmatpush1.msra.mxu0 0.0
  %1790 = vmatprep.subr.mxu0 0.0
  %1791 = vmatpush1.msra.mxu0 0.0
  %1792 = vmatprep.subr.mxu0 0.0
  %1793 = vmatpush1.msra.mxu0 0.0
  %1794 = vmatprep.subr.mxu0 0.0
  %1795 = vmatpush1.msra.mxu0 0.0
  %1796 = vmatprep.subr.mxu0 0.0
  %1797 = vmatpush1.msra.mxu0 0.0
  %1798 = vmatprep.subr.mxu0 0.0
  %1799 = vmatpush1.msra.mxu0 0.0
  %1800 = vmatprep.subr.mxu0 0.0
  %1801 = vmatpush1.msra.mxu0 0.0
  %1802 = vmatprep.subr.mxu0 0.0
  %1803 = vmatpush1.msra.mxu0 0.0
  %1804 = vmatprep.subr.mxu0 0.0
  %1805 = vmatpush1.msra.mxu0 0.0
  %1806 = vmatprep.subr.mxu0 0.0
  %1807 = vmatpush1.msra.mxu0 0.0
  %1808 = vmatprep.subr.mxu0 0.0
  %1809 = vmatpush1.msra.mxu0 0.0
  %1810 = vmatprep.subr.mxu0 0.0
  %1811 = vmatpush1.msra.mxu0 0.0
  %1812 = vmatprep.subr.mxu0 %v590
  %1813 = vmatpush1.msra.mxu0 %v587
  %1814 = vmatprep.subr.mxu0 %v561
  %1815 = vmatpush1.msra.mxu0 %v560
  %1816 = vmatprep.subr.mxu0 %v557
  %1817 = vmatpush1.msra.mxu0 %v556
  %1818 = vmatprep.subr.mxu0 %v553
  %1819 = vmatpush1.msra.mxu0 %v552
  %1820 = vmatprep.subr.mxu0 0.0
  %1821 = vmatpush2.msra.mxu0 0.0
  %1822 = vmatprep.subr.mxu0 0.0
  %1823 = vmatpush2.msra.mxu0 0.0
  %1824 = vmatprep.subr.mxu0 0.0
  %1825 = vmatpush2.msra.mxu0 0.0
  %1826 = vmatprep.subr.mxu0 0.0
  %1827 = vmatpush2.msra.mxu0 0.0
  %1828 = vmatprep.subr.mxu0 0.0
  %1829 = vmatpush2.msra.mxu0 0.0
  %1830 = vmatprep.subr.mxu0 0.0
  %1831 = vmatpush2.msra.mxu0 0.0
  %1832 = vmatprep.subr.mxu0 0.0
  %1833 = vmatpush2.msra.mxu0 0.0
  %1834 = vmatprep.subr.mxu0 0.0
  %1835 = vmatpush2.msra.mxu0 0.0
  %1836 = vmatprep.subr.mxu0 0.0
  %1837 = vmatpush2.msra.mxu0 0.0
  %1838 = vmatprep.subr.mxu0 0.0
  %1839 = vmatpush2.msra.mxu0 0.0
  %1840 = vmatprep.subr.mxu0 0.0
  %1841 = vmatpush2.msra.mxu0 0.0
  %1842 = vmatprep.subr.mxu0 0.0
  %1843 = vmatpush2.msra.mxu0 0.0
  %1844 = vmatprep.subr.mxu0 0.0
  %1845 = vmatpush2.msra.mxu0 0.0
  %1846 = vmatprep.subr.mxu0 0.0
  %1847 = vmatpush2.msra.mxu0 0.0
  %1848 = vmatprep.subr.mxu0 0.0
  %1849 = vmatpush2.msra.mxu0 0.0
  %1850 = vmatprep.subr.mxu0 0.0
  %1851 = vmatpush2.msra.mxu0 0.0
  %1852 = vmatprep.mubr.f32.mxu0 0.0
  %1853 = vmatmul.mubr.f32.gmra.mxu0 %v849
  %v1854 = vpop.f32.mrf.mxu0
  %v1855 = vadd.f32 0.0, %v1854
  %v1856 = vpop.f32.mrf.mxu0
  %v1857 = vadd.f32 0.0, %v1856
  %1858 = vmatprep.mubr.f32.mxu0 0.0
  %1859 = vmatmul.mubr.f32.gmra.mxu0 %v852
  %v1860 = vpop.f32.mrf.mxu0
  %v1861 = vadd.f32 0.0, %v1860
  %v1862 = vpop.f32.mrf.mxu0
  %v1863 = vadd.f32 0.0, %v1862
  %1864 = vmatprep.mubr.f32.mxu0 0.0
  %1865 = vmatmul.mubr.f32.gmra.mxu0 %v855
  %v1866 = vpop.f32.mrf.mxu0
  %v1867 = vadd.f32 0.0, %v1866
  %v1868 = vpop.f32.mrf.mxu0
  %v1869 = vadd.f32 0.0, %v1868
  %1870 = vmatprep.mubr.f32.mxu0 0.0
  %1871 = vmatmul.mubr.f32.gmra.mxu0 %v858
  %v1872 = vpop.f32.mrf.mxu0
  %v1873 = vadd.f32 0.0, %v1872
  %v1874 = vpop.f32.mrf.mxu0
  %v1875 = vadd.f32 0.0, %v1874
  %1876 = vmatprep.mubr.f32.mxu0 0.0
  %1877 = vmatmul.mubr.f32.gmra.mxu0 %v861
  %v1878 = vpop.f32.mrf.mxu0
  %v1879 = vadd.f32 0.0, %v1878
  %v1880 = vpop.f32.mrf.mxu0
  %v1881 = vadd.f32 0.0, %v1880
  %1882 = vmatprep.mubr.f32.mxu0 0.0
  %1883 = vmatmul.mubr.f32.gmra.mxu0 %v864
  %v1884 = vpop.f32.mrf.mxu0
  %v1885 = vadd.f32 0.0, %v1884
  %v1886 = vpop.f32.mrf.mxu0
  %v1887 = vadd.f32 0.0, %v1886
  %1888 = vdwg.mxu0
  %1889 = vmatprep.subr.mxu0 0.0
  %1890 = vmatpush1.msra.mxu0 0.0
  %1891 = vmatprep.subr.mxu0 0.0
  %1892 = vmatpush1.msra.mxu0 0.0
  %1893 = vmatprep.subr.mxu0 0.0
  %1894 = vmatpush1.msra.mxu0 0.0
  %1895 = vmatprep.subr.mxu0 0.0
  %1896 = vmatpush1.msra.mxu0 0.0
  %1897 = vmatprep.subr.mxu0 0.0
  %1898 = vmatpush1.msra.mxu0 0.0
  %1899 = vmatprep.subr.mxu0 0.0
  %1900 = vmatpush1.msra.mxu0 0.0
  %1901 = vmatprep.subr.mxu0 0.0
  %1902 = vmatpush1.msra.mxu0 0.0
  %1903 = vmatprep.subr.mxu0 0.0
  %1904 = vmatpush1.msra.mxu0 0.0
  %1905 = vmatprep.subr.mxu0 0.0
  %1906 = vmatpush1.msra.mxu0 0.0
  %1907 = vmatprep.subr.mxu0 0.0
  %1908 = vmatpush1.msra.mxu0 0.0
  %1909 = vmatprep.subr.mxu0 0.0
  %1910 = vmatpush1.msra.mxu0 0.0
  %1911 = vmatprep.subr.mxu0 0.0
  %1912 = vmatpush1.msra.mxu0 0.0
  %1913 = vmatprep.subr.mxu0 %v596
  %1914 = vmatpush1.msra.mxu0 %v593
  %1915 = vmatprep.subr.mxu0 %v563
  %1916 = vmatpush1.msra.mxu0 %v562
  %1917 = vmatprep.subr.mxu0 %v559
  %1918 = vmatpush1.msra.mxu0 %v558
  %1919 = vmatprep.subr.mxu0 %v555
  %1920 = vmatpush1.msra.mxu0 %v554
  %1921 = vmatprep.subr.mxu0 0.0
  %1922 = vmatpush2.msra.mxu0 0.0
  %1923 = vmatprep.subr.mxu0 0.0
  %1924 = vmatpush2.msra.mxu0 0.0
  %1925 = vmatprep.subr.mxu0 0.0
  %1926 = vmatpush2.msra.mxu0 0.0
  %1927 = vmatprep.subr.mxu0 0.0
  %1928 = vmatpush2.msra.mxu0 0.0
  %1929 = vmatprep.subr.mxu0 0.0
  %1930 = vmatpush2.msra.mxu0 0.0
  %1931 = vmatprep.subr.mxu0 0.0
  %1932 = vmatpush2.msra.mxu0 0.0
  %1933 = vmatprep.subr.mxu0 0.0
  %1934 = vmatpush2.msra.mxu0 0.0
  %1935 = vmatprep.subr.mxu0 0.0
  %1936 = vmatpush2.msra.mxu0 0.0
  %1937 = vmatprep.subr.mxu0 0.0
  %1938 = vmatpush2.msra.mxu0 0.0
  %1939 = vmatprep.subr.mxu0 0.0
  %1940 = vmatpush2.msra.mxu0 0.0
  %1941 = vmatprep.subr.mxu0 0.0
  %1942 = vmatpush2.msra.mxu0 0.0
  %1943 = vmatprep.subr.mxu0 0.0
  %1944 = vmatpush2.msra.mxu0 0.0
  %1945 = vmatprep.subr.mxu0 0.0
  %1946 = vmatpush2.msra.mxu0 0.0
  %1947 = vmatprep.subr.mxu0 0.0
  %1948 = vmatpush2.msra.mxu0 0.0
  %1949 = vmatprep.subr.mxu0 0.0
  %1950 = vmatpush2.msra.mxu0 0.0
  %1951 = vmatprep.subr.mxu0 0.0
  %1952 = vmatpush2.msra.mxu0 0.0
  %1953 = vmatprep.mubr.f32.mxu0 0.0
  %1954 = vmatmul.mubr.f32.gmra.mxu0 %v849
  %v1955 = vpop.f32.mrf.mxu0
  %v1956 = vadd.f32 0.0, %v1955
  %v1957 = vpop.f32.mrf.mxu0
  %v1958 = vadd.f32 0.0, %v1957
  %1959 = vmatprep.mubr.f32.mxu0 0.0
  %1960 = vmatmul.mubr.f32.gmra.mxu0 %v852
  %v1961 = vpop.f32.mrf.mxu0
  %v1962 = vadd.f32 0.0, %v1961
  %v1963 = vpop.f32.mrf.mxu0
  %v1964 = vadd.f32 0.0, %v1963
  %1965 = vmatprep.mubr.f32.mxu0 0.0
  %1966 = vmatmul.mubr.f32.gmra.mxu0 %v855
  %v1967 = vpop.f32.mrf.mxu0
  %v1968 = vadd.f32 0.0, %v1967
  %v1969 = vpop.f32.mrf.mxu0
  %v1970 = vadd.f32 0.0, %v1969
  %1971 = vmatprep.mubr.f32.mxu0 0.0
  %1972 = vmatmul.mubr.f32.gmra.mxu0 %v858
  %v1973 = vpop.f32.mrf.mxu0
  %v1974 = vadd.f32 0.0, %v1973
  %v1975 = vpop.f32.mrf.mxu0
  %v1976 = vadd.f32 0.0, %v1975
  %1977 = vmatprep.mubr.f32.mxu0 0.0
  %1978 = vmatmul.mubr.f32.gmra.mxu0 %v861
  %v1979 = vpop.f32.mrf.mxu0
  %v1980 = vadd.f32 0.0, %v1979
  %v1981 = vpop.f32.mrf.mxu0
  %v1982 = vadd.f32 0.0, %v1981
  %1983 = vmatprep.mubr.f32.mxu0 0.0
  %1984 = vmatmul.mubr.f32.gmra.mxu0 %v864
  %v1985 = vpop.f32.mrf.mxu0
  %v1986 = vadd.f32 0.0, %v1985
  %v1987 = vpop.f32.mrf.mxu0
  %v1988 = vadd.f32 0.0, %v1987
  %1989 = vdwg.mxu0
  %v1990 = vadd.f32 %v1653, %v1855
  %v1991 = vadd.f32 %v1655, %v1857
  %v1992 = vadd.f32 %v1754, %v1956
  %v1993 = vadd.f32 %v1756, %v1958
  %v1994 = vadd.f32 %v1659, %v1861
  %v1995 = vadd.f32 %v1661, %v1863
  %v1996 = vadd.f32 %v1760, %v1962
  %v1997 = vadd.f32 %v1762, %v1964
  %v1998 = vadd.f32 %v1665, %v1867
  %v1999 = vadd.f32 %v1667, %v1869
  %v2000 = vadd.f32 %v1766, %v1968
  %v2001 = vadd.f32 %v1768, %v1970
  %v2002 = vadd.f32 %v1671, %v1873
  %v2003 = vadd.f32 %v1673, %v1875
  %v2004 = vadd.f32 %v1772, %v1974
  %v2005 = vadd.f32 %v1774, %v1976
  %v2006 = vadd.f32 %v1677, %v1879
  %v2007 = vadd.f32 %v1679, %v1881
  %v2008 = vadd.f32 %v1778, %v1980
  %v2009 = vadd.f32 %v1780, %v1982
  %v2010 = vadd.f32 %v1683, %v1885
  %v2011 = vadd.f32 %v1685, %v1887
  %v2012 = vadd.f32 %v1784, %v1986
  %v2013 = vadd.f32 %v1786, %v1988
  %2014 = vmatprep.subr.mxu0 0.0
  %2015 = vmatpush1.msra.mxu0 0.0
  %2016 = vmatprep.subr.mxu0 0.0
  %2017 = vmatpush1.msra.mxu0 0.0
  %2018 = vmatprep.subr.mxu0 0.0
  %2019 = vmatpush1.msra.mxu0 0.0
  %2020 = vmatprep.subr.mxu0 0.0
  %2021 = vmatpush1.msra.mxu0 0.0
  %2022 = vmatprep.subr.mxu0 0.0
  %2023 = vmatpush1.msra.mxu0 0.0
  %2024 = vmatprep.subr.mxu0 0.0
  %2025 = vmatpush1.msra.mxu0 0.0
  %2026 = vmatprep.subr.mxu0 0.0
  %2027 = vmatpush1.msra.mxu0 0.0
  %2028 = vmatprep.subr.mxu0 0.0
  %2029 = vmatpush1.msra.mxu0 0.0
  %2030 = vmatprep.subr.mxu0 0.0
  %2031 = vmatpush1.msra.mxu0 0.0
  %2032 = vmatprep.subr.mxu0 0.0
  %2033 = vmatpush1.msra.mxu0 0.0
  %2034 = vmatprep.subr.mxu0 0.0
  %2035 = vmatpush1.msra.mxu0 0.0
  %2036 = vmatprep.subr.mxu0 0.0
  %2037 = vmatpush1.msra.mxu0 0.0
  %2038 = vmatprep.subr.mxu0 %v870
  %2039 = vmatpush1.msra.mxu0 %v867
  %2040 = vmatprep.subr.mxu0 %v841
  %2041 = vmatpush1.msra.mxu0 %v840
  %2042 = vmatprep.subr.mxu0 %v837
  %2043 = vmatpush1.msra.mxu0 %v836
  %2044 = vmatprep.subr.mxu0 %v833
  %2045 = vmatpush1.msra.mxu0 %v832
  %2046 = vmatprep.subr.mxu0 0.0
  %2047 = vmatpush2.msra.mxu0 0.0
  %2048 = vmatprep.subr.mxu0 0.0
  %2049 = vmatpush2.msra.mxu0 0.0
  %2050 = vmatprep.subr.mxu0 0.0
  %2051 = vmatpush2.msra.mxu0 0.0
  %2052 = vmatprep.subr.mxu0 0.0
  %2053 = vmatpush2.msra.mxu0 0.0
  %2054 = vmatprep.subr.mxu0 0.0
  %2055 = vmatpush2.msra.mxu0 0.0
  %2056 = vmatprep.subr.mxu0 0.0
  %2057 = vmatpush2.msra.mxu0 0.0
  %2058 = vmatprep.subr.mxu0 0.0
  %2059 = vmatpush2.msra.mxu0 0.0
  %2060 = vmatprep.subr.mxu0 0.0
  %2061 = vmatpush2.msra.mxu0 0.0
  %2062 = vmatprep.subr.mxu0 0.0
  %2063 = vmatpush2.msra.mxu0 0.0
  %2064 = vmatprep.subr.mxu0 0.0
  %2065 = vmatpush2.msra.mxu0 0.0
  %2066 = vmatprep.subr.mxu0 0.0
  %2067 = vmatpush2.msra.mxu0 0.0
  %2068 = vmatprep.subr.mxu0 0.0
  %2069 = vmatpush2.msra.mxu0 0.0
  %2070 = vmatprep.subr.mxu0 0.0
  %2071 = vmatpush2.msra.mxu0 0.0
  %2072 = vmatprep.subr.mxu0 0.0
  %2073 = vmatpush2.msra.mxu0 0.0
  %2074 = vmatprep.subr.mxu0 0.0
  %2075 = vmatpush2.msra.mxu0 0.0
  %2076 = vmatprep.subr.mxu0 0.0
  %2077 = vmatpush2.msra.mxu0 0.0
  %2078 = vmatprep.mubr.f32.mxu0 0.0
  %2079 = vmatmul.mubr.f32.gmra.mxu0 %v1129
  %v2080 = vpop.f32.mrf.mxu0
  %v2081 = vadd.f32 0.0, %v2080
  %v2082 = vpop.f32.mrf.mxu0
  %v2083 = vadd.f32 0.0, %v2082
  %2084 = vmatprep.mubr.f32.mxu0 0.0
  %2085 = vmatmul.mubr.f32.gmra.mxu0 %v1132
  %v2086 = vpop.f32.mrf.mxu0
  %v2087 = vadd.f32 0.0, %v2086
  %v2088 = vpop.f32.mrf.mxu0
  %v2089 = vadd.f32 0.0, %v2088
  %2090 = vmatprep.mubr.f32.mxu0 0.0
  %2091 = vmatmul.mubr.f32.gmra.mxu0 %v1135
  %v2092 = vpop.f32.mrf.mxu0
  %v2093 = vadd.f32 0.0, %v2092
  %v2094 = vpop.f32.mrf.mxu0
  %v2095 = vadd.f32 0.0, %v2094
  %2096 = vmatprep.mubr.f32.mxu0 0.0
  %2097 = vmatmul.mubr.f32.gmra.mxu0 %v1138
  %v2098 = vpop.f32.mrf.mxu0
  %v2099 = vadd.f32 0.0, %v2098
  %v2100 = vpop.f32.mrf.mxu0
  %v2101 = vadd.f32 0.0, %v2100
  %2102 = vmatprep.mubr.f32.mxu0 0.0
  %2103 = vmatmul.mubr.f32.gmra.mxu0 %v1141
  %v2104 = vpop.f32.mrf.mxu0
  %v2105 = vadd.f32 0.0, %v2104
  %v2106 = vpop.f32.mrf.mxu0
  %v2107 = vadd.f32 0.0, %v2106
  %2108 = vmatprep.mubr.f32.mxu0 0.0
  %2109 = vmatmul.mubr.f32.gmra.mxu0 %v1144
  %v2110 = vpop.f32.mrf.mxu0
  %v2111 = vadd.f32 0.0, %v2110
  %v2112 = vpop.f32.mrf.mxu0
  %v2113 = vadd.f32 0.0, %v2112
  %2114 = vdwg.mxu0
  %2115 = vmatprep.subr.mxu0 0.0
  %2116 = vmatpush1.msra.mxu0 0.0
  %2117 = vmatprep.subr.mxu0 0.0
  %2118 = vmatpush1.msra.mxu0 0.0
  %2119 = vmatprep.subr.mxu0 0.0
  %2120 = vmatpush1.msra.mxu0 0.0
  %2121 = vmatprep.subr.mxu0 0.0
  %2122 = vmatpush1.msra.mxu0 0.0
  %2123 = vmatprep.subr.mxu0 0.0
  %2124 = vmatpush1.msra.mxu0 0.0
  %2125 = vmatprep.subr.mxu0 0.0
  %2126 = vmatpush1.msra.mxu0 0.0
  %2127 = vmatprep.subr.mxu0 0.0
  %2128 = vmatpush1.msra.mxu0 0.0
  %2129 = vmatprep.subr.mxu0 0.0
  %2130 = vmatpush1.msra.mxu0 0.0
  %2131 = vmatprep.subr.mxu0 0.0
  %2132 = vmatpush1.msra.mxu0 0.0
  %2133 = vmatprep.subr.mxu0 0.0
  %2134 = vmatpush1.msra.mxu0 0.0
  %2135 = vmatprep.subr.mxu0 0.0
  %2136 = vmatpush1.msra.mxu0 0.0
  %2137 = vmatprep.subr.mxu0 0.0
  %2138 = vmatpush1.msra.mxu0 0.0
  %2139 = vmatprep.subr.mxu0 %v876
  %2140 = vmatpush1.msra.mxu0 %v873
  %2141 = vmatprep.subr.mxu0 %v843
  %2142 = vmatpush1.msra.mxu0 %v842
  %2143 = vmatprep.subr.mxu0 %v839
  %2144 = vmatpush1.msra.mxu0 %v838
  %2145 = vmatprep.subr.mxu0 %v835
  %2146 = vmatpush1.msra.mxu0 %v834
  %2147 = vmatprep.subr.mxu0 0.0
  %2148 = vmatpush2.msra.mxu0 0.0
  %2149 = vmatprep.subr.mxu0 0.0
  %2150 = vmatpush2.msra.mxu0 0.0
  %2151 = vmatprep.subr.mxu0 0.0
  %2152 = vmatpush2.msra.mxu0 0.0
  %2153 = vmatprep.subr.mxu0 0.0
  %2154 = vmatpush2.msra.mxu0 0.0
  %2155 = vmatprep.subr.mxu0 0.0
  %2156 = vmatpush2.msra.mxu0 0.0
  %2157 = vmatprep.subr.mxu0 0.0
  %2158 = vmatpush2.msra.mxu0 0.0
  %2159 = vmatprep.subr.mxu0 0.0
  %2160 = vmatpush2.msra.mxu0 0.0
  %2161 = vmatprep.subr.mxu0 0.0
  %2162 = vmatpush2.msra.mxu0 0.0
  %2163 = vmatprep.subr.mxu0 0.0
  %2164 = vmatpush2.msra.mxu0 0.0
  %2165 = vmatprep.subr.mxu0 0.0
  %2166 = vmatpush2.msra.mxu0 0.0
  %2167 = vmatprep.subr.mxu0 0.0
  %2168 = vmatpush2.msra.mxu0 0.0
  %2169 = vmatprep.subr.mxu0 0.0
  %2170 = vmatpush2.msra.mxu0 0.0
  %2171 = vmatprep.subr.mxu0 0.0
  %2172 = vmatpush2.msra.mxu0 0.0
  %2173 = vmatprep.subr.mxu0 0.0
  %2174 = vmatpush2.msra.mxu0 0.0
  %2175 = vmatprep.subr.mxu0 0.0
  %2176 = vmatpush2.msra.mxu0 0.0
  %2177 = vmatprep.subr.mxu0 0.0
  %2178 = vmatpush2.msra.mxu0 0.0
  %2179 = vmatprep.mubr.f32.mxu0 0.0
  %2180 = vmatmul.mubr.f32.gmra.mxu0 %v1129
  %v2181 = vpop.f32.mrf.mxu0
  %v2182 = vadd.f32 0.0, %v2181
  %v2183 = vpop.f32.mrf.mxu0
  %v2184 = vadd.f32 0.0, %v2183
  %2185 = vmatprep.mubr.f32.mxu0 0.0
  %2186 = vmatmul.mubr.f32.gmra.mxu0 %v1132
  %v2187 = vpop.f32.mrf.mxu0
  %v2188 = vadd.f32 0.0, %v2187
  %v2189 = vpop.f32.mrf.mxu0
  %v2190 = vadd.f32 0.0, %v2189
  %2191 = vmatprep.mubr.f32.mxu0 0.0
  %2192 = vmatmul.mubr.f32.gmra.mxu0 %v1135
  %v2193 = vpop.f32.mrf.mxu0
  %v2194 = vadd.f32 0.0, %v2193
  %v2195 = vpop.f32.mrf.mxu0
  %v2196 = vadd.f32 0.0, %v2195
  %2197 = vmatprep.mubr.f32.mxu0 0.0
  %2198 = vmatmul.mubr.f32.gmra.mxu0 %v1138
  %v2199 = vpop.f32.mrf.mxu0
  %v2200 = vadd.f32 0.0, %v2199
  %v2201 = vpop.f32.mrf.mxu0
  %v2202 = vadd.f32 0.0, %v2201
  %2203 = vmatprep.mubr.f32.mxu0 0.0
  %2204 = vmatmul.mubr.f32.gmra.mxu0 %v1141
  %v2205 = vpop.f32.mrf.mxu0
  %v2206 = vadd.f32 0.0, %v2205
  %v2207 = vpop.f32.mrf.mxu0
  %v2208 = vadd.f32 0.0, %v2207
  %2209 = vmatprep.mubr.f32.mxu0 0.0
  %2210 = vmatmul.mubr.f32.gmra.mxu0 %v1144
  %v2211 = vpop.f32.mrf.mxu0
  %v2212 = vadd.f32 0.0, %v2211
  %v2213 = vpop.f32.mrf.mxu0
  %v2214 = vadd.f32 0.0, %v2213
  %2215 = vdwg.mxu0
  %v2216 = vadd.f32 %v1990, %v2081
  %v2217 = vadd.f32 %v1991, %v2083
  %v2218 = vadd.f32 %v1992, %v2182
  %v2219 = vadd.f32 %v1993, %v2184
  %v2220 = vadd.f32 %v1994, %v2087
  %v2221 = vadd.f32 %v1995, %v2089
  %v2222 = vadd.f32 %v1996, %v2188
  %v2223 = vadd.f32 %v1997, %v2190
  %v2224 = vadd.f32 %v1998, %v2093
  %v2225 = vadd.f32 %v1999, %v2095
  %v2226 = vadd.f32 %v2000, %v2194
  %v2227 = vadd.f32 %v2001, %v2196
  %v2228 = vadd.f32 %v2002, %v2099
  %v2229 = vadd.f32 %v2003, %v2101
  %v2230 = vadd.f32 %v2004, %v2200
  %v2231 = vadd.f32 %v2005, %v2202
  %v2232 = vadd.f32 %v2006, %v2105
  %v2233 = vadd.f32 %v2007, %v2107
  %v2234 = vadd.f32 %v2008, %v2206
  %v2235 = vadd.f32 %v2009, %v2208
  %v2236 = vadd.f32 %v2010, %v2111
  %v2237 = vadd.f32 %v2011, %v2113
  %v2238 = vadd.f32 %v2012, %v2212
  %v2239 = vadd.f32 %v2013, %v2214
  %s2240 = scalar_lea.vmem %s0, 64
  %v2241 = vld [vmem:[%s2240] sm:$0xff]
  %v2242 = vld [vmem:[%s2240 + $0x8] sm:$0xff]
  %v2243 = vld [vmem:[%s2240 + $0x10] sm:$0xff]
  %v2244 = vld [vmem:[%s2240 + $0x18] sm:$0xff]
  %v2245 = vld [vmem:[%s2240 + $0x20] sm:$0xff]
  %v2246 = vld [vmem:[%s2240 + $0x28] sm:$0xff]
  %v2248 = vsel %vm78, %v2241, 0
  %v2251 = vsel %vm78, %v2242, 0
  %v2254 = vsel %vm78, %v2243, 0
  %v2257 = vsel %vm78, %v2244, 0
  %v2260 = vsel %vm78, %v2245, 0
  %v2263 = vsel %vm78, %v2246, 0
  %2265 = vmatprep.subr.mxu0 0.0
  %2266 = vmatpush1.msra.mxu0 0.0
  %2267 = vmatprep.subr.mxu0 0.0
  %2268 = vmatpush1.msra.mxu0 0.0
  %2269 = vmatprep.subr.mxu0 0.0
  %2270 = vmatpush1.msra.mxu0 0.0
  %2271 = vmatprep.subr.mxu0 0.0
  %2272 = vmatpush1.msra.mxu0 0.0
  %2273 = vmatprep.subr.mxu0 0.0
  %2274 = vmatpush1.msra.mxu0 0.0
  %2275 = vmatprep.subr.mxu0 0.0
  %2276 = vmatpush1.msra.mxu0 0.0
  %2277 = vmatprep.subr.mxu0 0.0
  %2278 = vmatpush1.msra.mxu0 0.0
  %2279 = vmatprep.subr.mxu0 0.0
  %2280 = vmatpush1.msra.mxu0 0.0
  %2281 = vmatprep.subr.mxu0 0.0
  %2282 = vmatpush1.msra.mxu0 0.0
  %2283 = vmatprep.subr.mxu0 0.0
  %2284 = vmatpush1.msra.mxu0 0.0
  %2285 = vmatprep.subr.mxu0 0.0
  %2286 = vmatpush1.msra.mxu0 0.0
  %2287 = vmatprep.subr.mxu0 0.0
  %2288 = vmatpush1.msra.mxu0 0.0
  %2289 = vmatprep.subr.mxu0 %v1150
  %2290 = vmatpush1.msra.mxu0 %v1147
  %2291 = vmatprep.subr.mxu0 %v1121
  %2292 = vmatpush1.msra.mxu0 %v1120
  %2293 = vmatprep.subr.mxu0 %v1117
  %2294 = vmatpush1.msra.mxu0 %v1116
  %2295 = vmatprep.subr.mxu0 %v1113
  %2296 = vmatpush1.msra.mxu0 %v1112
  %2297 = vmatprep.subr.mxu0 0.0
  %2298 = vmatpush2.msra.mxu0 0.0
  %2299 = vmatprep.subr.mxu0 0.0
  %2300 = vmatpush2.msra.mxu0 0.0
  %2301 = vmatprep.subr.mxu0 0.0
  %2302 = vmatpush2.msra.mxu0 0.0
  %2303 = vmatprep.subr.mxu0 0.0
  %2304 = vmatpush2.msra.mxu0 0.0
  %2305 = vmatprep.subr.mxu0 0.0
  %2306 = vmatpush2.msra.mxu0 0.0
  %2307 = vmatprep.subr.mxu0 0.0
  %2308 = vmatpush2.msra.mxu0 0.0
  %2309 = vmatprep.subr.mxu0 0.0
  %2310 = vmatpush2.msra.mxu0 0.0
  %2311 = vmatprep.subr.mxu0 0.0
  %2312 = vmatpush2.msra.mxu0 0.0
  %2313 = vmatprep.subr.mxu0 0.0
  %2314 = vmatpush2.msra.mxu0 0.0
  %2315 = vmatprep.subr.mxu0 0.0
  %2316 = vmatpush2.msra.mxu0 0.0
  %2317 = vmatprep.subr.mxu0 0.0
  %2318 = vmatpush2.msra.mxu0 0.0
  %2319 = vmatprep.subr.mxu0 0.0
  %2320 = vmatpush2.msra.mxu0 0.0
  %2321 = vmatprep.subr.mxu0 0.0
  %2322 = vmatpush2.msra.mxu0 0.0
  %2323 = vmatprep.subr.mxu0 0.0
  %2324 = vmatpush2.msra.mxu0 0.0
  %2325 = vmatprep.subr.mxu0 0.0
  %2326 = vmatpush2.msra.mxu0 0.0
  %2327 = vmatprep.subr.mxu0 0.0
  %2328 = vmatpush2.msra.mxu0 0.0
  %2329 = vmatprep.mubr.f32.mxu0 0.0
  %2330 = vmatmul.mubr.f32.gmra.mxu0 %v2248
  %v2331 = vpop.f32.mrf.mxu0
  %v2332 = vadd.f32 0.0, %v2331
  %v2333 = vpop.f32.mrf.mxu0
  %v2334 = vadd.f32 0.0, %v2333
  %2335 = vmatprep.mubr.f32.mxu0 0.0
  %2336 = vmatmul.mubr.f32.gmra.mxu0 %v2251
  %v2337 = vpop.f32.mrf.mxu0
  %v2338 = vadd.f32 0.0, %v2337
  %v2339 = vpop.f32.mrf.mxu0
  %v2340 = vadd.f32 0.0, %v2339
  %2341 = vmatprep.mubr.f32.mxu0 0.0
  %2342 = vmatmul.mubr.f32.gmra.mxu0 %v2254
  %v2343 = vpop.f32.mrf.mxu0
  %v2344 = vadd.f32 0.0, %v2343
  %v2345 = vpop.f32.mrf.mxu0
  %v2346 = vadd.f32 0.0, %v2345
  %2347 = vmatprep.mubr.f32.mxu0 0.0
  %2348 = vmatmul.mubr.f32.gmra.mxu0 %v2257
  %v2349 = vpop.f32.mrf.mxu0
  %v2350 = vadd.f32 0.0, %v2349
  %v2351 = vpop.f32.mrf.mxu0
  %v2352 = vadd.f32 0.0, %v2351
  %2353 = vmatprep.mubr.f32.mxu0 0.0
  %2354 = vmatmul.mubr.f32.gmra.mxu0 %v2260
  %v2355 = vpop.f32.mrf.mxu0
  %v2356 = vadd.f32 0.0, %v2355
  %v2357 = vpop.f32.mrf.mxu0
  %v2358 = vadd.f32 0.0, %v2357
  %2359 = vmatprep.mubr.f32.mxu0 0.0
  %2360 = vmatmul.mubr.f32.gmra.mxu0 %v2263
  %v2361 = vpop.f32.mrf.mxu0
  %v2362 = vadd.f32 0.0, %v2361
  %v2363 = vpop.f32.mrf.mxu0
  %v2364 = vadd.f32 0.0, %v2363
  %2365 = vdwg.mxu0
  %2366 = vmatprep.subr.mxu0 0.0
  %2367 = vmatpush1.msra.mxu0 0.0
  %2368 = vmatprep.subr.mxu0 0.0
  %2369 = vmatpush1.msra.mxu0 0.0
  %2370 = vmatprep.subr.mxu0 0.0
  %2371 = vmatpush1.msra.mxu0 0.0
  %2372 = vmatprep.subr.mxu0 0.0
  %2373 = vmatpush1.msra.mxu0 0.0
  %2374 = vmatprep.subr.mxu0 0.0
  %2375 = vmatpush1.msra.mxu0 0.0
  %2376 = vmatprep.subr.mxu0 0.0
  %2377 = vmatpush1.msra.mxu0 0.0
  %2378 = vmatprep.subr.mxu0 0.0
  %2379 = vmatpush1.msra.mxu0 0.0
  %2380 = vmatprep.subr.mxu0 0.0
  %2381 = vmatpush1.msra.mxu0 0.0
  %2382 = vmatprep.subr.mxu0 0.0
  %2383 = vmatpush1.msra.mxu0 0.0
  %2384 = vmatprep.subr.mxu0 0.0
  %2385 = vmatpush1.msra.mxu0 0.0
  %2386 = vmatprep.subr.mxu0 0.0
  %2387 = vmatpush1.msra.mxu0 0.0
  %2388 = vmatprep.subr.mxu0 0.0
  %2389 = vmatpush1.msra.mxu0 0.0
  %2390 = vmatprep.subr.mxu0 %v1156
  %2391 = vmatpush1.msra.mxu0 %v1153
  %2392 = vmatprep.subr.mxu0 %v1123
  %2393 = vmatpush1.msra.mxu0 %v1122
  %2394 = vmatprep.subr.mxu0 %v1119
  %2395 = vmatpush1.msra.mxu0 %v1118
  %2396 = vmatprep.subr.mxu0 %v1115
  %2397 = vmatpush1.msra.mxu0 %v1114
  %2398 = vmatprep.subr.mxu0 0.0
  %2399 = vmatpush2.msra.mxu0 0.0
  %2400 = vmatprep.subr.mxu0 0.0
  %2401 = vmatpush2.msra.mxu0 0.0
  %2402 = vmatprep.subr.mxu0 0.0
  %2403 = vmatpush2.msra.mxu0 0.0
  %2404 = vmatprep.subr.mxu0 0.0
  %2405 = vmatpush2.msra.mxu0 0.0
  %2406 = vmatprep.subr.mxu0 0.0
  %2407 = vmatpush2.msra.mxu0 0.0
  %2408 = vmatprep.subr.mxu0 0.0
  %2409 = vmatpush2.msra.mxu0 0.0
  %2410 = vmatprep.subr.mxu0 0.0
  %2411 = vmatpush2.msra.mxu0 0.0
  %2412 = vmatprep.subr.mxu0 0.0
  %2413 = vmatpush2.msra.mxu0 0.0
  %2414 = vmatprep.subr.mxu0 0.0
  %2415 = vmatpush2.msra.mxu0 0.0
  %2416 = vmatprep.subr.mxu0 0.0
  %2417 = vmatpush2.msra.mxu0 0.0
  %2418 = vmatprep.subr.mxu0 0.0
  %2419 = vmatpush2.msra.mxu0 0.0
  %2420 = vmatprep.subr.mxu0 0.0
  %2421 = vmatpush2.msra.mxu0 0.0
  %2422 = vmatprep.subr.mxu0 0.0
  %2423 = vmatpush2.msra.mxu0 0.0
  %2424 = vmatprep.subr.mxu0 0.0
  %2425 = vmatpush2.msra.mxu0 0.0
  %2426 = vmatprep.subr.mxu0 0.0
  %2427 = vmatpush2.msra.mxu0 0.0
  %2428 = vmatprep.subr.mxu0 0.0
  %2429 = vmatpush2.msra.mxu0 0.0
  %2430 = vmatprep.mubr.f32.mxu0 0.0
  %2431 = vmatmul.mubr.f32.gmra.mxu0 %v2248
  %v2432 = vpop.f32.mrf.mxu0
  %v2433 = vadd.f32 0.0, %v2432
  %v2434 = vpop.f32.mrf.mxu0
  %v2435 = vadd.f32 0.0, %v2434
  %2436 = vmatprep.mubr.f32.mxu0 0.0
  %2437 = vmatmul.mubr.f32.gmra.mxu0 %v2251
  %v2438 = vpop.f32.mrf.mxu0
  %v2439 = vadd.f32 0.0, %v2438
  %v2440 = vpop.f32.mrf.mxu0
  %v2441 = vadd.f32 0.0, %v2440
  %2442 = vmatprep.mubr.f32.mxu0 0.0
  %2443 = vmatmul.mubr.f32.gmra.mxu0 %v2254
  %v2444 = vpop.f32.mrf.mxu0
  %v2445 = vadd.f32 0.0, %v2444
  %v2446 = vpop.f32.mrf.mxu0
  %v2447 = vadd.f32 0.0, %v2446
  %2448 = vmatprep.mubr.f32.mxu0 0.0
  %2449 = vmatmul.mubr.f32.gmra.mxu0 %v2257
  %v2450 = vpop.f32.mrf.mxu0
  %v2451 = vadd.f32 0.0, %v2450
  %v2452 = vpop.f32.mrf.mxu0
  %v2453 = vadd.f32 0.0, %v2452
  %2454 = vmatprep.mubr.f32.mxu0 0.0
  %2455 = vmatmul.mubr.f32.gmra.mxu0 %v2260
  %v2456 = vpop.f32.mrf.mxu0
  %v2457 = vadd.f32 0.0, %v2456
  %v2458 = vpop.f32.mrf.mxu0
  %v2459 = vadd.f32 0.0, %v2458
  %2460 = vmatprep.mubr.f32.mxu0 0.0
  %2461 = vmatmul.mubr.f32.gmra.mxu0 %v2263
  %v2462 = vpop.f32.mrf.mxu0
  %v2463 = vadd.f32 0.0, %v2462
  %v2464 = vpop.f32.mrf.mxu0
  %v2465 = vadd.f32 0.0, %v2464
  %2466 = vdwg.mxu0
  %v2467 = vadd.f32 %v2216, %v2332
  %v2468 = vadd.f32 %v2217, %v2334
  %v2469 = vadd.f32 %v2218, %v2433
  %v2470 = vadd.f32 %v2219, %v2435
  %v2471 = vadd.f32 %v2220, %v2338
  %v2472 = vadd.f32 %v2221, %v2340
  %v2473 = vadd.f32 %v2222, %v2439
  %v2474 = vadd.f32 %v2223, %v2441
  %v2475 = vadd.f32 %v2224, %v2344
  %v2476 = vadd.f32 %v2225, %v2346
  %v2477 = vadd.f32 %v2226, %v2445
  %v2478 = vadd.f32 %v2227, %v2447
  %v2479 = vadd.f32 %v2228, %v2350
  %v2480 = vadd.f32 %v2229, %v2352
  %v2481 = vadd.f32 %v2230, %v2451
  %v2482 = vadd.f32 %v2231, %v2453
  %v2483 = vadd.f32 %v2232, %v2356
  %v2484 = vadd.f32 %v2233, %v2358
  %v2485 = vadd.f32 %v2234, %v2457
  %v2486 = vadd.f32 %v2235, %v2459
  %v2487 = vadd.f32 %v2236, %v2362
  %v2488 = vadd.f32 %v2237, %v2364
  %v2489 = vadd.f32 %v2238, %v2463
  %v2490 = vadd.f32 %v2239, %v2465
  %v2491 = vmax.f32 %v1360, %v2467
  %v2492 = vmax.f32 %v1361, %v2468
  %v2493 = vmax.f32 %v1362, %v2469
  %v2494 = vmax.f32 %v1363, %v2470
  %v2495 = vmax.f32 %v1364, %v2471
  %v2496 = vmax.f32 %v1365, %v2472
  %v2497 = vmax.f32 %v1366, %v2473
  %v2498 = vmax.f32 %v1367, %v2474
  %v2499 = vmax.f32 %v1368, %v2475
  %v2500 = vmax.f32 %v1369, %v2476
  %v2501 = vmax.f32 %v1370, %v2477
  %v2502 = vmax.f32 %v1371, %v2478
  %v2503 = vmax.f32 %v1372, %v2479
  %v2504 = vmax.f32 %v1373, %v2480
  %v2505 = vmax.f32 %v1374, %v2481
  %v2506 = vmax.f32 %v1375, %v2482
  %v2507 = vmax.f32 %v1376, %v2483
  %v2508 = vmax.f32 %v1377, %v2484
  %v2509 = vmax.f32 %v1378, %v2485
  %v2510 = vmax.f32 %v1379, %v2486
  %v2511 = vmax.f32 %v1380, %v2487
  %v2512 = vmax.f32 %v1381, %v2488
  %v2513 = vmax.f32 %v1382, %v2489
  %v2514 = vmax.f32 %v1383, %v2490
  %v2515 = vmax.f32 %v2491, %v2493
  %v2516 = vmax.f32 %v2492, %v2494
  %v2517 = vmax.f32 %v2495, %v2497
  %v2518 = vmax.f32 %v2496, %v2498
  %v2519 = vmax.f32 %v2499, %v2501
  %v2520 = vmax.f32 %v2500, %v2502
  %v2521 = vmax.f32 %v2503, %v2505
  %v2522 = vmax.f32 %v2504, %v2506
  %v2523 = vmax.f32 %v2507, %v2509
  %v2524 = vmax.f32 %v2508, %v2510
  %v2525 = vmax.f32 %v2511, %v2513
  %v2526 = vmax.f32 %v2512, %v2514
  %v2527 = vld [vmem:[%s2] sm:$0x3]
  %v2529 = vlaneseq
  %v2530 = vshrl.u32 %v2529, 7
  %v2531 = vsub.s32 0, %v2530
  %v2532 = vrot.slane %v2527, %v2531
  %v2533 = vlaneseq
  %v2534 = vshrl.u32 %v2533, 7
  %v2535 = vsub.s32 1, %v2534
  %v2536 = vrot.slane %v2527, %v2535
  %v2539 = vadd.f32 %v2515, %v2532
  %v2540 = vadd.f32 %v2516, %v2536
  %v2541 = vadd.f32 %v2517, %v2532
  %v2542 = vadd.f32 %v2518, %v2536
  %v2543 = vadd.f32 %v2519, %v2532
  %v2544 = vadd.f32 %v2520, %v2536
  %v2545 = vadd.f32 %v2521, %v2532
  %v2546 = vadd.f32 %v2522, %v2536
  %v2547 = vadd.f32 %v2523, %v2532
  %v2548 = vadd.f32 %v2524, %v2536
  %v2549 = vadd.f32 %v2525, %v2532
  %v2550 = vadd.f32 %v2526, %v2536
  %v2551 = vmax.f32 %v2539, 0.0
  %v2552 = vmax.f32 %v2540, 0.0
  %v2553 = vmax.f32 %v2541, 0.0
  %v2554 = vmax.f32 %v2542, 0.0
  %v2555 = vmax.f32 %v2543, 0.0
  %v2556 = vmax.f32 %v2544, 0.0
  %v2557 = vmax.f32 %v2545, 0.0
  %v2558 = vmax.f32 %v2546, 0.0
  %v2559 = vmax.f32 %v2547, 0.0
  %v2560 = vmax.f32 %v2548, 0.0
  %v2561 = vmax.f32 %v2549, 0.0
  %v2562 = vmax.f32 %v2550, 0.0
  %2563 = vmatprep.subr.mxu0 0.0
  %2564 = vmatpush1.msra.mxu0 0.0
  %2565 = vmatprep.subr.mxu0 0.0
  %2566 = vmatpush1.msra.mxu0 0.0
  %2567 = vmatprep.subr.mxu0 0.0
  %2568 = vmatpush1.msra.mxu0 0.0
  %2569 = vmatprep.subr.mxu0 0.0
  %2570 = vmatpush1.msra.mxu0 0.0
  %2571 = vmatprep.subr.mxu0 0.0
  %2572 = vmatpush1.msra.mxu0 0.0
  %2573 = vmatprep.subr.mxu0 0.0
  %2574 = vmatpush1.msra.mxu0 0.0
  %2575 = vmatprep.subr.mxu0 0.0
  %2576 = vmatpush1.msra.mxu0 0.0
  %2577 = vmatprep.subr.mxu0 0.0
  %2578 = vmatpush1.msra.mxu0 0.0
  %2579 = vmatprep.subr.mxu0 0.0
  %2580 = vmatpush1.msra.mxu0 0.0
  %2581 = vmatprep.subr.mxu0 0.0
  %2582 = vmatpush1.msra.mxu0 0.0
  %2583 = vmatprep.subr.mxu0 0.0
  %2584 = vmatpush1.msra.mxu0 0.0
  %2585 = vmatprep.subr.mxu0 0.0
  %2586 = vmatpush1.msra.mxu0 0.0
  %2587 = vmatprep.subr.mxu0 %v102
  %2588 = vmatpush1.msra.mxu0 %v99
  %2589 = vmatprep.subr.mxu0 %v71
  %2590 = vmatpush1.msra.mxu0 %v70
  %2591 = vmatprep.subr.mxu0 %v67
  %2592 = vmatpush1.msra.mxu0 %v66
  %2593 = vmatprep.subr.mxu0 %v63
  %2594 = vmatpush1.msra.mxu0 %v62
  %2595 = vmatprep.subr.mxu0 0.0
  %2596 = vmatpush2.msra.mxu0 0.0
  %2597 = vmatprep.subr.mxu0 0.0
  %2598 = vmatpush2.msra.mxu0 0.0
  %2599 = vmatprep.subr.mxu0 0.0
  %2600 = vmatpush2.msra.mxu0 0.0
  %2601 = vmatprep.subr.mxu0 0.0
  %2602 = vmatpush2.msra.mxu0 0.0
  %2603 = vmatprep.subr.mxu0 0.0
  %2604 = vmatpush2.msra.mxu0 0.0
  %2605 = vmatprep.subr.mxu0 0.0
  %2606 = vmatpush2.msra.mxu0 0.0
  %2607 = vmatprep.subr.mxu0 0.0
  %2608 = vmatpush2.msra.mxu0 0.0
  %2609 = vmatprep.subr.mxu0 0.0
  %2610 = vmatpush2.msra.mxu0 0.0
  %2611 = vmatprep.subr.mxu0 0.0
  %2612 = vmatpush2.msra.mxu0 0.0
  %2613 = vmatprep.subr.mxu0 0.0
  %2614 = vmatpush2.msra.mxu0 0.0
  %2615 = vmatprep.subr.mxu0 0.0
  %2616 = vmatpush2.msra.mxu0 0.0
  %2617 = vmatprep.subr.mxu0 0.0
  %2618 = vmatpush2.msra.mxu0 0.0
  %2619 = vmatprep.subr.mxu0 0.0
  %2620 = vmatpush2.msra.mxu0 0.0
  %2621 = vmatprep.subr.mxu0 0.0
  %2622 = vmatpush2.msra.mxu0 0.0
  %2623 = vmatprep.subr.mxu0 0.0
  %2624 = vmatpush2.msra.mxu0 0.0
  %2625 = vmatprep.subr.mxu0 0.0
  %2626 = vmatpush2.msra.mxu0 0.0
  %2627 = vmatprep.mubr.f32.mxu0 0.0
  %2628 = vmatmul.mubr.f32.gmra.mxu0 %v849
  %v2629 = vpop.f32.mrf.mxu0
  %v2630 = vadd.f32 0.0, %v2629
  %v2631 = vpop.f32.mrf.mxu0
  %v2632 = vadd.f32 0.0, %v2631
  %2633 = vmatprep.mubr.f32.mxu0 0.0
  %2634 = vmatmul.mubr.f32.gmra.mxu0 %v852
  %v2635 = vpop.f32.mrf.mxu0
  %v2636 = vadd.f32 0.0, %v2635
  %v2637 = vpop.f32.mrf.mxu0
  %v2638 = vadd.f32 0.0, %v2637
  %2639 = vmatprep.mubr.f32.mxu0 0.0
  %2640 = vmatmul.mubr.f32.gmra.mxu0 %v855
  %v2641 = vpop.f32.mrf.mxu0
  %v2642 = vadd.f32 0.0, %v2641
  %v2643 = vpop.f32.mrf.mxu0
  %v2644 = vadd.f32 0.0, %v2643
  %2645 = vmatprep.mubr.f32.mxu0 0.0
  %2646 = vmatmul.mubr.f32.gmra.mxu0 %v858
  %v2647 = vpop.f32.mrf.mxu0
  %v2648 = vadd.f32 0.0, %v2647
  %v2649 = vpop.f32.mrf.mxu0
  %v2650 = vadd.f32 0.0, %v2649
  %2651 = vmatprep.mubr.f32.mxu0 0.0
  %2652 = vmatmul.mubr.f32.gmra.mxu0 %v861
  %v2653 = vpop.f32.mrf.mxu0
  %v2654 = vadd.f32 0.0, %v2653
  %v2655 = vpop.f32.mrf.mxu0
  %v2656 = vadd.f32 0.0, %v2655
  %2657 = vmatprep.mubr.f32.mxu0 0.0
  %2658 = vmatmul.mubr.f32.gmra.mxu0 %v864
  %v2659 = vpop.f32.mrf.mxu0
  %v2660 = vadd.f32 0.0, %v2659
  %v2661 = vpop.f32.mrf.mxu0
  %v2662 = vadd.f32 0.0, %v2661
  %2663 = vdwg.mxu0
  %2664 = vmatprep.subr.mxu0 0.0
  %2665 = vmatpush1.msra.mxu0 0.0
  %2666 = vmatprep.subr.mxu0 0.0
  %2667 = vmatpush1.msra.mxu0 0.0
  %2668 = vmatprep.subr.mxu0 0.0
  %2669 = vmatpush1.msra.mxu0 0.0
  %2670 = vmatprep.subr.mxu0 0.0
  %2671 = vmatpush1.msra.mxu0 0.0
  %2672 = vmatprep.subr.mxu0 0.0
  %2673 = vmatpush1.msra.mxu0 0.0
  %2674 = vmatprep.subr.mxu0 0.0
  %2675 = vmatpush1.msra.mxu0 0.0
  %2676 = vmatprep.subr.mxu0 0.0
  %2677 = vmatpush1.msra.mxu0 0.0
  %2678 = vmatprep.subr.mxu0 0.0
  %2679 = vmatpush1.msra.mxu0 0.0
  %2680 = vmatprep.subr.mxu0 0.0
  %2681 = vmatpush1.msra.mxu0 0.0
  %2682 = vmatprep.subr.mxu0 0.0
  %2683 = vmatpush1.msra.mxu0 0.0
  %2684 = vmatprep.subr.mxu0 0.0
  %2685 = vmatpush1.msra.mxu0 0.0
  %2686 = vmatprep.subr.mxu0 0.0
  %2687 = vmatpush1.msra.mxu0 0.0
  %2688 = vmatprep.subr.mxu0 %v108
  %2689 = vmatpush1.msra.mxu0 %v105
  %2690 = vmatprep.subr.mxu0 %v73
  %2691 = vmatpush1.msra.mxu0 %v72
  %2692 = vmatprep.subr.mxu0 %v69
  %2693 = vmatpush1.msra.mxu0 %v68
  %2694 = vmatprep.subr.mxu0 %v65
  %2695 = vmatpush1.msra.mxu0 %v64
  %2696 = vmatprep.subr.mxu0 0.0
  %2697 = vmatpush2.msra.mxu0 0.0
  %2698 = vmatprep.subr.mxu0 0.0
  %2699 = vmatpush2.msra.mxu0 0.0
  %2700 = vmatprep.subr.mxu0 0.0
  %2701 = vmatpush2.msra.mxu0 0.0
  %2702 = vmatprep.subr.mxu0 0.0
  %2703 = vmatpush2.msra.mxu0 0.0
  %2704 = vmatprep.subr.mxu0 0.0
  %2705 = vmatpush2.msra.mxu0 0.0
  %2706 = vmatprep.subr.mxu0 0.0
  %2707 = vmatpush2.msra.mxu0 0.0
  %2708 = vmatprep.subr.mxu0 0.0
  %2709 = vmatpush2.msra.mxu0 0.0
  %2710 = vmatprep.subr.mxu0 0.0
  %2711 = vmatpush2.msra.mxu0 0.0
  %2712 = vmatprep.subr.mxu0 0.0
  %2713 = vmatpush2.msra.mxu0 0.0
  %2714 = vmatprep.subr.mxu0 0.0
  %2715 = vmatpush2.msra.mxu0 0.0
  %2716 = vmatprep.subr.mxu0 0.0
  %2717 = vmatpush2.msra.mxu0 0.0
  %2718 = vmatprep.subr.mxu0 0.0
  %2719 = vmatpush2.msra.mxu0 0.0
  %2720 = vmatprep.subr.mxu0 0.0
  %2721 = vmatpush2.msra.mxu0 0.0
  %2722 = vmatprep.subr.mxu0 0.0
  %2723 = vmatpush2.msra.mxu0 0.0
  %2724 = vmatprep.subr.mxu0 0.0
  %2725 = vmatpush2.msra.mxu0 0.0
  %2726 = vmatprep.subr.mxu0 0.0
  %2727 = vmatpush2.msra.mxu0 0.0
  %2728 = vmatprep.mubr.f32.mxu0 0.0
  %2729 = vmatmul.mubr.f32.gmra.mxu0 %v849
  %v2730 = vpop.f32.mrf.mxu0
  %v2731 = vadd.f32 0.0, %v2730
  %v2732 = vpop.f32.mrf.mxu0
  %v2733 = vadd.f32 0.0, %v2732
  %2734 = vmatprep.mubr.f32.mxu0 0.0
  %2735 = vmatmul.mubr.f32.gmra.mxu0 %v852
  %v2736 = vpop.f32.mrf.mxu0
  %v2737 = vadd.f32 0.0, %v2736
  %v2738 = vpop.f32.mrf.mxu0
  %v2739 = vadd.f32 0.0, %v2738
  %2740 = vmatprep.mubr.f32.mxu0 0.0
  %2741 = vmatmul.mubr.f32.gmra.mxu0 %v855
  %v2742 = vpop.f32.mrf.mxu0
  %v2743 = vadd.f32 0.0, %v2742
  %v2744 = vpop.f32.mrf.mxu0
  %v2745 = vadd.f32 0.0, %v2744
  %2746 = vmatprep.mubr.f32.mxu0 0.0
  %2747 = vmatmul.mubr.f32.gmra.mxu0 %v858
  %v2748 = vpop.f32.mrf.mxu0
  %v2749 = vadd.f32 0.0, %v2748
  %v2750 = vpop.f32.mrf.mxu0
  %v2751 = vadd.f32 0.0, %v2750
  %2752 = vmatprep.mubr.f32.mxu0 0.0
  %2753 = vmatmul.mubr.f32.gmra.mxu0 %v861
  %v2754 = vpop.f32.mrf.mxu0
  %v2755 = vadd.f32 0.0, %v2754
  %v2756 = vpop.f32.mrf.mxu0
  %v2757 = vadd.f32 0.0, %v2756
  %2758 = vmatprep.mubr.f32.mxu0 0.0
  %2759 = vmatmul.mubr.f32.gmra.mxu0 %v864
  %v2760 = vpop.f32.mrf.mxu0
  %v2761 = vadd.f32 0.0, %v2760
  %v2762 = vpop.f32.mrf.mxu0
  %v2763 = vadd.f32 0.0, %v2762
  %2764 = vdwg.mxu0
  %2765 = vmatprep.subr.mxu0 0.0
  %2766 = vmatpush1.msra.mxu0 0.0
  %2767 = vmatprep.subr.mxu0 0.0
  %2768 = vmatpush1.msra.mxu0 0.0
  %2769 = vmatprep.subr.mxu0 0.0
  %2770 = vmatpush1.msra.mxu0 0.0
  %2771 = vmatprep.subr.mxu0 0.0
  %2772 = vmatpush1.msra.mxu0 0.0
  %2773 = vmatprep.subr.mxu0 0.0
  %2774 = vmatpush1.msra.mxu0 0.0
  %2775 = vmatprep.subr.mxu0 0.0
  %2776 = vmatpush1.msra.mxu0 0.0
  %2777 = vmatprep.subr.mxu0 0.0
  %2778 = vmatpush1.msra.mxu0 0.0
  %2779 = vmatprep.subr.mxu0 0.0
  %2780 = vmatpush1.msra.mxu0 0.0
  %2781 = vmatprep.subr.mxu0 0.0
  %2782 = vmatpush1.msra.mxu0 0.0
  %2783 = vmatprep.subr.mxu0 0.0
  %2784 = vmatpush1.msra.mxu0 0.0
  %2785 = vmatprep.subr.mxu0 0.0
  %2786 = vmatpush1.msra.mxu0 0.0
  %2787 = vmatprep.subr.mxu0 0.0
  %2788 = vmatpush1.msra.mxu0 0.0
  %2789 = vmatprep.subr.mxu0 %v334
  %2790 = vmatpush1.msra.mxu0 %v331
  %2791 = vmatprep.subr.mxu0 %v47
  %2792 = vmatpush1.msra.mxu0 %v46
  %2793 = vmatprep.subr.mxu0 %v43
  %2794 = vmatpush1.msra.mxu0 %v42
  %2795 = vmatprep.subr.mxu0 %v39
  %2796 = vmatpush1.msra.mxu0 %v38
  %2797 = vmatprep.subr.mxu0 0.0
  %2798 = vmatpush2.msra.mxu0 0.0
  %2799 = vmatprep.subr.mxu0 0.0
  %2800 = vmatpush2.msra.mxu0 0.0
  %2801 = vmatprep.subr.mxu0 0.0
  %2802 = vmatpush2.msra.mxu0 0.0
  %2803 = vmatprep.subr.mxu0 0.0
  %2804 = vmatpush2.msra.mxu0 0.0
  %2805 = vmatprep.subr.mxu0 0.0
  %2806 = vmatpush2.msra.mxu0 0.0
  %2807 = vmatprep.subr.mxu0 0.0
  %2808 = vmatpush2.msra.mxu0 0.0
  %2809 = vmatprep.subr.mxu0 0.0
  %2810 = vmatpush2.msra.mxu0 0.0
  %2811 = vmatprep.subr.mxu0 0.0
  %2812 = vmatpush2.msra.mxu0 0.0
  %2813 = vmatprep.subr.mxu0 0.0
  %2814 = vmatpush2.msra.mxu0 0.0
  %2815 = vmatprep.subr.mxu0 0.0
  %2816 = vmatpush2.msra.mxu0 0.0
  %2817 = vmatprep.subr.mxu0 0.0
  %2818 = vmatpush2.msra.mxu0 0.0
  %2819 = vmatprep.subr.mxu0 0.0
  %2820 = vmatpush2.msra.mxu0 0.0
  %2821 = vmatprep.subr.mxu0 0.0
  %2822 = vmatpush2.msra.mxu0 0.0
  %2823 = vmatprep.subr.mxu0 0.0
  %2824 = vmatpush2.msra.mxu0 0.0
  %2825 = vmatprep.subr.mxu0 0.0
  %2826 = vmatpush2.msra.mxu0 0.0
  %2827 = vmatprep.subr.mxu0 0.0
  %2828 = vmatpush2.msra.mxu0 0.0
  %2829 = vmatprep.mubr.f32.mxu0 0.0
  %2830 = vmatmul.mubr.f32.gmra.mxu0 %v569
  %v2831 = vpop.f32.mrf.mxu0
  %v2832 = vadd.f32 %v2630, %v2831
  %v2833 = vpop.f32.mrf.mxu0
  %v2834 = vadd.f32 %v2632, %v2833
  %2835 = vmatprep.mubr.f32.mxu0 0.0
  %2836 = vmatmul.mubr.f32.gmra.mxu0 %v572
  %v2837 = vpop.f32.mrf.mxu0
  %v2838 = vadd.f32 %v2636, %v2837
  %v2839 = vpop.f32.mrf.mxu0
  %v2840 = vadd.f32 %v2638, %v2839
  %2841 = vmatprep.mubr.f32.mxu0 0.0
  %2842 = vmatmul.mubr.f32.gmra.mxu0 %v575
  %v2843 = vpop.f32.mrf.mxu0
  %v2844 = vadd.f32 %v2642, %v2843
  %v2845 = vpop.f32.mrf.mxu0
  %v2846 = vadd.f32 %v2644, %v2845
  %2847 = vmatprep.mubr.f32.mxu0 0.0
  %2848 = vmatmul.mubr.f32.gmra.mxu0 %v578
  %v2849 = vpop.f32.mrf.mxu0
  %v2850 = vadd.f32 %v2648, %v2849
  %v2851 = vpop.f32.mrf.mxu0
  %v2852 = vadd.f32 %v2650, %v2851
  %2853 = vmatprep.mubr.f32.mxu0 0.0
  %2854 = vmatmul.mubr.f32.gmra.mxu0 %v581
  %v2855 = vpop.f32.mrf.mxu0
  %v2856 = vadd.f32 %v2654, %v2855
  %v2857 = vpop.f32.mrf.mxu0
  %v2858 = vadd.f32 %v2656, %v2857
  %2859 = vmatprep.mubr.f32.mxu0 0.0
  %2860 = vmatmul.mubr.f32.gmra.mxu0 %v584
  %v2861 = vpop.f32.mrf.mxu0
  %v2862 = vadd.f32 %v2660, %v2861
  %v2863 = vpop.f32.mrf.mxu0
  %v2864 = vadd.f32 %v2662, %v2863
  %2865 = vdwg.mxu0
  %2866 = vmatprep.subr.mxu0 0.0
  %2867 = vmatpush1.msra.mxu0 0.0
  %2868 = vmatprep.subr.mxu0 0.0
  %2869 = vmatpush1.msra.mxu0 0.0
  %2870 = vmatprep.subr.mxu0 0.0
  %2871 = vmatpush1.msra.mxu0 0.0
  %2872 = vmatprep.subr.mxu0 0.0
  %2873 = vmatpush1.msra.mxu0 0.0
  %2874 = vmatprep.subr.mxu0 0.0
  %2875 = vmatpush1.msra.mxu0 0.0
  %2876 = vmatprep.subr.mxu0 0.0
  %2877 = vmatpush1.msra.mxu0 0.0
  %2878 = vmatprep.subr.mxu0 0.0
  %2879 = vmatpush1.msra.mxu0 0.0
  %2880 = vmatprep.subr.mxu0 0.0
  %2881 = vmatpush1.msra.mxu0 0.0
  %2882 = vmatprep.subr.mxu0 0.0
  %2883 = vmatpush1.msra.mxu0 0.0
  %2884 = vmatprep.subr.mxu0 0.0
  %2885 = vmatpush1.msra.mxu0 0.0
  %2886 = vmatprep.subr.mxu0 0.0
  %2887 = vmatpush1.msra.mxu0 0.0
  %2888 = vmatprep.subr.mxu0 0.0
  %2889 = vmatpush1.msra.mxu0 0.0
  %2890 = vmatprep.subr.mxu0 %v340
  %2891 = vmatpush1.msra.mxu0 %v337
  %2892 = vmatprep.subr.mxu0 %v49
  %2893 = vmatpush1.msra.mxu0 %v48
  %2894 = vmatprep.subr.mxu0 %v45
  %2895 = vmatpush1.msra.mxu0 %v44
  %2896 = vmatprep.subr.mxu0 %v41
  %2897 = vmatpush1.msra.mxu0 %v40
  %2898 = vmatprep.subr.mxu0 0.0
  %2899 = vmatpush2.msra.mxu0 0.0
  %2900 = vmatprep.subr.mxu0 0.0
  %2901 = vmatpush2.msra.mxu0 0.0
  %2902 = vmatprep.subr.mxu0 0.0
  %2903 = vmatpush2.msra.mxu0 0.0
  %2904 = vmatprep.subr.mxu0 0.0
  %2905 = vmatpush2.msra.mxu0 0.0
  %2906 = vmatprep.subr.mxu0 0.0
  %2907 = vmatpush2.msra.mxu0 0.0
  %2908 = vmatprep.subr.mxu0 0.0
  %2909 = vmatpush2.msra.mxu0 0.0
  %2910 = vmatprep.subr.mxu0 0.0
  %2911 = vmatpush2.msra.mxu0 0.0
  %2912 = vmatprep.subr.mxu0 0.0
  %2913 = vmatpush2.msra.mxu0 0.0
  %2914 = vmatprep.subr.mxu0 0.0
  %2915 = vmatpush2.msra.mxu0 0.0
  %2916 = vmatprep.subr.mxu0 0.0
  %2917 = vmatpush2.msra.mxu0 0.0
  %2918 = vmatprep.subr.mxu0 0.0
  %2919 = vmatpush2.msra.mxu0 0.0
  %2920 = vmatprep.subr.mxu0 0.0
  %2921 = vmatpush2.msra.mxu0 0.0
  %2922 = vmatprep.subr.mxu0 0.0
  %2923 = vmatpush2.msra.mxu0 0.0
  %2924 = vmatprep.subr.mxu0 0.0
  %2925 = vmatpush2.msra.mxu0 0.0
  %2926 = vmatprep.subr.mxu0 0.0
  %2927 = vmatpush2.msra.mxu0 0.0
  %2928 = vmatprep.subr.mxu0 0.0
  %2929 = vmatpush2.msra.mxu0 0.0
  %2930 = vmatprep.mubr.f32.mxu0 0.0
  %2931 = vmatmul.mubr.f32.gmra.mxu0 %v569
  %v2932 = vpop.f32.mrf.mxu0
  %v2933 = vadd.f32 %v2731, %v2932
  %v2934 = vpop.f32.mrf.mxu0
  %v2935 = vadd.f32 %v2733, %v2934
  %2936 = vmatprep.mubr.f32.mxu0 0.0
  %2937 = vmatmul.mubr.f32.gmra.mxu0 %v572
  %v2938 = vpop.f32.mrf.mxu0
  %v2939 = vadd.f32 %v2737, %v2938
  %v2940 = vpop.f32.mrf.mxu0
  %v2941 = vadd.f32 %v2739, %v2940
  %2942 = vmatprep.mubr.f32.mxu0 0.0
  %2943 = vmatmul.mubr.f32.gmra.mxu0 %v575
  %v2944 = vpop.f32.mrf.mxu0
  %v2945 = vadd.f32 %v2743, %v2944
  %v2946 = vpop.f32.mrf.mxu0
  %v2947 = vadd.f32 %v2745, %v2946
  %2948 = vmatprep.mubr.f32.mxu0 0.0
  %2949 = vmatmul.mubr.f32.gmra.mxu0 %v578
  %v2950 = vpop.f32.mrf.mxu0
  %v2951 = vadd.f32 %v2749, %v2950
  %v2952 = vpop.f32.mrf.mxu0
  %v2953 = vadd.f32 %v2751, %v2952
  %2954 = vmatprep.mubr.f32.mxu0 0.0
  %2955 = vmatmul.mubr.f32.gmra.mxu0 %v581
  %v2956 = vpop.f32.mrf.mxu0
  %v2957 = vadd.f32 %v2755, %v2956
  %v2958 = vpop.f32.mrf.mxu0
  %v2959 = vadd.f32 %v2757, %v2958
  %2960 = vmatprep.mubr.f32.mxu0 0.0
  %2961 = vmatmul.mubr.f32.gmra.mxu0 %v584
  %v2962 = vpop.f32.mrf.mxu0
  %v2963 = vadd.f32 %v2761, %v2962
  %v2964 = vpop.f32.mrf.mxu0
  %v2965 = vadd.f32 %v2763, %v2964
  %2966 = vdwg.mxu0
  %2967 = vmatprep.subr.mxu0 0.0
  %2968 = vmatpush1.msra.mxu0 0.0
  %2969 = vmatprep.subr.mxu0 0.0
  %2970 = vmatpush1.msra.mxu0 0.0
  %2971 = vmatprep.subr.mxu0 0.0
  %2972 = vmatpush1.msra.mxu0 0.0
  %2973 = vmatprep.subr.mxu0 0.0
  %2974 = vmatpush1.msra.mxu0 0.0
  %2975 = vmatprep.subr.mxu0 0.0
  %2976 = vmatpush1.msra.mxu0 0.0
  %2977 = vmatprep.subr.mxu0 0.0
  %2978 = vmatpush1.msra.mxu0 0.0
  %2979 = vmatprep.subr.mxu0 0.0
  %2980 = vmatpush1.msra.mxu0 0.0
  %2981 = vmatprep.subr.mxu0 0.0
  %2982 = vmatpush1.msra.mxu0 0.0
  %2983 = vmatprep.subr.mxu0 0.0
  %2984 = vmatpush1.msra.mxu0 0.0
  %2985 = vmatprep.subr.mxu0 0.0
  %2986 = vmatpush1.msra.mxu0 0.0
  %2987 = vmatprep.subr.mxu0 0.0
  %2988 = vmatpush1.msra.mxu0 0.0
  %2989 = vmatprep.subr.mxu0 0.0
  %2990 = vmatpush1.msra.mxu0 0.0
  %2991 = vmatprep.subr.mxu0 %v590
  %2992 = vmatpush1.msra.mxu0 %v587
  %2993 = vmatprep.subr.mxu0 %v561
  %2994 = vmatpush1.msra.mxu0 %v560
  %2995 = vmatprep.subr.mxu0 %v557
  %2996 = vmatpush1.msra.mxu0 %v556
  %2997 = vmatprep.subr.mxu0 %v553
  %2998 = vmatpush1.msra.mxu0 %v552
  %2999 = vmatprep.subr.mxu0 0.0
  %3000 = vmatpush2.msra.mxu0 0.0
  %3001 = vmatprep.subr.mxu0 0.0
  %3002 = vmatpush2.msra.mxu0 0.0
  %3003 = vmatprep.subr.mxu0 0.0
  %3004 = vmatpush2.msra.mxu0 0.0
  %3005 = vmatprep.subr.mxu0 0.0
  %3006 = vmatpush2.msra.mxu0 0.0
  %3007 = vmatprep.subr.mxu0 0.0
  %3008 = vmatpush2.msra.mxu0 0.0
  %3009 = vmatprep.subr.mxu0 0.0
  %3010 = vmatpush2.msra.mxu0 0.0
  %3011 = vmatprep.subr.mxu0 0.0
  %3012 = vmatpush2.msra.mxu0 0.0
  %3013 = vmatprep.subr.mxu0 0.0
  %3014 = vmatpush2.msra.mxu0 0.0
  %3015 = vmatprep.subr.mxu0 0.0
  %3016 = vmatpush2.msra.mxu0 0.0
  %3017 = vmatprep.subr.mxu0 0.0
  %3018 = vmatpush2.msra.mxu0 0.0
  %3019 = vmatprep.subr.mxu0 0.0
  %3020 = vmatpush2.msra.mxu0 0.0
  %3021 = vmatprep.subr.mxu0 0.0
  %3022 = vmatpush2.msra.mxu0 0.0
  %3023 = vmatprep.subr.mxu0 0.0
  %3024 = vmatpush2.msra.mxu0 0.0
  %3025 = vmatprep.subr.mxu0 0.0
  %3026 = vmatpush2.msra.mxu0 0.0
  %3027 = vmatprep.subr.mxu0 0.0
  %3028 = vmatpush2.msra.mxu0 0.0
  %3029 = vmatprep.subr.mxu0 0.0
  %3030 = vmatpush2.msra.mxu0 0.0
  %3031 = vmatprep.mubr.f32.mxu0 0.0
  %3032 = vmatmul.mubr.f32.gmra.mxu0 %v1129
  %v3033 = vpop.f32.mrf.mxu0
  %v3034 = vadd.f32 0.0, %v3033
  %v3035 = vpop.f32.mrf.mxu0
  %v3036 = vadd.f32 0.0, %v3035
  %3037 = vmatprep.mubr.f32.mxu0 0.0
  %3038 = vmatmul.mubr.f32.gmra.mxu0 %v1132
  %v3039 = vpop.f32.mrf.mxu0
  %v3040 = vadd.f32 0.0, %v3039
  %v3041 = vpop.f32.mrf.mxu0
  %v3042 = vadd.f32 0.0, %v3041
  %3043 = vmatprep.mubr.f32.mxu0 0.0
  %3044 = vmatmul.mubr.f32.gmra.mxu0 %v1135
  %v3045 = vpop.f32.mrf.mxu0
  %v3046 = vadd.f32 0.0, %v3045
  %v3047 = vpop.f32.mrf.mxu0
  %v3048 = vadd.f32 0.0, %v3047
  %3049 = vmatprep.mubr.f32.mxu0 0.0
  %3050 = vmatmul.mubr.f32.gmra.mxu0 %v1138
  %v3051 = vpop.f32.mrf.mxu0
  %v3052 = vadd.f32 0.0, %v3051
  %v3053 = vpop.f32.mrf.mxu0
  %v3054 = vadd.f32 0.0, %v3053
  %3055 = vmatprep.mubr.f32.mxu0 0.0
  %3056 = vmatmul.mubr.f32.gmra.mxu0 %v1141
  %v3057 = vpop.f32.mrf.mxu0
  %v3058 = vadd.f32 0.0, %v3057
  %v3059 = vpop.f32.mrf.mxu0
  %v3060 = vadd.f32 0.0, %v3059
  %3061 = vmatprep.mubr.f32.mxu0 0.0
  %3062 = vmatmul.mubr.f32.gmra.mxu0 %v1144
  %v3063 = vpop.f32.mrf.mxu0
  %v3064 = vadd.f32 0.0, %v3063
  %v3065 = vpop.f32.mrf.mxu0
  %v3066 = vadd.f32 0.0, %v3065
  %3067 = vdwg.mxu0
  %3068 = vmatprep.subr.mxu0 0.0
  %3069 = vmatpush1.msra.mxu0 0.0
  %3070 = vmatprep.subr.mxu0 0.0
  %3071 = vmatpush1.msra.mxu0 0.0
  %3072 = vmatprep.subr.mxu0 0.0
  %3073 = vmatpush1.msra.mxu0 0.0
  %3074 = vmatprep.subr.mxu0 0.0
  %3075 = vmatpush1.msra.mxu0 0.0
  %3076 = vmatprep.subr.mxu0 0.0
  %3077 = vmatpush1.msra.mxu0 0.0
  %3078 = vmatprep.subr.mxu0 0.0
  %3079 = vmatpush1.msra.mxu0 0.0
  %3080 = vmatprep.subr.mxu0 0.0
  %3081 = vmatpush1.msra.mxu0 0.0
  %3082 = vmatprep.subr.mxu0 0.0
  %3083 = vmatpush1.msra.mxu0 0.0
  %3084 = vmatprep.subr.mxu0 0.0
  %3085 = vmatpush1.msra.mxu0 0.0
  %3086 = vmatprep.subr.mxu0 0.0
  %3087 = vmatpush1.msra.mxu0 0.0
  %3088 = vmatprep.subr.mxu0 0.0
  %3089 = vmatpush1.msra.mxu0 0.0
  %3090 = vmatprep.subr.mxu0 0.0
  %3091 = vmatpush1.msra.mxu0 0.0
  %3092 = vmatprep.subr.mxu0 %v596
  %3093 = vmatpush1.msra.mxu0 %v593
  %3094 = vmatprep.subr.mxu0 %v563
  %3095 = vmatpush1.msra.mxu0 %v562
  %3096 = vmatprep.subr.mxu0 %v559
  %3097 = vmatpush1.msra.mxu0 %v558
  %3098 = vmatprep.subr.mxu0 %v555
  %3099 = vmatpush1.msra.mxu0 %v554
  %3100 = vmatprep.subr.mxu0 0.0
  %3101 = vmatpush2.msra.mxu0 0.0
  %3102 = vmatprep.subr.mxu0 0.0
  %3103 = vmatpush2.msra.mxu0 0.0
  %3104 = vmatprep.subr.mxu0 0.0
  %3105 = vmatpush2.msra.mxu0 0.0
  %3106 = vmatprep.subr.mxu0 0.0
  %3107 = vmatpush2.msra.mxu0 0.0
  %3108 = vmatprep.subr.mxu0 0.0
  %3109 = vmatpush2.msra.mxu0 0.0
  %3110 = vmatprep.subr.mxu0 0.0
  %3111 = vmatpush2.msra.mxu0 0.0
  %3112 = vmatprep.subr.mxu0 0.0
  %3113 = vmatpush2.msra.mxu0 0.0
  %3114 = vmatprep.subr.mxu0 0.0
  %3115 = vmatpush2.msra.mxu0 0.0
  %3116 = vmatprep.subr.mxu0 0.0
  %3117 = vmatpush2.msra.mxu0 0.0
  %3118 = vmatprep.subr.mxu0 0.0
  %3119 = vmatpush2.msra.mxu0 0.0
  %3120 = vmatprep.subr.mxu0 0.0
  %3121 = vmatpush2.msra.mxu0 0.0
  %3122 = vmatprep.subr.mxu0 0.0
  %3123 = vmatpush2.msra.mxu0 0.0
  %3124 = vmatprep.subr.mxu0 0.0
  %3125 = vmatpush2.msra.mxu0 0.0
  %3126 = vmatprep.subr.mxu0 0.0
  %3127 = vmatpush2.msra.mxu0 0.0
  %3128 = vmatprep.subr.mxu0 0.0
  %3129 = vmatpush2.msra.mxu0 0.0
  %3130 = vmatprep.subr.mxu0 0.0
  %3131 = vmatpush2.msra.mxu0 0.0
  %3132 = vmatprep.mubr.f32.mxu0 0.0
  %3133 = vmatmul.mubr.f32.gmra.mxu0 %v1129
  %v3134 = vpop.f32.mrf.mxu0
  %v3135 = vadd.f32 0.0, %v3134
  %v3136 = vpop.f32.mrf.mxu0
  %v3137 = vadd.f32 0.0, %v3136
  %3138 = vmatprep.mubr.f32.mxu0 0.0
  %3139 = vmatmul.mubr.f32.gmra.mxu0 %v1132
  %v3140 = vpop.f32.mrf.mxu0
  %v3141 = vadd.f32 0.0, %v3140
  %v3142 = vpop.f32.mrf.mxu0
  %v3143 = vadd.f32 0.0, %v3142
  %3144 = vmatprep.mubr.f32.mxu0 0.0
  %3145 = vmatmul.mubr.f32.gmra.mxu0 %v1135
  %v3146 = vpop.f32.mrf.mxu0
  %v3147 = vadd.f32 0.0, %v3146
  %v3148 = vpop.f32.mrf.mxu0
  %v3149 = vadd.f32 0.0, %v3148
  %3150 = vmatprep.mubr.f32.mxu0 0.0
  %3151 = vmatmul.mubr.f32.gmra.mxu0 %v1138
  %v3152 = vpop.f32.mrf.mxu0
  %v3153 = vadd.f32 0.0, %v3152
  %v3154 = vpop.f32.mrf.mxu0
  %v3155 = vadd.f32 0.0, %v3154
  %3156 = vmatprep.mubr.f32.mxu0 0.0
  %3157 = vmatmul.mubr.f32.gmra.mxu0 %v1141
  %v3158 = vpop.f32.mrf.mxu0
  %v3159 = vadd.f32 0.0, %v3158
  %v3160 = vpop.f32.mrf.mxu0
  %v3161 = vadd.f32 0.0, %v3160
  %3162 = vmatprep.mubr.f32.mxu0 0.0
  %3163 = vmatmul.mubr.f32.gmra.mxu0 %v1144
  %v3164 = vpop.f32.mrf.mxu0
  %v3165 = vadd.f32 0.0, %v3164
  %v3166 = vpop.f32.mrf.mxu0
  %v3167 = vadd.f32 0.0, %v3166
  %3168 = vdwg.mxu0
  %v3169 = vadd.f32 %v2832, %v3034
  %v3170 = vadd.f32 %v2834, %v3036
  %v3171 = vadd.f32 %v2933, %v3135
  %v3172 = vadd.f32 %v2935, %v3137
  %v3173 = vadd.f32 %v2838, %v3040
  %v3174 = vadd.f32 %v2840, %v3042
  %v3175 = vadd.f32 %v2939, %v3141
  %v3176 = vadd.f32 %v2941, %v3143
  %v3177 = vadd.f32 %v2844, %v3046
  %v3178 = vadd.f32 %v2846, %v3048
  %v3179 = vadd.f32 %v2945, %v3147
  %v3180 = vadd.f32 %v2947, %v3149
  %v3181 = vadd.f32 %v2850, %v3052
  %v3182 = vadd.f32 %v2852, %v3054
  %v3183 = vadd.f32 %v2951, %v3153
  %v3184 = vadd.f32 %v2953, %v3155
  %v3185 = vadd.f32 %v2856, %v3058
  %v3186 = vadd.f32 %v2858, %v3060
  %v3187 = vadd.f32 %v2957, %v3159
  %v3188 = vadd.f32 %v2959, %v3161
  %v3189 = vadd.f32 %v2862, %v3064
  %v3190 = vadd.f32 %v2864, %v3066
  %v3191 = vadd.f32 %v2963, %v3165
  %v3192 = vadd.f32 %v2965, %v3167
  %3193 = vmatprep.subr.mxu0 0.0
  %3194 = vmatpush1.msra.mxu0 0.0
  %3195 = vmatprep.subr.mxu0 0.0
  %3196 = vmatpush1.msra.mxu0 0.0
  %3197 = vmatprep.subr.mxu0 0.0
  %3198 = vmatpush1.msra.mxu0 0.0
  %3199 = vmatprep.subr.mxu0 0.0
  %3200 = vmatpush1.msra.mxu0 0.0
  %3201 = vmatprep.subr.mxu0 0.0
  %3202 = vmatpush1.msra.mxu0 0.0
  %3203 = vmatprep.subr.mxu0 0.0
  %3204 = vmatpush1.msra.mxu0 0.0
  %3205 = vmatprep.subr.mxu0 0.0
  %3206 = vmatpush1.msra.mxu0 0.0
  %3207 = vmatprep.subr.mxu0 0.0
  %3208 = vmatpush1.msra.mxu0 0.0
  %3209 = vmatprep.subr.mxu0 0.0
  %3210 = vmatpush1.msra.mxu0 0.0
  %3211 = vmatprep.subr.mxu0 0.0
  %3212 = vmatpush1.msra.mxu0 0.0
  %3213 = vmatprep.subr.mxu0 0.0
  %3214 = vmatpush1.msra.mxu0 0.0
  %3215 = vmatprep.subr.mxu0 0.0
  %3216 = vmatpush1.msra.mxu0 0.0
  %3217 = vmatprep.subr.mxu0 %v870
  %3218 = vmatpush1.msra.mxu0 %v867
  %3219 = vmatprep.subr.mxu0 %v841
  %3220 = vmatpush1.msra.mxu0 %v840
  %3221 = vmatprep.subr.mxu0 %v837
  %3222 = vmatpush1.msra.mxu0 %v836
  %3223 = vmatprep.subr.mxu0 %v833
  %3224 = vmatpush1.msra.mxu0 %v832
  %3225 = vmatprep.subr.mxu0 0.0
  %3226 = vmatpush2.msra.mxu0 0.0
  %3227 = vmatprep.subr.mxu0 0.0
  %3228 = vmatpush2.msra.mxu0 0.0
  %3229 = vmatprep.subr.mxu0 0.0
  %3230 = vmatpush2.msra.mxu0 0.0
  %3231 = vmatprep.subr.mxu0 0.0
  %3232 = vmatpush2.msra.mxu0 0.0
  %3233 = vmatprep.subr.mxu0 0.0
  %3234 = vmatpush2.msra.mxu0 0.0
  %3235 = vmatprep.subr.mxu0 0.0
  %3236 = vmatpush2.msra.mxu0 0.0
  %3237 = vmatprep.subr.mxu0 0.0
  %3238 = vmatpush2.msra.mxu0 0.0
  %3239 = vmatprep.subr.mxu0 0.0
  %3240 = vmatpush2.msra.mxu0 0.0
  %3241 = vmatprep.subr.mxu0 0.0
  %3242 = vmatpush2.msra.mxu0 0.0
  %3243 = vmatprep.subr.mxu0 0.0
  %3244 = vmatpush2.msra.mxu0 0.0
  %3245 = vmatprep.subr.mxu0 0.0
  %3246 = vmatpush2.msra.mxu0 0.0
  %3247 = vmatprep.subr.mxu0 0.0
  %3248 = vmatpush2.msra.mxu0 0.0
  %3249 = vmatprep.subr.mxu0 0.0
  %3250 = vmatpush2.msra.mxu0 0.0
  %3251 = vmatprep.subr.mxu0 0.0
  %3252 = vmatpush2.msra.mxu0 0.0
  %3253 = vmatprep.subr.mxu0 0.0
  %3254 = vmatpush2.msra.mxu0 0.0
  %3255 = vmatprep.subr.mxu0 0.0
  %3256 = vmatpush2.msra.mxu0 0.0
  %3257 = vmatprep.mubr.f32.mxu0 0.0
  %3258 = vmatmul.mubr.f32.gmra.mxu0 %v2248
  %v3259 = vpop.f32.mrf.mxu0
  %v3260 = vadd.f32 0.0, %v3259
  %v3261 = vpop.f32.mrf.mxu0
  %v3262 = vadd.f32 0.0, %v3261
  %3263 = vmatprep.mubr.f32.mxu0 0.0
  %3264 = vmatmul.mubr.f32.gmra.mxu0 %v2251
  %v3265 = vpop.f32.mrf.mxu0
  %v3266 = vadd.f32 0.0, %v3265
  %v3267 = vpop.f32.mrf.mxu0
  %v3268 = vadd.f32 0.0, %v3267
  %3269 = vmatprep.mubr.f32.mxu0 0.0
  %3270 = vmatmul.mubr.f32.gmra.mxu0 %v2254
  %v3271 = vpop.f32.mrf.mxu0
  %v3272 = vadd.f32 0.0, %v3271
  %v3273 = vpop.f32.mrf.mxu0
  %v3274 = vadd.f32 0.0, %v3273
  %3275 = vmatprep.mubr.f32.mxu0 0.0
  %3276 = vmatmul.mubr.f32.gmra.mxu0 %v2257
  %v3277 = vpop.f32.mrf.mxu0
  %v3278 = vadd.f32 0.0, %v3277
  %v3279 = vpop.f32.mrf.mxu0
  %v3280 = vadd.f32 0.0, %v3279
  %3281 = vmatprep.mubr.f32.mxu0 0.0
  %3282 = vmatmul.mubr.f32.gmra.mxu0 %v2260
  %v3283 = vpop.f32.mrf.mxu0
  %v3284 = vadd.f32 0.0, %v3283
  %v3285 = vpop.f32.mrf.mxu0
  %v3286 = vadd.f32 0.0, %v3285
  %3287 = vmatprep.mubr.f32.mxu0 0.0
  %3288 = vmatmul.mubr.f32.gmra.mxu0 %v2263
  %v3289 = vpop.f32.mrf.mxu0
  %v3290 = vadd.f32 0.0, %v3289
  %v3291 = vpop.f32.mrf.mxu0
  %v3292 = vadd.f32 0.0, %v3291
  %3293 = vdwg.mxu0
  %3294 = vmatprep.subr.mxu0 0.0
  %3295 = vmatpush1.msra.mxu0 0.0
  %3296 = vmatprep.subr.mxu0 0.0
  %3297 = vmatpush1.msra.mxu0 0.0
  %3298 = vmatprep.subr.mxu0 0.0
  %3299 = vmatpush1.msra.mxu0 0.0
  %3300 = vmatprep.subr.mxu0 0.0
  %3301 = vmatpush1.msra.mxu0 0.0
  %3302 = vmatprep.subr.mxu0 0.0
  %3303 = vmatpush1.msra.mxu0 0.0
  %3304 = vmatprep.subr.mxu0 0.0
  %3305 = vmatpush1.msra.mxu0 0.0
  %3306 = vmatprep.subr.mxu0 0.0
  %3307 = vmatpush1.msra.mxu0 0.0
  %3308 = vmatprep.subr.mxu0 0.0
  %3309 = vmatpush1.msra.mxu0 0.0
  %3310 = vmatprep.subr.mxu0 0.0
  %3311 = vmatpush1.msra.mxu0 0.0
  %3312 = vmatprep.subr.mxu0 0.0
  %3313 = vmatpush1.msra.mxu0 0.0
  %3314 = vmatprep.subr.mxu0 0.0
  %3315 = vmatpush1.msra.mxu0 0.0
  %3316 = vmatprep.subr.mxu0 0.0
  %3317 = vmatpush1.msra.mxu0 0.0
  %3318 = vmatprep.subr.mxu0 %v876
  %3319 = vmatpush1.msra.mxu0 %v873
  %3320 = vmatprep.subr.mxu0 %v843
  %3321 = vmatpush1.msra.mxu0 %v842
  %3322 = vmatprep.subr.mxu0 %v839
  %3323 = vmatpush1.msra.mxu0 %v838
  %3324 = vmatprep.subr.mxu0 %v835
  %3325 = vmatpush1.msra.mxu0 %v834
  %3326 = vmatprep.subr.mxu0 0.0
  %3327 = vmatpush2.msra.mxu0 0.0
  %3328 = vmatprep.subr.mxu0 0.0
  %3329 = vmatpush2.msra.mxu0 0.0
  %3330 = vmatprep.subr.mxu0 0.0
  %3331 = vmatpush2.msra.mxu0 0.0
  %3332 = vmatprep.subr.mxu0 0.0
  %3333 = vmatpush2.msra.mxu0 0.0
  %3334 = vmatprep.subr.mxu0 0.0
  %3335 = vmatpush2.msra.mxu0 0.0
  %3336 = vmatprep.subr.mxu0 0.0
  %3337 = vmatpush2.msra.mxu0 0.0
  %3338 = vmatprep.subr.mxu0 0.0
  %3339 = vmatpush2.msra.mxu0 0.0
  %3340 = vmatprep.subr.mxu0 0.0
  %3341 = vmatpush2.msra.mxu0 0.0
  %3342 = vmatprep.subr.mxu0 0.0
  %3343 = vmatpush2.msra.mxu0 0.0
  %3344 = vmatprep.subr.mxu0 0.0
  %3345 = vmatpush2.msra.mxu0 0.0
  %3346 = vmatprep.subr.mxu0 0.0
  %3347 = vmatpush2.msra.mxu0 0.0
  %3348 = vmatprep.subr.mxu0 0.0
  %3349 = vmatpush2.msra.mxu0 0.0
  %3350 = vmatprep.subr.mxu0 0.0
  %3351 = vmatpush2.msra.mxu0 0.0
  %3352 = vmatprep.subr.mxu0 0.0
  %3353 = vmatpush2.msra.mxu0 0.0
  %3354 = vmatprep.subr.mxu0 0.0
  %3355 = vmatpush2.msra.mxu0 0.0
  %3356 = vmatprep.subr.mxu0 0.0
  %3357 = vmatpush2.msra.mxu0 0.0
  %3358 = vmatprep.mubr.f32.mxu0 0.0
  %3359 = vmatmul.mubr.f32.gmra.mxu0 %v2248
  %v3360 = vpop.f32.mrf.mxu0
  %v3361 = vadd.f32 0.0, %v3360
  %v3362 = vpop.f32.mrf.mxu0
  %v3363 = vadd.f32 0.0, %v3362
  %3364 = vmatprep.mubr.f32.mxu0 0.0
  %3365 = vmatmul.mubr.f32.gmra.mxu0 %v2251
  %v3366 = vpop.f32.mrf.mxu0
  %v3367 = vadd.f32 0.0, %v3366
  %v3368 = vpop.f32.mrf.mxu0
  %v3369 = vadd.f32 0.0, %v3368
  %3370 = vmatprep.mubr.f32.mxu0 0.0
  %3371 = vmatmul.mubr.f32.gmra.mxu0 %v2254
  %v3372 = vpop.f32.mrf.mxu0
  %v3373 = vadd.f32 0.0, %v3372
  %v3374 = vpop.f32.mrf.mxu0
  %v3375 = vadd.f32 0.0, %v3374
  %3376 = vmatprep.mubr.f32.mxu0 0.0
  %3377 = vmatmul.mubr.f32.gmra.mxu0 %v2257
  %v3378 = vpop.f32.mrf.mxu0
  %v3379 = vadd.f32 0.0, %v3378
  %v3380 = vpop.f32.mrf.mxu0
  %v3381 = vadd.f32 0.0, %v3380
  %3382 = vmatprep.mubr.f32.mxu0 0.0
  %3383 = vmatmul.mubr.f32.gmra.mxu0 %v2260
  %v3384 = vpop.f32.mrf.mxu0
  %v3385 = vadd.f32 0.0, %v3384
  %v3386 = vpop.f32.mrf.mxu0
  %v3387 = vadd.f32 0.0, %v3386
  %3388 = vmatprep.mubr.f32.mxu0 0.0
  %3389 = vmatmul.mubr.f32.gmra.mxu0 %v2263
  %v3390 = vpop.f32.mrf.mxu0
  %v3391 = vadd.f32 0.0, %v3390
  %v3392 = vpop.f32.mrf.mxu0
  %v3393 = vadd.f32 0.0, %v3392
  %3394 = vdwg.mxu0
  %v3395 = vadd.f32 %v3169, %v3260
  %v3396 = vadd.f32 %v3170, %v3262
  %v3397 = vadd.f32 %v3171, %v3361
  %v3398 = vadd.f32 %v3172, %v3363
  %v3399 = vadd.f32 %v3173, %v3266
  %v3400 = vadd.f32 %v3174, %v3268
  %v3401 = vadd.f32 %v3175, %v3367
  %v3402 = vadd.f32 %v3176, %v3369
  %v3403 = vadd.f32 %v3177, %v3272
  %v3404 = vadd.f32 %v3178, %v3274
  %v3405 = vadd.f32 %v3179, %v3373
  %v3406 = vadd.f32 %v3180, %v3375
  %v3407 = vadd.f32 %v3181, %v3278
  %v3408 = vadd.f32 %v3182, %v3280
  %v3409 = vadd.f32 %v3183, %v3379
  %v3410 = vadd.f32 %v3184, %v3381
  %v3411 = vadd.f32 %v3185, %v3284
  %v3412 = vadd.f32 %v3186, %v3286
  %v3413 = vadd.f32 %v3187, %v3385
  %v3414 = vadd.f32 %v3188, %v3387
  %v3415 = vadd.f32 %v3189, %v3290
  %v3416 = vadd.f32 %v3190, %v3292
  %v3417 = vadd.f32 %v3191, %v3391
  %v3418 = vadd.f32 %v3192, %v3393
  %s3419 = scalar_lea.vmem %s0, 120
  %v3420 = vld [vmem:[%s3419] sm:$0xff]
  %v3421 = vld [vmem:[%s3419 + $0x8] sm:$0xff]
  %v3422 = vld [vmem:[%s3419 + $0x10] sm:$0xff]
  %v3423 = vld [vmem:[%s3419 + $0x18] sm:$0xff]
  %v3424 = vld [vmem:[%s3419 + $0x20] sm:$0xff]
  %v3425 = vld [vmem:[%s3419 + $0x28] sm:$0xff]
  %v3427 = vsel %vm78, %v3420, 0
  %v3430 = vsel %vm78, %v3421, 0
  %v3433 = vsel %vm78, %v3422, 0
  %v3436 = vsel %vm78, %v3423, 0
  %v3439 = vsel %vm78, %v3424, 0
  %v3442 = vsel %vm78, %v3425, 0
  %3444 = vmatprep.subr.mxu0 0.0
  %3445 = vmatpush1.msra.mxu0 0.0
  %3446 = vmatprep.subr.mxu0 0.0
  %3447 = vmatpush1.msra.mxu0 0.0
  %3448 = vmatprep.subr.mxu0 0.0
  %3449 = vmatpush1.msra.mxu0 0.0
  %3450 = vmatprep.subr.mxu0 0.0
  %3451 = vmatpush1.msra.mxu0 0.0
  %3452 = vmatprep.subr.mxu0 0.0
  %3453 = vmatpush1.msra.mxu0 0.0
  %3454 = vmatprep.subr.mxu0 0.0
  %3455 = vmatpush1.msra.mxu0 0.0
  %3456 = vmatprep.subr.mxu0 0.0
  %3457 = vmatpush1.msra.mxu0 0.0
  %3458 = vmatprep.subr.mxu0 0.0
  %3459 = vmatpush1.msra.mxu0 0.0
  %3460 = vmatprep.subr.mxu0 0.0
  %3461 = vmatpush1.msra.mxu0 0.0
  %3462 = vmatprep.subr.mxu0 0.0
  %3463 = vmatpush1.msra.mxu0 0.0
  %3464 = vmatprep.subr.mxu0 0.0
  %3465 = vmatpush1.msra.mxu0 0.0
  %3466 = vmatprep.subr.mxu0 0.0
  %3467 = vmatpush1.msra.mxu0 0.0
  %3468 = vmatprep.subr.mxu0 %v1150
  %3469 = vmatpush1.msra.mxu0 %v1147
  %3470 = vmatprep.subr.mxu0 %v1121
  %3471 = vmatpush1.msra.mxu0 %v1120
  %3472 = vmatprep.subr.mxu0 %v1117
  %3473 = vmatpush1.msra.mxu0 %v1116
  %3474 = vmatprep.subr.mxu0 %v1113
  %3475 = vmatpush1.msra.mxu0 %v1112
  %3476 = vmatprep.subr.mxu0 0.0
  %3477 = vmatpush2.msra.mxu0 0.0
  %3478 = vmatprep.subr.mxu0 0.0
  %3479 = vmatpush2.msra.mxu0 0.0
  %3480 = vmatprep.subr.mxu0 0.0
  %3481 = vmatpush2.msra.mxu0 0.0
  %3482 = vmatprep.subr.mxu0 0.0
  %3483 = vmatpush2.msra.mxu0 0.0
  %3484 = vmatprep.subr.mxu0 0.0
  %3485 = vmatpush2.msra.mxu0 0.0
  %3486 = vmatprep.subr.mxu0 0.0
  %3487 = vmatpush2.msra.mxu0 0.0
  %3488 = vmatprep.subr.mxu0 0.0
  %3489 = vmatpush2.msra.mxu0 0.0
  %3490 = vmatprep.subr.mxu0 0.0
  %3491 = vmatpush2.msra.mxu0 0.0
  %3492 = vmatprep.subr.mxu0 0.0
  %3493 = vmatpush2.msra.mxu0 0.0
  %3494 = vmatprep.subr.mxu0 0.0
  %3495 = vmatpush2.msra.mxu0 0.0
  %3496 = vmatprep.subr.mxu0 0.0
  %3497 = vmatpush2.msra.mxu0 0.0
  %3498 = vmatprep.subr.mxu0 0.0
  %3499 = vmatpush2.msra.mxu0 0.0
  %3500 = vmatprep.subr.mxu0 0.0
  %3501 = vmatpush2.msra.mxu0 0.0
  %3502 = vmatprep.subr.mxu0 0.0
  %3503 = vmatpush2.msra.mxu0 0.0
  %3504 = vmatprep.subr.mxu0 0.0
  %3505 = vmatpush2.msra.mxu0 0.0
  %3506 = vmatprep.subr.mxu0 0.0
  %3507 = vmatpush2.msra.mxu0 0.0
  %3508 = vmatprep.mubr.f32.mxu0 0.0
  %3509 = vmatmul.mubr.f32.gmra.mxu0 %v3427
  %v3510 = vpop.f32.mrf.mxu0
  %v3511 = vadd.f32 0.0, %v3510
  %v3512 = vpop.f32.mrf.mxu0
  %v3513 = vadd.f32 0.0, %v3512
  %3514 = vmatprep.mubr.f32.mxu0 0.0
  %3515 = vmatmul.mubr.f32.gmra.mxu0 %v3430
  %v3516 = vpop.f32.mrf.mxu0
  %v3517 = vadd.f32 0.0, %v3516
  %v3518 = vpop.f32.mrf.mxu0
  %v3519 = vadd.f32 0.0, %v3518
  %3520 = vmatprep.mubr.f32.mxu0 0.0
  %3521 = vmatmul.mubr.f32.gmra.mxu0 %v3433
  %v3522 = vpop.f32.mrf.mxu0
  %v3523 = vadd.f32 0.0, %v3522
  %v3524 = vpop.f32.mrf.mxu0
  %v3525 = vadd.f32 0.0, %v3524
  %3526 = vmatprep.mubr.f32.mxu0 0.0
  %3527 = vmatmul.mubr.f32.gmra.mxu0 %v3436
  %v3528 = vpop.f32.mrf.mxu0
  %v3529 = vadd.f32 0.0, %v3528
  %v3530 = vpop.f32.mrf.mxu0
  %v3531 = vadd.f32 0.0, %v3530
  %3532 = vmatprep.mubr.f32.mxu0 0.0
  %3533 = vmatmul.mubr.f32.gmra.mxu0 %v3439
  %v3534 = vpop.f32.mrf.mxu0
  %v3535 = vadd.f32 0.0, %v3534
  %v3536 = vpop.f32.mrf.mxu0
  %v3537 = vadd.f32 0.0, %v3536
  %3538 = vmatprep.mubr.f32.mxu0 0.0
  %3539 = vmatmul.mubr.f32.gmra.mxu0 %v3442
  %v3540 = vpop.f32.mrf.mxu0
  %v3541 = vadd.f32 0.0, %v3540
  %v3542 = vpop.f32.mrf.mxu0
  %v3543 = vadd.f32 0.0, %v3542
  %3544 = vdwg.mxu0
  %3545 = vmatprep.subr.mxu0 0.0
  %3546 = vmatpush1.msra.mxu0 0.0
  %3547 = vmatprep.subr.mxu0 0.0
  %3548 = vmatpush1.msra.mxu0 0.0
  %3549 = vmatprep.subr.mxu0 0.0
  %3550 = vmatpush1.msra.mxu0 0.0
  %3551 = vmatprep.subr.mxu0 0.0
  %3552 = vmatpush1.msra.mxu0 0.0
  %3553 = vmatprep.subr.mxu0 0.0
  %3554 = vmatpush1.msra.mxu0 0.0
  %3555 = vmatprep.subr.mxu0 0.0
  %3556 = vmatpush1.msra.mxu0 0.0
  %3557 = vmatprep.subr.mxu0 0.0
  %3558 = vmatpush1.msra.mxu0 0.0
  %3559 = vmatprep.subr.mxu0 0.0
  %3560 = vmatpush1.msra.mxu0 0.0
  %3561 = vmatprep.subr.mxu0 0.0
  %3562 = vmatpush1.msra.mxu0 0.0
  %3563 = vmatprep.subr.mxu0 0.0
  %3564 = vmatpush1.msra.mxu0 0.0
  %3565 = vmatprep.subr.mxu0 0.0
  %3566 = vmatpush1.msra.mxu0 0.0
  %3567 = vmatprep.subr.mxu0 0.0
  %3568 = vmatpush1.msra.mxu0 0.0
  %3569 = vmatprep.subr.mxu0 %v1156
  %3570 = vmatpush1.msra.mxu0 %v1153
  %3571 = vmatprep.subr.mxu0 %v1123
  %3572 = vmatpush1.msra.mxu0 %v1122
  %3573 = vmatprep.subr.mxu0 %v1119
  %3574 = vmatpush1.msra.mxu0 %v1118
  %3575 = vmatprep.subr.mxu0 %v1115
  %3576 = vmatpush1.msra.mxu0 %v1114
  %3577 = vmatprep.subr.mxu0 0.0
  %3578 = vmatpush2.msra.mxu0 0.0
  %3579 = vmatprep.subr.mxu0 0.0
  %3580 = vmatpush2.msra.mxu0 0.0
  %3581 = vmatprep.subr.mxu0 0.0
  %3582 = vmatpush2.msra.mxu0 0.0
  %3583 = vmatprep.subr.mxu0 0.0
  %3584 = vmatpush2.msra.mxu0 0.0
  %3585 = vmatprep.subr.mxu0 0.0
  %3586 = vmatpush2.msra.mxu0 0.0
  %3587 = vmatprep.subr.mxu0 0.0
  %3588 = vmatpush2.msra.mxu0 0.0
  %3589 = vmatprep.subr.mxu0 0.0
  %3590 = vmatpush2.msra.mxu0 0.0
  %3591 = vmatprep.subr.mxu0 0.0
  %3592 = vmatpush2.msra.mxu0 0.0
  %3593 = vmatprep.subr.mxu0 0.0
  %3594 = vmatpush2.msra.mxu0 0.0
  %3595 = vmatprep.subr.mxu0 0.0
  %3596 = vmatpush2.msra.mxu0 0.0
  %3597 = vmatprep.subr.mxu0 0.0
  %3598 = vmatpush2.msra.mxu0 0.0
  %3599 = vmatprep.subr.mxu0 0.0
  %3600 = vmatpush2.msra.mxu0 0.0
  %3601 = vmatprep.subr.mxu0 0.0
  %3602 = vmatpush2.msra.mxu0 0.0
  %3603 = vmatprep.subr.mxu0 0.0
  %3604 = vmatpush2.msra.mxu0 0.0
  %3605 = vmatprep.subr.mxu0 0.0
  %3606 = vmatpush2.msra.mxu0 0.0
  %3607 = vmatprep.subr.mxu0 0.0
  %3608 = vmatpush2.msra.mxu0 0.0
  %3609 = vmatprep.mubr.f32.mxu0 0.0
  %3610 = vmatmul.mubr.f32.gmra.mxu0 %v3427
  %v3611 = vpop.f32.mrf.mxu0
  %v3612 = vadd.f32 0.0, %v3611
  %v3613 = vpop.f32.mrf.mxu0
  %v3614 = vadd.f32 0.0, %v3613
  %3615 = vmatprep.mubr.f32.mxu0 0.0
  %3616 = vmatmul.mubr.f32.gmra.mxu0 %v3430
  %v3617 = vpop.f32.mrf.mxu0
  %v3618 = vadd.f32 0.0, %v3617
  %v3619 = vpop.f32.mrf.mxu0
  %v3620 = vadd.f32 0.0, %v3619
  %3621 = vmatprep.mubr.f32.mxu0 0.0
  %3622 = vmatmul.mubr.f32.gmra.mxu0 %v3433
  %v3623 = vpop.f32.mrf.mxu0
  %v3624 = vadd.f32 0.0, %v3623
  %v3625 = vpop.f32.mrf.mxu0
  %v3626 = vadd.f32 0.0, %v3625
  %3627 = vmatprep.mubr.f32.mxu0 0.0
  %3628 = vmatmul.mubr.f32.gmra.mxu0 %v3436
  %v3629 = vpop.f32.mrf.mxu0
  %v3630 = vadd.f32 0.0, %v3629
  %v3631 = vpop.f32.mrf.mxu0
  %v3632 = vadd.f32 0.0, %v3631
  %3633 = vmatprep.mubr.f32.mxu0 0.0
  %3634 = vmatmul.mubr.f32.gmra.mxu0 %v3439
  %v3635 = vpop.f32.mrf.mxu0
  %v3636 = vadd.f32 0.0, %v3635
  %v3637 = vpop.f32.mrf.mxu0
  %v3638 = vadd.f32 0.0, %v3637
  %3639 = vmatprep.mubr.f32.mxu0 0.0
  %3640 = vmatmul.mubr.f32.gmra.mxu0 %v3442
  %v3641 = vpop.f32.mrf.mxu0
  %v3642 = vadd.f32 0.0, %v3641
  %v3643 = vpop.f32.mrf.mxu0
  %v3644 = vadd.f32 0.0, %v3643
  %3645 = vdwg.mxu0
  %v3646 = vadd.f32 %v3395, %v3511
  %v3647 = vadd.f32 %v3396, %v3513
  %v3648 = vadd.f32 %v3397, %v3612
  %v3649 = vadd.f32 %v3398, %v3614
  %v3650 = vadd.f32 %v3399, %v3517
  %v3651 = vadd.f32 %v3400, %v3519
  %v3652 = vadd.f32 %v3401, %v3618
  %v3653 = vadd.f32 %v3402, %v3620
  %v3654 = vadd.f32 %v3403, %v3523
  %v3655 = vadd.f32 %v3404, %v3525
  %v3656 = vadd.f32 %v3405, %v3624
  %v3657 = vadd.f32 %v3406, %v3626
  %v3658 = vadd.f32 %v3407, %v3529
  %v3659 = vadd.f32 %v3408, %v3531
  %v3660 = vadd.f32 %v3409, %v3630
  %v3661 = vadd.f32 %v3410, %v3632
  %v3662 = vadd.f32 %v3411, %v3535
  %v3663 = vadd.f32 %v3412, %v3537
  %v3664 = vadd.f32 %v3413, %v3636
  %v3665 = vadd.f32 %v3414, %v3638
  %v3666 = vadd.f32 %v3415, %v3541
  %v3667 = vadd.f32 %v3416, %v3543
  %v3668 = vadd.f32 %v3417, %v3642
  %v3669 = vadd.f32 %v3418, %v3644
  %3670 = vmatprep.subr.mxu0 0.0
  %3671 = vmatpush1.msra.mxu0 0.0
  %3672 = vmatprep.subr.mxu0 0.0
  %3673 = vmatpush1.msra.mxu0 0.0
  %3674 = vmatprep.subr.mxu0 0.0
  %3675 = vmatpush1.msra.mxu0 0.0
  %3676 = vmatprep.subr.mxu0 0.0
  %3677 = vmatpush1.msra.mxu0 0.0
  %3678 = vmatprep.subr.mxu0 0.0
  %3679 = vmatpush1.msra.mxu0 0.0
  %3680 = vmatprep.subr.mxu0 0.0
  %3681 = vmatpush1.msra.mxu0 0.0
  %3682 = vmatprep.subr.mxu0 0.0
  %3683 = vmatpush1.msra.mxu0 0.0
  %3684 = vmatprep.subr.mxu0 0.0
  %3685 = vmatpush1.msra.mxu0 0.0
  %3686 = vmatprep.subr.mxu0 0.0
  %3687 = vmatpush1.msra.mxu0 0.0
  %3688 = vmatprep.subr.mxu0 0.0
  %3689 = vmatpush1.msra.mxu0 0.0
  %3690 = vmatprep.subr.mxu0 0.0
  %3691 = vmatpush1.msra.mxu0 0.0
  %3692 = vmatprep.subr.mxu0 0.0
  %3693 = vmatpush1.msra.mxu0 0.0
  %3694 = vmatprep.subr.mxu0 %v102
  %3695 = vmatpush1.msra.mxu0 %v99
  %3696 = vmatprep.subr.mxu0 %v71
  %3697 = vmatpush1.msra.mxu0 %v70
  %3698 = vmatprep.subr.mxu0 %v67
  %3699 = vmatpush1.msra.mxu0 %v66
  %3700 = vmatprep.subr.mxu0 %v63
  %3701 = vmatpush1.msra.mxu0 %v62
  %3702 = vmatprep.subr.mxu0 0.0
  %3703 = vmatpush2.msra.mxu0 0.0
  %3704 = vmatprep.subr.mxu0 0.0
  %3705 = vmatpush2.msra.mxu0 0.0
  %3706 = vmatprep.subr.mxu0 0.0
  %3707 = vmatpush2.msra.mxu0 0.0
  %3708 = vmatprep.subr.mxu0 0.0
  %3709 = vmatpush2.msra.mxu0 0.0
  %3710 = vmatprep.subr.mxu0 0.0
  %3711 = vmatpush2.msra.mxu0 0.0
  %3712 = vmatprep.subr.mxu0 0.0
  %3713 = vmatpush2.msra.mxu0 0.0
  %3714 = vmatprep.subr.mxu0 0.0
  %3715 = vmatpush2.msra.mxu0 0.0
  %3716 = vmatprep.subr.mxu0 0.0
  %3717 = vmatpush2.msra.mxu0 0.0
  %3718 = vmatprep.subr.mxu0 0.0
  %3719 = vmatpush2.msra.mxu0 0.0
  %3720 = vmatprep.subr.mxu0 0.0
  %3721 = vmatpush2.msra.mxu0 0.0
  %3722 = vmatprep.subr.mxu0 0.0
  %3723 = vmatpush2.msra.mxu0 0.0
  %3724 = vmatprep.subr.mxu0 0.0
  %3725 = vmatpush2.msra.mxu0 0.0
  %3726 = vmatprep.subr.mxu0 0.0
  %3727 = vmatpush2.msra.mxu0 0.0
  %3728 = vmatprep.subr.mxu0 0.0
  %3729 = vmatpush2.msra.mxu0 0.0
  %3730 = vmatprep.subr.mxu0 0.0
  %3731 = vmatpush2.msra.mxu0 0.0
  %3732 = vmatprep.subr.mxu0 0.0
  %3733 = vmatpush2.msra.mxu0 0.0
  %3734 = vmatprep.mubr.f32.mxu0 0.0
  %3735 = vmatmul.mubr.f32.gmra.mxu0 %v1129
  %v3736 = vpop.f32.mrf.mxu0
  %v3737 = vadd.f32 0.0, %v3736
  %v3738 = vpop.f32.mrf.mxu0
  %v3739 = vadd.f32 0.0, %v3738
  %3740 = vmatprep.mubr.f32.mxu0 0.0
  %3741 = vmatmul.mubr.f32.gmra.mxu0 %v1132
  %v3742 = vpop.f32.mrf.mxu0
  %v3743 = vadd.f32 0.0, %v3742
  %v3744 = vpop.f32.mrf.mxu0
  %v3745 = vadd.f32 0.0, %v3744
  %3746 = vmatprep.mubr.f32.mxu0 0.0
  %3747 = vmatmul.mubr.f32.gmra.mxu0 %v1135
  %v3748 = vpop.f32.mrf.mxu0
  %v3749 = vadd.f32 0.0, %v3748
  %v3750 = vpop.f32.mrf.mxu0
  %v3751 = vadd.f32 0.0, %v3750
  %3752 = vmatprep.mubr.f32.mxu0 0.0
  %3753 = vmatmul.mubr.f32.gmra.mxu0 %v1138
  %v3754 = vpop.f32.mrf.mxu0
  %v3755 = vadd.f32 0.0, %v3754
  %v3756 = vpop.f32.mrf.mxu0
  %v3757 = vadd.f32 0.0, %v3756
  %3758 = vmatprep.mubr.f32.mxu0 0.0
  %3759 = vmatmul.mubr.f32.gmra.mxu0 %v1141
  %v3760 = vpop.f32.mrf.mxu0
  %v3761 = vadd.f32 0.0, %v3760
  %v3762 = vpop.f32.mrf.mxu0
  %v3763 = vadd.f32 0.0, %v3762
  %3764 = vmatprep.mubr.f32.mxu0 0.0
  %3765 = vmatmul.mubr.f32.gmra.mxu0 %v1144
  %v3766 = vpop.f32.mrf.mxu0
  %v3767 = vadd.f32 0.0, %v3766
  %v3768 = vpop.f32.mrf.mxu0
  %v3769 = vadd.f32 0.0, %v3768
  %3770 = vdwg.mxu0
  %3771 = vmatprep.subr.mxu0 0.0
  %3772 = vmatpush1.msra.mxu0 0.0
  %3773 = vmatprep.subr.mxu0 0.0
  %3774 = vmatpush1.msra.mxu0 0.0
  %3775 = vmatprep.subr.mxu0 0.0
  %3776 = vmatpush1.msra.mxu0 0.0
  %3777 = vmatprep.subr.mxu0 0.0
  %3778 = vmatpush1.msra.mxu0 0.0
  %3779 = vmatprep.subr.mxu0 0.0
  %3780 = vmatpush1.msra.mxu0 0.0
  %3781 = vmatprep.subr.mxu0 0.0
  %3782 = vmatpush1.msra.mxu0 0.0
  %3783 = vmatprep.subr.mxu0 0.0
  %3784 = vmatpush1.msra.mxu0 0.0
  %3785 = vmatprep.subr.mxu0 0.0
  %3786 = vmatpush1.msra.mxu0 0.0
  %3787 = vmatprep.subr.mxu0 0.0
  %3788 = vmatpush1.msra.mxu0 0.0
  %3789 = vmatprep.subr.mxu0 0.0
  %3790 = vmatpush1.msra.mxu0 0.0
  %3791 = vmatprep.subr.mxu0 0.0
  %3792 = vmatpush1.msra.mxu0 0.0
  %3793 = vmatprep.subr.mxu0 0.0
  %3794 = vmatpush1.msra.mxu0 0.0
  %3795 = vmatprep.subr.mxu0 %v108
  %3796 = vmatpush1.msra.mxu0 %v105
  %3797 = vmatprep.subr.mxu0 %v73
  %3798 = vmatpush1.msra.mxu0 %v72
  %3799 = vmatprep.subr.mxu0 %v69
  %3800 = vmatpush1.msra.mxu0 %v68
  %3801 = vmatprep.subr.mxu0 %v65
  %3802 = vmatpush1.msra.mxu0 %v64
  %3803 = vmatprep.subr.mxu0 0.0
  %3804 = vmatpush2.msra.mxu0 0.0
  %3805 = vmatprep.subr.mxu0 0.0
  %3806 = vmatpush2.msra.mxu0 0.0
  %3807 = vmatprep.subr.mxu0 0.0
  %3808 = vmatpush2.msra.mxu0 0.0
  %3809 = vmatprep.subr.mxu0 0.0
  %3810 = vmatpush2.msra.mxu0 0.0
  %3811 = vmatprep.subr.mxu0 0.0
  %3812 = vmatpush2.msra.mxu0 0.0
  %3813 = vmatprep.subr.mxu0 0.0
  %3814 = vmatpush2.msra.mxu0 0.0
  %3815 = vmatprep.subr.mxu0 0.0
  %3816 = vmatpush2.msra.mxu0 0.0
  %3817 = vmatprep.subr.mxu0 0.0
  %3818 = vmatpush2.msra.mxu0 0.0
  %3819 = vmatprep.subr.mxu0 0.0
  %3820 = vmatpush2.msra.mxu0 0.0
  %3821 = vmatprep.subr.mxu0 0.0
  %3822 = vmatpush2.msra.mxu0 0.0
  %3823 = vmatprep.subr.mxu0 0.0
  %3824 = vmatpush2.msra.mxu0 0.0
  %3825 = vmatprep.subr.mxu0 0.0
  %3826 = vmatpush2.msra.mxu0 0.0
  %3827 = vmatprep.subr.mxu0 0.0
  %3828 = vmatpush2.msra.mxu0 0.0
  %3829 = vmatprep.subr.mxu0 0.0
  %3830 = vmatpush2.msra.mxu0 0.0
  %3831 = vmatprep.subr.mxu0 0.0
  %3832 = vmatpush2.msra.mxu0 0.0
  %3833 = vmatprep.subr.mxu0 0.0
  %3834 = vmatpush2.msra.mxu0 0.0
  %3835 = vmatprep.mubr.f32.mxu0 0.0
  %3836 = vmatmul.mubr.f32.gmra.mxu0 %v1129
  %v3837 = vpop.f32.mrf.mxu0
  %v3838 = vadd.f32 0.0, %v3837
  %v3839 = vpop.f32.mrf.mxu0
  %v3840 = vadd.f32 0.0, %v3839
  %3841 = vmatprep.mubr.f32.mxu0 0.0
  %3842 = vmatmul.mubr.f32.gmra.mxu0 %v1132
  %v3843 = vpop.f32.mrf.mxu0
  %v3844 = vadd.f32 0.0, %v3843
  %v3845 = vpop.f32.mrf.mxu0
  %v3846 = vadd.f32 0.0, %v3845
  %3847 = vmatprep.mubr.f32.mxu0 0.0
  %3848 = vmatmul.mubr.f32.gmra.mxu0 %v1135
  %v3849 = vpop.f32.mrf.mxu0
  %v3850 = vadd.f32 0.0, %v3849
  %v3851 = vpop.f32.mrf.mxu0
  %v3852 = vadd.f32 0.0, %v3851
  %3853 = vmatprep.mubr.f32.mxu0 0.0
  %3854 = vmatmul.mubr.f32.gmra.mxu0 %v1138
  %v3855 = vpop.f32.mrf.mxu0
  %v3856 = vadd.f32 0.0, %v3855
  %v3857 = vpop.f32.mrf.mxu0
  %v3858 = vadd.f32 0.0, %v3857
  %3859 = vmatprep.mubr.f32.mxu0 0.0
  %3860 = vmatmul.mubr.f32.gmra.mxu0 %v1141
  %v3861 = vpop.f32.mrf.mxu0
  %v3862 = vadd.f32 0.0, %v3861
  %v3863 = vpop.f32.mrf.mxu0
  %v3864 = vadd.f32 0.0, %v3863
  %3865 = vmatprep.mubr.f32.mxu0 0.0
  %3866 = vmatmul.mubr.f32.gmra.mxu0 %v1144
  %v3867 = vpop.f32.mrf.mxu0
  %v3868 = vadd.f32 0.0, %v3867
  %v3869 = vpop.f32.mrf.mxu0
  %v3870 = vadd.f32 0.0, %v3869
  %3871 = vdwg.mxu0
  %3872 = vmatprep.subr.mxu0 0.0
  %3873 = vmatpush1.msra.mxu0 0.0
  %3874 = vmatprep.subr.mxu0 0.0
  %3875 = vmatpush1.msra.mxu0 0.0
  %3876 = vmatprep.subr.mxu0 0.0
  %3877 = vmatpush1.msra.mxu0 0.0
  %3878 = vmatprep.subr.mxu0 0.0
  %3879 = vmatpush1.msra.mxu0 0.0
  %3880 = vmatprep.subr.mxu0 0.0
  %3881 = vmatpush1.msra.mxu0 0.0
  %3882 = vmatprep.subr.mxu0 0.0
  %3883 = vmatpush1.msra.mxu0 0.0
  %3884 = vmatprep.subr.mxu0 0.0
  %3885 = vmatpush1.msra.mxu0 0.0
  %3886 = vmatprep.subr.mxu0 0.0
  %3887 = vmatpush1.msra.mxu0 0.0
  %3888 = vmatprep.subr.mxu0 0.0
  %3889 = vmatpush1.msra.mxu0 0.0
  %3890 = vmatprep.subr.mxu0 0.0
  %3891 = vmatpush1.msra.mxu0 0.0
  %3892 = vmatprep.subr.mxu0 0.0
  %3893 = vmatpush1.msra.mxu0 0.0
  %3894 = vmatprep.subr.mxu0 0.0
  %3895 = vmatpush1.msra.mxu0 0.0
  %3896 = vmatprep.subr.mxu0 %v334
  %3897 = vmatpush1.msra.mxu0 %v331
  %3898 = vmatprep.subr.mxu0 %v47
  %3899 = vmatpush1.msra.mxu0 %v46
  %3900 = vmatprep.subr.mxu0 %v43
  %3901 = vmatpush1.msra.mxu0 %v42
  %3902 = vmatprep.subr.mxu0 %v39
  %3903 = vmatpush1.msra.mxu0 %v38
  %3904 = vmatprep.subr.mxu0 0.0
  %3905 = vmatpush2.msra.mxu0 0.0
  %3906 = vmatprep.subr.mxu0 0.0
  %3907 = vmatpush2.msra.mxu0 0.0
  %3908 = vmatprep.subr.mxu0 0.0
  %3909 = vmatpush2.msra.mxu0 0.0
  %3910 = vmatprep.subr.mxu0 0.0
  %3911 = vmatpush2.msra.mxu0 0.0
  %3912 = vmatprep.subr.mxu0 0.0
  %3913 = vmatpush2.msra.mxu0 0.0
  %3914 = vmatprep.subr.mxu0 0.0
  %3915 = vmatpush2.msra.mxu0 0.0
  %3916 = vmatprep.subr.mxu0 0.0
  %3917 = vmatpush2.msra.mxu0 0.0
  %3918 = vmatprep.subr.mxu0 0.0
  %3919 = vmatpush2.msra.mxu0 0.0
  %3920 = vmatprep.subr.mxu0 0.0
  %3921 = vmatpush2.msra.mxu0 0.0
  %3922 = vmatprep.subr.mxu0 0.0
  %3923 = vmatpush2.msra.mxu0 0.0
  %3924 = vmatprep.subr.mxu0 0.0
  %3925 = vmatpush2.msra.mxu0 0.0
  %3926 = vmatprep.subr.mxu0 0.0
  %3927 = vmatpush2.msra.mxu0 0.0
  %3928 = vmatprep.subr.mxu0 0.0
  %3929 = vmatpush2.msra.mxu0 0.0
  %3930 = vmatprep.subr.mxu0 0.0
  %3931 = vmatpush2.msra.mxu0 0.0
  %3932 = vmatprep.subr.mxu0 0.0
  %3933 = vmatpush2.msra.mxu0 0.0
  %3934 = vmatprep.subr.mxu0 0.0
  %3935 = vmatpush2.msra.mxu0 0.0
  %3936 = vmatprep.mubr.f32.mxu0 0.0
  %3937 = vmatmul.mubr.f32.gmra.mxu0 %v849
  %v3938 = vpop.f32.mrf.mxu0
  %v3939 = vadd.f32 %v3737, %v3938
  %v3940 = vpop.f32.mrf.mxu0
  %v3941 = vadd.f32 %v3739, %v3940
  %3942 = vmatprep.mubr.f32.mxu0 0.0
  %3943 = vmatmul.mubr.f32.gmra.mxu0 %v852
  %v3944 = vpop.f32.mrf.mxu0
  %v3945 = vadd.f32 %v3743, %v3944
  %v3946 = vpop.f32.mrf.mxu0
  %v3947 = vadd.f32 %v3745, %v3946
  %3948 = vmatprep.mubr.f32.mxu0 0.0
  %3949 = vmatmul.mubr.f32.gmra.mxu0 %v855
  %v3950 = vpop.f32.mrf.mxu0
  %v3951 = vadd.f32 %v3749, %v3950
  %v3952 = vpop.f32.mrf.mxu0
  %v3953 = vadd.f32 %v3751, %v3952
  %3954 = vmatprep.mubr.f32.mxu0 0.0
  %3955 = vmatmul.mubr.f32.gmra.mxu0 %v858
  %v3956 = vpop.f32.mrf.mxu0
  %v3957 = vadd.f32 %v3755, %v3956
  %v3958 = vpop.f32.mrf.mxu0
  %v3959 = vadd.f32 %v3757, %v3958
  %3960 = vmatprep.mubr.f32.mxu0 0.0
  %3961 = vmatmul.mubr.f32.gmra.mxu0 %v861
  %v3962 = vpop.f32.mrf.mxu0
  %v3963 = vadd.f32 %v3761, %v3962
  %v3964 = vpop.f32.mrf.mxu0
  %v3965 = vadd.f32 %v3763, %v3964
  %3966 = vmatprep.mubr.f32.mxu0 0.0
  %3967 = vmatmul.mubr.f32.gmra.mxu0 %v864
  %v3968 = vpop.f32.mrf.mxu0
  %v3969 = vadd.f32 %v3767, %v3968
  %v3970 = vpop.f32.mrf.mxu0
  %v3971 = vadd.f32 %v3769, %v3970
  %3972 = vdwg.mxu0
  %3973 = vmatprep.subr.mxu0 0.0
  %3974 = vmatpush1.msra.mxu0 0.0
  %3975 = vmatprep.subr.mxu0 0.0
  %3976 = vmatpush1.msra.mxu0 0.0
  %3977 = vmatprep.subr.mxu0 0.0
  %3978 = vmatpush1.msra.mxu0 0.0
  %3979 = vmatprep.subr.mxu0 0.0
  %3980 = vmatpush1.msra.mxu0 0.0
  %3981 = vmatprep.subr.mxu0 0.0
  %3982 = vmatpush1.msra.mxu0 0.0
  %3983 = vmatprep.subr.mxu0 0.0
  %3984 = vmatpush1.msra.mxu0 0.0
  %3985 = vmatprep.subr.mxu0 0.0
  %3986 = vmatpush1.msra.mxu0 0.0
  %3987 = vmatprep.subr.mxu0 0.0
  %3988 = vmatpush1.msra.mxu0 0.0
  %3989 = vmatprep.subr.mxu0 0.0
  %3990 = vmatpush1.msra.mxu0 0.0
  %3991 = vmatprep.subr.mxu0 0.0
  %3992 = vmatpush1.msra.mxu0 0.0
  %3993 = vmatprep.subr.mxu0 0.0
  %3994 = vmatpush1.msra.mxu0 0.0
  %3995 = vmatprep.subr.mxu0 0.0
  %3996 = vmatpush1.msra.mxu0 0.0
  %3997 = vmatprep.subr.mxu0 %v340
  %3998 = vmatpush1.msra.mxu0 %v337
  %3999 = vmatprep.subr.mxu0 %v49
  %4000 = vmatpush1.msra.mxu0 %v48
  %4001 = vmatprep.subr.mxu0 %v45
  %4002 = vmatpush1.msra.mxu0 %v44
  %4003 = vmatprep.subr.mxu0 %v41
  %4004 = vmatpush1.msra.mxu0 %v40
  %4005 = vmatprep.subr.mxu0 0.0
  %4006 = vmatpush2.msra.mxu0 0.0
  %4007 = vmatprep.subr.mxu0 0.0
  %4008 = vmatpush2.msra.mxu0 0.0
  %4009 = vmatprep.subr.mxu0 0.0
  %4010 = vmatpush2.msra.mxu0 0.0
  %4011 = vmatprep.subr.mxu0 0.0
  %4012 = vmatpush2.msra.mxu0 0.0
  %4013 = vmatprep.subr.mxu0 0.0
  %4014 = vmatpush2.msra.mxu0 0.0
  %4015 = vmatprep.subr.mxu0 0.0
  %4016 = vmatpush2.msra.mxu0 0.0
  %4017 = vmatprep.subr.mxu0 0.0
  %4018 = vmatpush2.msra.mxu0 0.0
  %4019 = vmatprep.subr.mxu0 0.0
  %4020 = vmatpush2.msra.mxu0 0.0
  %4021 = vmatprep.subr.mxu0 0.0
  %4022 = vmatpush2.msra.mxu0 0.0
  %4023 = vmatprep.subr.mxu0 0.0
  %4024 = vmatpush2.msra.mxu0 0.0
  %4025 = vmatprep.subr.mxu0 0.0
  %4026 = vmatpush2.msra.mxu0 0.0
  %4027 = vmatprep.subr.mxu0 0.0
  %4028 = vmatpush2.msra.mxu0 0.0
  %4029 = vmatprep.subr.mxu0 0.0
  %4030 = vmatpush2.msra.mxu0 0.0
  %4031 = vmatprep.subr.mxu0 0.0
  %4032 = vmatpush2.msra.mxu0 0.0
  %4033 = vmatprep.subr.mxu0 0.0
  %4034 = vmatpush2.msra.mxu0 0.0
  %4035 = vmatprep.subr.mxu0 0.0
  %4036 = vmatpush2.msra.mxu0 0.0
  %4037 = vmatprep.mubr.f32.mxu0 0.0
  %4038 = vmatmul.mubr.f32.gmra.mxu0 %v849
  %v4039 = vpop.f32.mrf.mxu0
  %v4040 = vadd.f32 %v3838, %v4039
  %v4041 = vpop.f32.mrf.mxu0
  %v4042 = vadd.f32 %v3840, %v4041
  %4043 = vmatprep.mubr.f32.mxu0 0.0
  %4044 = vmatmul.mubr.f32.gmra.mxu0 %v852
  %v4045 = vpop.f32.mrf.mxu0
  %v4046 = vadd.f32 %v3844, %v4045
  %v4047 = vpop.f32.mrf.mxu0
  %v4048 = vadd.f32 %v3846, %v4047
  %4049 = vmatprep.mubr.f32.mxu0 0.0
  %4050 = vmatmul.mubr.f32.gmra.mxu0 %v855
  %v4051 = vpop.f32.mrf.mxu0
  %v4052 = vadd.f32 %v3850, %v4051
  %v4053 = vpop.f32.mrf.mxu0
  %v4054 = vadd.f32 %v3852, %v4053
  %4055 = vmatprep.mubr.f32.mxu0 0.0
  %4056 = vmatmul.mubr.f32.gmra.mxu0 %v858
  %v4057 = vpop.f32.mrf.mxu0
  %v4058 = vadd.f32 %v3856, %v4057
  %v4059 = vpop.f32.mrf.mxu0
  %v4060 = vadd.f32 %v3858, %v4059
  %4061 = vmatprep.mubr.f32.mxu0 0.0
  %4062 = vmatmul.mubr.f32.gmra.mxu0 %v861
  %v4063 = vpop.f32.mrf.mxu0
  %v4064 = vadd.f32 %v3862, %v4063
  %v4065 = vpop.f32.mrf.mxu0
  %v4066 = vadd.f32 %v3864, %v4065
  %4067 = vmatprep.mubr.f32.mxu0 0.0
  %4068 = vmatmul.mubr.f32.gmra.mxu0 %v864
  %v4069 = vpop.f32.mrf.mxu0
  %v4070 = vadd.f32 %v3868, %v4069
  %v4071 = vpop.f32.mrf.mxu0
  %v4072 = vadd.f32 %v3870, %v4071
  %4073 = vdwg.mxu0
  %4074 = vmatprep.subr.mxu0 0.0
  %4075 = vmatpush1.msra.mxu0 0.0
  %4076 = vmatprep.subr.mxu0 0.0
  %4077 = vmatpush1.msra.mxu0 0.0
  %4078 = vmatprep.subr.mxu0 0.0
  %4079 = vmatpush1.msra.mxu0 0.0
  %4080 = vmatprep.subr.mxu0 0.0
  %4081 = vmatpush1.msra.mxu0 0.0
  %4082 = vmatprep.subr.mxu0 0.0
  %4083 = vmatpush1.msra.mxu0 0.0
  %4084 = vmatprep.subr.mxu0 0.0
  %4085 = vmatpush1.msra.mxu0 0.0
  %4086 = vmatprep.subr.mxu0 0.0
  %4087 = vmatpush1.msra.mxu0 0.0
  %4088 = vmatprep.subr.mxu0 0.0
  %4089 = vmatpush1.msra.mxu0 0.0
  %4090 = vmatprep.subr.mxu0 0.0
  %4091 = vmatpush1.msra.mxu0 0.0
  %4092 = vmatprep.subr.mxu0 0.0
  %4093 = vmatpush1.msra.mxu0 0.0
  %4094 = vmatprep.subr.mxu0 0.0
  %4095 = vmatpush1.msra.mxu0 0.0
  %4096 = vmatprep.subr.mxu0 0.0
  %4097 = vmatpush1.msra.mxu0 0.0
  %4098 = vmatprep.subr.mxu0 %v590
  %4099 = vmatpush1.msra.mxu0 %v587
  %4100 = vmatprep.subr.mxu0 %v561
  %4101 = vmatpush1.msra.mxu0 %v560
  %4102 = vmatprep.subr.mxu0 %v557
  %4103 = vmatpush1.msra.mxu0 %v556
  %4104 = vmatprep.subr.mxu0 %v553
  %4105 = vmatpush1.msra.mxu0 %v552
  %4106 = vmatprep.subr.mxu0 0.0
  %4107 = vmatpush2.msra.mxu0 0.0
  %4108 = vmatprep.subr.mxu0 0.0
  %4109 = vmatpush2.msra.mxu0 0.0
  %4110 = vmatprep.subr.mxu0 0.0
  %4111 = vmatpush2.msra.mxu0 0.0
  %4112 = vmatprep.subr.mxu0 0.0
  %4113 = vmatpush2.msra.mxu0 0.0
  %4114 = vmatprep.subr.mxu0 0.0
  %4115 = vmatpush2.msra.mxu0 0.0
  %4116 = vmatprep.subr.mxu0 0.0
  %4117 = vmatpush2.msra.mxu0 0.0
  %4118 = vmatprep.subr.mxu0 0.0
  %4119 = vmatpush2.msra.mxu0 0.0
  %4120 = vmatprep.subr.mxu0 0.0
  %4121 = vmatpush2.msra.mxu0 0.0
  %4122 = vmatprep.subr.mxu0 0.0
  %4123 = vmatpush2.msra.mxu0 0.0
  %4124 = vmatprep.subr.mxu0 0.0
  %4125 = vmatpush2.msra.mxu0 0.0
  %4126 = vmatprep.subr.mxu0 0.0
  %4127 = vmatpush2.msra.mxu0 0.0
  %4128 = vmatprep.subr.mxu0 0.0
  %4129 = vmatpush2.msra.mxu0 0.0
  %4130 = vmatprep.subr.mxu0 0.0
  %4131 = vmatpush2.msra.mxu0 0.0
  %4132 = vmatprep.subr.mxu0 0.0
  %4133 = vmatpush2.msra.mxu0 0.0
  %4134 = vmatprep.subr.mxu0 0.0
  %4135 = vmatpush2.msra.mxu0 0.0
  %4136 = vmatprep.subr.mxu0 0.0
  %4137 = vmatpush2.msra.mxu0 0.0
  %4138 = vmatprep.mubr.f32.mxu0 0.0
  %4139 = vmatmul.mubr.f32.gmra.mxu0 %v2248
  %v4140 = vpop.f32.mrf.mxu0
  %v4141 = vadd.f32 0.0, %v4140
  %v4142 = vpop.f32.mrf.mxu0
  %v4143 = vadd.f32 0.0, %v4142
  %4144 = vmatprep.mubr.f32.mxu0 0.0
  %4145 = vmatmul.mubr.f32.gmra.mxu0 %v2251
  %v4146 = vpop.f32.mrf.mxu0
  %v4147 = vadd.f32 0.0, %v4146
  %v4148 = vpop.f32.mrf.mxu0
  %v4149 = vadd.f32 0.0, %v4148
  %4150 = vmatprep.mubr.f32.mxu0 0.0
  %4151 = vmatmul.mubr.f32.gmra.mxu0 %v2254
  %v4152 = vpop.f32.mrf.mxu0
  %v4153 = vadd.f32 0.0, %v4152
  %v4154 = vpop.f32.mrf.mxu0
  %v4155 = vadd.f32 0.0, %v4154
  %4156 = vmatprep.mubr.f32.mxu0 0.0
  %4157 = vmatmul.mubr.f32.gmra.mxu0 %v2257
  %v4158 = vpop.f32.mrf.mxu0
  %v4159 = vadd.f32 0.0, %v4158
  %v4160 = vpop.f32.mrf.mxu0
  %v4161 = vadd.f32 0.0, %v4160
  %4162 = vmatprep.mubr.f32.mxu0 0.0
  %4163 = vmatmul.mubr.f32.gmra.mxu0 %v2260
  %v4164 = vpop.f32.mrf.mxu0
  %v4165 = vadd.f32 0.0, %v4164
  %v4166 = vpop.f32.mrf.mxu0
  %v4167 = vadd.f32 0.0, %v4166
  %4168 = vmatprep.mubr.f32.mxu0 0.0
  %4169 = vmatmul.mubr.f32.gmra.mxu0 %v2263
  %v4170 = vpop.f32.mrf.mxu0
  %v4171 = vadd.f32 0.0, %v4170
  %v4172 = vpop.f32.mrf.mxu0
  %v4173 = vadd.f32 0.0, %v4172
  %4174 = vdwg.mxu0
  %4175 = vmatprep.subr.mxu0 0.0
  %4176 = vmatpush1.msra.mxu0 0.0
  %4177 = vmatprep.subr.mxu0 0.0
  %4178 = vmatpush1.msra.mxu0 0.0
  %4179 = vmatprep.subr.mxu0 0.0
  %4180 = vmatpush1.msra.mxu0 0.0
  %4181 = vmatprep.subr.mxu0 0.0
  %4182 = vmatpush1.msra.mxu0 0.0
  %4183 = vmatprep.subr.mxu0 0.0
  %4184 = vmatpush1.msra.mxu0 0.0
  %4185 = vmatprep.subr.mxu0 0.0
  %4186 = vmatpush1.msra.mxu0 0.0
  %4187 = vmatprep.subr.mxu0 0.0
  %4188 = vmatpush1.msra.mxu0 0.0
  %4189 = vmatprep.subr.mxu0 0.0
  %4190 = vmatpush1.msra.mxu0 0.0
  %4191 = vmatprep.subr.mxu0 0.0
  %4192 = vmatpush1.msra.mxu0 0.0
  %4193 = vmatprep.subr.mxu0 0.0
  %4194 = vmatpush1.msra.mxu0 0.0
  %4195 = vmatprep.subr.mxu0 0.0
  %4196 = vmatpush1.msra.mxu0 0.0
  %4197 = vmatprep.subr.mxu0 0.0
  %4198 = vmatpush1.msra.mxu0 0.0
  %4199 = vmatprep.subr.mxu0 %v596
  %4200 = vmatpush1.msra.mxu0 %v593
  %4201 = vmatprep.subr.mxu0 %v563
  %4202 = vmatpush1.msra.mxu0 %v562
  %4203 = vmatprep.subr.mxu0 %v559
  %4204 = vmatpush1.msra.mxu0 %v558
  %4205 = vmatprep.subr.mxu0 %v555
  %4206 = vmatpush1.msra.mxu0 %v554
  %4207 = vmatprep.subr.mxu0 0.0
  %4208 = vmatpush2.msra.mxu0 0.0
  %4209 = vmatprep.subr.mxu0 0.0
  %4210 = vmatpush2.msra.mxu0 0.0
  %4211 = vmatprep.subr.mxu0 0.0
  %4212 = vmatpush2.msra.mxu0 0.0
  %4213 = vmatprep.subr.mxu0 0.0
  %4214 = vmatpush2.msra.mxu0 0.0
  %4215 = vmatprep.subr.mxu0 0.0
  %4216 = vmatpush2.msra.mxu0 0.0
  %4217 = vmatprep.subr.mxu0 0.0
  %4218 = vmatpush2.msra.mxu0 0.0
  %4219 = vmatprep.subr.mxu0 0.0
  %4220 = vmatpush2.msra.mxu0 0.0
  %4221 = vmatprep.subr.mxu0 0.0
  %4222 = vmatpush2.msra.mxu0 0.0
  %4223 = vmatprep.subr.mxu0 0.0
  %4224 = vmatpush2.msra.mxu0 0.0
  %4225 = vmatprep.subr.mxu0 0.0
  %4226 = vmatpush2.msra.mxu0 0.0
  %4227 = vmatprep.subr.mxu0 0.0
  %4228 = vmatpush2.msra.mxu0 0.0
  %4229 = vmatprep.subr.mxu0 0.0
  %4230 = vmatpush2.msra.mxu0 0.0
  %4231 = vmatprep.subr.mxu0 0.0
  %4232 = vmatpush2.msra.mxu0 0.0
  %4233 = vmatprep.subr.mxu0 0.0
  %4234 = vmatpush2.msra.mxu0 0.0
  %4235 = vmatprep.subr.mxu0 0.0
  %4236 = vmatpush2.msra.mxu0 0.0
  %4237 = vmatprep.subr.mxu0 0.0
  %4238 = vmatpush2.msra.mxu0 0.0
  %4239 = vmatprep.mubr.f32.mxu0 0.0
  %4240 = vmatmul.mubr.f32.gmra.mxu0 %v2248
  %v4241 = vpop.f32.mrf.mxu0
  %v4242 = vadd.f32 0.0, %v4241
  %v4243 = vpop.f32.mrf.mxu0
  %v4244 = vadd.f32 0.0, %v4243
  %4245 = vmatprep.mubr.f32.mxu0 0.0
  %4246 = vmatmul.mubr.f32.gmra.mxu0 %v2251
  %v4247 = vpop.f32.mrf.mxu0
  %v4248 = vadd.f32 0.0, %v4247
  %v4249 = vpop.f32.mrf.mxu0
  %v4250 = vadd.f32 0.0, %v4249
  %4251 = vmatprep.mubr.f32.mxu0 0.0
  %4252 = vmatmul.mubr.f32.gmra.mxu0 %v2254
  %v4253 = vpop.f32.mrf.mxu0
  %v4254 = vadd.f32 0.0, %v4253
  %v4255 = vpop.f32.mrf.mxu0
  %v4256 = vadd.f32 0.0, %v4255
  %4257 = vmatprep.mubr.f32.mxu0 0.0
  %4258 = vmatmul.mubr.f32.gmra.mxu0 %v2257
  %v4259 = vpop.f32.mrf.mxu0
  %v4260 = vadd.f32 0.0, %v4259
  %v4261 = vpop.f32.mrf.mxu0
  %v4262 = vadd.f32 0.0, %v4261
  %4263 = vmatprep.mubr.f32.mxu0 0.0
  %4264 = vmatmul.mubr.f32.gmra.mxu0 %v2260
  %v4265 = vpop.f32.mrf.mxu0
  %v4266 = vadd.f32 0.0, %v4265
  %v4267 = vpop.f32.mrf.mxu0
  %v4268 = vadd.f32 0.0, %v4267
  %4269 = vmatprep.mubr.f32.mxu0 0.0
  %4270 = vmatmul.mubr.f32.gmra.mxu0 %v2263
  %v4271 = vpop.f32.mrf.mxu0
  %v4272 = vadd.f32 0.0, %v4271
  %v4273 = vpop.f32.mrf.mxu0
  %v4274 = vadd.f32 0.0, %v4273
  %4275 = vdwg.mxu0
  %v4276 = vadd.f32 %v3939, %v4141
  %v4277 = vadd.f32 %v3941, %v4143
  %v4278 = vadd.f32 %v4040, %v4242
  %v4279 = vadd.f32 %v4042, %v4244
  %v4280 = vadd.f32 %v3945, %v4147
  %v4281 = vadd.f32 %v3947, %v4149
  %v4282 = vadd.f32 %v4046, %v4248
  %v4283 = vadd.f32 %v4048, %v4250
  %v4284 = vadd.f32 %v3951, %v4153
  %v4285 = vadd.f32 %v3953, %v4155
  %v4286 = vadd.f32 %v4052, %v4254
  %v4287 = vadd.f32 %v4054, %v4256
  %v4288 = vadd.f32 %v3957, %v4159
  %v4289 = vadd.f32 %v3959, %v4161
  %v4290 = vadd.f32 %v4058, %v4260
  %v4291 = vadd.f32 %v4060, %v4262
  %v4292 = vadd.f32 %v3963, %v4165
  %v4293 = vadd.f32 %v3965, %v4167
  %v4294 = vadd.f32 %v4064, %v4266
  %v4295 = vadd.f32 %v4066, %v4268
  %v4296 = vadd.f32 %v3969, %v4171
  %v4297 = vadd.f32 %v3971, %v4173
  %v4298 = vadd.f32 %v4070, %v4272
  %v4299 = vadd.f32 %v4072, %v4274
  %4300 = vmatprep.subr.mxu0 0.0
  %4301 = vmatpush1.msra.mxu0 0.0
  %4302 = vmatprep.subr.mxu0 0.0
  %4303 = vmatpush1.msra.mxu0 0.0
  %4304 = vmatprep.subr.mxu0 0.0
  %4305 = vmatpush1.msra.mxu0 0.0
  %4306 = vmatprep.subr.mxu0 0.0
  %4307 = vmatpush1.msra.mxu0 0.0
  %4308 = vmatprep.subr.mxu0 0.0
  %4309 = vmatpush1.msra.mxu0 0.0
  %4310 = vmatprep.subr.mxu0 0.0
  %4311 = vmatpush1.msra.mxu0 0.0
  %4312 = vmatprep.subr.mxu0 0.0
  %4313 = vmatpush1.msra.mxu0 0.0
  %4314 = vmatprep.subr.mxu0 0.0
  %4315 = vmatpush1.msra.mxu0 0.0
  %4316 = vmatprep.subr.mxu0 0.0
  %4317 = vmatpush1.msra.mxu0 0.0
  %4318 = vmatprep.subr.mxu0 0.0
  %4319 = vmatpush1.msra.mxu0 0.0
  %4320 = vmatprep.subr.mxu0 0.0
  %4321 = vmatpush1.msra.mxu0 0.0
  %4322 = vmatprep.subr.mxu0 0.0
  %4323 = vmatpush1.msra.mxu0 0.0
  %4324 = vmatprep.subr.mxu0 %v870
  %4325 = vmatpush1.msra.mxu0 %v867
  %4326 = vmatprep.subr.mxu0 %v841
  %4327 = vmatpush1.msra.mxu0 %v840
  %4328 = vmatprep.subr.mxu0 %v837
  %4329 = vmatpush1.msra.mxu0 %v836
  %4330 = vmatprep.subr.mxu0 %v833
  %4331 = vmatpush1.msra.mxu0 %v832
  %4332 = vmatprep.subr.mxu0 0.0
  %4333 = vmatpush2.msra.mxu0 0.0
  %4334 = vmatprep.subr.mxu0 0.0
  %4335 = vmatpush2.msra.mxu0 0.0
  %4336 = vmatprep.subr.mxu0 0.0
  %4337 = vmatpush2.msra.mxu0 0.0
  %4338 = vmatprep.subr.mxu0 0.0
  %4339 = vmatpush2.msra.mxu0 0.0
  %4340 = vmatprep.subr.mxu0 0.0
  %4341 = vmatpush2.msra.mxu0 0.0
  %4342 = vmatprep.subr.mxu0 0.0
  %4343 = vmatpush2.msra.mxu0 0.0
  %4344 = vmatprep.subr.mxu0 0.0
  %4345 = vmatpush2.msra.mxu0 0.0
  %4346 = vmatprep.subr.mxu0 0.0
  %4347 = vmatpush2.msra.mxu0 0.0
  %4348 = vmatprep.subr.mxu0 0.0
  %4349 = vmatpush2.msra.mxu0 0.0
  %4350 = vmatprep.subr.mxu0 0.0
  %4351 = vmatpush2.msra.mxu0 0.0
  %4352 = vmatprep.subr.mxu0 0.0
  %4353 = vmatpush2.msra.mxu0 0.0
  %4354 = vmatprep.subr.mxu0 0.0
  %4355 = vmatpush2.msra.mxu0 0.0
  %4356 = vmatprep.subr.mxu0 0.0
  %4357 = vmatpush2.msra.mxu0 0.0
  %4358 = vmatprep.subr.mxu0 0.0
  %4359 = vmatpush2.msra.mxu0 0.0
  %4360 = vmatprep.subr.mxu0 0.0
  %4361 = vmatpush2.msra.mxu0 0.0
  %4362 = vmatprep.subr.mxu0 0.0
  %4363 = vmatpush2.msra.mxu0 0.0
  %4364 = vmatprep.mubr.f32.mxu0 0.0
  %4365 = vmatmul.mubr.f32.gmra.mxu0 %v3427
  %v4366 = vpop.f32.mrf.mxu0
  %v4367 = vadd.f32 0.0, %v4366
  %v4368 = vpop.f32.mrf.mxu0
  %v4369 = vadd.f32 0.0, %v4368
  %4370 = vmatprep.mubr.f32.mxu0 0.0
  %4371 = vmatmul.mubr.f32.gmra.mxu0 %v3430
  %v4372 = vpop.f32.mrf.mxu0
  %v4373 = vadd.f32 0.0, %v4372
  %v4374 = vpop.f32.mrf.mxu0
  %v4375 = vadd.f32 0.0, %v4374
  %4376 = vmatprep.mubr.f32.mxu0 0.0
  %4377 = vmatmul.mubr.f32.gmra.mxu0 %v3433
  %v4378 = vpop.f32.mrf.mxu0
  %v4379 = vadd.f32 0.0, %v4378
  %v4380 = vpop.f32.mrf.mxu0
  %v4381 = vadd.f32 0.0, %v4380
  %4382 = vmatprep.mubr.f32.mxu0 0.0
  %4383 = vmatmul.mubr.f32.gmra.mxu0 %v3436
  %v4384 = vpop.f32.mrf.mxu0
  %v4385 = vadd.f32 0.0, %v4384
  %v4386 = vpop.f32.mrf.mxu0
  %v4387 = vadd.f32 0.0, %v4386
  %4388 = vmatprep.mubr.f32.mxu0 0.0
  %4389 = vmatmul.mubr.f32.gmra.mxu0 %v3439
  %v4390 = vpop.f32.mrf.mxu0
  %v4391 = vadd.f32 0.0, %v4390
  %v4392 = vpop.f32.mrf.mxu0
  %v4393 = vadd.f32 0.0, %v4392
  %4394 = vmatprep.mubr.f32.mxu0 0.0
  %4395 = vmatmul.mubr.f32.gmra.mxu0 %v3442
  %v4396 = vpop.f32.mrf.mxu0
  %v4397 = vadd.f32 0.0, %v4396
  %v4398 = vpop.f32.mrf.mxu0
  %v4399 = vadd.f32 0.0, %v4398
  %4400 = vdwg.mxu0
  %4401 = vmatprep.subr.mxu0 0.0
  %4402 = vmatpush1.msra.mxu0 0.0
  %4403 = vmatprep.subr.mxu0 0.0
  %4404 = vmatpush1.msra.mxu0 0.0
  %4405 = vmatprep.subr.mxu0 0.0
  %4406 = vmatpush1.msra.mxu0 0.0
  %4407 = vmatprep.subr.mxu0 0.0
  %4408 = vmatpush1.msra.mxu0 0.0
  %4409 = vmatprep.subr.mxu0 0.0
  %4410 = vmatpush1.msra.mxu0 0.0
  %4411 = vmatprep.subr.mxu0 0.0
  %4412 = vmatpush1.msra.mxu0 0.0
  %4413 = vmatprep.subr.mxu0 0.0
  %4414 = vmatpush1.msra.mxu0 0.0
  %4415 = vmatprep.subr.mxu0 0.0
  %4416 = vmatpush1.msra.mxu0 0.0
  %4417 = vmatprep.subr.mxu0 0.0
  %4418 = vmatpush1.msra.mxu0 0.0
  %4419 = vmatprep.subr.mxu0 0.0
  %4420 = vmatpush1.msra.mxu0 0.0
  %4421 = vmatprep.subr.mxu0 0.0
  %4422 = vmatpush1.msra.mxu0 0.0
  %4423 = vmatprep.subr.mxu0 0.0
  %4424 = vmatpush1.msra.mxu0 0.0
  %4425 = vmatprep.subr.mxu0 %v876
  %4426 = vmatpush1.msra.mxu0 %v873
  %4427 = vmatprep.subr.mxu0 %v843
  %4428 = vmatpush1.msra.mxu0 %v842
  %4429 = vmatprep.subr.mxu0 %v839
  %4430 = vmatpush1.msra.mxu0 %v838
  %4431 = vmatprep.subr.mxu0 %v835
  %4432 = vmatpush1.msra.mxu0 %v834
  %4433 = vmatprep.subr.mxu0 0.0
  %4434 = vmatpush2.msra.mxu0 0.0
  %4435 = vmatprep.subr.mxu0 0.0
  %4436 = vmatpush2.msra.mxu0 0.0
  %4437 = vmatprep.subr.mxu0 0.0
  %4438 = vmatpush2.msra.mxu0 0.0
  %4439 = vmatprep.subr.mxu0 0.0
  %4440 = vmatpush2.msra.mxu0 0.0
  %4441 = vmatprep.subr.mxu0 0.0
  %4442 = vmatpush2.msra.mxu0 0.0
  %4443 = vmatprep.subr.mxu0 0.0
  %4444 = vmatpush2.msra.mxu0 0.0
  %4445 = vmatprep.subr.mxu0 0.0
  %4446 = vmatpush2.msra.mxu0 0.0
  %4447 = vmatprep.subr.mxu0 0.0
  %4448 = vmatpush2.msra.mxu0 0.0
  %4449 = vmatprep.subr.mxu0 0.0
  %4450 = vmatpush2.msra.mxu0 0.0
  %4451 = vmatprep.subr.mxu0 0.0
  %4452 = vmatpush2.msra.mxu0 0.0
  %4453 = vmatprep.subr.mxu0 0.0
  %4454 = vmatpush2.msra.mxu0 0.0
  %4455 = vmatprep.subr.mxu0 0.0
  %4456 = vmatpush2.msra.mxu0 0.0
  %4457 = vmatprep.subr.mxu0 0.0
  %4458 = vmatpush2.msra.mxu0 0.0
  %4459 = vmatprep.subr.mxu0 0.0
  %4460 = vmatpush2.msra.mxu0 0.0
  %4461 = vmatprep.subr.mxu0 0.0
  %4462 = vmatpush2.msra.mxu0 0.0
  %4463 = vmatprep.subr.mxu0 0.0
  %4464 = vmatpush2.msra.mxu0 0.0
  %4465 = vmatprep.mubr.f32.mxu0 0.0
  %4466 = vmatmul.mubr.f32.gmra.mxu0 %v3427
  %v4467 = vpop.f32.mrf.mxu0
  %v4468 = vadd.f32 0.0, %v4467
  %v4469 = vpop.f32.mrf.mxu0
  %v4470 = vadd.f32 0.0, %v4469
  %4471 = vmatprep.mubr.f32.mxu0 0.0
  %4472 = vmatmul.mubr.f32.gmra.mxu0 %v3430
  %v4473 = vpop.f32.mrf.mxu0
  %v4474 = vadd.f32 0.0, %v4473
  %v4475 = vpop.f32.mrf.mxu0
  %v4476 = vadd.f32 0.0, %v4475
  %4477 = vmatprep.mubr.f32.mxu0 0.0
  %4478 = vmatmul.mubr.f32.gmra.mxu0 %v3433
  %v4479 = vpop.f32.mrf.mxu0
  %v4480 = vadd.f32 0.0, %v4479
  %v4481 = vpop.f32.mrf.mxu0
  %v4482 = vadd.f32 0.0, %v4481
  %4483 = vmatprep.mubr.f32.mxu0 0.0
  %4484 = vmatmul.mubr.f32.gmra.mxu0 %v3436
  %v4485 = vpop.f32.mrf.mxu0
  %v4486 = vadd.f32 0.0, %v4485
  %v4487 = vpop.f32.mrf.mxu0
  %v4488 = vadd.f32 0.0, %v4487
  %4489 = vmatprep.mubr.f32.mxu0 0.0
  %4490 = vmatmul.mubr.f32.gmra.mxu0 %v3439
  %v4491 = vpop.f32.mrf.mxu0
  %v4492 = vadd.f32 0.0, %v4491
  %v4493 = vpop.f32.mrf.mxu0
  %v4494 = vadd.f32 0.0, %v4493
  %4495 = vmatprep.mubr.f32.mxu0 0.0
  %4496 = vmatmul.mubr.f32.gmra.mxu0 %v3442
  %v4497 = vpop.f32.mrf.mxu0
  %v4498 = vadd.f32 0.0, %v4497
  %v4499 = vpop.f32.mrf.mxu0
  %v4500 = vadd.f32 0.0, %v4499
  %4501 = vdwg.mxu0
  %v4502 = vadd.f32 %v4276, %v4367
  %v4503 = vadd.f32 %v4277, %v4369
  %v4504 = vadd.f32 %v4278, %v4468
  %v4505 = vadd.f32 %v4279, %v4470
  %v4506 = vadd.f32 %v4280, %v4373
  %v4507 = vadd.f32 %v4281, %v4375
  %v4508 = vadd.f32 %v4282, %v4474
  %v4509 = vadd.f32 %v4283, %v4476
  %v4510 = vadd.f32 %v4284, %v4379
  %v4511 = vadd.f32 %v4285, %v4381
  %v4512 = vadd.f32 %v4286, %v4480
  %v4513 = vadd.f32 %v4287, %v4482
  %v4514 = vadd.f32 %v4288, %v4385
  %v4515 = vadd.f32 %v4289, %v4387
  %v4516 = vadd.f32 %v4290, %v4486
  %v4517 = vadd.f32 %v4291, %v4488
  %v4518 = vadd.f32 %v4292, %v4391
  %v4519 = vadd.f32 %v4293, %v4393
  %v4520 = vadd.f32 %v4294, %v4492
  %v4521 = vadd.f32 %v4295, %v4494
  %v4522 = vadd.f32 %v4296, %v4397
  %v4523 = vadd.f32 %v4297, %v4399
  %v4524 = vadd.f32 %v4298, %v4498
  %v4525 = vadd.f32 %v4299, %v4500
  %s4526 = scalar_lea.vmem %s0, 176
  %v4527 = vld [vmem:[%s4526] sm:$0xff]
  %v4528 = vld [vmem:[%s4526 + $0x8] sm:$0xff]
  %v4529 = vld [vmem:[%s4526 + $0x10] sm:$0xff]
  %v4530 = vld [vmem:[%s4526 + $0x18] sm:$0xff]
  %v4531 = vld [vmem:[%s4526 + $0x20] sm:$0xff]
  %v4532 = vld [vmem:[%s4526 + $0x28] sm:$0xff]
  %v4534 = vsel %vm78, %v4527, 0
  %v4537 = vsel %vm78, %v4528, 0
  %v4540 = vsel %vm78, %v4529, 0
  %v4543 = vsel %vm78, %v4530, 0
  %v4546 = vsel %vm78, %v4531, 0
  %v4549 = vsel %vm78, %v4532, 0
  %4551 = vmatprep.subr.mxu0 0.0
  %4552 = vmatpush1.msra.mxu0 0.0
  %4553 = vmatprep.subr.mxu0 0.0
  %4554 = vmatpush1.msra.mxu0 0.0
  %4555 = vmatprep.subr.mxu0 0.0
  %4556 = vmatpush1.msra.mxu0 0.0
  %4557 = vmatprep.subr.mxu0 0.0
  %4558 = vmatpush1.msra.mxu0 0.0
  %4559 = vmatprep.subr.mxu0 0.0
  %4560 = vmatpush1.msra.mxu0 0.0
  %4561 = vmatprep.subr.mxu0 0.0
  %4562 = vmatpush1.msra.mxu0 0.0
  %4563 = vmatprep.subr.mxu0 0.0
  %4564 = vmatpush1.msra.mxu0 0.0
  %4565 = vmatprep.subr.mxu0 0.0
  %4566 = vmatpush1.msra.mxu0 0.0
  %4567 = vmatprep.subr.mxu0 0.0
  %4568 = vmatpush1.msra.mxu0 0.0
  %4569 = vmatprep.subr.mxu0 0.0
  %4570 = vmatpush1.msra.mxu0 0.0
  %4571 = vmatprep.subr.mxu0 0.0
  %4572 = vmatpush1.msra.mxu0 0.0
  %4573 = vmatprep.subr.mxu0 0.0
  %4574 = vmatpush1.msra.mxu0 0.0
  %4575 = vmatprep.subr.mxu0 %v1150
  %4576 = vmatpush1.msra.mxu0 %v1147
  %4577 = vmatprep.subr.mxu0 %v1121
  %4578 = vmatpush1.msra.mxu0 %v1120
  %4579 = vmatprep.subr.mxu0 %v1117
  %4580 = vmatpush1.msra.mxu0 %v1116
  %4581 = vmatprep.subr.mxu0 %v1113
  %4582 = vmatpush1.msra.mxu0 %v1112
  %4583 = vmatprep.subr.mxu0 0.0
  %4584 = vmatpush2.msra.mxu0 0.0
  %4585 = vmatprep.subr.mxu0 0.0
  %4586 = vmatpush2.msra.mxu0 0.0
  %4587 = vmatprep.subr.mxu0 0.0
  %4588 = vmatpush2.msra.mxu0 0.0
  %4589 = vmatprep.subr.mxu0 0.0
  %4590 = vmatpush2.msra.mxu0 0.0
  %4591 = vmatprep.subr.mxu0 0.0
  %4592 = vmatpush2.msra.mxu0 0.0
  %4593 = vmatprep.subr.mxu0 0.0
  %4594 = vmatpush2.msra.mxu0 0.0
  %4595 = vmatprep.subr.mxu0 0.0
  %4596 = vmatpush2.msra.mxu0 0.0
  %4597 = vmatprep.subr.mxu0 0.0
  %4598 = vmatpush2.msra.mxu0 0.0
  %4599 = vmatprep.subr.mxu0 0.0
  %4600 = vmatpush2.msra.mxu0 0.0
  %4601 = vmatprep.subr.mxu0 0.0
  %4602 = vmatpush2.msra.mxu0 0.0
  %4603 = vmatprep.subr.mxu0 0.0
  %4604 = vmatpush2.msra.mxu0 0.0
  %4605 = vmatprep.subr.mxu0 0.0
  %4606 = vmatpush2.msra.mxu0 0.0
  %4607 = vmatprep.subr.mxu0 0.0
  %4608 = vmatpush2.msra.mxu0 0.0
  %4609 = vmatprep.subr.mxu0 0.0
  %4610 = vmatpush2.msra.mxu0 0.0
  %4611 = vmatprep.subr.mxu0 0.0
  %4612 = vmatpush2.msra.mxu0 0.0
  %4613 = vmatprep.subr.mxu0 0.0
  %4614 = vmatpush2.msra.mxu0 0.0
  %4615 = vmatprep.mubr.f32.mxu0 0.0
  %4616 = vmatmul.mubr.f32.gmra.mxu0 %v4534
  %v4617 = vpop.f32.mrf.mxu0
  %v4618 = vadd.f32 0.0, %v4617
  %v4619 = vpop.f32.mrf.mxu0
  %v4620 = vadd.f32 0.0, %v4619
  %4621 = vmatprep.mubr.f32.mxu0 0.0
  %4622 = vmatmul.mubr.f32.gmra.mxu0 %v4537
  %v4623 = vpop.f32.mrf.mxu0
  %v4624 = vadd.f32 0.0, %v4623
  %v4625 = vpop.f32.mrf.mxu0
  %v4626 = vadd.f32 0.0, %v4625
  %4627 = vmatprep.mubr.f32.mxu0 0.0
  %4628 = vmatmul.mubr.f32.gmra.mxu0 %v4540
  %v4629 = vpop.f32.mrf.mxu0
  %v4630 = vadd.f32 0.0, %v4629
  %v4631 = vpop.f32.mrf.mxu0
  %v4632 = vadd.f32 0.0, %v4631
  %4633 = vmatprep.mubr.f32.mxu0 0.0
  %4634 = vmatmul.mubr.f32.gmra.mxu0 %v4543
  %v4635 = vpop.f32.mrf.mxu0
  %v4636 = vadd.f32 0.0, %v4635
  %v4637 = vpop.f32.mrf.mxu0
  %v4638 = vadd.f32 0.0, %v4637
  %4639 = vmatprep.mubr.f32.mxu0 0.0
  %4640 = vmatmul.mubr.f32.gmra.mxu0 %v4546
  %v4641 = vpop.f32.mrf.mxu0
  %v4642 = vadd.f32 0.0, %v4641
  %v4643 = vpop.f32.mrf.mxu0
  %v4644 = vadd.f32 0.0, %v4643
  %4645 = vmatprep.mubr.f32.mxu0 0.0
  %4646 = vmatmul.mubr.f32.gmra.mxu0 %v4549
  %v4647 = vpop.f32.mrf.mxu0
  %v4648 = vadd.f32 0.0, %v4647
  %v4649 = vpop.f32.mrf.mxu0
  %v4650 = vadd.f32 0.0, %v4649
  %4651 = vdwg.mxu0
  %4652 = vmatprep.subr.mxu0 0.0
  %4653 = vmatpush1.msra.mxu0 0.0
  %4654 = vmatprep.subr.mxu0 0.0
  %4655 = vmatpush1.msra.mxu0 0.0
  %4656 = vmatprep.subr.mxu0 0.0
  %4657 = vmatpush1.msra.mxu0 0.0
  %4658 = vmatprep.subr.mxu0 0.0
  %4659 = vmatpush1.msra.mxu0 0.0
  %4660 = vmatprep.subr.mxu0 0.0
  %4661 = vmatpush1.msra.mxu0 0.0
  %4662 = vmatprep.subr.mxu0 0.0
  %4663 = vmatpush1.msra.mxu0 0.0
  %4664 = vmatprep.subr.mxu0 0.0
  %4665 = vmatpush1.msra.mxu0 0.0
  %4666 = vmatprep.subr.mxu0 0.0
  %4667 = vmatpush1.msra.mxu0 0.0
  %4668 = vmatprep.subr.mxu0 0.0
  %4669 = vmatpush1.msra.mxu0 0.0
  %4670 = vmatprep.subr.mxu0 0.0
  %4671 = vmatpush1.msra.mxu0 0.0
  %4672 = vmatprep.subr.mxu0 0.0
  %4673 = vmatpush1.msra.mxu0 0.0
  %4674 = vmatprep.subr.mxu0 0.0
  %4675 = vmatpush1.msra.mxu0 0.0
  %4676 = vmatprep.subr.mxu0 %v1156
  %4677 = vmatpush1.msra.mxu0 %v1153
  %4678 = vmatprep.subr.mxu0 %v1123
  %4679 = vmatpush1.msra.mxu0 %v1122
  %4680 = vmatprep.subr.mxu0 %v1119
  %4681 = vmatpush1.msra.mxu0 %v1118
  %4682 = vmatprep.subr.mxu0 %v1115
  %4683 = vmatpush1.msra.mxu0 %v1114
  %4684 = vmatprep.subr.mxu0 0.0
  %4685 = vmatpush2.msra.mxu0 0.0
  %4686 = vmatprep.subr.mxu0 0.0
  %4687 = vmatpush2.msra.mxu0 0.0
  %4688 = vmatprep.subr.mxu0 0.0
  %4689 = vmatpush2.msra.mxu0 0.0
  %4690 = vmatprep.subr.mxu0 0.0
  %4691 = vmatpush2.msra.mxu0 0.0
  %4692 = vmatprep.subr.mxu0 0.0
  %4693 = vmatpush2.msra.mxu0 0.0
  %4694 = vmatprep.subr.mxu0 0.0
  %4695 = vmatpush2.msra.mxu0 0.0
  %4696 = vmatprep.subr.mxu0 0.0
  %4697 = vmatpush2.msra.mxu0 0.0
  %4698 = vmatprep.subr.mxu0 0.0
  %4699 = vmatpush2.msra.mxu0 0.0
  %4700 = vmatprep.subr.mxu0 0.0
  %4701 = vmatpush2.msra.mxu0 0.0
  %4702 = vmatprep.subr.mxu0 0.0
  %4703 = vmatpush2.msra.mxu0 0.0
  %4704 = vmatprep.subr.mxu0 0.0
  %4705 = vmatpush2.msra.mxu0 0.0
  %4706 = vmatprep.subr.mxu0 0.0
  %4707 = vmatpush2.msra.mxu0 0.0
  %4708 = vmatprep.subr.mxu0 0.0
  %4709 = vmatpush2.msra.mxu0 0.0
  %4710 = vmatprep.subr.mxu0 0.0
  %4711 = vmatpush2.msra.mxu0 0.0
  %4712 = vmatprep.subr.mxu0 0.0
  %4713 = vmatpush2.msra.mxu0 0.0
  %4714 = vmatprep.subr.mxu0 0.0
  %4715 = vmatpush2.msra.mxu0 0.0
  %4716 = vmatprep.mubr.f32.mxu0 0.0
  %4717 = vmatmul.mubr.f32.gmra.mxu0 %v4534
  %v4718 = vpop.f32.mrf.mxu0
  %v4719 = vadd.f32 0.0, %v4718
  %v4720 = vpop.f32.mrf.mxu0
  %v4721 = vadd.f32 0.0, %v4720
  %4722 = vmatprep.mubr.f32.mxu0 0.0
  %4723 = vmatmul.mubr.f32.gmra.mxu0 %v4537
  %v4724 = vpop.f32.mrf.mxu0
  %v4725 = vadd.f32 0.0, %v4724
  %v4726 = vpop.f32.mrf.mxu0
  %v4727 = vadd.f32 0.0, %v4726
  %4728 = vmatprep.mubr.f32.mxu0 0.0
  %4729 = vmatmul.mubr.f32.gmra.mxu0 %v4540
  %v4730 = vpop.f32.mrf.mxu0
  %v4731 = vadd.f32 0.0, %v4730
  %v4732 = vpop.f32.mrf.mxu0
  %v4733 = vadd.f32 0.0, %v4732
  %4734 = vmatprep.mubr.f32.mxu0 0.0
  %4735 = vmatmul.mubr.f32.gmra.mxu0 %v4543
  %v4736 = vpop.f32.mrf.mxu0
  %v4737 = vadd.f32 0.0, %v4736
  %v4738 = vpop.f32.mrf.mxu0
  %v4739 = vadd.f32 0.0, %v4738
  %4740 = vmatprep.mubr.f32.mxu0 0.0
  %4741 = vmatmul.mubr.f32.gmra.mxu0 %v4546
  %v4742 = vpop.f32.mrf.mxu0
  %v4743 = vadd.f32 0.0, %v4742
  %v4744 = vpop.f32.mrf.mxu0
  %v4745 = vadd.f32 0.0, %v4744
  %4746 = vmatprep.mubr.f32.mxu0 0.0
  %4747 = vmatmul.mubr.f32.gmra.mxu0 %v4549
  %v4748 = vpop.f32.mrf.mxu0
  %v4749 = vadd.f32 0.0, %v4748
  %v4750 = vpop.f32.mrf.mxu0
  %v4751 = vadd.f32 0.0, %v4750
  %4752 = vdwg.mxu0
  %v4753 = vadd.f32 %v4502, %v4618
  %v4754 = vadd.f32 %v4503, %v4620
  %v4755 = vadd.f32 %v4504, %v4719
  %v4756 = vadd.f32 %v4505, %v4721
  %v4757 = vadd.f32 %v4506, %v4624
  %v4758 = vadd.f32 %v4507, %v4626
  %v4759 = vadd.f32 %v4508, %v4725
  %v4760 = vadd.f32 %v4509, %v4727
  %v4761 = vadd.f32 %v4510, %v4630
  %v4762 = vadd.f32 %v4511, %v4632
  %v4763 = vadd.f32 %v4512, %v4731
  %v4764 = vadd.f32 %v4513, %v4733
  %v4765 = vadd.f32 %v4514, %v4636
  %v4766 = vadd.f32 %v4515, %v4638
  %v4767 = vadd.f32 %v4516, %v4737
  %v4768 = vadd.f32 %v4517, %v4739
  %v4769 = vadd.f32 %v4518, %v4642
  %v4770 = vadd.f32 %v4519, %v4644
  %v4771 = vadd.f32 %v4520, %v4743
  %v4772 = vadd.f32 %v4521, %v4745
  %v4773 = vadd.f32 %v4522, %v4648
  %v4774 = vadd.f32 %v4523, %v4650
  %v4775 = vadd.f32 %v4524, %v4749
  %v4776 = vadd.f32 %v4525, %v4751
  %v4777 = vmax.f32 %v3646, %v4753
  %v4778 = vmax.f32 %v3647, %v4754
  %v4779 = vmax.f32 %v3648, %v4755
  %v4780 = vmax.f32 %v3649, %v4756
  %v4781 = vmax.f32 %v3650, %v4757
  %v4782 = vmax.f32 %v3651, %v4758
  %v4783 = vmax.f32 %v3652, %v4759
  %v4784 = vmax.f32 %v3653, %v4760
  %v4785 = vmax.f32 %v3654, %v4761
  %v4786 = vmax.f32 %v3655, %v4762
  %v4787 = vmax.f32 %v3656, %v4763
  %v4788 = vmax.f32 %v3657, %v4764
  %v4789 = vmax.f32 %v3658, %v4765
  %v4790 = vmax.f32 %v3659, %v4766
  %v4791 = vmax.f32 %v3660, %v4767
  %v4792 = vmax.f32 %v3661, %v4768
  %v4793 = vmax.f32 %v3662, %v4769
  %v4794 = vmax.f32 %v3663, %v4770
  %v4795 = vmax.f32 %v3664, %v4771
  %v4796 = vmax.f32 %v3665, %v4772
  %v4797 = vmax.f32 %v3666, %v4773
  %v4798 = vmax.f32 %v3667, %v4774
  %v4799 = vmax.f32 %v3668, %v4775
  %v4800 = vmax.f32 %v3669, %v4776
  %v4801 = vmax.f32 %v4777, %v4779
  %v4802 = vmax.f32 %v4778, %v4780
  %v4803 = vmax.f32 %v4781, %v4783
  %v4804 = vmax.f32 %v4782, %v4784
  %v4805 = vmax.f32 %v4785, %v4787
  %v4806 = vmax.f32 %v4786, %v4788
  %v4807 = vmax.f32 %v4789, %v4791
  %v4808 = vmax.f32 %v4790, %v4792
  %v4809 = vmax.f32 %v4793, %v4795
  %v4810 = vmax.f32 %v4794, %v4796
  %v4811 = vmax.f32 %v4797, %v4799
  %v4812 = vmax.f32 %v4798, %v4800
  %v4813 = vadd.f32 %v4801, %v2532
  %v4814 = vadd.f32 %v4802, %v2536
  %v4815 = vadd.f32 %v4803, %v2532
  %v4816 = vadd.f32 %v4804, %v2536
  %v4817 = vadd.f32 %v4805, %v2532
  %v4818 = vadd.f32 %v4806, %v2536
  %v4819 = vadd.f32 %v4807, %v2532
  %v4820 = vadd.f32 %v4808, %v2536
  %v4821 = vadd.f32 %v4809, %v2532
  %v4822 = vadd.f32 %v4810, %v2536
  %v4823 = vadd.f32 %v4811, %v2532
  %v4824 = vadd.f32 %v4812, %v2536
  %v4825 = vmax.f32 %v4813, 0.0
  %v4826 = vmax.f32 %v4814, 0.0
  %v4827 = vmax.f32 %v4815, 0.0
  %v4828 = vmax.f32 %v4816, 0.0
  %v4829 = vmax.f32 %v4817, 0.0
  %v4830 = vmax.f32 %v4818, 0.0
  %v4831 = vmax.f32 %v4819, 0.0
  %v4832 = vmax.f32 %v4820, 0.0
  %v4833 = vmax.f32 %v4821, 0.0
  %v4834 = vmax.f32 %v4822, 0.0
  %v4835 = vmax.f32 %v4823, 0.0
  %v4836 = vmax.f32 %v4824, 0.0
  %v4837 = vld [vmem:[%s3] sm:$0xff]
  %v4838 = vld [vmem:[%s3 + $0x8] sm:$0xff]
  %v4839 = vld [vmem:[%s3 + $0x10] sm:$0xff]
  %v4840 = vld [vmem:[%s3 + $0x18] sm:$0xff]
  %v4841 = vld [vmem:[%s3 + $0x20] sm:$0xff]
  %v4842 = vld [vmem:[%s3 + $0x28] sm:$0xff]
  %v4843 = vld [vmem:[%s3 + $0x30] sm:$0xff]
  %v4844 = vld [vmem:[%s3 + $0x38] sm:$0xff]
  %v4845 = vld [vmem:[%s3 + $0x40] sm:$0xff]
  %v4846 = vld [vmem:[%s3 + $0x48] sm:$0xff]
  %v4847 = vld [vmem:[%s3 + $0x50] sm:$0xff]
  %v4848 = vld [vmem:[%s3 + $0x58] sm:$0xff]
  %v4849 = vld [vmem:[%s3 + $0x60] sm:$0xff]
  %v4850 = vld [vmem:[%s3 + $0x68] sm:$0xff]
  %v4851 = vld [vmem:[%s3 + $0x70] sm:$0xff]
  %v4852 = vld [vmem:[%s3 + $0x78] sm:$0xff]
  %v4853 = vld [vmem:[%s3 + $0x80] sm:$0xff]
  %v4854 = vld [vmem:[%s3 + $0x88] sm:$0xff]
  %v4855 = vld [vmem:[%s3 + $0x90] sm:$0xff]
  %v4856 = vld [vmem:[%s3 + $0x98] sm:$0xff]
  %v4857 = vld [vmem:[%s3 + $0xa0] sm:$0xff]
  %v4858 = vld [vmem:[%s3 + $0xa8] sm:$0xff]
  %v4859 = vld [vmem:[%s3 + $0xb0] sm:$0xff]
  %v4860 = vld [vmem:[%s3 + $0xb8] sm:$0xff]
  %v4861 = vld [vmem:[%s3 + $0xc0] sm:$0xff]
  %v4862 = vld [vmem:[%s3 + $0xc8] sm:$0xff]
  %v4863 = vld [vmem:[%s3 + $0xd0] sm:$0xff]
  %v4864 = vld [vmem:[%s3 + $0xd8] sm:$0xff]
  %v4865 = vld [vmem:[%s3 + $0xe0] sm:$0xff]
  %v4866 = vld [vmem:[%s3 + $0xe8] sm:$0xff]
  %v4867 = vld [vmem:[%s3 + $0xf0] sm:$0xff]
  %v4868 = vld [vmem:[%s3 + $0xf8] sm:$0xff]
  %v4869 = vld [vmem:[%s3 + $0x100] sm:$0xff]
  %v4870 = vld [vmem:[%s3 + $0x108] sm:$0xff]
  %v4871 = vld [vmem:[%s3 + $0x110] sm:$0xff]
  %v4872 = vld [vmem:[%s3 + $0x118] sm:$0xff]
  %v4873 = vld [vmem:[%s3 + $0x120] sm:$0xff]
  %v4874 = vld [vmem:[%s3 + $0x128] sm:$0xff]
  %v4875 = vld [vmem:[%s3 + $0x130] sm:$0xff]
  %v4876 = vld [vmem:[%s3 + $0x138] sm:$0xff]
  %v4877 = vld [vmem:[%s3 + $0x140] sm:$0xff]
  %v4878 = vld [vmem:[%s3 + $0x148] sm:$0xff]
  %v4879 = vld [vmem:[%s3 + $0x150] sm:$0xff]
  %v4880 = vld [vmem:[%s3 + $0x158] sm:$0xff]
  %v4881 = vld [vmem:[%s3 + $0x160] sm:$0xff]
  %v4882 = vld [vmem:[%s3 + $0x168] sm:$0xff]
  %v4883 = vld [vmem:[%s3 + $0x170] sm:$0xff]
  %v4884 = vld [vmem:[%s3 + $0x178] sm:$0xff]
  %v4885 = vld [vmem:[%s3 + $0x180] sm:$0xff]
  %v4886 = vld [vmem:[%s3 + $0x188] sm:$0xff]
  %v4887 = vld [vmem:[%s3 + $0x190] sm:$0xff]
  %v4888 = vld [vmem:[%s3 + $0x198] sm:$0xff]
  %v4889 = vld [vmem:[%s3 + $0x1a0] sm:$0xff]
  %v4890 = vld [vmem:[%s3 + $0x1a8] sm:$0xff]
  %v4891 = vld [vmem:[%s3 + $0x1b0] sm:$0xff]
  %v4892 = vld [vmem:[%s3 + $0x1b8] sm:$0xff]
  %v4893 = vld [vmem:[%s3 + $0x1c0] sm:$0xff]
  %v4894 = vld [vmem:[%s3 + $0x1c8] sm:$0xff]
  %v4895 = vld [vmem:[%s3 + $0x1d0] sm:$0xff]
  %v4896 = vld [vmem:[%s3 + $0x1d8] sm:$0xff]
  %v4897 = vld [vmem:[%s3 + $0x1e0] sm:$0xff]
  %v4898 = vld [vmem:[%s3 + $0x1e8] sm:$0xff]
  %v4899 = vld [vmem:[%s3 + $0x1f0] sm:$0xff]
  %v4900 = vld [vmem:[%s3 + $0x1f8] sm:$0xff]
  %v4901 = vld [vmem:[%s3 + $0x200] sm:$0xff]
  %v4902 = vld [vmem:[%s3 + $0x208] sm:$0xff]
  %v4903 = vld [vmem:[%s3 + $0x210] sm:$0xff]
  %v4904 = vld [vmem:[%s3 + $0x218] sm:$0xff]
  %v4905 = vld [vmem:[%s3 + $0x220] sm:$0xff]
  %v4906 = vld [vmem:[%s3 + $0x228] sm:$0xff]
  %v4907 = vld [vmem:[%s3 + $0x230] sm:$0xff]
  %v4908 = vld [vmem:[%s3 + $0x238] sm:$0xff]
  %v4909 = vld [vmem:[%s3 + $0x240] sm:$0xff]
  %v4910 = vld [vmem:[%s3 + $0x248] sm:$0xff]
  %v4911 = vld [vmem:[%s3 + $0x250] sm:$0xff]
  %v4912 = vld [vmem:[%s3 + $0x258] sm:$0xff]
  %v4913 = vld [vmem:[%s3 + $0x260] sm:$0xff]
  %v4914 = vld [vmem:[%s3 + $0x268] sm:$0xff]
  %v4915 = vld [vmem:[%s3 + $0x270] sm:$0xff]
  %v4916 = vld [vmem:[%s3 + $0x278] sm:$0xff]
  %v4917 = vld [vmem:[%s3 + $0x280] sm:$0xff]
  %v4918 = vld [vmem:[%s3 + $0x288] sm:$0xff]
  %v4919 = vld [vmem:[%s3 + $0x290] sm:$0xff]
  %v4920 = vld [vmem:[%s3 + $0x298] sm:$0xff]
  %v4921 = vld [vmem:[%s3 + $0x2a0] sm:$0xff]
  %v4922 = vld [vmem:[%s3 + $0x2a8] sm:$0xff]
  %v4923 = vld [vmem:[%s3 + $0x2b0] sm:$0xff]
  %v4924 = vld [vmem:[%s3 + $0x2b8] sm:$0xff]
  %v4925 = vld [vmem:[%s3 + $0x2c0] sm:$0xff]
  %v4926 = vld [vmem:[%s3 + $0x2c8] sm:$0xff]
  %v4927 = vld [vmem:[%s3 + $0x2d0] sm:$0xff]
  %v4928 = vld [vmem:[%s3 + $0x2d8] sm:$0xff]
  %v4929 = vld [vmem:[%s3 + $0x2e0] sm:$0xff]
  %v4930 = vld [vmem:[%s3 + $0x2e8] sm:$0xff]
  %v4931 = vld [vmem:[%s3 + $0x2f0] sm:$0xff]
  %v4932 = vld [vmem:[%s3 + $0x2f8] sm:$0xff]
  %v4933 = vld [vmem:[%s3 + $0x300] sm:$0xff]
  %v4934 = vld [vmem:[%s3 + $0x308] sm:$0xff]
  %v4935 = vld [vmem:[%s3 + $0x310] sm:$0xff]
  %v4936 = vld [vmem:[%s3 + $0x318] sm:$0xff]
  %v4937 = vld [vmem:[%s3 + $0x320] sm:$0xff]
  %v4938 = vld [vmem:[%s3 + $0x328] sm:$0xff]
  %v4939 = vld [vmem:[%s3 + $0x330] sm:$0xff]
  %v4940 = vld [vmem:[%s3 + $0x338] sm:$0xff]
  %v4941 = vld [vmem:[%s3 + $0x340] sm:$0xff]
  %v4942 = vld [vmem:[%s3 + $0x348] sm:$0xff]
  %v4943 = vld [vmem:[%s3 + $0x350] sm:$0xff]
  %v4944 = vld [vmem:[%s3 + $0x358] sm:$0xff]
  %v4945 = vld [vmem:[%s3 + $0x360] sm:$0xff]
  %v4946 = vld [vmem:[%s3 + $0x368] sm:$0xff]
  %v4947 = vld [vmem:[%s3 + $0x370] sm:$0xff]
  %v4948 = vld [vmem:[%s3 + $0x378] sm:$0xff]
  %v4949 = vld [vmem:[%s3 + $0x380] sm:$0xff]
  %v4950 = vld [vmem:[%s3 + $0x388] sm:$0xff]
  %v4951 = vld [vmem:[%s3 + $0x390] sm:$0xff]
  %v4952 = vld [vmem:[%s3 + $0x398] sm:$0xff]
  %v4953 = vld [vmem:[%s3 + $0x3a0] sm:$0xff]
  %v4954 = vld [vmem:[%s3 + $0x3a8] sm:$0xff]
  %v4955 = vld [vmem:[%s3 + $0x3b0] sm:$0xff]
  %v4956 = vld [vmem:[%s3 + $0x3b8] sm:$0xff]
  %v4957 = vld [vmem:[%s3 + $0x3c0] sm:$0xff]
  %v4958 = vld [vmem:[%s3 + $0x3c8] sm:$0xff]
  %v4959 = vld [vmem:[%s3 + $0x3d0] sm:$0xff]
  %v4960 = vld [vmem:[%s3 + $0x3d8] sm:$0xff]
  %v4961 = vld [vmem:[%s3 + $0x3e0] sm:$0xff]
  %v4962 = vld [vmem:[%s3 + $0x3e8] sm:$0xff]
  %v4963 = vld [vmem:[%s3 + $0x3f0] sm:$0xff]
  %v4964 = vld [vmem:[%s3 + $0x3f8] sm:$0xff]
  %s4965 = scalar_lea.vmem %s3, 1024
  %v4966 = vld [vmem:[%s4965] sm:$0xff]
  %v4967 = vld [vmem:[%s4965 + $0x8] sm:$0xff]
  %v4968 = vld [vmem:[%s4965 + $0x10] sm:$0xff]
  %v4969 = vld [vmem:[%s4965 + $0x18] sm:$0xff]
  %v4970 = vld [vmem:[%s4965 + $0x20] sm:$0xff]
  %v4971 = vld [vmem:[%s4965 + $0x28] sm:$0xff]
  %v4972 = vld [vmem:[%s4965 + $0x30] sm:$0xff]
  %v4973 = vld [vmem:[%s4965 + $0x38] sm:$0xff]
  %v4974 = vld [vmem:[%s4965 + $0x40] sm:$0xff]
  %v4975 = vld [vmem:[%s4965 + $0x48] sm:$0xff]
  %v4976 = vld [vmem:[%s4965 + $0x50] sm:$0xff]
  %v4977 = vld [vmem:[%s4965 + $0x58] sm:$0xff]
  %v4978 = vld [vmem:[%s4965 + $0x60] sm:$0xff]
  %v4979 = vld [vmem:[%s4965 + $0x68] sm:$0xff]
  %v4980 = vld [vmem:[%s4965 + $0x70] sm:$0xff]
  %v4981 = vld [vmem:[%s4965 + $0x78] sm:$0xff]
  %v4982 = vld [vmem:[%s4965 + $0x80] sm:$0xff]
  %v4983 = vld [vmem:[%s4965 + $0x88] sm:$0xff]
  %v4984 = vld [vmem:[%s4965 + $0x90] sm:$0xff]
  %v4985 = vld [vmem:[%s4965 + $0x98] sm:$0xff]
  %v4986 = vld [vmem:[%s4965 + $0xa0] sm:$0xff]
  %v4987 = vld [vmem:[%s4965 + $0xa8] sm:$0xff]
  %v4988 = vld [vmem:[%s4965 + $0xb0] sm:$0xff]
  %v4989 = vld [vmem:[%s4965 + $0xb8] sm:$0xff]
  %v4990 = vld [vmem:[%s4965 + $0xc0] sm:$0xff]
  %v4991 = vld [vmem:[%s4965 + $0xc8] sm:$0xff]
  %v4992 = vld [vmem:[%s4965 + $0xd0] sm:$0xff]
  %v4993 = vld [vmem:[%s4965 + $0xd8] sm:$0xff]
  %v4994 = vld [vmem:[%s4965 + $0xe0] sm:$0xff]
  %v4995 = vld [vmem:[%s4965 + $0xe8] sm:$0xff]
  %v4996 = vld [vmem:[%s4965 + $0xf0] sm:$0xff]
  %v4997 = vld [vmem:[%s4965 + $0xf8] sm:$0xff]
  %v4998 = vld [vmem:[%s4965 + $0x100] sm:$0xff]
  %v4999 = vld [vmem:[%s4965 + $0x108] sm:$0xff]
  %v5000 = vld [vmem:[%s4965 + $0x110] sm:$0xff]
  %v5001 = vld [vmem:[%s4965 + $0x118] sm:$0xff]
  %v5002 = vld [vmem:[%s4965 + $0x120] sm:$0xff]
  %v5003 = vld [vmem:[%s4965 + $0x128] sm:$0xff]
  %v5004 = vld [vmem:[%s4965 + $0x130] sm:$0xff]
  %v5005 = vld [vmem:[%s4965 + $0x138] sm:$0xff]
  %v5006 = vld [vmem:[%s4965 + $0x140] sm:$0xff]
  %v5007 = vld [vmem:[%s4965 + $0x148] sm:$0xff]
  %v5008 = vld [vmem:[%s4965 + $0x150] sm:$0xff]
  %v5009 = vld [vmem:[%s4965 + $0x158] sm:$0xff]
  %v5010 = vld [vmem:[%s4965 + $0x160] sm:$0xff]
  %v5011 = vld [vmem:[%s4965 + $0x168] sm:$0xff]
  %v5012 = vld [vmem:[%s4965 + $0x170] sm:$0xff]
  %v5013 = vld [vmem:[%s4965 + $0x178] sm:$0xff]
  %v5014 = vld [vmem:[%s4965 + $0x180] sm:$0xff]
  %v5015 = vld [vmem:[%s4965 + $0x188] sm:$0xff]
  %v5016 = vld [vmem:[%s4965 + $0x190] sm:$0xff]
  %v5017 = vld [vmem:[%s4965 + $0x198] sm:$0xff]
  %v5018 = vld [vmem:[%s4965 + $0x1a0] sm:$0xff]
  %v5019 = vld [vmem:[%s4965 + $0x1a8] sm:$0xff]
  %v5020 = vld [vmem:[%s4965 + $0x1b0] sm:$0xff]
  %v5021 = vld [vmem:[%s4965 + $0x1b8] sm:$0xff]
  %v5022 = vld [vmem:[%s4965 + $0x1c0] sm:$0xff]
  %v5023 = vld [vmem:[%s4965 + $0x1c8] sm:$0xff]
  %v5024 = vld [vmem:[%s4965 + $0x1d0] sm:$0xff]
  %v5025 = vld [vmem:[%s4965 + $0x1d8] sm:$0xff]
  %v5026 = vld [vmem:[%s4965 + $0x1e0] sm:$0xff]
  %v5027 = vld [vmem:[%s4965 + $0x1e8] sm:$0xff]
  %v5028 = vld [vmem:[%s4965 + $0x1f0] sm:$0xff]
  %v5029 = vld [vmem:[%s4965 + $0x1f8] sm:$0xff]
  %v5030 = vld [vmem:[%s4965 + $0x200] sm:$0xff]
  %v5031 = vld [vmem:[%s4965 + $0x208] sm:$0xff]
  %v5032 = vld [vmem:[%s4965 + $0x210] sm:$0xff]
  %v5033 = vld [vmem:[%s4965 + $0x218] sm:$0xff]
  %v5034 = vld [vmem:[%s4965 + $0x220] sm:$0xff]
  %v5035 = vld [vmem:[%s4965 + $0x228] sm:$0xff]
  %v5036 = vld [vmem:[%s4965 + $0x230] sm:$0xff]
  %v5037 = vld [vmem:[%s4965 + $0x238] sm:$0xff]
  %v5038 = vld [vmem:[%s4965 + $0x240] sm:$0xff]
  %v5039 = vld [vmem:[%s4965 + $0x248] sm:$0xff]
  %v5040 = vld [vmem:[%s4965 + $0x250] sm:$0xff]
  %v5041 = vld [vmem:[%s4965 + $0x258] sm:$0xff]
  %v5042 = vld [vmem:[%s4965 + $0x260] sm:$0xff]
  %v5043 = vld [vmem:[%s4965 + $0x268] sm:$0xff]
  %v5044 = vld [vmem:[%s4965 + $0x270] sm:$0xff]
  %v5045 = vld [vmem:[%s4965 + $0x278] sm:$0xff]
  %v5046 = vld [vmem:[%s4965 + $0x280] sm:$0xff]
  %v5047 = vld [vmem:[%s4965 + $0x288] sm:$0xff]
  %v5048 = vld [vmem:[%s4965 + $0x290] sm:$0xff]
  %v5049 = vld [vmem:[%s4965 + $0x298] sm:$0xff]
  %v5050 = vld [vmem:[%s4965 + $0x2a0] sm:$0xff]
  %v5051 = vld [vmem:[%s4965 + $0x2a8] sm:$0xff]
  %v5052 = vld [vmem:[%s4965 + $0x2b0] sm:$0xff]
  %v5053 = vld [vmem:[%s4965 + $0x2b8] sm:$0xff]
  %v5054 = vld [vmem:[%s4965 + $0x2c0] sm:$0xff]
  %v5055 = vld [vmem:[%s4965 + $0x2c8] sm:$0xff]
  %v5056 = vld [vmem:[%s4965 + $0x2d0] sm:$0xff]
  %v5057 = vld [vmem:[%s4965 + $0x2d8] sm:$0xff]
  %v5058 = vld [vmem:[%s4965 + $0x2e0] sm:$0xff]
  %v5059 = vld [vmem:[%s4965 + $0x2e8] sm:$0xff]
  %v5060 = vld [vmem:[%s4965 + $0x2f0] sm:$0xff]
  %v5061 = vld [vmem:[%s4965 + $0x2f8] sm:$0xff]
  %v5062 = vld [vmem:[%s4965 + $0x300] sm:$0xff]
  %v5063 = vld [vmem:[%s4965 + $0x308] sm:$0xff]
  %v5064 = vld [vmem:[%s4965 + $0x310] sm:$0xff]
  %v5065 = vld [vmem:[%s4965 + $0x318] sm:$0xff]
  %v5066 = vld [vmem:[%s4965 + $0x320] sm:$0xff]
  %v5067 = vld [vmem:[%s4965 + $0x328] sm:$0xff]
  %v5068 = vld [vmem:[%s4965 + $0x330] sm:$0xff]
  %v5069 = vld [vmem:[%s4965 + $0x338] sm:$0xff]
  %v5070 = vld [vmem:[%s4965 + $0x340] sm:$0xff]
  %v5071 = vld [vmem:[%s4965 + $0x348] sm:$0xff]
  %v5072 = vld [vmem:[%s4965 + $0x350] sm:$0xff]
  %v5073 = vld [vmem:[%s4965 + $0x358] sm:$0xff]
  %v5074 = vld [vmem:[%s4965 + $0x360] sm:$0xff]
  %v5075 = vld [vmem:[%s4965 + $0x368] sm:$0xff]
  %v5076 = vld [vmem:[%s4965 + $0x370] sm:$0xff]
  %v5077 = vld [vmem:[%s4965 + $0x378] sm:$0xff]
  %v5078 = vld [vmem:[%s4965 + $0x380] sm:$0xff]
  %v5079 = vld [vmem:[%s4965 + $0x388] sm:$0xff]
  %v5080 = vld [vmem:[%s4965 + $0x390] sm:$0xff]
  %v5081 = vld [vmem:[%s4965 + $0x398] sm:$0xff]
  %v5082 = vld [vmem:[%s4965 + $0x3a0] sm:$0xff]
  %v5083 = vld [vmem:[%s4965 + $0x3a8] sm:$0xff]
  %v5084 = vld [vmem:[%s4965 + $0x3b0] sm:$0xff]
  %v5085 = vld [vmem:[%s4965 + $0x3b8] sm:$0xff]
  %v5086 = vld [vmem:[%s4965 + $0x3c0] sm:$0xff]
  %v5087 = vld [vmem:[%s4965 + $0x3c8] sm:$0xff]
  %v5088 = vld [vmem:[%s4965 + $0x3d0] sm:$0xff]
  %v5089 = vld [vmem:[%s4965 + $0x3d8] sm:$0xff]
  %v5090 = vld [vmem:[%s4965 + $0x3e0] sm:$0xff]
  %v5091 = vld [vmem:[%s4965 + $0x3e8] sm:$0xff]
  %v5092 = vld [vmem:[%s4965 + $0x3f0] sm:$0xff]
  %v5093 = vld [vmem:[%s4965 + $0x3f8] sm:$0xff]
  %5094 = vmatprep.subr.mxu0 %v5027
  %5095 = vmatpush1.msra.mxu0 %v5026
  %5096 = vmatprep.subr.mxu0 %v5023
  %5097 = vmatpush1.msra.mxu0 %v5022
  %5098 = vmatprep.subr.mxu0 %v5019
  %5099 = vmatpush1.msra.mxu0 %v5018
  %5100 = vmatprep.subr.mxu0 %v5015
  %5101 = vmatpush1.msra.mxu0 %v5014
  %5102 = vmatprep.subr.mxu0 %v5011
  %5103 = vmatpush1.msra.mxu0 %v5010
  %5104 = vmatprep.subr.mxu0 %v5007
  %5105 = vmatpush1.msra.mxu0 %v5006
  %5106 = vmatprep.subr.mxu0 %v5003
  %5107 = vmatpush1.msra.mxu0 %v5002
  %5108 = vmatprep.subr.mxu0 %v4999
  %5109 = vmatpush1.msra.mxu0 %v4998
  %5110 = vmatprep.subr.mxu0 %v4995
  %5111 = vmatpush1.msra.mxu0 %v4994
  %5112 = vmatprep.subr.mxu0 %v4991
  %5113 = vmatpush1.msra.mxu0 %v4990
  %5114 = vmatprep.subr.mxu0 %v4987
  %5115 = vmatpush1.msra.mxu0 %v4986
  %5116 = vmatprep.subr.mxu0 %v4983
  %5117 = vmatpush1.msra.mxu0 %v4982
  %5118 = vmatprep.subr.mxu0 %v4979
  %5119 = vmatpush1.msra.mxu0 %v4978
  %5120 = vmatprep.subr.mxu0 %v4975
  %5121 = vmatpush1.msra.mxu0 %v4974
  %5122 = vmatprep.subr.mxu0 %v4971
  %5123 = vmatpush1.msra.mxu0 %v4970
  %5124 = vmatprep.subr.mxu0 %v4967
  %5125 = vmatpush1.msra.mxu0 %v4966
  %5126 = vmatprep.subr.mxu0 %v5091
  %5127 = vmatpush2.msra.mxu0 %v5090
  %5128 = vmatprep.subr.mxu0 %v5087
  %5129 = vmatpush2.msra.mxu0 %v5086
  %5130 = vmatprep.subr.mxu0 %v5083
  %5131 = vmatpush2.msra.mxu0 %v5082
  %5132 = vmatprep.subr.mxu0 %v5079
  %5133 = vmatpush2.msra.mxu0 %v5078
  %5134 = vmatprep.subr.mxu0 %v5075
  %5135 = vmatpush2.msra.mxu0 %v5074
  %5136 = vmatprep.subr.mxu0 %v5071
  %5137 = vmatpush2.msra.mxu0 %v5070
  %5138 = vmatprep.subr.mxu0 %v5067
  %5139 = vmatpush2.msra.mxu0 %v5066
  %5140 = vmatprep.subr.mxu0 %v5063
  %5141 = vmatpush2.msra.mxu0 %v5062
  %5142 = vmatprep.subr.mxu0 %v5059
  %5143 = vmatpush2.msra.mxu0 %v5058
  %5144 = vmatprep.subr.mxu0 %v5055
  %5145 = vmatpush2.msra.mxu0 %v5054
  %5146 = vmatprep.subr.mxu0 %v5051
  %5147 = vmatpush2.msra.mxu0 %v5050
  %5148 = vmatprep.subr.mxu0 %v5047
  %5149 = vmatpush2.msra.mxu0 %v5046
  %5150 = vmatprep.subr.mxu0 %v5043
  %5151 = vmatpush2.msra.mxu0 %v5042
  %5152 = vmatprep.subr.mxu0 %v5039
  %5153 = vmatpush2.msra.mxu0 %v5038
  %5154 = vmatprep.subr.mxu0 %v5035
  %5155 = vmatpush2.msra.mxu0 %v5034
  %5156 = vmatprep.subr.mxu0 %v5031
  %5157 = vmatpush2.msra.mxu0 %v5030
  %5158 = vmatprep.mubr.f32.mxu0 %v4826
  %5159 = vmatmul.mubr.f32.gmra.mxu0 %v4825
  %v5160 = vpop.f32.mrf.mxu0
  %v5161 = vadd.f32 0.0, %v5160
  %v5162 = vpop.f32.mrf.mxu0
  %v5163 = vadd.f32 0.0, %v5162
  %5164 = vmatprep.mubr.f32.mxu0 %v4828
  %5165 = vmatmul.mubr.f32.gmra.mxu0 %v4827
  %v5166 = vpop.f32.mrf.mxu0
  %v5167 = vadd.f32 0.0, %v5166
  %v5168 = vpop.f32.mrf.mxu0
  %v5169 = vadd.f32 0.0, %v5168
  %5170 = vmatprep.mubr.f32.mxu0 %v4830
  %5171 = vmatmul.mubr.f32.gmra.mxu0 %v4829
  %v5172 = vpop.f32.mrf.mxu0
  %v5173 = vadd.f32 0.0, %v5172
  %v5174 = vpop.f32.mrf.mxu0
  %v5175 = vadd.f32 0.0, %v5174
  %5176 = vmatprep.mubr.f32.mxu0 %v4832
  %5177 = vmatmul.mubr.f32.gmra.mxu0 %v4831
  %v5178 = vpop.f32.mrf.mxu0
  %v5179 = vadd.f32 0.0, %v5178
  %v5180 = vpop.f32.mrf.mxu0
  %v5181 = vadd.f32 0.0, %v5180
  %5182 = vdwg.mxu0
  %5183 = vmatprep.subr.mxu0 %v5029
  %5184 = vmatpush1.msra.mxu0 %v5028
  %5185 = vmatprep.subr.mxu0 %v5025
  %5186 = vmatpush1.msra.mxu0 %v5024
  %5187 = vmatprep.subr.mxu0 %v5021
  %5188 = vmatpush1.msra.mxu0 %v5020
  %5189 = vmatprep.subr.mxu0 %v5017
  %5190 = vmatpush1.msra.mxu0 %v5016
  %5191 = vmatprep.subr.mxu0 %v5013
  %5192 = vmatpush1.msra.mxu0 %v5012
  %5193 = vmatprep.subr.mxu0 %v5009
  %5194 = vmatpush1.msra.mxu0 %v5008
  %5195 = vmatprep.subr.mxu0 %v5005
  %5196 = vmatpush1.msra.mxu0 %v5004
  %5197 = vmatprep.subr.mxu0 %v5001
  %5198 = vmatpush1.msra.mxu0 %v5000
  %5199 = vmatprep.subr.mxu0 %v4997
  %5200 = vmatpush1.msra.mxu0 %v4996
  %5201 = vmatprep.subr.mxu0 %v4993
  %5202 = vmatpush1.msra.mxu0 %v4992
  %5203 = vmatprep.subr.mxu0 %v4989
  %5204 = vmatpush1.msra.mxu0 %v4988
  %5205 = vmatprep.subr.mxu0 %v4985
  %5206 = vmatpush1.msra.mxu0 %v4984
  %5207 = vmatprep.subr.mxu0 %v4981
  %5208 = vmatpush1.msra.mxu0 %v4980
  %5209 = vmatprep.subr.mxu0 %v4977
  %5210 = vmatpush1.msra.mxu0 %v4976
  %5211 = vmatprep.subr.mxu0 %v4973
  %5212 = vmatpush1.msra.mxu0 %v4972
  %5213 = vmatprep.subr.mxu0 %v4969
  %5214 = vmatpush1.msra.mxu0 %v4968
  %5215 = vmatprep.subr.mxu0 %v5093
  %5216 = vmatpush2.msra.mxu0 %v5092
  %5217 = vmatprep.subr.mxu0 %v5089
  %5218 = vmatpush2.msra.mxu0 %v5088
  %5219 = vmatprep.subr.mxu0 %v5085
  %5220 = vmatpush2.msra.mxu0 %v5084
  %5221 = vmatprep.subr.mxu0 %v5081
  %5222 = vmatpush2.msra.mxu0 %v5080
  %5223 = vmatprep.subr.mxu0 %v5077
  %5224 = vmatpush2.msra.mxu0 %v5076
  %5225 = vmatprep.subr.mxu0 %v5073
  %5226 = vmatpush2.msra.mxu0 %v5072
  %5227 = vmatprep.subr.mxu0 %v5069
  %5228 = vmatpush2.msra.mxu0 %v5068
  %5229 = vmatprep.subr.mxu0 %v5065
  %5230 = vmatpush2.msra.mxu0 %v5064
  %5231 = vmatprep.subr.mxu0 %v5061
  %5232 = vmatpush2.msra.mxu0 %v5060
  %5233 = vmatprep.subr.mxu0 %v5057
  %5234 = vmatpush2.msra.mxu0 %v5056
  %5235 = vmatprep.subr.mxu0 %v5053
  %5236 = vmatpush2.msra.mxu0 %v5052
  %5237 = vmatprep.subr.mxu0 %v5049
  %5238 = vmatpush2.msra.mxu0 %v5048
  %5239 = vmatprep.subr.mxu0 %v5045
  %5240 = vmatpush2.msra.mxu0 %v5044
  %5241 = vmatprep.subr.mxu0 %v5041
  %5242 = vmatpush2.msra.mxu0 %v5040
  %5243 = vmatprep.subr.mxu0 %v5037
  %5244 = vmatpush2.msra.mxu0 %v5036
  %5245 = vmatprep.subr.mxu0 %v5033
  %5246 = vmatpush2.msra.mxu0 %v5032
  %5247 = vmatprep.mubr.f32.mxu0 %v4826
  %5248 = vmatmul.mubr.f32.gmra.mxu0 %v4825
  %v5249 = vpop.f32.mrf.mxu0
  %v5250 = vadd.f32 0.0, %v5249
  %v5251 = vpop.f32.mrf.mxu0
  %v5252 = vadd.f32 0.0, %v5251
  %5253 = vmatprep.mubr.f32.mxu0 %v4828
  %5254 = vmatmul.mubr.f32.gmra.mxu0 %v4827
  %v5255 = vpop.f32.mrf.mxu0
  %v5256 = vadd.f32 0.0, %v5255
  %v5257 = vpop.f32.mrf.mxu0
  %v5258 = vadd.f32 0.0, %v5257
  %5259 = vmatprep.mubr.f32.mxu0 %v4830
  %5260 = vmatmul.mubr.f32.gmra.mxu0 %v4829
  %v5261 = vpop.f32.mrf.mxu0
  %v5262 = vadd.f32 0.0, %v5261
  %v5263 = vpop.f32.mrf.mxu0
  %v5264 = vadd.f32 0.0, %v5263
  %5265 = vmatprep.mubr.f32.mxu0 %v4832
  %5266 = vmatmul.mubr.f32.gmra.mxu0 %v4831
  %v5267 = vpop.f32.mrf.mxu0
  %v5268 = vadd.f32 0.0, %v5267
  %v5269 = vpop.f32.mrf.mxu0
  %v5270 = vadd.f32 0.0, %v5269
  %5271 = vdwg.mxu0
  %5272 = vmatprep.subr.mxu0 %v4898
  %5273 = vmatpush1.msra.mxu0 %v4897
  %5274 = vmatprep.subr.mxu0 %v4894
  %5275 = vmatpush1.msra.mxu0 %v4893
  %5276 = vmatprep.subr.mxu0 %v4890
  %5277 = vmatpush1.msra.mxu0 %v4889
  %5278 = vmatprep.subr.mxu0 %v4886
  %5279 = vmatpush1.msra.mxu0 %v4885
  %5280 = vmatprep.subr.mxu0 %v4882
  %5281 = vmatpush1.msra.mxu0 %v4881
  %5282 = vmatprep.subr.mxu0 %v4878
  %5283 = vmatpush1.msra.mxu0 %v4877
  %5284 = vmatprep.subr.mxu0 %v4874
  %5285 = vmatpush1.msra.mxu0 %v4873
  %5286 = vmatprep.subr.mxu0 %v4870
  %5287 = vmatpush1.msra.mxu0 %v4869
  %5288 = vmatprep.subr.mxu0 %v4866
  %5289 = vmatpush1.msra.mxu0 %v4865
  %5290 = vmatprep.subr.mxu0 %v4862
  %5291 = vmatpush1.msra.mxu0 %v4861
  %5292 = vmatprep.subr.mxu0 %v4858
  %5293 = vmatpush1.msra.mxu0 %v4857
  %5294 = vmatprep.subr.mxu0 %v4854
  %5295 = vmatpush1.msra.mxu0 %v4853
  %5296 = vmatprep.subr.mxu0 %v4850
  %5297 = vmatpush1.msra.mxu0 %v4849
  %5298 = vmatprep.subr.mxu0 %v4846
  %5299 = vmatpush1.msra.mxu0 %v4845
  %5300 = vmatprep.subr.mxu0 %v4842
  %5301 = vmatpush1.msra.mxu0 %v4841
  %5302 = vmatprep.subr.mxu0 %v4838
  %5303 = vmatpush1.msra.mxu0 %v4837
  %5304 = vmatprep.subr.mxu0 %v4962
  %5305 = vmatpush2.msra.mxu0 %v4961
  %5306 = vmatprep.subr.mxu0 %v4958
  %5307 = vmatpush2.msra.mxu0 %v4957
  %5308 = vmatprep.subr.mxu0 %v4954
  %5309 = vmatpush2.msra.mxu0 %v4953
  %5310 = vmatprep.subr.mxu0 %v4950
  %5311 = vmatpush2.msra.mxu0 %v4949
  %5312 = vmatprep.subr.mxu0 %v4946
  %5313 = vmatpush2.msra.mxu0 %v4945
  %5314 = vmatprep.subr.mxu0 %v4942
  %5315 = vmatpush2.msra.mxu0 %v4941
  %5316 = vmatprep.subr.mxu0 %v4938
  %5317 = vmatpush2.msra.mxu0 %v4937
  %5318 = vmatprep.subr.mxu0 %v4934
  %5319 = vmatpush2.msra.mxu0 %v4933
  %5320 = vmatprep.subr.mxu0 %v4930
  %5321 = vmatpush2.msra.mxu0 %v4929
  %5322 = vmatprep.subr.mxu0 %v4926
  %5323 = vmatpush2.msra.mxu0 %v4925
  %5324 = vmatprep.subr.mxu0 %v4922
  %5325 = vmatpush2.msra.mxu0 %v4921
  %5326 = vmatprep.subr.mxu0 %v4918
  %5327 = vmatpush2.msra.mxu0 %v4917
  %5328 = vmatprep.subr.mxu0 %v4914
  %5329 = vmatpush2.msra.mxu0 %v4913
  %5330 = vmatprep.subr.mxu0 %v4910
  %5331 = vmatpush2.msra.mxu0 %v4909
  %5332 = vmatprep.subr.mxu0 %v4906
  %5333 = vmatpush2.msra.mxu0 %v4905
  %5334 = vmatprep.subr.mxu0 %v4902
  %5335 = vmatpush2.msra.mxu0 %v4901
  %5336 = vmatprep.mubr.f32.mxu0 %v2552
  %5337 = vmatmul.mubr.f32.gmra.mxu0 %v2551
  %v5338 = vpop.f32.mrf.mxu0
  %v5339 = vadd.f32 %v5161, %v5338
  %v5340 = vpop.f32.mrf.mxu0
  %v5341 = vadd.f32 %v5163, %v5340
  %5342 = vmatprep.mubr.f32.mxu0 %v2554
  %5343 = vmatmul.mubr.f32.gmra.mxu0 %v2553
  %v5344 = vpop.f32.mrf.mxu0
  %v5345 = vadd.f32 %v5167, %v5344
  %v5346 = vpop.f32.mrf.mxu0
  %v5347 = vadd.f32 %v5169, %v5346
  %5348 = vmatprep.mubr.f32.mxu0 %v2556
  %5349 = vmatmul.mubr.f32.gmra.mxu0 %v2555
  %v5350 = vpop.f32.mrf.mxu0
  %v5351 = vadd.f32 %v5173, %v5350
  %v5352 = vpop.f32.mrf.mxu0
  %v5353 = vadd.f32 %v5175, %v5352
  %5354 = vmatprep.mubr.f32.mxu0 %v2558
  %5355 = vmatmul.mubr.f32.gmra.mxu0 %v2557
  %v5356 = vpop.f32.mrf.mxu0
  %v5357 = vadd.f32 %v5179, %v5356
  %v5358 = vpop.f32.mrf.mxu0
  %v5359 = vadd.f32 %v5181, %v5358
  %5360 = vdwg.mxu0
  %5361 = vmatprep.subr.mxu0 %v4900
  %5362 = vmatpush1.msra.mxu0 %v4899
  %5363 = vmatprep.subr.mxu0 %v4896
  %5364 = vmatpush1.msra.mxu0 %v4895
  %5365 = vmatprep.subr.mxu0 %v4892
  %5366 = vmatpush1.msra.mxu0 %v4891
  %5367 = vmatprep.subr.mxu0 %v4888
  %5368 = vmatpush1.msra.mxu0 %v4887
  %5369 = vmatprep.subr.mxu0 %v4884
  %5370 = vmatpush1.msra.mxu0 %v4883
  %5371 = vmatprep.subr.mxu0 %v4880
  %5372 = vmatpush1.msra.mxu0 %v4879
  %5373 = vmatprep.subr.mxu0 %v4876
  %5374 = vmatpush1.msra.mxu0 %v4875
  %5375 = vmatprep.subr.mxu0 %v4872
  %5376 = vmatpush1.msra.mxu0 %v4871
  %5377 = vmatprep.subr.mxu0 %v4868
  %5378 = vmatpush1.msra.mxu0 %v4867
  %5379 = vmatprep.subr.mxu0 %v4864
  %5380 = vmatpush1.msra.mxu0 %v4863
  %5381 = vmatprep.subr.mxu0 %v4860
  %5382 = vmatpush1.msra.mxu0 %v4859
  %5383 = vmatprep.subr.mxu0 %v4856
  %5384 = vmatpush1.msra.mxu0 %v4855
  %5385 = vmatprep.subr.mxu0 %v4852
  %5386 = vmatpush1.msra.mxu0 %v4851
  %5387 = vmatprep.subr.mxu0 %v4848
  %5388 = vmatpush1.msra.mxu0 %v4847
  %5389 = vmatprep.subr.mxu0 %v4844
  %5390 = vmatpush1.msra.mxu0 %v4843
  %5391 = vmatprep.subr.mxu0 %v4840
  %5392 = vmatpush1.msra.mxu0 %v4839
  %5393 = vmatprep.subr.mxu0 %v4964
  %5394 = vmatpush2.msra.mxu0 %v4963
  %5395 = vmatprep.subr.mxu0 %v4960
  %5396 = vmatpush2.msra.mxu0 %v4959
  %5397 = vmatprep.subr.mxu0 %v4956
  %5398 = vmatpush2.msra.mxu0 %v4955
  %5399 = vmatprep.subr.mxu0 %v4952
  %5400 = vmatpush2.msra.mxu0 %v4951
  %5401 = vmatprep.subr.mxu0 %v4948
  %5402 = vmatpush2.msra.mxu0 %v4947
  %5403 = vmatprep.subr.mxu0 %v4944
  %5404 = vmatpush2.msra.mxu0 %v4943
  %5405 = vmatprep.subr.mxu0 %v4940
  %5406 = vmatpush2.msra.mxu0 %v4939
  %5407 = vmatprep.subr.mxu0 %v4936
  %5408 = vmatpush2.msra.mxu0 %v4935
  %5409 = vmatprep.subr.mxu0 %v4932
  %5410 = vmatpush2.msra.mxu0 %v4931
  %5411 = vmatprep.subr.mxu0 %v4928
  %5412 = vmatpush2.msra.mxu0 %v4927
  %5413 = vmatprep.subr.mxu0 %v4924
  %5414 = vmatpush2.msra.mxu0 %v4923
  %5415 = vmatprep.subr.mxu0 %v4920
  %5416 = vmatpush2.msra.mxu0 %v4919
  %5417 = vmatprep.subr.mxu0 %v4916
  %5418 = vmatpush2.msra.mxu0 %v4915
  %5419 = vmatprep.subr.mxu0 %v4912
  %5420 = vmatpush2.msra.mxu0 %v4911
  %5421 = vmatprep.subr.mxu0 %v4908
  %5422 = vmatpush2.msra.mxu0 %v4907
  %5423 = vmatprep.subr.mxu0 %v4904
  %5424 = vmatpush2.msra.mxu0 %v4903
  %5425 = vmatprep.mubr.f32.mxu0 %v2552
  %5426 = vmatmul.mubr.f32.gmra.mxu0 %v2551
  %v5427 = vpop.f32.mrf.mxu0
  %v5428 = vadd.f32 %v5250, %v5427
  %v5429 = vpop.f32.mrf.mxu0
  %v5430 = vadd.f32 %v5252, %v5429
  %5431 = vmatprep.mubr.f32.mxu0 %v2554
  %5432 = vmatmul.mubr.f32.gmra.mxu0 %v2553
  %v5433 = vpop.f32.mrf.mxu0
  %v5434 = vadd.f32 %v5256, %v5433
  %v5435 = vpop.f32.mrf.mxu0
  %v5436 = vadd.f32 %v5258, %v5435
  %5437 = vmatprep.mubr.f32.mxu0 %v2556
  %5438 = vmatmul.mubr.f32.gmra.mxu0 %v2555
  %v5439 = vpop.f32.mrf.mxu0
  %v5440 = vadd.f32 %v5262, %v5439
  %v5441 = vpop.f32.mrf.mxu0
  %v5442 = vadd.f32 %v5264, %v5441
  %5443 = vmatprep.mubr.f32.mxu0 %v2558
  %5444 = vmatmul.mubr.f32.gmra.mxu0 %v2557
  %v5445 = vpop.f32.mrf.mxu0
  %v5446 = vadd.f32 %v5268, %v5445
  %v5447 = vpop.f32.mrf.mxu0
  %v5448 = vadd.f32 %v5270, %v5447
  %5449 = vdwg.mxu0
  %s5450 = scalar_lea.vmem %s3, 2048
  %v5451 = vld [vmem:[%s5450] sm:$0xff]
  %v5452 = vld [vmem:[%s5450 + $0x8] sm:$0xff]
  %v5453 = vld [vmem:[%s5450 + $0x10] sm:$0xff]
  %v5454 = vld [vmem:[%s5450 + $0x18] sm:$0xff]
  %v5455 = vld [vmem:[%s5450 + $0x20] sm:$0xff]
  %v5456 = vld [vmem:[%s5450 + $0x28] sm:$0xff]
  %v5457 = vld [vmem:[%s5450 + $0x30] sm:$0xff]
  %v5458 = vld [vmem:[%s5450 + $0x38] sm:$0xff]
  %v5459 = vld [vmem:[%s5450 + $0x40] sm:$0xff]
  %v5460 = vld [vmem:[%s5450 + $0x48] sm:$0xff]
  %v5461 = vld [vmem:[%s5450 + $0x50] sm:$0xff]
  %v5462 = vld [vmem:[%s5450 + $0x58] sm:$0xff]
  %v5463 = vld [vmem:[%s5450 + $0x60] sm:$0xff]
  %v5464 = vld [vmem:[%s5450 + $0x68] sm:$0xff]
  %v5465 = vld [vmem:[%s5450 + $0x70] sm:$0xff]
  %v5466 = vld [vmem:[%s5450 + $0x78] sm:$0xff]
  %v5467 = vld [vmem:[%s5450 + $0x80] sm:$0xff]
  %v5468 = vld [vmem:[%s5450 + $0x88] sm:$0xff]
  %v5469 = vld [vmem:[%s5450 + $0x90] sm:$0xff]
  %v5470 = vld [vmem:[%s5450 + $0x98] sm:$0xff]
  %v5471 = vld [vmem:[%s5450 + $0xa0] sm:$0xff]
  %v5472 = vld [vmem:[%s5450 + $0xa8] sm:$0xff]
  %v5473 = vld [vmem:[%s5450 + $0xb0] sm:$0xff]
  %v5474 = vld [vmem:[%s5450 + $0xb8] sm:$0xff]
  %v5475 = vld [vmem:[%s5450 + $0xc0] sm:$0xff]
  %v5476 = vld [vmem:[%s5450 + $0xc8] sm:$0xff]
  %v5477 = vld [vmem:[%s5450 + $0xd0] sm:$0xff]
  %v5478 = vld [vmem:[%s5450 + $0xd8] sm:$0xff]
  %v5479 = vld [vmem:[%s5450 + $0xe0] sm:$0xff]
  %v5480 = vld [vmem:[%s5450 + $0xe8] sm:$0xff]
  %v5481 = vld [vmem:[%s5450 + $0xf0] sm:$0xff]
  %v5482 = vld [vmem:[%s5450 + $0xf8] sm:$0xff]
  %v5483 = vld [vmem:[%s5450 + $0x100] sm:$0xff]
  %v5484 = vld [vmem:[%s5450 + $0x108] sm:$0xff]
  %v5485 = vld [vmem:[%s5450 + $0x110] sm:$0xff]
  %v5486 = vld [vmem:[%s5450 + $0x118] sm:$0xff]
  %v5487 = vld [vmem:[%s5450 + $0x120] sm:$0xff]
  %v5488 = vld [vmem:[%s5450 + $0x128] sm:$0xff]
  %v5489 = vld [vmem:[%s5450 + $0x130] sm:$0xff]
  %v5490 = vld [vmem:[%s5450 + $0x138] sm:$0xff]
  %v5491 = vld [vmem:[%s5450 + $0x140] sm:$0xff]
  %v5492 = vld [vmem:[%s5450 + $0x148] sm:$0xff]
  %v5493 = vld [vmem:[%s5450 + $0x150] sm:$0xff]
  %v5494 = vld [vmem:[%s5450 + $0x158] sm:$0xff]
  %v5495 = vld [vmem:[%s5450 + $0x160] sm:$0xff]
  %v5496 = vld [vmem:[%s5450 + $0x168] sm:$0xff]
  %v5497 = vld [vmem:[%s5450 + $0x170] sm:$0xff]
  %v5498 = vld [vmem:[%s5450 + $0x178] sm:$0xff]
  %v5499 = vld [vmem:[%s5450 + $0x180] sm:$0xff]
  %v5500 = vld [vmem:[%s5450 + $0x188] sm:$0xff]
  %v5501 = vld [vmem:[%s5450 + $0x190] sm:$0xff]
  %v5502 = vld [vmem:[%s5450 + $0x198] sm:$0xff]
  %v5503 = vld [vmem:[%s5450 + $0x1a0] sm:$0xff]
  %v5504 = vld [vmem:[%s5450 + $0x1a8] sm:$0xff]
  %v5505 = vld [vmem:[%s5450 + $0x1b0] sm:$0xff]
  %v5506 = vld [vmem:[%s5450 + $0x1b8] sm:$0xff]
  %v5507 = vld [vmem:[%s5450 + $0x1c0] sm:$0xff]
  %v5508 = vld [vmem:[%s5450 + $0x1c8] sm:$0xff]
  %v5509 = vld [vmem:[%s5450 + $0x1d0] sm:$0xff]
  %v5510 = vld [vmem:[%s5450 + $0x1d8] sm:$0xff]
  %v5511 = vld [vmem:[%s5450 + $0x1e0] sm:$0xff]
  %v5512 = vld [vmem:[%s5450 + $0x1e8] sm:$0xff]
  %v5513 = vld [vmem:[%s5450 + $0x1f0] sm:$0xff]
  %v5514 = vld [vmem:[%s5450 + $0x1f8] sm:$0xff]
  %v5515 = vld [vmem:[%s5450 + $0x200] sm:$0xff]
  %v5516 = vld [vmem:[%s5450 + $0x208] sm:$0xff]
  %v5517 = vld [vmem:[%s5450 + $0x210] sm:$0xff]
  %v5518 = vld [vmem:[%s5450 + $0x218] sm:$0xff]
  %v5519 = vld [vmem:[%s5450 + $0x220] sm:$0xff]
  %v5520 = vld [vmem:[%s5450 + $0x228] sm:$0xff]
  %v5521 = vld [vmem:[%s5450 + $0x230] sm:$0xff]
  %v5522 = vld [vmem:[%s5450 + $0x238] sm:$0xff]
  %v5523 = vld [vmem:[%s5450 + $0x240] sm:$0xff]
  %v5524 = vld [vmem:[%s5450 + $0x248] sm:$0xff]
  %v5525 = vld [vmem:[%s5450 + $0x250] sm:$0xff]
  %v5526 = vld [vmem:[%s5450 + $0x258] sm:$0xff]
  %v5527 = vld [vmem:[%s5450 + $0x260] sm:$0xff]
  %v5528 = vld [vmem:[%s5450 + $0x268] sm:$0xff]
  %v5529 = vld [vmem:[%s5450 + $0x270] sm:$0xff]
  %v5530 = vld [vmem:[%s5450 + $0x278] sm:$0xff]
  %v5531 = vld [vmem:[%s5450 + $0x280] sm:$0xff]
  %v5532 = vld [vmem:[%s5450 + $0x288] sm:$0xff]
  %v5533 = vld [vmem:[%s5450 + $0x290] sm:$0xff]
  %v5534 = vld [vmem:[%s5450 + $0x298] sm:$0xff]
  %v5535 = vld [vmem:[%s5450 + $0x2a0] sm:$0xff]
  %v5536 = vld [vmem:[%s5450 + $0x2a8] sm:$0xff]
  %v5537 = vld [vmem:[%s5450 + $0x2b0] sm:$0xff]
  %v5538 = vld [vmem:[%s5450 + $0x2b8] sm:$0xff]
  %v5539 = vld [vmem:[%s5450 + $0x2c0] sm:$0xff]
  %v5540 = vld [vmem:[%s5450 + $0x2c8] sm:$0xff]
  %v5541 = vld [vmem:[%s5450 + $0x2d0] sm:$0xff]
  %v5542 = vld [vmem:[%s5450 + $0x2d8] sm:$0xff]
  %v5543 = vld [vmem:[%s5450 + $0x2e0] sm:$0xff]
  %v5544 = vld [vmem:[%s5450 + $0x2e8] sm:$0xff]
  %v5545 = vld [vmem:[%s5450 + $0x2f0] sm:$0xff]
  %v5546 = vld [vmem:[%s5450 + $0x2f8] sm:$0xff]
  %v5547 = vld [vmem:[%s5450 + $0x300] sm:$0xff]
  %v5548 = vld [vmem:[%s5450 + $0x308] sm:$0xff]
  %v5549 = vld [vmem:[%s5450 + $0x310] sm:$0xff]
  %v5550 = vld [vmem:[%s5450 + $0x318] sm:$0xff]
  %v5551 = vld [vmem:[%s5450 + $0x320] sm:$0xff]
  %v5552 = vld [vmem:[%s5450 + $0x328] sm:$0xff]
  %v5553 = vld [vmem:[%s5450 + $0x330] sm:$0xff]
  %v5554 = vld [vmem:[%s5450 + $0x338] sm:$0xff]
  %v5555 = vld [vmem:[%s5450 + $0x340] sm:$0xff]
  %v5556 = vld [vmem:[%s5450 + $0x348] sm:$0xff]
  %v5557 = vld [vmem:[%s5450 + $0x350] sm:$0xff]
  %v5558 = vld [vmem:[%s5450 + $0x358] sm:$0xff]
  %v5559 = vld [vmem:[%s5450 + $0x360] sm:$0xff]
  %v5560 = vld [vmem:[%s5450 + $0x368] sm:$0xff]
  %v5561 = vld [vmem:[%s5450 + $0x370] sm:$0xff]
  %v5562 = vld [vmem:[%s5450 + $0x378] sm:$0xff]
  %v5563 = vld [vmem:[%s5450 + $0x380] sm:$0xff]
  %v5564 = vld [vmem:[%s5450 + $0x388] sm:$0xff]
  %v5565 = vld [vmem:[%s5450 + $0x390] sm:$0xff]
  %v5566 = vld [vmem:[%s5450 + $0x398] sm:$0xff]
  %v5567 = vld [vmem:[%s5450 + $0x3a0] sm:$0xff]
  %v5568 = vld [vmem:[%s5450 + $0x3a8] sm:$0xff]
  %v5569 = vld [vmem:[%s5450 + $0x3b0] sm:$0xff]
  %v5570 = vld [vmem:[%s5450 + $0x3b8] sm:$0xff]
  %v5571 = vld [vmem:[%s5450 + $0x3c0] sm:$0xff]
  %v5572 = vld [vmem:[%s5450 + $0x3c8] sm:$0xff]
  %v5573 = vld [vmem:[%s5450 + $0x3d0] sm:$0xff]
  %v5574 = vld [vmem:[%s5450 + $0x3d8] sm:$0xff]
  %v5575 = vld [vmem:[%s5450 + $0x3e0] sm:$0xff]
  %v5576 = vld [vmem:[%s5450 + $0x3e8] sm:$0xff]
  %v5577 = vld [vmem:[%s5450 + $0x3f0] sm:$0xff]
  %v5578 = vld [vmem:[%s5450 + $0x3f8] sm:$0xff]
  %5579 = vmatprep.subr.mxu0 %v5512
  %5580 = vmatpush1.msra.mxu0 %v5511
  %5581 = vmatprep.subr.mxu0 %v5508
  %5582 = vmatpush1.msra.mxu0 %v5507
  %5583 = vmatprep.subr.mxu0 %v5504
  %5584 = vmatpush1.msra.mxu0 %v5503
  %5585 = vmatprep.subr.mxu0 %v5500
  %5586 = vmatpush1.msra.mxu0 %v5499
  %5587 = vmatprep.subr.mxu0 %v5496
  %5588 = vmatpush1.msra.mxu0 %v5495
  %5589 = vmatprep.subr.mxu0 %v5492
  %5590 = vmatpush1.msra.mxu0 %v5491
  %5591 = vmatprep.subr.mxu0 %v5488
  %5592 = vmatpush1.msra.mxu0 %v5487
  %5593 = vmatprep.subr.mxu0 %v5484
  %5594 = vmatpush1.msra.mxu0 %v5483
  %5595 = vmatprep.subr.mxu0 %v5480
  %5596 = vmatpush1.msra.mxu0 %v5479
  %5597 = vmatprep.subr.mxu0 %v5476
  %5598 = vmatpush1.msra.mxu0 %v5475
  %5599 = vmatprep.subr.mxu0 %v5472
  %5600 = vmatpush1.msra.mxu0 %v5471
  %5601 = vmatprep.subr.mxu0 %v5468
  %5602 = vmatpush1.msra.mxu0 %v5467
  %5603 = vmatprep.subr.mxu0 %v5464
  %5604 = vmatpush1.msra.mxu0 %v5463
  %5605 = vmatprep.subr.mxu0 %v5460
  %5606 = vmatpush1.msra.mxu0 %v5459
  %5607 = vmatprep.subr.mxu0 %v5456
  %5608 = vmatpush1.msra.mxu0 %v5455
  %5609 = vmatprep.subr.mxu0 %v5452
  %5610 = vmatpush1.msra.mxu0 %v5451
  %5611 = vmatprep.subr.mxu0 %v5576
  %5612 = vmatpush2.msra.mxu0 %v5575
  %5613 = vmatprep.subr.mxu0 %v5572
  %5614 = vmatpush2.msra.mxu0 %v5571
  %5615 = vmatprep.subr.mxu0 %v5568
  %5616 = vmatpush2.msra.mxu0 %v5567
  %5617 = vmatprep.subr.mxu0 %v5564
  %5618 = vmatpush2.msra.mxu0 %v5563
  %5619 = vmatprep.subr.mxu0 %v5560
  %5620 = vmatpush2.msra.mxu0 %v5559
  %5621 = vmatprep.subr.mxu0 %v5556
  %5622 = vmatpush2.msra.mxu0 %v5555
  %5623 = vmatprep.subr.mxu0 %v5552
  %5624 = vmatpush2.msra.mxu0 %v5551
  %5625 = vmatprep.subr.mxu0 %v5548
  %5626 = vmatpush2.msra.mxu0 %v5547
  %5627 = vmatprep.subr.mxu0 %v5544
  %5628 = vmatpush2.msra.mxu0 %v5543
  %5629 = vmatprep.subr.mxu0 %v5540
  %5630 = vmatpush2.msra.mxu0 %v5539
  %5631 = vmatprep.subr.mxu0 %v5536
  %5632 = vmatpush2.msra.mxu0 %v5535
  %5633 = vmatprep.subr.mxu0 %v5532
  %5634 = vmatpush2.msra.mxu0 %v5531
  %5635 = vmatprep.subr.mxu0 %v5528
  %5636 = vmatpush2.msra.mxu0 %v5527
  %5637 = vmatprep.subr.mxu0 %v5524
  %5638 = vmatpush2.msra.mxu0 %v5523
  %5639 = vmatprep.subr.mxu0 %v5520
  %5640 = vmatpush2.msra.mxu0 %v5519
  %5641 = vmatprep.subr.mxu0 %v5516
  %5642 = vmatpush2.msra.mxu0 %v5515
  %5643 = vmatprep.mubr.f32.mxu0 %v2554
  %5644 = vmatmul.mubr.f32.gmra.mxu0 %v2553
  %v5645 = vpop.f32.mrf.mxu0
  %v5646 = vadd.f32 0.0, %v5645
  %v5647 = vpop.f32.mrf.mxu0
  %v5648 = vadd.f32 0.0, %v5647
  %5649 = vmatprep.mubr.f32.mxu0 %v2556
  %5650 = vmatmul.mubr.f32.gmra.mxu0 %v2555
  %v5651 = vpop.f32.mrf.mxu0
  %v5652 = vadd.f32 0.0, %v5651
  %v5653 = vpop.f32.mrf.mxu0
  %v5654 = vadd.f32 0.0, %v5653
  %5655 = vmatprep.mubr.f32.mxu0 %v2558
  %5656 = vmatmul.mubr.f32.gmra.mxu0 %v2557
  %v5657 = vpop.f32.mrf.mxu0
  %v5658 = vadd.f32 0.0, %v5657
  %v5659 = vpop.f32.mrf.mxu0
  %v5660 = vadd.f32 0.0, %v5659
  %5661 = vmatprep.mubr.f32.mxu0 %v2560
  %5662 = vmatmul.mubr.f32.gmra.mxu0 %v2559
  %v5663 = vpop.f32.mrf.mxu0
  %v5664 = vadd.f32 0.0, %v5663
  %v5665 = vpop.f32.mrf.mxu0
  %v5666 = vadd.f32 0.0, %v5665
  %5667 = vdwg.mxu0
  %5668 = vmatprep.subr.mxu0 %v5514
  %5669 = vmatpush1.msra.mxu0 %v5513
  %5670 = vmatprep.subr.mxu0 %v5510
  %5671 = vmatpush1.msra.mxu0 %v5509
  %5672 = vmatprep.subr.mxu0 %v5506
  %5673 = vmatpush1.msra.mxu0 %v5505
  %5674 = vmatprep.subr.mxu0 %v5502
  %5675 = vmatpush1.msra.mxu0 %v5501
  %5676 = vmatprep.subr.mxu0 %v5498
  %5677 = vmatpush1.msra.mxu0 %v5497
  %5678 = vmatprep.subr.mxu0 %v5494
  %5679 = vmatpush1.msra.mxu0 %v5493
  %5680 = vmatprep.subr.mxu0 %v5490
  %5681 = vmatpush1.msra.mxu0 %v5489
  %5682 = vmatprep.subr.mxu0 %v5486
  %5683 = vmatpush1.msra.mxu0 %v5485
  %5684 = vmatprep.subr.mxu0 %v5482
  %5685 = vmatpush1.msra.mxu0 %v5481
  %5686 = vmatprep.subr.mxu0 %v5478
  %5687 = vmatpush1.msra.mxu0 %v5477
  %5688 = vmatprep.subr.mxu0 %v5474
  %5689 = vmatpush1.msra.mxu0 %v5473
  %5690 = vmatprep.subr.mxu0 %v5470
  %5691 = vmatpush1.msra.mxu0 %v5469
  %5692 = vmatprep.subr.mxu0 %v5466
  %5693 = vmatpush1.msra.mxu0 %v5465
  %5694 = vmatprep.subr.mxu0 %v5462
  %5695 = vmatpush1.msra.mxu0 %v5461
  %5696 = vmatprep.subr.mxu0 %v5458
  %5697 = vmatpush1.msra.mxu0 %v5457
  %5698 = vmatprep.subr.mxu0 %v5454
  %5699 = vmatpush1.msra.mxu0 %v5453
  %5700 = vmatprep.subr.mxu0 %v5578
  %5701 = vmatpush2.msra.mxu0 %v5577
  %5702 = vmatprep.subr.mxu0 %v5574
  %5703 = vmatpush2.msra.mxu0 %v5573
  %5704 = vmatprep.subr.mxu0 %v5570
  %5705 = vmatpush2.msra.mxu0 %v5569
  %5706 = vmatprep.subr.mxu0 %v5566
  %5707 = vmatpush2.msra.mxu0 %v5565
  %5708 = vmatprep.subr.mxu0 %v5562
  %5709 = vmatpush2.msra.mxu0 %v5561
  %5710 = vmatprep.subr.mxu0 %v5558
  %5711 = vmatpush2.msra.mxu0 %v5557
  %5712 = vmatprep.subr.mxu0 %v5554
  %5713 = vmatpush2.msra.mxu0 %v5553
  %5714 = vmatprep.subr.mxu0 %v5550
  %5715 = vmatpush2.msra.mxu0 %v5549
  %5716 = vmatprep.subr.mxu0 %v5546
  %5717 = vmatpush2.msra.mxu0 %v5545
  %5718 = vmatprep.subr.mxu0 %v5542
  %5719 = vmatpush2.msra.mxu0 %v5541
  %5720 = vmatprep.subr.mxu0 %v5538
  %5721 = vmatpush2.msra.mxu0 %v5537
  %5722 = vmatprep.subr.mxu0 %v5534
  %5723 = vmatpush2.msra.mxu0 %v5533
  %5724 = vmatprep.subr.mxu0 %v5530
  %5725 = vmatpush2.msra.mxu0 %v5529
  %5726 = vmatprep.subr.mxu0 %v5526
  %5727 = vmatpush2.msra.mxu0 %v5525
  %5728 = vmatprep.subr.mxu0 %v5522
  %5729 = vmatpush2.msra.mxu0 %v5521
  %5730 = vmatprep.subr.mxu0 %v5518
  %5731 = vmatpush2.msra.mxu0 %v5517
  %5732 = vmatprep.mubr.f32.mxu0 %v2554
  %5733 = vmatmul.mubr.f32.gmra.mxu0 %v2553
  %v5734 = vpop.f32.mrf.mxu0
  %v5735 = vadd.f32 0.0, %v5734
  %v5736 = vpop.f32.mrf.mxu0
  %v5737 = vadd.f32 0.0, %v5736
  %5738 = vmatprep.mubr.f32.mxu0 %v2556
  %5739 = vmatmul.mubr.f32.gmra.mxu0 %v2555
  %v5740 = vpop.f32.mrf.mxu0
  %v5741 = vadd.f32 0.0, %v5740
  %v5742 = vpop.f32.mrf.mxu0
  %v5743 = vadd.f32 0.0, %v5742
  %5744 = vmatprep.mubr.f32.mxu0 %v2558
  %5745 = vmatmul.mubr.f32.gmra.mxu0 %v2557
  %v5746 = vpop.f32.mrf.mxu0
  %v5747 = vadd.f32 0.0, %v5746
  %v5748 = vpop.f32.mrf.mxu0
  %v5749 = vadd.f32 0.0, %v5748
  %5750 = vmatprep.mubr.f32.mxu0 %v2560
  %5751 = vmatmul.mubr.f32.gmra.mxu0 %v2559
  %v5752 = vpop.f32.mrf.mxu0
  %v5753 = vadd.f32 0.0, %v5752
  %v5754 = vpop.f32.mrf.mxu0
  %v5755 = vadd.f32 0.0, %v5754
  %5756 = vdwg.mxu0
  %v5757 = vadd.f32 %v5339, %v5646
  %v5758 = vadd.f32 %v5341, %v5648
  %v5759 = vadd.f32 %v5428, %v5735
  %v5760 = vadd.f32 %v5430, %v5737
  %v5761 = vadd.f32 %v5345, %v5652
  %v5762 = vadd.f32 %v5347, %v5654
  %v5763 = vadd.f32 %v5434, %v5741
  %v5764 = vadd.f32 %v5436, %v5743
  %v5765 = vadd.f32 %v5351, %v5658
  %v5766 = vadd.f32 %v5353, %v5660
  %v5767 = vadd.f32 %v5440, %v5747
  %v5768 = vadd.f32 %v5442, %v5749
  %v5769 = vadd.f32 %v5357, %v5664
  %v5770 = vadd.f32 %v5359, %v5666
  %v5771 = vadd.f32 %v5446, %v5753
  %v5772 = vadd.f32 %v5448, %v5755
  %s5773 = scalar_lea.vmem %s3, 3072
  %v5774 = vld [vmem:[%s5773] sm:$0xff]
  %v5775 = vld [vmem:[%s5773 + $0x8] sm:$0xff]
  %v5776 = vld [vmem:[%s5773 + $0x10] sm:$0xff]
  %v5777 = vld [vmem:[%s5773 + $0x18] sm:$0xff]
  %v5778 = vld [vmem:[%s5773 + $0x20] sm:$0xff]
  %v5779 = vld [vmem:[%s5773 + $0x28] sm:$0xff]
  %v5780 = vld [vmem:[%s5773 + $0x30] sm:$0xff]
  %v5781 = vld [vmem:[%s5773 + $0x38] sm:$0xff]
  %v5782 = vld [vmem:[%s5773 + $0x40] sm:$0xff]
  %v5783 = vld [vmem:[%s5773 + $0x48] sm:$0xff]
  %v5784 = vld [vmem:[%s5773 + $0x50] sm:$0xff]
  %v5785 = vld [vmem:[%s5773 + $0x58] sm:$0xff]
  %v5786 = vld [vmem:[%s5773 + $0x60] sm:$0xff]
  %v5787 = vld [vmem:[%s5773 + $0x68] sm:$0xff]
  %v5788 = vld [vmem:[%s5773 + $0x70] sm:$0xff]
  %v5789 = vld [vmem:[%s5773 + $0x78] sm:$0xff]
  %v5790 = vld [vmem:[%s5773 + $0x80] sm:$0xff]
  %v5791 = vld [vmem:[%s5773 + $0x88] sm:$0xff]
  %v5792 = vld [vmem:[%s5773 + $0x90] sm:$0xff]
  %v5793 = vld [vmem:[%s5773 + $0x98] sm:$0xff]
  %v5794 = vld [vmem:[%s5773 + $0xa0] sm:$0xff]
  %v5795 = vld [vmem:[%s5773 + $0xa8] sm:$0xff]
  %v5796 = vld [vmem:[%s5773 + $0xb0] sm:$0xff]
  %v5797 = vld [vmem:[%s5773 + $0xb8] sm:$0xff]
  %v5798 = vld [vmem:[%s5773 + $0xc0] sm:$0xff]
  %v5799 = vld [vmem:[%s5773 + $0xc8] sm:$0xff]
  %v5800 = vld [vmem:[%s5773 + $0xd0] sm:$0xff]
  %v5801 = vld [vmem:[%s5773 + $0xd8] sm:$0xff]
  %v5802 = vld [vmem:[%s5773 + $0xe0] sm:$0xff]
  %v5803 = vld [vmem:[%s5773 + $0xe8] sm:$0xff]
  %v5804 = vld [vmem:[%s5773 + $0xf0] sm:$0xff]
  %v5805 = vld [vmem:[%s5773 + $0xf8] sm:$0xff]
  %v5806 = vld [vmem:[%s5773 + $0x100] sm:$0xff]
  %v5807 = vld [vmem:[%s5773 + $0x108] sm:$0xff]
  %v5808 = vld [vmem:[%s5773 + $0x110] sm:$0xff]
  %v5809 = vld [vmem:[%s5773 + $0x118] sm:$0xff]
  %v5810 = vld [vmem:[%s5773 + $0x120] sm:$0xff]
  %v5811 = vld [vmem:[%s5773 + $0x128] sm:$0xff]
  %v5812 = vld [vmem:[%s5773 + $0x130] sm:$0xff]
  %v5813 = vld [vmem:[%s5773 + $0x138] sm:$0xff]
  %v5814 = vld [vmem:[%s5773 + $0x140] sm:$0xff]
  %v5815 = vld [vmem:[%s5773 + $0x148] sm:$0xff]
  %v5816 = vld [vmem:[%s5773 + $0x150] sm:$0xff]
  %v5817 = vld [vmem:[%s5773 + $0x158] sm:$0xff]
  %v5818 = vld [vmem:[%s5773 + $0x160] sm:$0xff]
  %v5819 = vld [vmem:[%s5773 + $0x168] sm:$0xff]
  %v5820 = vld [vmem:[%s5773 + $0x170] sm:$0xff]
  %v5821 = vld [vmem:[%s5773 + $0x178] sm:$0xff]
  %v5822 = vld [vmem:[%s5773 + $0x180] sm:$0xff]
  %v5823 = vld [vmem:[%s5773 + $0x188] sm:$0xff]
  %v5824 = vld [vmem:[%s5773 + $0x190] sm:$0xff]
  %v5825 = vld [vmem:[%s5773 + $0x198] sm:$0xff]
  %v5826 = vld [vmem:[%s5773 + $0x1a0] sm:$0xff]
  %v5827 = vld [vmem:[%s5773 + $0x1a8] sm:$0xff]
  %v5828 = vld [vmem:[%s5773 + $0x1b0] sm:$0xff]
  %v5829 = vld [vmem:[%s5773 + $0x1b8] sm:$0xff]
  %v5830 = vld [vmem:[%s5773 + $0x1c0] sm:$0xff]
  %v5831 = vld [vmem:[%s5773 + $0x1c8] sm:$0xff]
  %v5832 = vld [vmem:[%s5773 + $0x1d0] sm:$0xff]
  %v5833 = vld [vmem:[%s5773 + $0x1d8] sm:$0xff]
  %v5834 = vld [vmem:[%s5773 + $0x1e0] sm:$0xff]
  %v5835 = vld [vmem:[%s5773 + $0x1e8] sm:$0xff]
  %v5836 = vld [vmem:[%s5773 + $0x1f0] sm:$0xff]
  %v5837 = vld [vmem:[%s5773 + $0x1f8] sm:$0xff]
  %v5838 = vld [vmem:[%s5773 + $0x200] sm:$0xff]
  %v5839 = vld [vmem:[%s5773 + $0x208] sm:$0xff]
  %v5840 = vld [vmem:[%s5773 + $0x210] sm:$0xff]
  %v5841 = vld [vmem:[%s5773 + $0x218] sm:$0xff]
  %v5842 = vld [vmem:[%s5773 + $0x220] sm:$0xff]
  %v5843 = vld [vmem:[%s5773 + $0x228] sm:$0xff]
  %v5844 = vld [vmem:[%s5773 + $0x230] sm:$0xff]
  %v5845 = vld [vmem:[%s5773 + $0x238] sm:$0xff]
  %v5846 = vld [vmem:[%s5773 + $0x240] sm:$0xff]
  %v5847 = vld [vmem:[%s5773 + $0x248] sm:$0xff]
  %v5848 = vld [vmem:[%s5773 + $0x250] sm:$0xff]
  %v5849 = vld [vmem:[%s5773 + $0x258] sm:$0xff]
  %v5850 = vld [vmem:[%s5773 + $0x260] sm:$0xff]
  %v5851 = vld [vmem:[%s5773 + $0x268] sm:$0xff]
  %v5852 = vld [vmem:[%s5773 + $0x270] sm:$0xff]
  %v5853 = vld [vmem:[%s5773 + $0x278] sm:$0xff]
  %v5854 = vld [vmem:[%s5773 + $0x280] sm:$0xff]
  %v5855 = vld [vmem:[%s5773 + $0x288] sm:$0xff]
  %v5856 = vld [vmem:[%s5773 + $0x290] sm:$0xff]
  %v5857 = vld [vmem:[%s5773 + $0x298] sm:$0xff]
  %v5858 = vld [vmem:[%s5773 + $0x2a0] sm:$0xff]
  %v5859 = vld [vmem:[%s5773 + $0x2a8] sm:$0xff]
  %v5860 = vld [vmem:[%s5773 + $0x2b0] sm:$0xff]
  %v5861 = vld [vmem:[%s5773 + $0x2b8] sm:$0xff]
  %v5862 = vld [vmem:[%s5773 + $0x2c0] sm:$0xff]
  %v5863 = vld [vmem:[%s5773 + $0x2c8] sm:$0xff]
  %v5864 = vld [vmem:[%s5773 + $0x2d0] sm:$0xff]
  %v5865 = vld [vmem:[%s5773 + $0x2d8] sm:$0xff]
  %v5866 = vld [vmem:[%s5773 + $0x2e0] sm:$0xff]
  %v5867 = vld [vmem:[%s5773 + $0x2e8] sm:$0xff]
  %v5868 = vld [vmem:[%s5773 + $0x2f0] sm:$0xff]
  %v5869 = vld [vmem:[%s5773 + $0x2f8] sm:$0xff]
  %v5870 = vld [vmem:[%s5773 + $0x300] sm:$0xff]
  %v5871 = vld [vmem:[%s5773 + $0x308] sm:$0xff]
  %v5872 = vld [vmem:[%s5773 + $0x310] sm:$0xff]
  %v5873 = vld [vmem:[%s5773 + $0x318] sm:$0xff]
  %v5874 = vld [vmem:[%s5773 + $0x320] sm:$0xff]
  %v5875 = vld [vmem:[%s5773 + $0x328] sm:$0xff]
  %v5876 = vld [vmem:[%s5773 + $0x330] sm:$0xff]
  %v5877 = vld [vmem:[%s5773 + $0x338] sm:$0xff]
  %v5878 = vld [vmem:[%s5773 + $0x340] sm:$0xff]
  %v5879 = vld [vmem:[%s5773 + $0x348] sm:$0xff]
  %v5880 = vld [vmem:[%s5773 + $0x350] sm:$0xff]
  %v5881 = vld [vmem:[%s5773 + $0x358] sm:$0xff]
  %v5882 = vld [vmem:[%s5773 + $0x360] sm:$0xff]
  %v5883 = vld [vmem:[%s5773 + $0x368] sm:$0xff]
  %v5884 = vld [vmem:[%s5773 + $0x370] sm:$0xff]
  %v5885 = vld [vmem:[%s5773 + $0x378] sm:$0xff]
  %v5886 = vld [vmem:[%s5773 + $0x380] sm:$0xff]
  %v5887 = vld [vmem:[%s5773 + $0x388] sm:$0xff]
  %v5888 = vld [vmem:[%s5773 + $0x390] sm:$0xff]
  %v5889 = vld [vmem:[%s5773 + $0x398] sm:$0xff]
  %v5890 = vld [vmem:[%s5773 + $0x3a0] sm:$0xff]
  %v5891 = vld [vmem:[%s5773 + $0x3a8] sm:$0xff]
  %v5892 = vld [vmem:[%s5773 + $0x3b0] sm:$0xff]
  %v5893 = vld [vmem:[%s5773 + $0x3b8] sm:$0xff]
  %v5894 = vld [vmem:[%s5773 + $0x3c0] sm:$0xff]
  %v5895 = vld [vmem:[%s5773 + $0x3c8] sm:$0xff]
  %v5896 = vld [vmem:[%s5773 + $0x3d0] sm:$0xff]
  %v5897 = vld [vmem:[%s5773 + $0x3d8] sm:$0xff]
  %v5898 = vld [vmem:[%s5773 + $0x3e0] sm:$0xff]
  %v5899 = vld [vmem:[%s5773 + $0x3e8] sm:$0xff]
  %v5900 = vld [vmem:[%s5773 + $0x3f0] sm:$0xff]
  %v5901 = vld [vmem:[%s5773 + $0x3f8] sm:$0xff]
  %5902 = vmatprep.subr.mxu0 %v5835
  %5903 = vmatpush1.msra.mxu0 %v5834
  %5904 = vmatprep.subr.mxu0 %v5831
  %5905 = vmatpush1.msra.mxu0 %v5830
  %5906 = vmatprep.subr.mxu0 %v5827
  %5907 = vmatpush1.msra.mxu0 %v5826
  %5908 = vmatprep.subr.mxu0 %v5823
  %5909 = vmatpush1.msra.mxu0 %v5822
  %5910 = vmatprep.subr.mxu0 %v5819
  %5911 = vmatpush1.msra.mxu0 %v5818
  %5912 = vmatprep.subr.mxu0 %v5815
  %5913 = vmatpush1.msra.mxu0 %v5814
  %5914 = vmatprep.subr.mxu0 %v5811
  %5915 = vmatpush1.msra.mxu0 %v5810
  %5916 = vmatprep.subr.mxu0 %v5807
  %5917 = vmatpush1.msra.mxu0 %v5806
  %5918 = vmatprep.subr.mxu0 %v5803
  %5919 = vmatpush1.msra.mxu0 %v5802
  %5920 = vmatprep.subr.mxu0 %v5799
  %5921 = vmatpush1.msra.mxu0 %v5798
  %5922 = vmatprep.subr.mxu0 %v5795
  %5923 = vmatpush1.msra.mxu0 %v5794
  %5924 = vmatprep.subr.mxu0 %v5791
  %5925 = vmatpush1.msra.mxu0 %v5790
  %5926 = vmatprep.subr.mxu0 %v5787
  %5927 = vmatpush1.msra.mxu0 %v5786
  %5928 = vmatprep.subr.mxu0 %v5783
  %5929 = vmatpush1.msra.mxu0 %v5782
  %5930 = vmatprep.subr.mxu0 %v5779
  %5931 = vmatpush1.msra.mxu0 %v5778
  %5932 = vmatprep.subr.mxu0 %v5775
  %5933 = vmatpush1.msra.mxu0 %v5774
  %5934 = vmatprep.subr.mxu0 %v5899
  %5935 = vmatpush2.msra.mxu0 %v5898
  %5936 = vmatprep.subr.mxu0 %v5895
  %5937 = vmatpush2.msra.mxu0 %v5894
  %5938 = vmatprep.subr.mxu0 %v5891
  %5939 = vmatpush2.msra.mxu0 %v5890
  %5940 = vmatprep.subr.mxu0 %v5887
  %5941 = vmatpush2.msra.mxu0 %v5886
  %5942 = vmatprep.subr.mxu0 %v5883
  %5943 = vmatpush2.msra.mxu0 %v5882
  %5944 = vmatprep.subr.mxu0 %v5879
  %5945 = vmatpush2.msra.mxu0 %v5878
  %5946 = vmatprep.subr.mxu0 %v5875
  %5947 = vmatpush2.msra.mxu0 %v5874
  %5948 = vmatprep.subr.mxu0 %v5871
  %5949 = vmatpush2.msra.mxu0 %v5870
  %5950 = vmatprep.subr.mxu0 %v5867
  %5951 = vmatpush2.msra.mxu0 %v5866
  %5952 = vmatprep.subr.mxu0 %v5863
  %5953 = vmatpush2.msra.mxu0 %v5862
  %5954 = vmatprep.subr.mxu0 %v5859
  %5955 = vmatpush2.msra.mxu0 %v5858
  %5956 = vmatprep.subr.mxu0 %v5855
  %5957 = vmatpush2.msra.mxu0 %v5854
  %5958 = vmatprep.subr.mxu0 %v5851
  %5959 = vmatpush2.msra.mxu0 %v5850
  %5960 = vmatprep.subr.mxu0 %v5847
  %5961 = vmatpush2.msra.mxu0 %v5846
  %5962 = vmatprep.subr.mxu0 %v5843
  %5963 = vmatpush2.msra.mxu0 %v5842
  %5964 = vmatprep.subr.mxu0 %v5839
  %5965 = vmatpush2.msra.mxu0 %v5838
  %5966 = vmatprep.mubr.f32.mxu0 %v4828
  %5967 = vmatmul.mubr.f32.gmra.mxu0 %v4827
  %v5968 = vpop.f32.mrf.mxu0
  %v5969 = vadd.f32 0.0, %v5968
  %v5970 = vpop.f32.mrf.mxu0
  %v5971 = vadd.f32 0.0, %v5970
  %5972 = vmatprep.mubr.f32.mxu0 %v4830
  %5973 = vmatmul.mubr.f32.gmra.mxu0 %v4829
  %v5974 = vpop.f32.mrf.mxu0
  %v5975 = vadd.f32 0.0, %v5974
  %v5976 = vpop.f32.mrf.mxu0
  %v5977 = vadd.f32 0.0, %v5976
  %5978 = vmatprep.mubr.f32.mxu0 %v4832
  %5979 = vmatmul.mubr.f32.gmra.mxu0 %v4831
  %v5980 = vpop.f32.mrf.mxu0
  %v5981 = vadd.f32 0.0, %v5980
  %v5982 = vpop.f32.mrf.mxu0
  %v5983 = vadd.f32 0.0, %v5982
  %5984 = vmatprep.mubr.f32.mxu0 %v4834
  %5985 = vmatmul.mubr.f32.gmra.mxu0 %v4833
  %v5986 = vpop.f32.mrf.mxu0
  %v5987 = vadd.f32 0.0, %v5986
  %v5988 = vpop.f32.mrf.mxu0
  %v5989 = vadd.f32 0.0, %v5988
  %5990 = vdwg.mxu0
  %5991 = vmatprep.subr.mxu0 %v5837
  %5992 = vmatpush1.msra.mxu0 %v5836
  %5993 = vmatprep.subr.mxu0 %v5833
  %5994 = vmatpush1.msra.mxu0 %v5832
  %5995 = vmatprep.subr.mxu0 %v5829
  %5996 = vmatpush1.msra.mxu0 %v5828
  %5997 = vmatprep.subr.mxu0 %v5825
  %5998 = vmatpush1.msra.mxu0 %v5824
  %5999 = vmatprep.subr.mxu0 %v5821
  %6000 = vmatpush1.msra.mxu0 %v5820
  %6001 = vmatprep.subr.mxu0 %v5817
  %6002 = vmatpush1.msra.mxu0 %v5816
  %6003 = vmatprep.subr.mxu0 %v5813
  %6004 = vmatpush1.msra.mxu0 %v5812
  %6005 = vmatprep.subr.mxu0 %v5809
  %6006 = vmatpush1.msra.mxu0 %v5808
  %6007 = vmatprep.subr.mxu0 %v5805
  %6008 = vmatpush1.msra.mxu0 %v5804
  %6009 = vmatprep.subr.mxu0 %v5801
  %6010 = vmatpush1.msra.mxu0 %v5800
  %6011 = vmatprep.subr.mxu0 %v5797
  %6012 = vmatpush1.msra.mxu0 %v5796
  %6013 = vmatprep.subr.mxu0 %v5793
  %6014 = vmatpush1.msra.mxu0 %v5792
  %6015 = vmatprep.subr.mxu0 %v5789
  %6016 = vmatpush1.msra.mxu0 %v5788
  %6017 = vmatprep.subr.mxu0 %v5785
  %6018 = vmatpush1.msra.mxu0 %v5784
  %6019 = vmatprep.subr.mxu0 %v5781
  %6020 = vmatpush1.msra.mxu0 %v5780
  %6021 = vmatprep.subr.mxu0 %v5777
  %6022 = vmatpush1.msra.mxu0 %v5776
  %6023 = vmatprep.subr.mxu0 %v5901
  %6024 = vmatpush2.msra.mxu0 %v5900
  %6025 = vmatprep.subr.mxu0 %v5897
  %6026 = vmatpush2.msra.mxu0 %v5896
  %6027 = vmatprep.subr.mxu0 %v5893
  %6028 = vmatpush2.msra.mxu0 %v5892
  %6029 = vmatprep.subr.mxu0 %v5889
  %6030 = vmatpush2.msra.mxu0 %v5888
  %6031 = vmatprep.subr.mxu0 %v5885
  %6032 = vmatpush2.msra.mxu0 %v5884
  %6033 = vmatprep.subr.mxu0 %v5881
  %6034 = vmatpush2.msra.mxu0 %v5880
  %6035 = vmatprep.subr.mxu0 %v5877
  %6036 = vmatpush2.msra.mxu0 %v5876
  %6037 = vmatprep.subr.mxu0 %v5873
  %6038 = vmatpush2.msra.mxu0 %v5872
  %6039 = vmatprep.subr.mxu0 %v5869
  %6040 = vmatpush2.msra.mxu0 %v5868
  %6041 = vmatprep.subr.mxu0 %v5865
  %6042 = vmatpush2.msra.mxu0 %v5864
  %6043 = vmatprep.subr.mxu0 %v5861
  %6044 = vmatpush2.msra.mxu0 %v5860
  %6045 = vmatprep.subr.mxu0 %v5857
  %6046 = vmatpush2.msra.mxu0 %v5856
  %6047 = vmatprep.subr.mxu0 %v5853
  %6048 = vmatpush2.msra.mxu0 %v5852
  %6049 = vmatprep.subr.mxu0 %v5849
  %6050 = vmatpush2.msra.mxu0 %v5848
  %6051 = vmatprep.subr.mxu0 %v5845
  %6052 = vmatpush2.msra.mxu0 %v5844
  %6053 = vmatprep.subr.mxu0 %v5841
  %6054 = vmatpush2.msra.mxu0 %v5840
  %6055 = vmatprep.mubr.f32.mxu0 %v4828
  %6056 = vmatmul.mubr.f32.gmra.mxu0 %v4827
  %v6057 = vpop.f32.mrf.mxu0
  %v6058 = vadd.f32 0.0, %v6057
  %v6059 = vpop.f32.mrf.mxu0
  %v6060 = vadd.f32 0.0, %v6059
  %6061 = vmatprep.mubr.f32.mxu0 %v4830
  %6062 = vmatmul.mubr.f32.gmra.mxu0 %v4829
  %v6063 = vpop.f32.mrf.mxu0
  %v6064 = vadd.f32 0.0, %v6063
  %v6065 = vpop.f32.mrf.mxu0
  %v6066 = vadd.f32 0.0, %v6065
  %6067 = vmatprep.mubr.f32.mxu0 %v4832
  %6068 = vmatmul.mubr.f32.gmra.mxu0 %v4831
  %v6069 = vpop.f32.mrf.mxu0
  %v6070 = vadd.f32 0.0, %v6069
  %v6071 = vpop.f32.mrf.mxu0
  %v6072 = vadd.f32 0.0, %v6071
  %6073 = vmatprep.mubr.f32.mxu0 %v4834
  %6074 = vmatmul.mubr.f32.gmra.mxu0 %v4833
  %v6075 = vpop.f32.mrf.mxu0
  %v6076 = vadd.f32 0.0, %v6075
  %v6077 = vpop.f32.mrf.mxu0
  %v6078 = vadd.f32 0.0, %v6077
  %6079 = vdwg.mxu0
  %v6080 = vadd.f32 %v5757, %v5969
  %v6081 = vadd.f32 %v5758, %v5971
  %v6082 = vadd.f32 %v5759, %v6058
  %v6083 = vadd.f32 %v5760, %v6060
  %v6084 = vadd.f32 %v5761, %v5975
  %v6085 = vadd.f32 %v5762, %v5977
  %v6086 = vadd.f32 %v5763, %v6064
  %v6087 = vadd.f32 %v5764, %v6066
  %v6088 = vadd.f32 %v5765, %v5981
  %v6089 = vadd.f32 %v5766, %v5983
  %v6090 = vadd.f32 %v5767, %v6070
  %v6091 = vadd.f32 %v5768, %v6072
  %v6092 = vadd.f32 %v5769, %v5987
  %v6093 = vadd.f32 %v5770, %v5989
  %v6094 = vadd.f32 %v5771, %v6076
  %v6095 = vadd.f32 %v5772, %v6078
  %s6096 = scalar_lea.vmem %s3, 4096
  %v6097 = vld [vmem:[%s6096] sm:$0xff]
  %v6098 = vld [vmem:[%s6096 + $0x8] sm:$0xff]
  %v6099 = vld [vmem:[%s6096 + $0x10] sm:$0xff]
  %v6100 = vld [vmem:[%s6096 + $0x18] sm:$0xff]
  %v6101 = vld [vmem:[%s6096 + $0x20] sm:$0xff]
  %v6102 = vld [vmem:[%s6096 + $0x28] sm:$0xff]
  %v6103 = vld [vmem:[%s6096 + $0x30] sm:$0xff]
  %v6104 = vld [vmem:[%s6096 + $0x38] sm:$0xff]
  %v6105 = vld [vmem:[%s6096 + $0x40] sm:$0xff]
  %v6106 = vld [vmem:[%s6096 + $0x48] sm:$0xff]
  %v6107 = vld [vmem:[%s6096 + $0x50] sm:$0xff]
  %v6108 = vld [vmem:[%s6096 + $0x58] sm:$0xff]
  %v6109 = vld [vmem:[%s6096 + $0x60] sm:$0xff]
  %v6110 = vld [vmem:[%s6096 + $0x68] sm:$0xff]
  %v6111 = vld [vmem:[%s6096 + $0x70] sm:$0xff]
  %v6112 = vld [vmem:[%s6096 + $0x78] sm:$0xff]
  %v6113 = vld [vmem:[%s6096 + $0x80] sm:$0xff]
  %v6114 = vld [vmem:[%s6096 + $0x88] sm:$0xff]
  %v6115 = vld [vmem:[%s6096 + $0x90] sm:$0xff]
  %v6116 = vld [vmem:[%s6096 + $0x98] sm:$0xff]
  %v6117 = vld [vmem:[%s6096 + $0xa0] sm:$0xff]
  %v6118 = vld [vmem:[%s6096 + $0xa8] sm:$0xff]
  %v6119 = vld [vmem:[%s6096 + $0xb0] sm:$0xff]
  %v6120 = vld [vmem:[%s6096 + $0xb8] sm:$0xff]
  %v6121 = vld [vmem:[%s6096 + $0xc0] sm:$0xff]
  %v6122 = vld [vmem:[%s6096 + $0xc8] sm:$0xff]
  %v6123 = vld [vmem:[%s6096 + $0xd0] sm:$0xff]
  %v6124 = vld [vmem:[%s6096 + $0xd8] sm:$0xff]
  %v6125 = vld [vmem:[%s6096 + $0xe0] sm:$0xff]
  %v6126 = vld [vmem:[%s6096 + $0xe8] sm:$0xff]
  %v6127 = vld [vmem:[%s6096 + $0xf0] sm:$0xff]
  %v6128 = vld [vmem:[%s6096 + $0xf8] sm:$0xff]
  %v6129 = vld [vmem:[%s6096 + $0x100] sm:$0xff]
  %v6130 = vld [vmem:[%s6096 + $0x108] sm:$0xff]
  %v6131 = vld [vmem:[%s6096 + $0x110] sm:$0xff]
  %v6132 = vld [vmem:[%s6096 + $0x118] sm:$0xff]
  %v6133 = vld [vmem:[%s6096 + $0x120] sm:$0xff]
  %v6134 = vld [vmem:[%s6096 + $0x128] sm:$0xff]
  %v6135 = vld [vmem:[%s6096 + $0x130] sm:$0xff]
  %v6136 = vld [vmem:[%s6096 + $0x138] sm:$0xff]
  %v6137 = vld [vmem:[%s6096 + $0x140] sm:$0xff]
  %v6138 = vld [vmem:[%s6096 + $0x148] sm:$0xff]
  %v6139 = vld [vmem:[%s6096 + $0x150] sm:$0xff]
  %v6140 = vld [vmem:[%s6096 + $0x158] sm:$0xff]
  %v6141 = vld [vmem:[%s6096 + $0x160] sm:$0xff]
  %v6142 = vld [vmem:[%s6096 + $0x168] sm:$0xff]
  %v6143 = vld [vmem:[%s6096 + $0x170] sm:$0xff]
  %v6144 = vld [vmem:[%s6096 + $0x178] sm:$0xff]
  %v6145 = vld [vmem:[%s6096 + $0x180] sm:$0xff]
  %v6146 = vld [vmem:[%s6096 + $0x188] sm:$0xff]
  %v6147 = vld [vmem:[%s6096 + $0x190] sm:$0xff]
  %v6148 = vld [vmem:[%s6096 + $0x198] sm:$0xff]
  %v6149 = vld [vmem:[%s6096 + $0x1a0] sm:$0xff]
  %v6150 = vld [vmem:[%s6096 + $0x1a8] sm:$0xff]
  %v6151 = vld [vmem:[%s6096 + $0x1b0] sm:$0xff]
  %v6152 = vld [vmem:[%s6096 + $0x1b8] sm:$0xff]
  %v6153 = vld [vmem:[%s6096 + $0x1c0] sm:$0xff]
  %v6154 = vld [vmem:[%s6096 + $0x1c8] sm:$0xff]
  %v6155 = vld [vmem:[%s6096 + $0x1d0] sm:$0xff]
  %v6156 = vld [vmem:[%s6096 + $0x1d8] sm:$0xff]
  %v6157 = vld [vmem:[%s6096 + $0x1e0] sm:$0xff]
  %v6158 = vld [vmem:[%s6096 + $0x1e8] sm:$0xff]
  %v6159 = vld [vmem:[%s6096 + $0x1f0] sm:$0xff]
  %v6160 = vld [vmem:[%s6096 + $0x1f8] sm:$0xff]
  %v6161 = vld [vmem:[%s6096 + $0x200] sm:$0xff]
  %v6162 = vld [vmem:[%s6096 + $0x208] sm:$0xff]
  %v6163 = vld [vmem:[%s6096 + $0x210] sm:$0xff]
  %v6164 = vld [vmem:[%s6096 + $0x218] sm:$0xff]
  %v6165 = vld [vmem:[%s6096 + $0x220] sm:$0xff]
  %v6166 = vld [vmem:[%s6096 + $0x228] sm:$0xff]
  %v6167 = vld [vmem:[%s6096 + $0x230] sm:$0xff]
  %v6168 = vld [vmem:[%s6096 + $0x238] sm:$0xff]
  %v6169 = vld [vmem:[%s6096 + $0x240] sm:$0xff]
  %v6170 = vld [vmem:[%s6096 + $0x248] sm:$0xff]
  %v6171 = vld [vmem:[%s6096 + $0x250] sm:$0xff]
  %v6172 = vld [vmem:[%s6096 + $0x258] sm:$0xff]
  %v6173 = vld [vmem:[%s6096 + $0x260] sm:$0xff]
  %v6174 = vld [vmem:[%s6096 + $0x268] sm:$0xff]
  %v6175 = vld [vmem:[%s6096 + $0x270] sm:$0xff]
  %v6176 = vld [vmem:[%s6096 + $0x278] sm:$0xff]
  %v6177 = vld [vmem:[%s6096 + $0x280] sm:$0xff]
  %v6178 = vld [vmem:[%s6096 + $0x288] sm:$0xff]
  %v6179 = vld [vmem:[%s6096 + $0x290] sm:$0xff]
  %v6180 = vld [vmem:[%s6096 + $0x298] sm:$0xff]
  %v6181 = vld [vmem:[%s6096 + $0x2a0] sm:$0xff]
  %v6182 = vld [vmem:[%s6096 + $0x2a8] sm:$0xff]
  %v6183 = vld [vmem:[%s6096 + $0x2b0] sm:$0xff]
  %v6184 = vld [vmem:[%s6096 + $0x2b8] sm:$0xff]
  %v6185 = vld [vmem:[%s6096 + $0x2c0] sm:$0xff]
  %v6186 = vld [vmem:[%s6096 + $0x2c8] sm:$0xff]
  %v6187 = vld [vmem:[%s6096 + $0x2d0] sm:$0xff]
  %v6188 = vld [vmem:[%s6096 + $0x2d8] sm:$0xff]
  %v6189 = vld [vmem:[%s6096 + $0x2e0] sm:$0xff]
  %v6190 = vld [vmem:[%s6096 + $0x2e8] sm:$0xff]
  %v6191 = vld [vmem:[%s6096 + $0x2f0] sm:$0xff]
  %v6192 = vld [vmem:[%s6096 + $0x2f8] sm:$0xff]
  %v6193 = vld [vmem:[%s6096 + $0x300] sm:$0xff]
  %v6194 = vld [vmem:[%s6096 + $0x308] sm:$0xff]
  %v6195 = vld [vmem:[%s6096 + $0x310] sm:$0xff]
  %v6196 = vld [vmem:[%s6096 + $0x318] sm:$0xff]
  %v6197 = vld [vmem:[%s6096 + $0x320] sm:$0xff]
  %v6198 = vld [vmem:[%s6096 + $0x328] sm:$0xff]
  %v6199 = vld [vmem:[%s6096 + $0x330] sm:$0xff]
  %v6200 = vld [vmem:[%s6096 + $0x338] sm:$0xff]
  %v6201 = vld [vmem:[%s6096 + $0x340] sm:$0xff]
  %v6202 = vld [vmem:[%s6096 + $0x348] sm:$0xff]
  %v6203 = vld [vmem:[%s6096 + $0x350] sm:$0xff]
  %v6204 = vld [vmem:[%s6096 + $0x358] sm:$0xff]
  %v6205 = vld [vmem:[%s6096 + $0x360] sm:$0xff]
  %v6206 = vld [vmem:[%s6096 + $0x368] sm:$0xff]
  %v6207 = vld [vmem:[%s6096 + $0x370] sm:$0xff]
  %v6208 = vld [vmem:[%s6096 + $0x378] sm:$0xff]
  %v6209 = vld [vmem:[%s6096 + $0x380] sm:$0xff]
  %v6210 = vld [vmem:[%s6096 + $0x388] sm:$0xff]
  %v6211 = vld [vmem:[%s6096 + $0x390] sm:$0xff]
  %v6212 = vld [vmem:[%s6096 + $0x398] sm:$0xff]
  %v6213 = vld [vmem:[%s6096 + $0x3a0] sm:$0xff]
  %v6214 = vld [vmem:[%s6096 + $0x3a8] sm:$0xff]
  %v6215 = vld [vmem:[%s6096 + $0x3b0] sm:$0xff]
  %v6216 = vld [vmem:[%s6096 + $0x3b8] sm:$0xff]
  %v6217 = vld [vmem:[%s6096 + $0x3c0] sm:$0xff]
  %v6218 = vld [vmem:[%s6096 + $0x3c8] sm:$0xff]
  %v6219 = vld [vmem:[%s6096 + $0x3d0] sm:$0xff]
  %v6220 = vld [vmem:[%s6096 + $0x3d8] sm:$0xff]
  %v6221 = vld [vmem:[%s6096 + $0x3e0] sm:$0xff]
  %v6222 = vld [vmem:[%s6096 + $0x3e8] sm:$0xff]
  %v6223 = vld [vmem:[%s6096 + $0x3f0] sm:$0xff]
  %v6224 = vld [vmem:[%s6096 + $0x3f8] sm:$0xff]
  %6225 = vmatprep.subr.mxu0 %v6158
  %6226 = vmatpush1.msra.mxu0 %v6157
  %6227 = vmatprep.subr.mxu0 %v6154
  %6228 = vmatpush1.msra.mxu0 %v6153
  %6229 = vmatprep.subr.mxu0 %v6150
  %6230 = vmatpush1.msra.mxu0 %v6149
  %6231 = vmatprep.subr.mxu0 %v6146
  %6232 = vmatpush1.msra.mxu0 %v6145
  %6233 = vmatprep.subr.mxu0 %v6142
  %6234 = vmatpush1.msra.mxu0 %v6141
  %6235 = vmatprep.subr.mxu0 %v6138
  %6236 = vmatpush1.msra.mxu0 %v6137
  %6237 = vmatprep.subr.mxu0 %v6134
  %6238 = vmatpush1.msra.mxu0 %v6133
  %6239 = vmatprep.subr.mxu0 %v6130
  %6240 = vmatpush1.msra.mxu0 %v6129
  %6241 = vmatprep.subr.mxu0 %v6126
  %6242 = vmatpush1.msra.mxu0 %v6125
  %6243 = vmatprep.subr.mxu0 %v6122
  %6244 = vmatpush1.msra.mxu0 %v6121
  %6245 = vmatprep.subr.mxu0 %v6118
  %6246 = vmatpush1.msra.mxu0 %v6117
  %6247 = vmatprep.subr.mxu0 %v6114
  %6248 = vmatpush1.msra.mxu0 %v6113
  %6249 = vmatprep.subr.mxu0 %v6110
  %6250 = vmatpush1.msra.mxu0 %v6109
  %6251 = vmatprep.subr.mxu0 %v6106
  %6252 = vmatpush1.msra.mxu0 %v6105
  %6253 = vmatprep.subr.mxu0 %v6102
  %6254 = vmatpush1.msra.mxu0 %v6101
  %6255 = vmatprep.subr.mxu0 %v6098
  %6256 = vmatpush1.msra.mxu0 %v6097
  %6257 = vmatprep.subr.mxu0 %v6222
  %6258 = vmatpush2.msra.mxu0 %v6221
  %6259 = vmatprep.subr.mxu0 %v6218
  %6260 = vmatpush2.msra.mxu0 %v6217
  %6261 = vmatprep.subr.mxu0 %v6214
  %6262 = vmatpush2.msra.mxu0 %v6213
  %6263 = vmatprep.subr.mxu0 %v6210
  %6264 = vmatpush2.msra.mxu0 %v6209
  %6265 = vmatprep.subr.mxu0 %v6206
  %6266 = vmatpush2.msra.mxu0 %v6205
  %6267 = vmatprep.subr.mxu0 %v6202
  %6268 = vmatpush2.msra.mxu0 %v6201
  %6269 = vmatprep.subr.mxu0 %v6198
  %6270 = vmatpush2.msra.mxu0 %v6197
  %6271 = vmatprep.subr.mxu0 %v6194
  %6272 = vmatpush2.msra.mxu0 %v6193
  %6273 = vmatprep.subr.mxu0 %v6190
  %6274 = vmatpush2.msra.mxu0 %v6189
  %6275 = vmatprep.subr.mxu0 %v6186
  %6276 = vmatpush2.msra.mxu0 %v6185
  %6277 = vmatprep.subr.mxu0 %v6182
  %6278 = vmatpush2.msra.mxu0 %v6181
  %6279 = vmatprep.subr.mxu0 %v6178
  %6280 = vmatpush2.msra.mxu0 %v6177
  %6281 = vmatprep.subr.mxu0 %v6174
  %6282 = vmatpush2.msra.mxu0 %v6173
  %6283 = vmatprep.subr.mxu0 %v6170
  %6284 = vmatpush2.msra.mxu0 %v6169
  %6285 = vmatprep.subr.mxu0 %v6166
  %6286 = vmatpush2.msra.mxu0 %v6165
  %6287 = vmatprep.subr.mxu0 %v6162
  %6288 = vmatpush2.msra.mxu0 %v6161
  %6289 = vmatprep.mubr.f32.mxu0 %v2556
  %6290 = vmatmul.mubr.f32.gmra.mxu0 %v2555
  %v6291 = vpop.f32.mrf.mxu0
  %v6292 = vadd.f32 0.0, %v6291
  %v6293 = vpop.f32.mrf.mxu0
  %v6294 = vadd.f32 0.0, %v6293
  %6295 = vmatprep.mubr.f32.mxu0 %v2558
  %6296 = vmatmul.mubr.f32.gmra.mxu0 %v2557
  %v6297 = vpop.f32.mrf.mxu0
  %v6298 = vadd.f32 0.0, %v6297
  %v6299 = vpop.f32.mrf.mxu0
  %v6300 = vadd.f32 0.0, %v6299
  %6301 = vmatprep.mubr.f32.mxu0 %v2560
  %6302 = vmatmul.mubr.f32.gmra.mxu0 %v2559
  %v6303 = vpop.f32.mrf.mxu0
  %v6304 = vadd.f32 0.0, %v6303
  %v6305 = vpop.f32.mrf.mxu0
  %v6306 = vadd.f32 0.0, %v6305
  %6307 = vmatprep.mubr.f32.mxu0 %v2562
  %6308 = vmatmul.mubr.f32.gmra.mxu0 %v2561
  %v6309 = vpop.f32.mrf.mxu0
  %v6310 = vadd.f32 0.0, %v6309
  %v6311 = vpop.f32.mrf.mxu0
  %v6312 = vadd.f32 0.0, %v6311
  %6313 = vdwg.mxu0
  %6314 = vmatprep.subr.mxu0 %v6160
  %6315 = vmatpush1.msra.mxu0 %v6159
  %6316 = vmatprep.subr.mxu0 %v6156
  %6317 = vmatpush1.msra.mxu0 %v6155
  %6318 = vmatprep.subr.mxu0 %v6152
  %6319 = vmatpush1.msra.mxu0 %v6151
  %6320 = vmatprep.subr.mxu0 %v6148
  %6321 = vmatpush1.msra.mxu0 %v6147
  %6322 = vmatprep.subr.mxu0 %v6144
  %6323 = vmatpush1.msra.mxu0 %v6143
  %6324 = vmatprep.subr.mxu0 %v6140
  %6325 = vmatpush1.msra.mxu0 %v6139
  %6326 = vmatprep.subr.mxu0 %v6136
  %6327 = vmatpush1.msra.mxu0 %v6135
  %6328 = vmatprep.subr.mxu0 %v6132
  %6329 = vmatpush1.msra.mxu0 %v6131
  %6330 = vmatprep.subr.mxu0 %v6128
  %6331 = vmatpush1.msra.mxu0 %v6127
  %6332 = vmatprep.subr.mxu0 %v6124
  %6333 = vmatpush1.msra.mxu0 %v6123
  %6334 = vmatprep.subr.mxu0 %v6120
  %6335 = vmatpush1.msra.mxu0 %v6119
  %6336 = vmatprep.subr.mxu0 %v6116
  %6337 = vmatpush1.msra.mxu0 %v6115
  %6338 = vmatprep.subr.mxu0 %v6112
  %6339 = vmatpush1.msra.mxu0 %v6111
  %6340 = vmatprep.subr.mxu0 %v6108
  %6341 = vmatpush1.msra.mxu0 %v6107
  %6342 = vmatprep.subr.mxu0 %v6104
  %6343 = vmatpush1.msra.mxu0 %v6103
  %6344 = vmatprep.subr.mxu0 %v6100
  %6345 = vmatpush1.msra.mxu0 %v6099
  %6346 = vmatprep.subr.mxu0 %v6224
  %6347 = vmatpush2.msra.mxu0 %v6223
  %6348 = vmatprep.subr.mxu0 %v6220
  %6349 = vmatpush2.msra.mxu0 %v6219
  %6350 = vmatprep.subr.mxu0 %v6216
  %6351 = vmatpush2.msra.mxu0 %v6215
  %6352 = vmatprep.subr.mxu0 %v6212
  %6353 = vmatpush2.msra.mxu0 %v6211
  %6354 = vmatprep.subr.mxu0 %v6208
  %6355 = vmatpush2.msra.mxu0 %v6207
  %6356 = vmatprep.subr.mxu0 %v6204
  %6357 = vmatpush2.msra.mxu0 %v6203
  %6358 = vmatprep.subr.mxu0 %v6200
  %6359 = vmatpush2.msra.mxu0 %v6199
  %6360 = vmatprep.subr.mxu0 %v6196
  %6361 = vmatpush2.msra.mxu0 %v6195
  %6362 = vmatprep.subr.mxu0 %v6192
  %6363 = vmatpush2.msra.mxu0 %v6191
  %6364 = vmatprep.subr.mxu0 %v6188
  %6365 = vmatpush2.msra.mxu0 %v6187
  %6366 = vmatprep.subr.mxu0 %v6184
  %6367 = vmatpush2.msra.mxu0 %v6183
  %6368 = vmatprep.subr.mxu0 %v6180
  %6369 = vmatpush2.msra.mxu0 %v6179
  %6370 = vmatprep.subr.mxu0 %v6176
  %6371 = vmatpush2.msra.mxu0 %v6175
  %6372 = vmatprep.subr.mxu0 %v6172
  %6373 = vmatpush2.msra.mxu0 %v6171
  %6374 = vmatprep.subr.mxu0 %v6168
  %6375 = vmatpush2.msra.mxu0 %v6167
  %6376 = vmatprep.subr.mxu0 %v6164
  %6377 = vmatpush2.msra.mxu0 %v6163
  %6378 = vmatprep.mubr.f32.mxu0 %v2556
  %6379 = vmatmul.mubr.f32.gmra.mxu0 %v2555
  %v6380 = vpop.f32.mrf.mxu0
  %v6381 = vadd.f32 0.0, %v6380
  %v6382 = vpop.f32.mrf.mxu0
  %v6383 = vadd.f32 0.0, %v6382
  %6384 = vmatprep.mubr.f32.mxu0 %v2558
  %6385 = vmatmul.mubr.f32.gmra.mxu0 %v2557
  %v6386 = vpop.f32.mrf.mxu0
  %v6387 = vadd.f32 0.0, %v6386
  %v6388 = vpop.f32.mrf.mxu0
  %v6389 = vadd.f32 0.0, %v6388
  %6390 = vmatprep.mubr.f32.mxu0 %v2560
  %6391 = vmatmul.mubr.f32.gmra.mxu0 %v2559
  %v6392 = vpop.f32.mrf.mxu0
  %v6393 = vadd.f32 0.0, %v6392
  %v6394 = vpop.f32.mrf.mxu0
  %v6395 = vadd.f32 0.0, %v6394
  %6396 = vmatprep.mubr.f32.mxu0 %v2562
  %6397 = vmatmul.mubr.f32.gmra.mxu0 %v2561
  %v6398 = vpop.f32.mrf.mxu0
  %v6399 = vadd.f32 0.0, %v6398
  %v6400 = vpop.f32.mrf.mxu0
  %v6401 = vadd.f32 0.0, %v6400
  %6402 = vdwg.mxu0
  %v6403 = vadd.f32 %v6080, %v6292
  %v6404 = vadd.f32 %v6081, %v6294
  %v6405 = vadd.f32 %v6082, %v6381
  %v6406 = vadd.f32 %v6083, %v6383
  %v6407 = vadd.f32 %v6084, %v6298
  %v6408 = vadd.f32 %v6085, %v6300
  %v6409 = vadd.f32 %v6086, %v6387
  %v6410 = vadd.f32 %v6087, %v6389
  %v6411 = vadd.f32 %v6088, %v6304
  %v6412 = vadd.f32 %v6089, %v6306
  %v6413 = vadd.f32 %v6090, %v6393
  %v6414 = vadd.f32 %v6091, %v6395
  %v6415 = vadd.f32 %v6092, %v6310
  %v6416 = vadd.f32 %v6093, %v6312
  %v6417 = vadd.f32 %v6094, %v6399
  %v6418 = vadd.f32 %v6095, %v6401
  %6419 = vmatprep.subr.mxu0 %v5027
  %6420 = vmatpush1.msra.mxu0 %v5026
  %6421 = vmatprep.subr.mxu0 %v5023
  %6422 = vmatpush1.msra.mxu0 %v5022
  %6423 = vmatprep.subr.mxu0 %v5019
  %6424 = vmatpush1.msra.mxu0 %v5018
  %6425 = vmatprep.subr.mxu0 %v5015
  %6426 = vmatpush1.msra.mxu0 %v5014
  %6427 = vmatprep.subr.mxu0 %v5011
  %6428 = vmatpush1.msra.mxu0 %v5010
  %6429 = vmatprep.subr.mxu0 %v5007
  %6430 = vmatpush1.msra.mxu0 %v5006
  %6431 = vmatprep.subr.mxu0 %v5003
  %6432 = vmatpush1.msra.mxu0 %v5002
  %6433 = vmatprep.subr.mxu0 %v4999
  %6434 = vmatpush1.msra.mxu0 %v4998
  %6435 = vmatprep.subr.mxu0 %v4995
  %6436 = vmatpush1.msra.mxu0 %v4994
  %6437 = vmatprep.subr.mxu0 %v4991
  %6438 = vmatpush1.msra.mxu0 %v4990
  %6439 = vmatprep.subr.mxu0 %v4987
  %6440 = vmatpush1.msra.mxu0 %v4986
  %6441 = vmatprep.subr.mxu0 %v4983
  %6442 = vmatpush1.msra.mxu0 %v4982
  %6443 = vmatprep.subr.mxu0 %v4979
  %6444 = vmatpush1.msra.mxu0 %v4978
  %6445 = vmatprep.subr.mxu0 %v4975
  %6446 = vmatpush1.msra.mxu0 %v4974
  %6447 = vmatprep.subr.mxu0 %v4971
  %6448 = vmatpush1.msra.mxu0 %v4970
  %6449 = vmatprep.subr.mxu0 %v4967
  %6450 = vmatpush1.msra.mxu0 %v4966
  %6451 = vmatprep.subr.mxu0 %v5091
  %6452 = vmatpush2.msra.mxu0 %v5090
  %6453 = vmatprep.subr.mxu0 %v5087
  %6454 = vmatpush2.msra.mxu0 %v5086
  %6455 = vmatprep.subr.mxu0 %v5083
  %6456 = vmatpush2.msra.mxu0 %v5082
  %6457 = vmatprep.subr.mxu0 %v5079
  %6458 = vmatpush2.msra.mxu0 %v5078
  %6459 = vmatprep.subr.mxu0 %v5075
  %6460 = vmatpush2.msra.mxu0 %v5074
  %6461 = vmatprep.subr.mxu0 %v5071
  %6462 = vmatpush2.msra.mxu0 %v5070
  %6463 = vmatprep.subr.mxu0 %v5067
  %6464 = vmatpush2.msra.mxu0 %v5066
  %6465 = vmatprep.subr.mxu0 %v5063
  %6466 = vmatpush2.msra.mxu0 %v5062
  %6467 = vmatprep.subr.mxu0 %v5059
  %6468 = vmatpush2.msra.mxu0 %v5058
  %6469 = vmatprep.subr.mxu0 %v5055
  %6470 = vmatpush2.msra.mxu0 %v5054
  %6471 = vmatprep.subr.mxu0 %v5051
  %6472 = vmatpush2.msra.mxu0 %v5050
  %6473 = vmatprep.subr.mxu0 %v5047
  %6474 = vmatpush2.msra.mxu0 %v5046
  %6475 = vmatprep.subr.mxu0 %v5043
  %6476 = vmatpush2.msra.mxu0 %v5042
  %6477 = vmatprep.subr.mxu0 %v5039
  %6478 = vmatpush2.msra.mxu0 %v5038
  %6479 = vmatprep.subr.mxu0 %v5035
  %6480 = vmatpush2.msra.mxu0 %v5034
  %6481 = vmatprep.subr.mxu0 %v5031
  %6482 = vmatpush2.msra.mxu0 %v5030
  %6483 = vmatprep.mubr.f32.mxu0 %v2554
  %6484 = vmatmul.mubr.f32.gmra.mxu0 %v2553
  %v6485 = vpop.f32.mrf.mxu0
  %v6486 = vadd.f32 0.0, %v6485
  %v6487 = vpop.f32.mrf.mxu0
  %v6488 = vadd.f32 0.0, %v6487
  %6489 = vmatprep.mubr.f32.mxu0 %v2556
  %6490 = vmatmul.mubr.f32.gmra.mxu0 %v2555
  %v6491 = vpop.f32.mrf.mxu0
  %v6492 = vadd.f32 0.0, %v6491
  %v6493 = vpop.f32.mrf.mxu0
  %v6494 = vadd.f32 0.0, %v6493
  %6495 = vmatprep.mubr.f32.mxu0 %v2558
  %6496 = vmatmul.mubr.f32.gmra.mxu0 %v2557
  %v6497 = vpop.f32.mrf.mxu0
  %v6498 = vadd.f32 0.0, %v6497
  %v6499 = vpop.f32.mrf.mxu0
  %v6500 = vadd.f32 0.0, %v6499
  %6501 = vmatprep.mubr.f32.mxu0 %v2560
  %6502 = vmatmul.mubr.f32.gmra.mxu0 %v2559
  %v6503 = vpop.f32.mrf.mxu0
  %v6504 = vadd.f32 0.0, %v6503
  %v6505 = vpop.f32.mrf.mxu0
  %v6506 = vadd.f32 0.0, %v6505
  %6507 = vdwg.mxu0
  %6508 = vmatprep.subr.mxu0 %v5029
  %6509 = vmatpush1.msra.mxu0 %v5028
  %6510 = vmatprep.subr.mxu0 %v5025
  %6511 = vmatpush1.msra.mxu0 %v5024
  %6512 = vmatprep.subr.mxu0 %v5021
  %6513 = vmatpush1.msra.mxu0 %v5020
  %6514 = vmatprep.subr.mxu0 %v5017
  %6515 = vmatpush1.msra.mxu0 %v5016
  %6516 = vmatprep.subr.mxu0 %v5013
  %6517 = vmatpush1.msra.mxu0 %v5012
  %6518 = vmatprep.subr.mxu0 %v5009
  %6519 = vmatpush1.msra.mxu0 %v5008
  %6520 = vmatprep.subr.mxu0 %v5005
  %6521 = vmatpush1.msra.mxu0 %v5004
  %6522 = vmatprep.subr.mxu0 %v5001
  %6523 = vmatpush1.msra.mxu0 %v5000
  %6524 = vmatprep.subr.mxu0 %v4997
  %6525 = vmatpush1.msra.mxu0 %v4996
  %6526 = vmatprep.subr.mxu0 %v4993
  %6527 = vmatpush1.msra.mxu0 %v4992
  %6528 = vmatprep.subr.mxu0 %v4989
  %6529 = vmatpush1.msra.mxu0 %v4988
  %6530 = vmatprep.subr.mxu0 %v4985
  %6531 = vmatpush1.msra.mxu0 %v4984
  %6532 = vmatprep.subr.mxu0 %v4981
  %6533 = vmatpush1.msra.mxu0 %v4980
  %6534 = vmatprep.subr.mxu0 %v4977
  %6535 = vmatpush1.msra.mxu0 %v4976
  %6536 = vmatprep.subr.mxu0 %v4973
  %6537 = vmatpush1.msra.mxu0 %v4972
  %6538 = vmatprep.subr.mxu0 %v4969
  %6539 = vmatpush1.msra.mxu0 %v4968
  %6540 = vmatprep.subr.mxu0 %v5093
  %6541 = vmatpush2.msra.mxu0 %v5092
  %6542 = vmatprep.subr.mxu0 %v5089
  %6543 = vmatpush2.msra.mxu0 %v5088
  %6544 = vmatprep.subr.mxu0 %v5085
  %6545 = vmatpush2.msra.mxu0 %v5084
  %6546 = vmatprep.subr.mxu0 %v5081
  %6547 = vmatpush2.msra.mxu0 %v5080
  %6548 = vmatprep.subr.mxu0 %v5077
  %6549 = vmatpush2.msra.mxu0 %v5076
  %6550 = vmatprep.subr.mxu0 %v5073
  %6551 = vmatpush2.msra.mxu0 %v5072
  %6552 = vmatprep.subr.mxu0 %v5069
  %6553 = vmatpush2.msra.mxu0 %v5068
  %6554 = vmatprep.subr.mxu0 %v5065
  %6555 = vmatpush2.msra.mxu0 %v5064
  %6556 = vmatprep.subr.mxu0 %v5061
  %6557 = vmatpush2.msra.mxu0 %v5060
  %6558 = vmatprep.subr.mxu0 %v5057
  %6559 = vmatpush2.msra.mxu0 %v5056
  %6560 = vmatprep.subr.mxu0 %v5053
  %6561 = vmatpush2.msra.mxu0 %v5052
  %6562 = vmatprep.subr.mxu0 %v5049
  %6563 = vmatpush2.msra.mxu0 %v5048
  %6564 = vmatprep.subr.mxu0 %v5045
  %6565 = vmatpush2.msra.mxu0 %v5044
  %6566 = vmatprep.subr.mxu0 %v5041
  %6567 = vmatpush2.msra.mxu0 %v5040
  %6568 = vmatprep.subr.mxu0 %v5037
  %6569 = vmatpush2.msra.mxu0 %v5036
  %6570 = vmatprep.subr.mxu0 %v5033
  %6571 = vmatpush2.msra.mxu0 %v5032
  %6572 = vmatprep.mubr.f32.mxu0 %v2554
  %6573 = vmatmul.mubr.f32.gmra.mxu0 %v2553
  %v6574 = vpop.f32.mrf.mxu0
  %v6575 = vadd.f32 0.0, %v6574
  %v6576 = vpop.f32.mrf.mxu0
  %v6577 = vadd.f32 0.0, %v6576
  %6578 = vmatprep.mubr.f32.mxu0 %v2556
  %6579 = vmatmul.mubr.f32.gmra.mxu0 %v2555
  %v6580 = vpop.f32.mrf.mxu0
  %v6581 = vadd.f32 0.0, %v6580
  %v6582 = vpop.f32.mrf.mxu0
  %v6583 = vadd.f32 0.0, %v6582
  %6584 = vmatprep.mubr.f32.mxu0 %v2558
  %6585 = vmatmul.mubr.f32.gmra.mxu0 %v2557
  %v6586 = vpop.f32.mrf.mxu0
  %v6587 = vadd.f32 0.0, %v6586
  %v6588 = vpop.f32.mrf.mxu0
  %v6589 = vadd.f32 0.0, %v6588
  %6590 = vmatprep.mubr.f32.mxu0 %v2560
  %6591 = vmatmul.mubr.f32.gmra.mxu0 %v2559
  %v6592 = vpop.f32.mrf.mxu0
  %v6593 = vadd.f32 0.0, %v6592
  %v6594 = vpop.f32.mrf.mxu0
  %v6595 = vadd.f32 0.0, %v6594
  %6596 = vdwg.mxu0
  %6597 = vmatprep.subr.mxu0 %v4898
  %6598 = vmatpush1.msra.mxu0 %v4897
  %6599 = vmatprep.subr.mxu0 %v4894
  %6600 = vmatpush1.msra.mxu0 %v4893
  %6601 = vmatprep.subr.mxu0 %v4890
  %6602 = vmatpush1.msra.mxu0 %v4889
  %6603 = vmatprep.subr.mxu0 %v4886
  %6604 = vmatpush1.msra.mxu0 %v4885
  %6605 = vmatprep.subr.mxu0 %v4882
  %6606 = vmatpush1.msra.mxu0 %v4881
  %6607 = vmatprep.subr.mxu0 %v4878
  %6608 = vmatpush1.msra.mxu0 %v4877
  %6609 = vmatprep.subr.mxu0 %v4874
  %6610 = vmatpush1.msra.mxu0 %v4873
  %6611 = vmatprep.subr.mxu0 %v4870
  %6612 = vmatpush1.msra.mxu0 %v4869
  %6613 = vmatprep.subr.mxu0 %v4866
  %6614 = vmatpush1.msra.mxu0 %v4865
  %6615 = vmatprep.subr.mxu0 %v4862
  %6616 = vmatpush1.msra.mxu0 %v4861
  %6617 = vmatprep.subr.mxu0 %v4858
  %6618 = vmatpush1.msra.mxu0 %v4857
  %6619 = vmatprep.subr.mxu0 %v4854
  %6620 = vmatpush1.msra.mxu0 %v4853
  %6621 = vmatprep.subr.mxu0 %v4850
  %6622 = vmatpush1.msra.mxu0 %v4849
  %6623 = vmatprep.subr.mxu0 %v4846
  %6624 = vmatpush1.msra.mxu0 %v4845
  %6625 = vmatprep.subr.mxu0 %v4842
  %6626 = vmatpush1.msra.mxu0 %v4841
  %6627 = vmatprep.subr.mxu0 %v4838
  %6628 = vmatpush1.msra.mxu0 %v4837
  %6629 = vmatprep.subr.mxu0 %v4962
  %6630 = vmatpush2.msra.mxu0 %v4961
  %6631 = vmatprep.subr.mxu0 %v4958
  %6632 = vmatpush2.msra.mxu0 %v4957
  %6633 = vmatprep.subr.mxu0 %v4954
  %6634 = vmatpush2.msra.mxu0 %v4953
  %6635 = vmatprep.subr.mxu0 %v4950
  %6636 = vmatpush2.msra.mxu0 %v4949
  %6637 = vmatprep.subr.mxu0 %v4946
  %6638 = vmatpush2.msra.mxu0 %v4945
  %6639 = vmatprep.subr.mxu0 %v4942
  %6640 = vmatpush2.msra.mxu0 %v4941
  %6641 = vmatprep.subr.mxu0 %v4938
  %6642 = vmatpush2.msra.mxu0 %v4937
  %6643 = vmatprep.subr.mxu0 %v4934
  %6644 = vmatpush2.msra.mxu0 %v4933
  %6645 = vmatprep.subr.mxu0 %v4930
  %6646 = vmatpush2.msra.mxu0 %v4929
  %6647 = vmatprep.subr.mxu0 %v4926
  %6648 = vmatpush2.msra.mxu0 %v4925
  %6649 = vmatprep.subr.mxu0 %v4922
  %6650 = vmatpush2.msra.mxu0 %v4921
  %6651 = vmatprep.subr.mxu0 %v4918
  %6652 = vmatpush2.msra.mxu0 %v4917
  %6653 = vmatprep.subr.mxu0 %v4914
  %6654 = vmatpush2.msra.mxu0 %v4913
  %6655 = vmatprep.subr.mxu0 %v4910
  %6656 = vmatpush2.msra.mxu0 %v4909
  %6657 = vmatprep.subr.mxu0 %v4906
  %6658 = vmatpush2.msra.mxu0 %v4905
  %6659 = vmatprep.subr.mxu0 %v4902
  %6660 = vmatpush2.msra.mxu0 %v4901
  %6661 = vmatprep.mubr.f32.mxu0 %v4826
  %6662 = vmatmul.mubr.f32.gmra.mxu0 %v4825
  %v6663 = vpop.f32.mrf.mxu0
  %v6664 = vadd.f32 %v6486, %v6663
  %v6665 = vpop.f32.mrf.mxu0
  %v6666 = vadd.f32 %v6488, %v6665
  %6667 = vmatprep.mubr.f32.mxu0 %v4828
  %6668 = vmatmul.mubr.f32.gmra.mxu0 %v4827
  %v6669 = vpop.f32.mrf.mxu0
  %v6670 = vadd.f32 %v6492, %v6669
  %v6671 = vpop.f32.mrf.mxu0
  %v6672 = vadd.f32 %v6494, %v6671
  %6673 = vmatprep.mubr.f32.mxu0 %v4830
  %6674 = vmatmul.mubr.f32.gmra.mxu0 %v4829
  %v6675 = vpop.f32.mrf.mxu0
  %v6676 = vadd.f32 %v6498, %v6675
  %v6677 = vpop.f32.mrf.mxu0
  %v6678 = vadd.f32 %v6500, %v6677
  %6679 = vmatprep.mubr.f32.mxu0 %v4832
  %6680 = vmatmul.mubr.f32.gmra.mxu0 %v4831
  %v6681 = vpop.f32.mrf.mxu0
  %v6682 = vadd.f32 %v6504, %v6681
  %v6683 = vpop.f32.mrf.mxu0
  %v6684 = vadd.f32 %v6506, %v6683
  %6685 = vdwg.mxu0
  %6686 = vmatprep.subr.mxu0 %v4900
  %6687 = vmatpush1.msra.mxu0 %v4899
  %6688 = vmatprep.subr.mxu0 %v4896
  %6689 = vmatpush1.msra.mxu0 %v4895
  %6690 = vmatprep.subr.mxu0 %v4892
  %6691 = vmatpush1.msra.mxu0 %v4891
  %6692 = vmatprep.subr.mxu0 %v4888
  %6693 = vmatpush1.msra.mxu0 %v4887
  %6694 = vmatprep.subr.mxu0 %v4884
  %6695 = vmatpush1.msra.mxu0 %v4883
  %6696 = vmatprep.subr.mxu0 %v4880
  %6697 = vmatpush1.msra.mxu0 %v4879
  %6698 = vmatprep.subr.mxu0 %v4876
  %6699 = vmatpush1.msra.mxu0 %v4875
  %6700 = vmatprep.subr.mxu0 %v4872
  %6701 = vmatpush1.msra.mxu0 %v4871
  %6702 = vmatprep.subr.mxu0 %v4868
  %6703 = vmatpush1.msra.mxu0 %v4867
  %6704 = vmatprep.subr.mxu0 %v4864
  %6705 = vmatpush1.msra.mxu0 %v4863
  %6706 = vmatprep.subr.mxu0 %v4860
  %6707 = vmatpush1.msra.mxu0 %v4859
  %6708 = vmatprep.subr.mxu0 %v4856
  %6709 = vmatpush1.msra.mxu0 %v4855
  %6710 = vmatprep.subr.mxu0 %v4852
  %6711 = vmatpush1.msra.mxu0 %v4851
  %6712 = vmatprep.subr.mxu0 %v4848
  %6713 = vmatpush1.msra.mxu0 %v4847
  %6714 = vmatprep.subr.mxu0 %v4844
  %6715 = vmatpush1.msra.mxu0 %v4843
  %6716 = vmatprep.subr.mxu0 %v4840
  %6717 = vmatpush1.msra.mxu0 %v4839
  %6718 = vmatprep.subr.mxu0 %v4964
  %6719 = vmatpush2.msra.mxu0 %v4963
  %6720 = vmatprep.subr.mxu0 %v4960
  %6721 = vmatpush2.msra.mxu0 %v4959
  %6722 = vmatprep.subr.mxu0 %v4956
  %6723 = vmatpush2.msra.mxu0 %v4955
  %6724 = vmatprep.subr.mxu0 %v4952
  %6725 = vmatpush2.msra.mxu0 %v4951
  %6726 = vmatprep.subr.mxu0 %v4948
  %6727 = vmatpush2.msra.mxu0 %v4947
  %6728 = vmatprep.subr.mxu0 %v4944
  %6729 = vmatpush2.msra.mxu0 %v4943
  %6730 = vmatprep.subr.mxu0 %v4940
  %6731 = vmatpush2.msra.mxu0 %v4939
  %6732 = vmatprep.subr.mxu0 %v4936
  %6733 = vmatpush2.msra.mxu0 %v4935
  %6734 = vmatprep.subr.mxu0 %v4932
  %6735 = vmatpush2.msra.mxu0 %v4931
  %6736 = vmatprep.subr.mxu0 %v4928
  %6737 = vmatpush2.msra.mxu0 %v4927
  %6738 = vmatprep.subr.mxu0 %v4924
  %6739 = vmatpush2.msra.mxu0 %v4923
  %6740 = vmatprep.subr.mxu0 %v4920
  %6741 = vmatpush2.msra.mxu0 %v4919
  %6742 = vmatprep.subr.mxu0 %v4916
  %6743 = vmatpush2.msra.mxu0 %v4915
  %6744 = vmatprep.subr.mxu0 %v4912
  %6745 = vmatpush2.msra.mxu0 %v4911
  %6746 = vmatprep.subr.mxu0 %v4908
  %6747 = vmatpush2.msra.mxu0 %v4907
  %6748 = vmatprep.subr.mxu0 %v4904
  %6749 = vmatpush2.msra.mxu0 %v4903
  %6750 = vmatprep.mubr.f32.mxu0 %v4826
  %6751 = vmatmul.mubr.f32.gmra.mxu0 %v4825
  %v6752 = vpop.f32.mrf.mxu0
  %v6753 = vadd.f32 %v6575, %v6752
  %v6754 = vpop.f32.mrf.mxu0
  %v6755 = vadd.f32 %v6577, %v6754
  %6756 = vmatprep.mubr.f32.mxu0 %v4828
  %6757 = vmatmul.mubr.f32.gmra.mxu0 %v4827
  %v6758 = vpop.f32.mrf.mxu0
  %v6759 = vadd.f32 %v6581, %v6758
  %v6760 = vpop.f32.mrf.mxu0
  %v6761 = vadd.f32 %v6583, %v6760
  %6762 = vmatprep.mubr.f32.mxu0 %v4830
  %6763 = vmatmul.mubr.f32.gmra.mxu0 %v4829
  %v6764 = vpop.f32.mrf.mxu0
  %v6765 = vadd.f32 %v6587, %v6764
  %v6766 = vpop.f32.mrf.mxu0
  %v6767 = vadd.f32 %v6589, %v6766
  %6768 = vmatprep.mubr.f32.mxu0 %v4832
  %6769 = vmatmul.mubr.f32.gmra.mxu0 %v4831
  %v6770 = vpop.f32.mrf.mxu0
  %v6771 = vadd.f32 %v6593, %v6770
  %v6772 = vpop.f32.mrf.mxu0
  %v6773 = vadd.f32 %v6595, %v6772
  %6774 = vdwg.mxu0
  %6775 = vmatprep.subr.mxu0 %v5512
  %6776 = vmatpush1.msra.mxu0 %v5511
  %6777 = vmatprep.subr.mxu0 %v5508
  %6778 = vmatpush1.msra.mxu0 %v5507
  %6779 = vmatprep.subr.mxu0 %v5504
  %6780 = vmatpush1.msra.mxu0 %v5503
  %6781 = vmatprep.subr.mxu0 %v5500
  %6782 = vmatpush1.msra.mxu0 %v5499
  %6783 = vmatprep.subr.mxu0 %v5496
  %6784 = vmatpush1.msra.mxu0 %v5495
  %6785 = vmatprep.subr.mxu0 %v5492
  %6786 = vmatpush1.msra.mxu0 %v5491
  %6787 = vmatprep.subr.mxu0 %v5488
  %6788 = vmatpush1.msra.mxu0 %v5487
  %6789 = vmatprep.subr.mxu0 %v5484
  %6790 = vmatpush1.msra.mxu0 %v5483
  %6791 = vmatprep.subr.mxu0 %v5480
  %6792 = vmatpush1.msra.mxu0 %v5479
  %6793 = vmatprep.subr.mxu0 %v5476
  %6794 = vmatpush1.msra.mxu0 %v5475
  %6795 = vmatprep.subr.mxu0 %v5472
  %6796 = vmatpush1.msra.mxu0 %v5471
  %6797 = vmatprep.subr.mxu0 %v5468
  %6798 = vmatpush1.msra.mxu0 %v5467
  %6799 = vmatprep.subr.mxu0 %v5464
  %6800 = vmatpush1.msra.mxu0 %v5463
  %6801 = vmatprep.subr.mxu0 %v5460
  %6802 = vmatpush1.msra.mxu0 %v5459
  %6803 = vmatprep.subr.mxu0 %v5456
  %6804 = vmatpush1.msra.mxu0 %v5455
  %6805 = vmatprep.subr.mxu0 %v5452
  %6806 = vmatpush1.msra.mxu0 %v5451
  %6807 = vmatprep.subr.mxu0 %v5576
  %6808 = vmatpush2.msra.mxu0 %v5575
  %6809 = vmatprep.subr.mxu0 %v5572
  %6810 = vmatpush2.msra.mxu0 %v5571
  %6811 = vmatprep.subr.mxu0 %v5568
  %6812 = vmatpush2.msra.mxu0 %v5567
  %6813 = vmatprep.subr.mxu0 %v5564
  %6814 = vmatpush2.msra.mxu0 %v5563
  %6815 = vmatprep.subr.mxu0 %v5560
  %6816 = vmatpush2.msra.mxu0 %v5559
  %6817 = vmatprep.subr.mxu0 %v5556
  %6818 = vmatpush2.msra.mxu0 %v5555
  %6819 = vmatprep.subr.mxu0 %v5552
  %6820 = vmatpush2.msra.mxu0 %v5551
  %6821 = vmatprep.subr.mxu0 %v5548
  %6822 = vmatpush2.msra.mxu0 %v5547
  %6823 = vmatprep.subr.mxu0 %v5544
  %6824 = vmatpush2.msra.mxu0 %v5543
  %6825 = vmatprep.subr.mxu0 %v5540
  %6826 = vmatpush2.msra.mxu0 %v5539
  %6827 = vmatprep.subr.mxu0 %v5536
  %6828 = vmatpush2.msra.mxu0 %v5535
  %6829 = vmatprep.subr.mxu0 %v5532
  %6830 = vmatpush2.msra.mxu0 %v5531
  %6831 = vmatprep.subr.mxu0 %v5528
  %6832 = vmatpush2.msra.mxu0 %v5527
  %6833 = vmatprep.subr.mxu0 %v5524
  %6834 = vmatpush2.msra.mxu0 %v5523
  %6835 = vmatprep.subr.mxu0 %v5520
  %6836 = vmatpush2.msra.mxu0 %v5519
  %6837 = vmatprep.subr.mxu0 %v5516
  %6838 = vmatpush2.msra.mxu0 %v5515
  %6839 = vmatprep.mubr.f32.mxu0 %v4828
  %6840 = vmatmul.mubr.f32.gmra.mxu0 %v4827
  %v6841 = vpop.f32.mrf.mxu0
  %v6842 = vadd.f32 0.0, %v6841
  %v6843 = vpop.f32.mrf.mxu0
  %v6844 = vadd.f32 0.0, %v6843
  %6845 = vmatprep.mubr.f32.mxu0 %v4830
  %6846 = vmatmul.mubr.f32.gmra.mxu0 %v4829
  %v6847 = vpop.f32.mrf.mxu0
  %v6848 = vadd.f32 0.0, %v6847
  %v6849 = vpop.f32.mrf.mxu0
  %v6850 = vadd.f32 0.0, %v6849
  %6851 = vmatprep.mubr.f32.mxu0 %v4832
  %6852 = vmatmul.mubr.f32.gmra.mxu0 %v4831
  %v6853 = vpop.f32.mrf.mxu0
  %v6854 = vadd.f32 0.0, %v6853
  %v6855 = vpop.f32.mrf.mxu0
  %v6856 = vadd.f32 0.0, %v6855
  %6857 = vmatprep.mubr.f32.mxu0 %v4834
  %6858 = vmatmul.mubr.f32.gmra.mxu0 %v4833
  %v6859 = vpop.f32.mrf.mxu0
  %v6860 = vadd.f32 0.0, %v6859
  %v6861 = vpop.f32.mrf.mxu0
  %v6862 = vadd.f32 0.0, %v6861
  %6863 = vdwg.mxu0
  %6864 = vmatprep.subr.mxu0 %v5514
  %6865 = vmatpush1.msra.mxu0 %v5513
  %6866 = vmatprep.subr.mxu0 %v5510
  %6867 = vmatpush1.msra.mxu0 %v5509
  %6868 = vmatprep.subr.mxu0 %v5506
  %6869 = vmatpush1.msra.mxu0 %v5505
  %6870 = vmatprep.subr.mxu0 %v5502
  %6871 = vmatpush1.msra.mxu0 %v5501
  %6872 = vmatprep.subr.mxu0 %v5498
  %6873 = vmatpush1.msra.mxu0 %v5497
  %6874 = vmatprep.subr.mxu0 %v5494
  %6875 = vmatpush1.msra.mxu0 %v5493
  %6876 = vmatprep.subr.mxu0 %v5490
  %6877 = vmatpush1.msra.mxu0 %v5489
  %6878 = vmatprep.subr.mxu0 %v5486
  %6879 = vmatpush1.msra.mxu0 %v5485
  %6880 = vmatprep.subr.mxu0 %v5482
  %6881 = vmatpush1.msra.mxu0 %v5481
  %6882 = vmatprep.subr.mxu0 %v5478
  %6883 = vmatpush1.msra.mxu0 %v5477
  %6884 = vmatprep.subr.mxu0 %v5474
  %6885 = vmatpush1.msra.mxu0 %v5473
  %6886 = vmatprep.subr.mxu0 %v5470
  %6887 = vmatpush1.msra.mxu0 %v5469
  %6888 = vmatprep.subr.mxu0 %v5466
  %6889 = vmatpush1.msra.mxu0 %v5465
  %6890 = vmatprep.subr.mxu0 %v5462
  %6891 = vmatpush1.msra.mxu0 %v5461
  %6892 = vmatprep.subr.mxu0 %v5458
  %6893 = vmatpush1.msra.mxu0 %v5457
  %6894 = vmatprep.subr.mxu0 %v5454
  %6895 = vmatpush1.msra.mxu0 %v5453
  %6896 = vmatprep.subr.mxu0 %v5578
  %6897 = vmatpush2.msra.mxu0 %v5577
  %6898 = vmatprep.subr.mxu0 %v5574
  %6899 = vmatpush2.msra.mxu0 %v5573
  %6900 = vmatprep.subr.mxu0 %v5570
  %6901 = vmatpush2.msra.mxu0 %v5569
  %6902 = vmatprep.subr.mxu0 %v5566
  %6903 = vmatpush2.msra.mxu0 %v5565
  %6904 = vmatprep.subr.mxu0 %v5562
  %6905 = vmatpush2.msra.mxu0 %v5561
  %6906 = vmatprep.subr.mxu0 %v5558
  %6907 = vmatpush2.msra.mxu0 %v5557
  %6908 = vmatprep.subr.mxu0 %v5554
  %6909 = vmatpush2.msra.mxu0 %v5553
  %6910 = vmatprep.subr.mxu0 %v5550
  %6911 = vmatpush2.msra.mxu0 %v5549
  %6912 = vmatprep.subr.mxu0 %v5546
  %6913 = vmatpush2.msra.mxu0 %v5545
  %6914 = vmatprep.subr.mxu0 %v5542
  %6915 = vmatpush2.msra.mxu0 %v5541
  %6916 = vmatprep.subr.mxu0 %v5538
  %6917 = vmatpush2.msra.mxu0 %v5537
  %6918 = vmatprep.subr.mxu0 %v5534
  %6919 = vmatpush2.msra.mxu0 %v5533
  %6920 = vmatprep.subr.mxu0 %v5530
  %6921 = vmatpush2.msra.mxu0 %v5529
  %6922 = vmatprep.subr.mxu0 %v5526
  %6923 = vmatpush2.msra.mxu0 %v5525
  %6924 = vmatprep.subr.mxu0 %v5522
  %6925 = vmatpush2.msra.mxu0 %v5521
  %6926 = vmatprep.subr.mxu0 %v5518
  %6927 = vmatpush2.msra.mxu0 %v5517
  %6928 = vmatprep.mubr.f32.mxu0 %v4828
  %6929 = vmatmul.mubr.f32.gmra.mxu0 %v4827
  %v6930 = vpop.f32.mrf.mxu0
  %v6931 = vadd.f32 0.0, %v6930
  %v6932 = vpop.f32.mrf.mxu0
  %v6933 = vadd.f32 0.0, %v6932
  %6934 = vmatprep.mubr.f32.mxu0 %v4830
  %6935 = vmatmul.mubr.f32.gmra.mxu0 %v4829
  %v6936 = vpop.f32.mrf.mxu0
  %v6937 = vadd.f32 0.0, %v6936
  %v6938 = vpop.f32.mrf.mxu0
  %v6939 = vadd.f32 0.0, %v6938
  %6940 = vmatprep.mubr.f32.mxu0 %v4832
  %6941 = vmatmul.mubr.f32.gmra.mxu0 %v4831
  %v6942 = vpop.f32.mrf.mxu0
  %v6943 = vadd.f32 0.0, %v6942
  %v6944 = vpop.f32.mrf.mxu0
  %v6945 = vadd.f32 0.0, %v6944
  %6946 = vmatprep.mubr.f32.mxu0 %v4834
  %6947 = vmatmul.mubr.f32.gmra.mxu0 %v4833
  %v6948 = vpop.f32.mrf.mxu0
  %v6949 = vadd.f32 0.0, %v6948
  %v6950 = vpop.f32.mrf.mxu0
  %v6951 = vadd.f32 0.0, %v6950
  %6952 = vdwg.mxu0
  %v6953 = vadd.f32 %v6664, %v6842
  %v6954 = vadd.f32 %v6666, %v6844
  %v6955 = vadd.f32 %v6753, %v6931
  %v6956 = vadd.f32 %v6755, %v6933
  %v6957 = vadd.f32 %v6670, %v6848
  %v6958 = vadd.f32 %v6672, %v6850
  %v6959 = vadd.f32 %v6759, %v6937
  %v6960 = vadd.f32 %v6761, %v6939
  %v6961 = vadd.f32 %v6676, %v6854
  %v6962 = vadd.f32 %v6678, %v6856
  %v6963 = vadd.f32 %v6765, %v6943
  %v6964 = vadd.f32 %v6767, %v6945
  %v6965 = vadd.f32 %v6682, %v6860
  %v6966 = vadd.f32 %v6684, %v6862
  %v6967 = vadd.f32 %v6771, %v6949
  %v6968 = vadd.f32 %v6773, %v6951
  %6969 = vmatprep.subr.mxu0 %v5835
  %6970 = vmatpush1.msra.mxu0 %v5834
  %6971 = vmatprep.subr.mxu0 %v5831
  %6972 = vmatpush1.msra.mxu0 %v5830
  %6973 = vmatprep.subr.mxu0 %v5827
  %6974 = vmatpush1.msra.mxu0 %v5826
  %6975 = vmatprep.subr.mxu0 %v5823
  %6976 = vmatpush1.msra.mxu0 %v5822
  %6977 = vmatprep.subr.mxu0 %v5819
  %6978 = vmatpush1.msra.mxu0 %v5818
  %6979 = vmatprep.subr.mxu0 %v5815
  %6980 = vmatpush1.msra.mxu0 %v5814
  %6981 = vmatprep.subr.mxu0 %v5811
  %6982 = vmatpush1.msra.mxu0 %v5810
  %6983 = vmatprep.subr.mxu0 %v5807
  %6984 = vmatpush1.msra.mxu0 %v5806
  %6985 = vmatprep.subr.mxu0 %v5803
  %6986 = vmatpush1.msra.mxu0 %v5802
  %6987 = vmatprep.subr.mxu0 %v5799
  %6988 = vmatpush1.msra.mxu0 %v5798
  %6989 = vmatprep.subr.mxu0 %v5795
  %6990 = vmatpush1.msra.mxu0 %v5794
  %6991 = vmatprep.subr.mxu0 %v5791
  %6992 = vmatpush1.msra.mxu0 %v5790
  %6993 = vmatprep.subr.mxu0 %v5787
  %6994 = vmatpush1.msra.mxu0 %v5786
  %6995 = vmatprep.subr.mxu0 %v5783
  %6996 = vmatpush1.msra.mxu0 %v5782
  %6997 = vmatprep.subr.mxu0 %v5779
  %6998 = vmatpush1.msra.mxu0 %v5778
  %6999 = vmatprep.subr.mxu0 %v5775
  %7000 = vmatpush1.msra.mxu0 %v5774
  %7001 = vmatprep.subr.mxu0 %v5899
  %7002 = vmatpush2.msra.mxu0 %v5898
  %7003 = vmatprep.subr.mxu0 %v5895
  %7004 = vmatpush2.msra.mxu0 %v5894
  %7005 = vmatprep.subr.mxu0 %v5891
  %7006 = vmatpush2.msra.mxu0 %v5890
  %7007 = vmatprep.subr.mxu0 %v5887
  %7008 = vmatpush2.msra.mxu0 %v5886
  %7009 = vmatprep.subr.mxu0 %v5883
  %7010 = vmatpush2.msra.mxu0 %v5882
  %7011 = vmatprep.subr.mxu0 %v5879
  %7012 = vmatpush2.msra.mxu0 %v5878
  %7013 = vmatprep.subr.mxu0 %v5875
  %7014 = vmatpush2.msra.mxu0 %v5874
  %7015 = vmatprep.subr.mxu0 %v5871
  %7016 = vmatpush2.msra.mxu0 %v5870
  %7017 = vmatprep.subr.mxu0 %v5867
  %7018 = vmatpush2.msra.mxu0 %v5866
  %7019 = vmatprep.subr.mxu0 %v5863
  %7020 = vmatpush2.msra.mxu0 %v5862
  %7021 = vmatprep.subr.mxu0 %v5859
  %7022 = vmatpush2.msra.mxu0 %v5858
  %7023 = vmatprep.subr.mxu0 %v5855
  %7024 = vmatpush2.msra.mxu0 %v5854
  %7025 = vmatprep.subr.mxu0 %v5851
  %7026 = vmatpush2.msra.mxu0 %v5850
  %7027 = vmatprep.subr.mxu0 %v5847
  %7028 = vmatpush2.msra.mxu0 %v5846
  %7029 = vmatprep.subr.mxu0 %v5843
  %7030 = vmatpush2.msra.mxu0 %v5842
  %7031 = vmatprep.subr.mxu0 %v5839
  %7032 = vmatpush2.msra.mxu0 %v5838
  %7033 = vmatprep.mubr.f32.mxu0 %v2556
  %7034 = vmatmul.mubr.f32.gmra.mxu0 %v2555
  %v7035 = vpop.f32.mrf.mxu0
  %v7036 = vadd.f32 0.0, %v7035
  %v7037 = vpop.f32.mrf.mxu0
  %v7038 = vadd.f32 0.0, %v7037
  %7039 = vmatprep.mubr.f32.mxu0 %v2558
  %7040 = vmatmul.mubr.f32.gmra.mxu0 %v2557
  %v7041 = vpop.f32.mrf.mxu0
  %v7042 = vadd.f32 0.0, %v7041
  %v7043 = vpop.f32.mrf.mxu0
  %v7044 = vadd.f32 0.0, %v7043
  %7045 = vmatprep.mubr.f32.mxu0 %v2560
  %7046 = vmatmul.mubr.f32.gmra.mxu0 %v2559
  %v7047 = vpop.f32.mrf.mxu0
  %v7048 = vadd.f32 0.0, %v7047
  %v7049 = vpop.f32.mrf.mxu0
  %v7050 = vadd.f32 0.0, %v7049
  %7051 = vmatprep.mubr.f32.mxu0 %v2562
  %7052 = vmatmul.mubr.f32.gmra.mxu0 %v2561
  %v7053 = vpop.f32.mrf.mxu0
  %v7054 = vadd.f32 0.0, %v7053
  %v7055 = vpop.f32.mrf.mxu0
  %v7056 = vadd.f32 0.0, %v7055
  %7057 = vdwg.mxu0
  %7058 = vmatprep.subr.mxu0 %v5837
  %7059 = vmatpush1.msra.mxu0 %v5836
  %7060 = vmatprep.subr.mxu0 %v5833
  %7061 = vmatpush1.msra.mxu0 %v5832
  %7062 = vmatprep.subr.mxu0 %v5829
  %7063 = vmatpush1.msra.mxu0 %v5828
  %7064 = vmatprep.subr.mxu0 %v5825
  %7065 = vmatpush1.msra.mxu0 %v5824
  %7066 = vmatprep.subr.mxu0 %v5821
  %7067 = vmatpush1.msra.mxu0 %v5820
  %7068 = vmatprep.subr.mxu0 %v5817
  %7069 = vmatpush1.msra.mxu0 %v5816
  %7070 = vmatprep.subr.mxu0 %v5813
  %7071 = vmatpush1.msra.mxu0 %v5812
  %7072 = vmatprep.subr.mxu0 %v5809
  %7073 = vmatpush1.msra.mxu0 %v5808
  %7074 = vmatprep.subr.mxu0 %v5805
  %7075 = vmatpush1.msra.mxu0 %v5804
  %7076 = vmatprep.subr.mxu0 %v5801
  %7077 = vmatpush1.msra.mxu0 %v5800
  %7078 = vmatprep.subr.mxu0 %v5797
  %7079 = vmatpush1.msra.mxu0 %v5796
  %7080 = vmatprep.subr.mxu0 %v5793
  %7081 = vmatpush1.msra.mxu0 %v5792
  %7082 = vmatprep.subr.mxu0 %v5789
  %7083 = vmatpush1.msra.mxu0 %v5788
  %7084 = vmatprep.subr.mxu0 %v5785
  %7085 = vmatpush1.msra.mxu0 %v5784
  %7086 = vmatprep.subr.mxu0 %v5781
  %7087 = vmatpush1.msra.mxu0 %v5780
  %7088 = vmatprep.subr.mxu0 %v5777
  %7089 = vmatpush1.msra.mxu0 %v5776
  %7090 = vmatprep.subr.mxu0 %v5901
  %7091 = vmatpush2.msra.mxu0 %v5900
  %7092 = vmatprep.subr.mxu0 %v5897
  %7093 = vmatpush2.msra.mxu0 %v5896
  %7094 = vmatprep.subr.mxu0 %v5893
  %7095 = vmatpush2.msra.mxu0 %v5892
  %7096 = vmatprep.subr.mxu0 %v5889
  %7097 = vmatpush2.msra.mxu0 %v5888
  %7098 = vmatprep.subr.mxu0 %v5885
  %7099 = vmatpush2.msra.mxu0 %v5884
  %7100 = vmatprep.subr.mxu0 %v5881
  %7101 = vmatpush2.msra.mxu0 %v5880
  %7102 = vmatprep.subr.mxu0 %v5877
  %7103 = vmatpush2.msra.mxu0 %v5876
  %7104 = vmatprep.subr.mxu0 %v5873
  %7105 = vmatpush2.msra.mxu0 %v5872
  %7106 = vmatprep.subr.mxu0 %v5869
  %7107 = vmatpush2.msra.mxu0 %v5868
  %7108 = vmatprep.subr.mxu0 %v5865
  %7109 = vmatpush2.msra.mxu0 %v5864
  %7110 = vmatprep.subr.mxu0 %v5861
  %7111 = vmatpush2.msra.mxu0 %v5860
  %7112 = vmatprep.subr.mxu0 %v5857
  %7113 = vmatpush2.msra.mxu0 %v5856
  %7114 = vmatprep.subr.mxu0 %v5853
  %7115 = vmatpush2.msra.mxu0 %v5852
  %7116 = vmatprep.subr.mxu0 %v5849
  %7117 = vmatpush2.msra.mxu0 %v5848
  %7118 = vmatprep.subr.mxu0 %v5845
  %7119 = vmatpush2.msra.mxu0 %v5844
  %7120 = vmatprep.subr.mxu0 %v5841
  %7121 = vmatpush2.msra.mxu0 %v5840
  %7122 = vmatprep.mubr.f32.mxu0 %v2556
  %7123 = vmatmul.mubr.f32.gmra.mxu0 %v2555
  %v7124 = vpop.f32.mrf.mxu0
  %v7125 = vadd.f32 0.0, %v7124
  %v7126 = vpop.f32.mrf.mxu0
  %v7127 = vadd.f32 0.0, %v7126
  %7128 = vmatprep.mubr.f32.mxu0 %v2558
  %7129 = vmatmul.mubr.f32.gmra.mxu0 %v2557
  %v7130 = vpop.f32.mrf.mxu0
  %v7131 = vadd.f32 0.0, %v7130
  %v7132 = vpop.f32.mrf.mxu0
  %v7133 = vadd.f32 0.0, %v7132
  %7134 = vmatprep.mubr.f32.mxu0 %v2560
  %7135 = vmatmul.mubr.f32.gmra.mxu0 %v2559
  %v7136 = vpop.f32.mrf.mxu0
  %v7137 = vadd.f32 0.0, %v7136
  %v7138 = vpop.f32.mrf.mxu0
  %v7139 = vadd.f32 0.0, %v7138
  %7140 = vmatprep.mubr.f32.mxu0 %v2562
  %7141 = vmatmul.mubr.f32.gmra.mxu0 %v2561
  %v7142 = vpop.f32.mrf.mxu0
  %v7143 = vadd.f32 0.0, %v7142
  %v7144 = vpop.f32.mrf.mxu0
  %v7145 = vadd.f32 0.0, %v7144
  %7146 = vdwg.mxu0
  %v7147 = vadd.f32 %v6953, %v7036
  %v7148 = vadd.f32 %v6954, %v7038
  %v7149 = vadd.f32 %v6955, %v7125
  %v7150 = vadd.f32 %v6956, %v7127
  %v7151 = vadd.f32 %v6957, %v7042
  %v7152 = vadd.f32 %v6958, %v7044
  %v7153 = vadd.f32 %v6959, %v7131
  %v7154 = vadd.f32 %v6960, %v7133
  %v7155 = vadd.f32 %v6961, %v7048
  %v7156 = vadd.f32 %v6962, %v7050
  %v7157 = vadd.f32 %v6963, %v7137
  %v7158 = vadd.f32 %v6964, %v7139
  %v7159 = vadd.f32 %v6965, %v7054
  %v7160 = vadd.f32 %v6966, %v7056
  %v7161 = vadd.f32 %v6967, %v7143
  %v7162 = vadd.f32 %v6968, %v7145
  %7163 = vmatprep.subr.mxu0 %v6158
  %7164 = vmatpush1.msra.mxu0 %v6157
  %7165 = vmatprep.subr.mxu0 %v6154
  %7166 = vmatpush1.msra.mxu0 %v6153
  %7167 = vmatprep.subr.mxu0 %v6150
  %7168 = vmatpush1.msra.mxu0 %v6149
  %7169 = vmatprep.subr.mxu0 %v6146
  %7170 = vmatpush1.msra.mxu0 %v6145
  %7171 = vmatprep.subr.mxu0 %v6142
  %7172 = vmatpush1.msra.mxu0 %v6141
  %7173 = vmatprep.subr.mxu0 %v6138
  %7174 = vmatpush1.msra.mxu0 %v6137
  %7175 = vmatprep.subr.mxu0 %v6134
  %7176 = vmatpush1.msra.mxu0 %v6133
  %7177 = vmatprep.subr.mxu0 %v6130
  %7178 = vmatpush1.msra.mxu0 %v6129
  %7179 = vmatprep.subr.mxu0 %v6126
  %7180 = vmatpush1.msra.mxu0 %v6125
  %7181 = vmatprep.subr.mxu0 %v6122
  %7182 = vmatpush1.msra.mxu0 %v6121
  %7183 = vmatprep.subr.mxu0 %v6118
  %7184 = vmatpush1.msra.mxu0 %v6117
  %7185 = vmatprep.subr.mxu0 %v6114
  %7186 = vmatpush1.msra.mxu0 %v6113
  %7187 = vmatprep.subr.mxu0 %v6110
  %7188 = vmatpush1.msra.mxu0 %v6109
  %7189 = vmatprep.subr.mxu0 %v6106
  %7190 = vmatpush1.msra.mxu0 %v6105
  %7191 = vmatprep.subr.mxu0 %v6102
  %7192 = vmatpush1.msra.mxu0 %v6101
  %7193 = vmatprep.subr.mxu0 %v6098
  %7194 = vmatpush1.msra.mxu0 %v6097
  %7195 = vmatprep.subr.mxu0 %v6222
  %7196 = vmatpush2.msra.mxu0 %v6221
  %7197 = vmatprep.subr.mxu0 %v6218
  %7198 = vmatpush2.msra.mxu0 %v6217
  %7199 = vmatprep.subr.mxu0 %v6214
  %7200 = vmatpush2.msra.mxu0 %v6213
  %7201 = vmatprep.subr.mxu0 %v6210
  %7202 = vmatpush2.msra.mxu0 %v6209
  %7203 = vmatprep.subr.mxu0 %v6206
  %7204 = vmatpush2.msra.mxu0 %v6205
  %7205 = vmatprep.subr.mxu0 %v6202
  %7206 = vmatpush2.msra.mxu0 %v6201
  %7207 = vmatprep.subr.mxu0 %v6198
  %7208 = vmatpush2.msra.mxu0 %v6197
  %7209 = vmatprep.subr.mxu0 %v6194
  %7210 = vmatpush2.msra.mxu0 %v6193
  %7211 = vmatprep.subr.mxu0 %v6190
  %7212 = vmatpush2.msra.mxu0 %v6189
  %7213 = vmatprep.subr.mxu0 %v6186
  %7214 = vmatpush2.msra.mxu0 %v6185
  %7215 = vmatprep.subr.mxu0 %v6182
  %7216 = vmatpush2.msra.mxu0 %v6181
  %7217 = vmatprep.subr.mxu0 %v6178
  %7218 = vmatpush2.msra.mxu0 %v6177
  %7219 = vmatprep.subr.mxu0 %v6174
  %7220 = vmatpush2.msra.mxu0 %v6173
  %7221 = vmatprep.subr.mxu0 %v6170
  %7222 = vmatpush2.msra.mxu0 %v6169
  %7223 = vmatprep.subr.mxu0 %v6166
  %7224 = vmatpush2.msra.mxu0 %v6165
  %7225 = vmatprep.subr.mxu0 %v6162
  %7226 = vmatpush2.msra.mxu0 %v6161
  %7227 = vmatprep.mubr.f32.mxu0 %v4830
  %7228 = vmatmul.mubr.f32.gmra.mxu0 %v4829
  %v7229 = vpop.f32.mrf.mxu0
  %v7230 = vadd.f32 0.0, %v7229
  %v7231 = vpop.f32.mrf.mxu0
  %v7232 = vadd.f32 0.0, %v7231
  %7233 = vmatprep.mubr.f32.mxu0 %v4832
  %7234 = vmatmul.mubr.f32.gmra.mxu0 %v4831
  %v7235 = vpop.f32.mrf.mxu0
  %v7236 = vadd.f32 0.0, %v7235
  %v7237 = vpop.f32.mrf.mxu0
  %v7238 = vadd.f32 0.0, %v7237
  %7239 = vmatprep.mubr.f32.mxu0 %v4834
  %7240 = vmatmul.mubr.f32.gmra.mxu0 %v4833
  %v7241 = vpop.f32.mrf.mxu0
  %v7242 = vadd.f32 0.0, %v7241
  %v7243 = vpop.f32.mrf.mxu0
  %v7244 = vadd.f32 0.0, %v7243
  %7245 = vmatprep.mubr.f32.mxu0 %v4836
  %7246 = vmatmul.mubr.f32.gmra.mxu0 %v4835
  %v7247 = vpop.f32.mrf.mxu0
  %v7248 = vadd.f32 0.0, %v7247
  %v7249 = vpop.f32.mrf.mxu0
  %v7250 = vadd.f32 0.0, %v7249
  %7251 = vdwg.mxu0
  %7252 = vmatprep.subr.mxu0 %v6160
  %7253 = vmatpush1.msra.mxu0 %v6159
  %7254 = vmatprep.subr.mxu0 %v6156
  %7255 = vmatpush1.msra.mxu0 %v6155
  %7256 = vmatprep.subr.mxu0 %v6152
  %7257 = vmatpush1.msra.mxu0 %v6151
  %7258 = vmatprep.subr.mxu0 %v6148
  %7259 = vmatpush1.msra.mxu0 %v6147
  %7260 = vmatprep.subr.mxu0 %v6144
  %7261 = vmatpush1.msra.mxu0 %v6143
  %7262 = vmatprep.subr.mxu0 %v6140
  %7263 = vmatpush1.msra.mxu0 %v6139
  %7264 = vmatprep.subr.mxu0 %v6136
  %7265 = vmatpush1.msra.mxu0 %v6135
  %7266 = vmatprep.subr.mxu0 %v6132
  %7267 = vmatpush1.msra.mxu0 %v6131
  %7268 = vmatprep.subr.mxu0 %v6128
  %7269 = vmatpush1.msra.mxu0 %v6127
  %7270 = vmatprep.subr.mxu0 %v6124
  %7271 = vmatpush1.msra.mxu0 %v6123
  %7272 = vmatprep.subr.mxu0 %v6120
  %7273 = vmatpush1.msra.mxu0 %v6119
  %7274 = vmatprep.subr.mxu0 %v6116
  %7275 = vmatpush1.msra.mxu0 %v6115
  %7276 = vmatprep.subr.mxu0 %v6112
  %7277 = vmatpush1.msra.mxu0 %v6111
  %7278 = vmatprep.subr.mxu0 %v6108
  %7279 = vmatpush1.msra.mxu0 %v6107
  %7280 = vmatprep.subr.mxu0 %v6104
  %7281 = vmatpush1.msra.mxu0 %v6103
  %7282 = vmatprep.subr.mxu0 %v6100
  %7283 = vmatpush1.msra.mxu0 %v6099
  %7284 = vmatprep.subr.mxu0 %v6224
  %7285 = vmatpush2.msra.mxu0 %v6223
  %7286 = vmatprep.subr.mxu0 %v6220
  %7287 = vmatpush2.msra.mxu0 %v6219
  %7288 = vmatprep.subr.mxu0 %v6216
  %7289 = vmatpush2.msra.mxu0 %v6215
  %7290 = vmatprep.subr.mxu0 %v6212
  %7291 = vmatpush2.msra.mxu0 %v6211
  %7292 = vmatprep.subr.mxu0 %v6208
  %7293 = vmatpush2.msra.mxu0 %v6207
  %7294 = vmatprep.subr.mxu0 %v6204
  %7295 = vmatpush2.msra.mxu0 %v6203
  %7296 = vmatprep.subr.mxu0 %v6200
  %7297 = vmatpush2.msra.mxu0 %v6199
  %7298 = vmatprep.subr.mxu0 %v6196
  %7299 = vmatpush2.msra.mxu0 %v6195
  %7300 = vmatprep.subr.mxu0 %v6192
  %7301 = vmatpush2.msra.mxu0 %v6191
  %7302 = vmatprep.subr.mxu0 %v6188
  %7303 = vmatpush2.msra.mxu0 %v6187
  %7304 = vmatprep.subr.mxu0 %v6184
  %7305 = vmatpush2.msra.mxu0 %v6183
  %7306 = vmatprep.subr.mxu0 %v6180
  %7307 = vmatpush2.msra.mxu0 %v6179
  %7308 = vmatprep.subr.mxu0 %v6176
  %7309 = vmatpush2.msra.mxu0 %v6175
  %7310 = vmatprep.subr.mxu0 %v6172
  %7311 = vmatpush2.msra.mxu0 %v6171
  %7312 = vmatprep.subr.mxu0 %v6168
  %7313 = vmatpush2.msra.mxu0 %v6167
  %7314 = vmatprep.subr.mxu0 %v6164
  %7315 = vmatpush2.msra.mxu0 %v6163
  %7316 = vmatprep.mubr.f32.mxu0 %v4830
  %7317 = vmatmul.mubr.f32.gmra.mxu0 %v4829
  %v7318 = vpop.f32.mrf.mxu0
  %v7319 = vadd.f32 0.0, %v7318
  %v7320 = vpop.f32.mrf.mxu0
  %v7321 = vadd.f32 0.0, %v7320
  %7322 = vmatprep.mubr.f32.mxu0 %v4832
  %7323 = vmatmul.mubr.f32.gmra.mxu0 %v4831
  %v7324 = vpop.f32.mrf.mxu0
  %v7325 = vadd.f32 0.0, %v7324
  %v7326 = vpop.f32.mrf.mxu0
  %v7327 = vadd.f32 0.0, %v7326
  %7328 = vmatprep.mubr.f32.mxu0 %v4834
  %7329 = vmatmul.mubr.f32.gmra.mxu0 %v4833
  %v7330 = vpop.f32.mrf.mxu0
  %v7331 = vadd.f32 0.0, %v7330
  %v7332 = vpop.f32.mrf.mxu0
  %v7333 = vadd.f32 0.0, %v7332
  %7334 = vmatprep.mubr.f32.mxu0 %v4836
  %7335 = vmatmul.mubr.f32.gmra.mxu0 %v4835
  %v7336 = vpop.f32.mrf.mxu0
  %v7337 = vadd.f32 0.0, %v7336
  %v7338 = vpop.f32.mrf.mxu0
  %v7339 = vadd.f32 0.0, %v7338
  %7340 = vdwg.mxu0
  %v7341 = vadd.f32 %v7147, %v7230
  %v7342 = vadd.f32 %v7148, %v7232
  %v7343 = vadd.f32 %v7149, %v7319
  %v7344 = vadd.f32 %v7150, %v7321
  %v7345 = vadd.f32 %v7151, %v7236
  %v7346 = vadd.f32 %v7152, %v7238
  %v7347 = vadd.f32 %v7153, %v7325
  %v7348 = vadd.f32 %v7154, %v7327
  %v7349 = vadd.f32 %v7155, %v7242
  %v7350 = vadd.f32 %v7156, %v7244
  %v7351 = vadd.f32 %v7157, %v7331
  %v7352 = vadd.f32 %v7158, %v7333
  %v7353 = vadd.f32 %v7159, %v7248
  %v7354 = vadd.f32 %v7160, %v7250
  %v7355 = vadd.f32 %v7161, %v7337
  %v7356 = vadd.f32 %v7162, %v7339
  %v7357 = vmax.f32 %v6403, %v7341
  %v7358 = vmax.f32 %v6404, %v7342
  %v7359 = vmax.f32 %v6405, %v7343
  %v7360 = vmax.f32 %v6406, %v7344
  %v7361 = vmax.f32 %v6407, %v7345
  %v7362 = vmax.f32 %v6408, %v7346
  %v7363 = vmax.f32 %v6409, %v7347
  %v7364 = vmax.f32 %v6410, %v7348
  %v7365 = vmax.f32 %v6411, %v7349
  %v7366 = vmax.f32 %v6412, %v7350
  %v7367 = vmax.f32 %v6413, %v7351
  %v7368 = vmax.f32 %v6414, %v7352
  %v7369 = vmax.f32 %v6415, %v7353
  %v7370 = vmax.f32 %v6416, %v7354
  %v7371 = vmax.f32 %v6417, %v7355
  %v7372 = vmax.f32 %v6418, %v7356
  %v7373 = vmax.f32 %v7357, %v7359
  %v7374 = vmax.f32 %v7358, %v7360
  %v7375 = vmax.f32 %v7361, %v7363
  %v7376 = vmax.f32 %v7362, %v7364
  %v7377 = vmax.f32 %v7365, %v7367
  %v7378 = vmax.f32 %v7366, %v7368
  %v7379 = vmax.f32 %v7369, %v7371
  %v7380 = vmax.f32 %v7370, %v7372
  %v7381 = vld [vmem:[%s4] sm:$0x3]
  %v7383 = vlaneseq
  %v7384 = vshrl.u32 %v7383, 7
  %v7385 = vsub.s32 0, %v7384
  %v7386 = vrot.slane %v7381, %v7385
  %v7387 = vlaneseq
  %v7388 = vshrl.u32 %v7387, 7
  %v7389 = vsub.s32 1, %v7388
  %v7390 = vrot.slane %v7381, %v7389
  %v7393 = vadd.f32 %v7373, %v7386
  %v7394 = vadd.f32 %v7374, %v7390
  %v7395 = vadd.f32 %v7375, %v7386
  %v7396 = vadd.f32 %v7376, %v7390
  %v7397 = vadd.f32 %v7377, %v7386
  %v7398 = vadd.f32 %v7378, %v7390
  %v7399 = vadd.f32 %v7379, %v7386
  %v7400 = vadd.f32 %v7380, %v7390
  %v7401 = vmax.f32 %v7393, 0.0
  %v7402 = vmax.f32 %v7394, 0.0
  %v7403 = vmax.f32 %v7395, 0.0
  %v7404 = vmax.f32 %v7396, 0.0
  %v7405 = vmax.f32 %v7397, 0.0
  %v7406 = vmax.f32 %v7398, 0.0
  %v7407 = vmax.f32 %v7399, 0.0
  %v7408 = vmax.f32 %v7400, 0.0
  %v7409 = vld [vmem:[%s6] sm:$0xf]
  %v7410 = vld [vmem:[%s5] sm:$0xff]
  %v7411 = vld [vmem:[%s5 + $0x8] sm:$0xff]
  %v7412 = vld [vmem:[%s5 + $0x10] sm:$0xff]
  %v7413 = vld [vmem:[%s5 + $0x18] sm:$0xff]
  %v7414 = vld [vmem:[%s5 + $0x20] sm:$0xff]
  %v7415 = vld [vmem:[%s5 + $0x28] sm:$0xff]
  %v7416 = vld [vmem:[%s5 + $0x30] sm:$0xff]
  %v7417 = vld [vmem:[%s5 + $0x38] sm:$0xff]
  %v7418 = vld [vmem:[%s5 + $0x40] sm:$0xff]
  %v7419 = vld [vmem:[%s5 + $0x48] sm:$0xff]
  %v7420 = vld [vmem:[%s5 + $0x50] sm:$0xff]
  %v7421 = vld [vmem:[%s5 + $0x58] sm:$0xff]
  %v7422 = vld [vmem:[%s5 + $0x60] sm:$0xff]
  %v7423 = vld [vmem:[%s5 + $0x68] sm:$0xff]
  %v7424 = vld [vmem:[%s5 + $0x70] sm:$0xff]
  %v7425 = vld [vmem:[%s5 + $0x78] sm:$0xff]
  %v7426 = vld [vmem:[%s5 + $0x80] sm:$0xff]
  %v7427 = vld [vmem:[%s5 + $0x88] sm:$0xff]
  %v7428 = vld [vmem:[%s5 + $0x90] sm:$0xff]
  %v7429 = vld [vmem:[%s5 + $0x98] sm:$0xff]
  %v7430 = vld [vmem:[%s5 + $0xa0] sm:$0xff]
  %v7431 = vld [vmem:[%s5 + $0xa8] sm:$0xff]
  %v7432 = vld [vmem:[%s5 + $0xb0] sm:$0xff]
  %v7433 = vld [vmem:[%s5 + $0xb8] sm:$0xff]
  %v7434 = vld [vmem:[%s5 + $0xc0] sm:$0xff]
  %v7435 = vld [vmem:[%s5 + $0xc8] sm:$0xff]
  %v7436 = vld [vmem:[%s5 + $0xd0] sm:$0xff]
  %v7437 = vld [vmem:[%s5 + $0xd8] sm:$0xff]
  %v7438 = vld [vmem:[%s5 + $0xe0] sm:$0xff]
  %v7439 = vld [vmem:[%s5 + $0xe8] sm:$0xff]
  %v7440 = vld [vmem:[%s5 + $0xf0] sm:$0xff]
  %v7441 = vld [vmem:[%s5 + $0xf8] sm:$0xff]
  %v7442 = vld [vmem:[%s5 + $0x100] sm:$0xff]
  %v7443 = vld [vmem:[%s5 + $0x108] sm:$0xff]
  %v7444 = vld [vmem:[%s5 + $0x110] sm:$0xff]
  %v7445 = vld [vmem:[%s5 + $0x118] sm:$0xff]
  %v7446 = vld [vmem:[%s5 + $0x120] sm:$0xff]
  %v7447 = vld [vmem:[%s5 + $0x128] sm:$0xff]
  %v7448 = vld [vmem:[%s5 + $0x130] sm:$0xff]
  %v7449 = vld [vmem:[%s5 + $0x138] sm:$0xff]
  %v7450 = vld [vmem:[%s5 + $0x140] sm:$0xff]
  %v7451 = vld [vmem:[%s5 + $0x148] sm:$0xff]
  %v7452 = vld [vmem:[%s5 + $0x150] sm:$0xff]
  %v7453 = vld [vmem:[%s5 + $0x158] sm:$0xff]
  %v7454 = vld [vmem:[%s5 + $0x160] sm:$0xff]
  %v7455 = vld [vmem:[%s5 + $0x168] sm:$0xff]
  %v7456 = vld [vmem:[%s5 + $0x170] sm:$0xff]
  %v7457 = vld [vmem:[%s5 + $0x178] sm:$0xff]
  %v7458 = vld [vmem:[%s5 + $0x180] sm:$0xff]
  %v7459 = vld [vmem:[%s5 + $0x188] sm:$0xff]
  %v7460 = vld [vmem:[%s5 + $0x190] sm:$0xff]
  %v7461 = vld [vmem:[%s5 + $0x198] sm:$0xff]
  %v7462 = vld [vmem:[%s5 + $0x1a0] sm:$0xff]
  %v7463 = vld [vmem:[%s5 + $0x1a8] sm:$0xff]
  %v7464 = vld [vmem:[%s5 + $0x1b0] sm:$0xff]
  %v7465 = vld [vmem:[%s5 + $0x1b8] sm:$0xff]
  %v7466 = vld [vmem:[%s5 + $0x1c0] sm:$0xff]
  %v7467 = vld [vmem:[%s5 + $0x1c8] sm:$0xff]
  %v7468 = vld [vmem:[%s5 + $0x1d0] sm:$0xff]
  %v7469 = vld [vmem:[%s5 + $0x1d8] sm:$0xff]
  %v7470 = vld [vmem:[%s5 + $0x1e0] sm:$0xff]
  %v7471 = vld [vmem:[%s5 + $0x1e8] sm:$0xff]
  %v7472 = vld [vmem:[%s5 + $0x1f0] sm:$0xff]
  %v7473 = vld [vmem:[%s5 + $0x1f8] sm:$0xff]
  %v7474 = vld [vmem:[%s5 + $0x200] sm:$0xff]
  %v7475 = vld [vmem:[%s5 + $0x208] sm:$0xff]
  %v7476 = vld [vmem:[%s5 + $0x210] sm:$0xff]
  %v7477 = vld [vmem:[%s5 + $0x218] sm:$0xff]
  %v7478 = vld [vmem:[%s5 + $0x220] sm:$0xff]
  %v7479 = vld [vmem:[%s5 + $0x228] sm:$0xff]
  %v7480 = vld [vmem:[%s5 + $0x230] sm:$0xff]
  %v7481 = vld [vmem:[%s5 + $0x238] sm:$0xff]
  %v7482 = vld [vmem:[%s5 + $0x240] sm:$0xff]
  %v7483 = vld [vmem:[%s5 + $0x248] sm:$0xff]
  %v7484 = vld [vmem:[%s5 + $0x250] sm:$0xff]
  %v7485 = vld [vmem:[%s5 + $0x258] sm:$0xff]
  %v7486 = vld [vmem:[%s5 + $0x260] sm:$0xff]
  %v7487 = vld [vmem:[%s5 + $0x268] sm:$0xff]
  %v7488 = vld [vmem:[%s5 + $0x270] sm:$0xff]
  %v7489 = vld [vmem:[%s5 + $0x278] sm:$0xff]
  %v7490 = vld [vmem:[%s5 + $0x280] sm:$0xff]
  %v7491 = vld [vmem:[%s5 + $0x288] sm:$0xff]
  %v7492 = vld [vmem:[%s5 + $0x290] sm:$0xff]
  %v7493 = vld [vmem:[%s5 + $0x298] sm:$0xff]
  %v7494 = vld [vmem:[%s5 + $0x2a0] sm:$0xff]
  %v7495 = vld [vmem:[%s5 + $0x2a8] sm:$0xff]
  %v7496 = vld [vmem:[%s5 + $0x2b0] sm:$0xff]
  %v7497 = vld [vmem:[%s5 + $0x2b8] sm:$0xff]
  %v7498 = vld [vmem:[%s5 + $0x2c0] sm:$0xff]
  %v7499 = vld [vmem:[%s5 + $0x2c8] sm:$0xff]
  %v7500 = vld [vmem:[%s5 + $0x2d0] sm:$0xff]
  %v7501 = vld [vmem:[%s5 + $0x2d8] sm:$0xff]
  %v7502 = vld [vmem:[%s5 + $0x2e0] sm:$0xff]
  %v7503 = vld [vmem:[%s5 + $0x2e8] sm:$0xff]
  %v7504 = vld [vmem:[%s5 + $0x2f0] sm:$0xff]
  %v7505 = vld [vmem:[%s5 + $0x2f8] sm:$0xff]
  %v7506 = vld [vmem:[%s5 + $0x300] sm:$0xff]
  %v7507 = vld [vmem:[%s5 + $0x308] sm:$0xff]
  %v7508 = vld [vmem:[%s5 + $0x310] sm:$0xff]
  %v7509 = vld [vmem:[%s5 + $0x318] sm:$0xff]
  %v7510 = vld [vmem:[%s5 + $0x320] sm:$0xff]
  %v7511 = vld [vmem:[%s5 + $0x328] sm:$0xff]
  %v7512 = vld [vmem:[%s5 + $0x330] sm:$0xff]
  %v7513 = vld [vmem:[%s5 + $0x338] sm:$0xff]
  %v7514 = vld [vmem:[%s5 + $0x340] sm:$0xff]
  %v7515 = vld [vmem:[%s5 + $0x348] sm:$0xff]
  %v7516 = vld [vmem:[%s5 + $0x350] sm:$0xff]
  %v7517 = vld [vmem:[%s5 + $0x358] sm:$0xff]
  %v7518 = vld [vmem:[%s5 + $0x360] sm:$0xff]
  %v7519 = vld [vmem:[%s5 + $0x368] sm:$0xff]
  %v7520 = vld [vmem:[%s5 + $0x370] sm:$0xff]
  %v7521 = vld [vmem:[%s5 + $0x378] sm:$0xff]
  %v7522 = vld [vmem:[%s5 + $0x380] sm:$0xff]
  %v7523 = vld [vmem:[%s5 + $0x388] sm:$0xff]
  %v7524 = vld [vmem:[%s5 + $0x390] sm:$0xff]
  %v7525 = vld [vmem:[%s5 + $0x398] sm:$0xff]
  %v7526 = vld [vmem:[%s5 + $0x3a0] sm:$0xff]
  %v7527 = vld [vmem:[%s5 + $0x3a8] sm:$0xff]
  %v7528 = vld [vmem:[%s5 + $0x3b0] sm:$0xff]
  %v7529 = vld [vmem:[%s5 + $0x3b8] sm:$0xff]
  %v7530 = vld [vmem:[%s5 + $0x3c0] sm:$0xff]
  %v7531 = vld [vmem:[%s5 + $0x3c8] sm:$0xff]
  %v7532 = vld [vmem:[%s5 + $0x3d0] sm:$0xff]
  %v7533 = vld [vmem:[%s5 + $0x3d8] sm:$0xff]
  %v7534 = vld [vmem:[%s5 + $0x3e0] sm:$0xff]
  %v7535 = vld [vmem:[%s5 + $0x3e8] sm:$0xff]
  %v7536 = vld [vmem:[%s5 + $0x3f0] sm:$0xff]
  %v7537 = vld [vmem:[%s5 + $0x3f8] sm:$0xff]
  %7538 = vmatprep.subr.mxu0 %v7471
  %7539 = vmatpush1.msra.mxu0 %v7470
  %7540 = vmatprep.subr.mxu0 %v7467
  %7541 = vmatpush1.msra.mxu0 %v7466
  %7542 = vmatprep.subr.mxu0 %v7463
  %7543 = vmatpush1.msra.mxu0 %v7462
  %7544 = vmatprep.subr.mxu0 %v7459
  %7545 = vmatpush1.msra.mxu0 %v7458
  %7546 = vmatprep.subr.mxu0 %v7455
  %7547 = vmatpush1.msra.mxu0 %v7454
  %7548 = vmatprep.subr.mxu0 %v7451
  %7549 = vmatpush1.msra.mxu0 %v7450
  %7550 = vmatprep.subr.mxu0 %v7447
  %7551 = vmatpush1.msra.mxu0 %v7446
  %7552 = vmatprep.subr.mxu0 %v7443
  %7553 = vmatpush1.msra.mxu0 %v7442
  %7554 = vmatprep.subr.mxu0 %v7439
  %7555 = vmatpush1.msra.mxu0 %v7438
  %7556 = vmatprep.subr.mxu0 %v7435
  %7557 = vmatpush1.msra.mxu0 %v7434
  %7558 = vmatprep.subr.mxu0 %v7431
  %7559 = vmatpush1.msra.mxu0 %v7430
  %7560 = vmatprep.subr.mxu0 %v7427
  %7561 = vmatpush1.msra.mxu0 %v7426
  %7562 = vmatprep.subr.mxu0 %v7423
  %7563 = vmatpush1.msra.mxu0 %v7422
  %7564 = vmatprep.subr.mxu0 %v7419
  %7565 = vmatpush1.msra.mxu0 %v7418
  %7566 = vmatprep.subr.mxu0 %v7415
  %7567 = vmatpush1.msra.mxu0 %v7414
  %7568 = vmatprep.subr.mxu0 %v7411
  %7569 = vmatpush1.msra.mxu0 %v7410
  %7570 = vmatprep.subr.mxu0 %v7535
  %7571 = vmatpush2.msra.mxu0 %v7534
  %7572 = vmatprep.subr.mxu0 %v7531
  %7573 = vmatpush2.msra.mxu0 %v7530
  %7574 = vmatprep.subr.mxu0 %v7527
  %7575 = vmatpush2.msra.mxu0 %v7526
  %7576 = vmatprep.subr.mxu0 %v7523
  %7577 = vmatpush2.msra.mxu0 %v7522
  %7578 = vmatprep.subr.mxu0 %v7519
  %7579 = vmatpush2.msra.mxu0 %v7518
  %7580 = vmatprep.subr.mxu0 %v7515
  %7581 = vmatpush2.msra.mxu0 %v7514
  %7582 = vmatprep.subr.mxu0 %v7511
  %7583 = vmatpush2.msra.mxu0 %v7510
  %7584 = vmatprep.subr.mxu0 %v7507
  %7585 = vmatpush2.msra.mxu0 %v7506
  %7586 = vmatprep.subr.mxu0 %v7503
  %7587 = vmatpush2.msra.mxu0 %v7502
  %7588 = vmatprep.subr.mxu0 %v7499
  %7589 = vmatpush2.msra.mxu0 %v7498
  %7590 = vmatprep.subr.mxu0 %v7495
  %7591 = vmatpush2.msra.mxu0 %v7494
  %7592 = vmatprep.subr.mxu0 %v7491
  %7593 = vmatpush2.msra.mxu0 %v7490
  %7594 = vmatprep.subr.mxu0 %v7487
  %7595 = vmatpush2.msra.mxu0 %v7486
  %7596 = vmatprep.subr.mxu0 %v7483
  %7597 = vmatpush2.msra.mxu0 %v7482
  %7598 = vmatprep.subr.mxu0 %v7479
  %7599 = vmatpush2.msra.mxu0 %v7478
  %7600 = vmatprep.subr.mxu0 %v7475
  %7601 = vmatpush2.msra.mxu0 %v7474
  %7602 = vmatprep.mubr.f32.mxu0 %v7402
  %7603 = vmatmul.mubr.f32.gmra.mxu0 %v7401
  %v7604 = vpop.f32.mrf.mxu0
  %v7605 = vadd.f32 0.0, %v7604
  %v7606 = vpop.f32.mrf.mxu0
  %v7607 = vadd.f32 0.0, %v7606
  %7608 = vdwg.mxu0
  %7609 = vmatprep.subr.mxu0 %v7473
  %7610 = vmatpush1.msra.mxu0 %v7472
  %7611 = vmatprep.subr.mxu0 %v7469
  %7612 = vmatpush1.msra.mxu0 %v7468
  %7613 = vmatprep.subr.mxu0 %v7465
  %7614 = vmatpush1.msra.mxu0 %v7464
  %7615 = vmatprep.subr.mxu0 %v7461
  %7616 = vmatpush1.msra.mxu0 %v7460
  %7617 = vmatprep.subr.mxu0 %v7457
  %7618 = vmatpush1.msra.mxu0 %v7456
  %7619 = vmatprep.subr.mxu0 %v7453
  %7620 = vmatpush1.msra.mxu0 %v7452
  %7621 = vmatprep.subr.mxu0 %v7449
  %7622 = vmatpush1.msra.mxu0 %v7448
  %7623 = vmatprep.subr.mxu0 %v7445
  %7624 = vmatpush1.msra.mxu0 %v7444
  %7625 = vmatprep.subr.mxu0 %v7441
  %7626 = vmatpush1.msra.mxu0 %v7440
  %7627 = vmatprep.subr.mxu0 %v7437
  %7628 = vmatpush1.msra.mxu0 %v7436
  %7629 = vmatprep.subr.mxu0 %v7433
  %7630 = vmatpush1.msra.mxu0 %v7432
  %7631 = vmatprep.subr.mxu0 %v7429
  %7632 = vmatpush1.msra.mxu0 %v7428
  %7633 = vmatprep.subr.mxu0 %v7425
  %7634 = vmatpush1.msra.mxu0 %v7424
  %7635 = vmatprep.subr.mxu0 %v7421
  %7636 = vmatpush1.msra.mxu0 %v7420
  %7637 = vmatprep.subr.mxu0 %v7417
  %7638 = vmatpush1.msra.mxu0 %v7416
  %7639 = vmatprep.subr.mxu0 %v7413
  %7640 = vmatpush1.msra.mxu0 %v7412
  %7641 = vmatprep.subr.mxu0 %v7537
  %7642 = vmatpush2.msra.mxu0 %v7536
  %7643 = vmatprep.subr.mxu0 %v7533
  %7644 = vmatpush2.msra.mxu0 %v7532
  %7645 = vmatprep.subr.mxu0 %v7529
  %7646 = vmatpush2.msra.mxu0 %v7528
  %7647 = vmatprep.subr.mxu0 %v7525
  %7648 = vmatpush2.msra.mxu0 %v7524
  %7649 = vmatprep.subr.mxu0 %v7521
  %7650 = vmatpush2.msra.mxu0 %v7520
  %7651 = vmatprep.subr.mxu0 %v7517
  %7652 = vmatpush2.msra.mxu0 %v7516
  %7653 = vmatprep.subr.mxu0 %v7513
  %7654 = vmatpush2.msra.mxu0 %v7512
  %7655 = vmatprep.subr.mxu0 %v7509
  %7656 = vmatpush2.msra.mxu0 %v7508
  %7657 = vmatprep.subr.mxu0 %v7505
  %7658 = vmatpush2.msra.mxu0 %v7504
  %7659 = vmatprep.subr.mxu0 %v7501
  %7660 = vmatpush2.msra.mxu0 %v7500
  %7661 = vmatprep.subr.mxu0 %v7497
  %7662 = vmatpush2.msra.mxu0 %v7496
  %7663 = vmatprep.subr.mxu0 %v7493
  %7664 = vmatpush2.msra.mxu0 %v7492
  %7665 = vmatprep.subr.mxu0 %v7489
  %7666 = vmatpush2.msra.mxu0 %v7488
  %7667 = vmatprep.subr.mxu0 %v7485
  %7668 = vmatpush2.msra.mxu0 %v7484
  %7669 = vmatprep.subr.mxu0 %v7481
  %7670 = vmatpush2.msra.mxu0 %v7480
  %7671 = vmatprep.subr.mxu0 %v7477
  %7672 = vmatpush2.msra.mxu0 %v7476
  %7673 = vmatprep.mubr.f32.mxu0 %v7402
  %7674 = vmatmul.mubr.f32.gmra.mxu0 %v7401
  %v7675 = vpop.f32.mrf.mxu0
  %v7676 = vadd.f32 0.0, %v7675
  %v7677 = vpop.f32.mrf.mxu0
  %v7678 = vadd.f32 0.0, %v7677
  %7679 = vdwg.mxu0
  %v7681 = vlaneseq
  %v7682 = vshrl.u32 %v7681, 7
  %v7683 = vsub.s32 0, %v7682
  %v7684 = vrot.slane %v7409, %v7683
  %v7685 = vlaneseq
  %v7686 = vshrl.u32 %v7685, 7
  %v7687 = vsub.s32 1, %v7686
  %v7688 = vrot.slane %v7409, %v7687
  %v7689 = vlaneseq
  %v7690 = vshrl.u32 %v7689, 7
  %v7691 = vsub.s32 2, %v7690
  %v7692 = vrot.slane %v7409, %v7691
  %v7693 = vlaneseq
  %v7694 = vshrl.u32 %v7693, 7
  %v7695 = vsub.s32 3, %v7694
  %v7696 = vrot.slane %v7409, %v7695
  %v7701 = vadd.f32 %v7684, %v7605
  %v7702 = vadd.f32 %v7688, %v7607
  %v7703 = vadd.f32 %v7692, %v7676
  %v7704 = vadd.f32 %v7696, %v7678
  %s7705 = scalar_lea.vmem %s5, 1024
  %v7706 = vld [vmem:[%s7705] sm:$0xff]
  %v7707 = vld [vmem:[%s7705 + $0x8] sm:$0xff]
  %v7708 = vld [vmem:[%s7705 + $0x10] sm:$0xff]
  %v7709 = vld [vmem:[%s7705 + $0x18] sm:$0xff]
  %v7710 = vld [vmem:[%s7705 + $0x20] sm:$0xff]
  %v7711 = vld [vmem:[%s7705 + $0x28] sm:$0xff]
  %v7712 = vld [vmem:[%s7705 + $0x30] sm:$0xff]
  %v7713 = vld [vmem:[%s7705 + $0x38] sm:$0xff]
  %v7714 = vld [vmem:[%s7705 + $0x40] sm:$0xff]
  %v7715 = vld [vmem:[%s7705 + $0x48] sm:$0xff]
  %v7716 = vld [vmem:[%s7705 + $0x50] sm:$0xff]
  %v7717 = vld [vmem:[%s7705 + $0x58] sm:$0xff]
  %v7718 = vld [vmem:[%s7705 + $0x60] sm:$0xff]
  %v7719 = vld [vmem:[%s7705 + $0x68] sm:$0xff]
  %v7720 = vld [vmem:[%s7705 + $0x70] sm:$0xff]
  %v7721 = vld [vmem:[%s7705 + $0x78] sm:$0xff]
  %v7722 = vld [vmem:[%s7705 + $0x80] sm:$0xff]
  %v7723 = vld [vmem:[%s7705 + $0x88] sm:$0xff]
  %v7724 = vld [vmem:[%s7705 + $0x90] sm:$0xff]
  %v7725 = vld [vmem:[%s7705 + $0x98] sm:$0xff]
  %v7726 = vld [vmem:[%s7705 + $0xa0] sm:$0xff]
  %v7727 = vld [vmem:[%s7705 + $0xa8] sm:$0xff]
  %v7728 = vld [vmem:[%s7705 + $0xb0] sm:$0xff]
  %v7729 = vld [vmem:[%s7705 + $0xb8] sm:$0xff]
  %v7730 = vld [vmem:[%s7705 + $0xc0] sm:$0xff]
  %v7731 = vld [vmem:[%s7705 + $0xc8] sm:$0xff]
  %v7732 = vld [vmem:[%s7705 + $0xd0] sm:$0xff]
  %v7733 = vld [vmem:[%s7705 + $0xd8] sm:$0xff]
  %v7734 = vld [vmem:[%s7705 + $0xe0] sm:$0xff]
  %v7735 = vld [vmem:[%s7705 + $0xe8] sm:$0xff]
  %v7736 = vld [vmem:[%s7705 + $0xf0] sm:$0xff]
  %v7737 = vld [vmem:[%s7705 + $0xf8] sm:$0xff]
  %v7738 = vld [vmem:[%s7705 + $0x100] sm:$0xff]
  %v7739 = vld [vmem:[%s7705 + $0x108] sm:$0xff]
  %v7740 = vld [vmem:[%s7705 + $0x110] sm:$0xff]
  %v7741 = vld [vmem:[%s7705 + $0x118] sm:$0xff]
  %v7742 = vld [vmem:[%s7705 + $0x120] sm:$0xff]
  %v7743 = vld [vmem:[%s7705 + $0x128] sm:$0xff]
  %v7744 = vld [vmem:[%s7705 + $0x130] sm:$0xff]
  %v7745 = vld [vmem:[%s7705 + $0x138] sm:$0xff]
  %v7746 = vld [vmem:[%s7705 + $0x140] sm:$0xff]
  %v7747 = vld [vmem:[%s7705 + $0x148] sm:$0xff]
  %v7748 = vld [vmem:[%s7705 + $0x150] sm:$0xff]
  %v7749 = vld [vmem:[%s7705 + $0x158] sm:$0xff]
  %v7750 = vld [vmem:[%s7705 + $0x160] sm:$0xff]
  %v7751 = vld [vmem:[%s7705 + $0x168] sm:$0xff]
  %v7752 = vld [vmem:[%s7705 + $0x170] sm:$0xff]
  %v7753 = vld [vmem:[%s7705 + $0x178] sm:$0xff]
  %v7754 = vld [vmem:[%s7705 + $0x180] sm:$0xff]
  %v7755 = vld [vmem:[%s7705 + $0x188] sm:$0xff]
  %v7756 = vld [vmem:[%s7705 + $0x190] sm:$0xff]
  %v7757 = vld [vmem:[%s7705 + $0x198] sm:$0xff]
  %v7758 = vld [vmem:[%s7705 + $0x1a0] sm:$0xff]
  %v7759 = vld [vmem:[%s7705 + $0x1a8] sm:$0xff]
  %v7760 = vld [vmem:[%s7705 + $0x1b0] sm:$0xff]
  %v7761 = vld [vmem:[%s7705 + $0x1b8] sm:$0xff]
  %v7762 = vld [vmem:[%s7705 + $0x1c0] sm:$0xff]
  %v7763 = vld [vmem:[%s7705 + $0x1c8] sm:$0xff]
  %v7764 = vld [vmem:[%s7705 + $0x1d0] sm:$0xff]
  %v7765 = vld [vmem:[%s7705 + $0x1d8] sm:$0xff]
  %v7766 = vld [vmem:[%s7705 + $0x1e0] sm:$0xff]
  %v7767 = vld [vmem:[%s7705 + $0x1e8] sm:$0xff]
  %v7768 = vld [vmem:[%s7705 + $0x1f0] sm:$0xff]
  %v7769 = vld [vmem:[%s7705 + $0x1f8] sm:$0xff]
  %v7770 = vld [vmem:[%s7705 + $0x200] sm:$0xff]
  %v7771 = vld [vmem:[%s7705 + $0x208] sm:$0xff]
  %v7772 = vld [vmem:[%s7705 + $0x210] sm:$0xff]
  %v7773 = vld [vmem:[%s7705 + $0x218] sm:$0xff]
  %v7774 = vld [vmem:[%s7705 + $0x220] sm:$0xff]
  %v7775 = vld [vmem:[%s7705 + $0x228] sm:$0xff]
  %v7776 = vld [vmem:[%s7705 + $0x230] sm:$0xff]
  %v7777 = vld [vmem:[%s7705 + $0x238] sm:$0xff]
  %v7778 = vld [vmem:[%s7705 + $0x240] sm:$0xff]
  %v7779 = vld [vmem:[%s7705 + $0x248] sm:$0xff]
  %v7780 = vld [vmem:[%s7705 + $0x250] sm:$0xff]
  %v7781 = vld [vmem:[%s7705 + $0x258] sm:$0xff]
  %v7782 = vld [vmem:[%s7705 + $0x260] sm:$0xff]
  %v7783 = vld [vmem:[%s7705 + $0x268] sm:$0xff]
  %v7784 = vld [vmem:[%s7705 + $0x270] sm:$0xff]
  %v7785 = vld [vmem:[%s7705 + $0x278] sm:$0xff]
  %v7786 = vld [vmem:[%s7705 + $0x280] sm:$0xff]
  %v7787 = vld [vmem:[%s7705 + $0x288] sm:$0xff]
  %v7788 = vld [vmem:[%s7705 + $0x290] sm:$0xff]
  %v7789 = vld [vmem:[%s7705 + $0x298] sm:$0xff]
  %v7790 = vld [vmem:[%s7705 + $0x2a0] sm:$0xff]
  %v7791 = vld [vmem:[%s7705 + $0x2a8] sm:$0xff]
  %v7792 = vld [vmem:[%s7705 + $0x2b0] sm:$0xff]
  %v7793 = vld [vmem:[%s7705 + $0x2b8] sm:$0xff]
  %v7794 = vld [vmem:[%s7705 + $0x2c0] sm:$0xff]
  %v7795 = vld [vmem:[%s7705 + $0x2c8] sm:$0xff]
  %v7796 = vld [vmem:[%s7705 + $0x2d0] sm:$0xff]
  %v7797 = vld [vmem:[%s7705 + $0x2d8] sm:$0xff]
  %v7798 = vld [vmem:[%s7705 + $0x2e0] sm:$0xff]
  %v7799 = vld [vmem:[%s7705 + $0x2e8] sm:$0xff]
  %v7800 = vld [vmem:[%s7705 + $0x2f0] sm:$0xff]
  %v7801 = vld [vmem:[%s7705 + $0x2f8] sm:$0xff]
  %v7802 = vld [vmem:[%s7705 + $0x300] sm:$0xff]
  %v7803 = vld [vmem:[%s7705 + $0x308] sm:$0xff]
  %v7804 = vld [vmem:[%s7705 + $0x310] sm:$0xff]
  %v7805 = vld [vmem:[%s7705 + $0x318] sm:$0xff]
  %v7806 = vld [vmem:[%s7705 + $0x320] sm:$0xff]
  %v7807 = vld [vmem:[%s7705 + $0x328] sm:$0xff]
  %v7808 = vld [vmem:[%s7705 + $0x330] sm:$0xff]
  %v7809 = vld [vmem:[%s7705 + $0x338] sm:$0xff]
  %v7810 = vld [vmem:[%s7705 + $0x340] sm:$0xff]
  %v7811 = vld [vmem:[%s7705 + $0x348] sm:$0xff]
  %v7812 = vld [vmem:[%s7705 + $0x350] sm:$0xff]
  %v7813 = vld [vmem:[%s7705 + $0x358] sm:$0xff]
  %v7814 = vld [vmem:[%s7705 + $0x360] sm:$0xff]
  %v7815 = vld [vmem:[%s7705 + $0x368] sm:$0xff]
  %v7816 = vld [vmem:[%s7705 + $0x370] sm:$0xff]
  %v7817 = vld [vmem:[%s7705 + $0x378] sm:$0xff]
  %v7818 = vld [vmem:[%s7705 + $0x380] sm:$0xff]
  %v7819 = vld [vmem:[%s7705 + $0x388] sm:$0xff]
  %v7820 = vld [vmem:[%s7705 + $0x390] sm:$0xff]
  %v7821 = vld [vmem:[%s7705 + $0x398] sm:$0xff]
  %v7822 = vld [vmem:[%s7705 + $0x3a0] sm:$0xff]
  %v7823 = vld [vmem:[%s7705 + $0x3a8] sm:$0xff]
  %v7824 = vld [vmem:[%s7705 + $0x3b0] sm:$0xff]
  %v7825 = vld [vmem:[%s7705 + $0x3b8] sm:$0xff]
  %v7826 = vld [vmem:[%s7705 + $0x3c0] sm:$0xff]
  %v7827 = vld [vmem:[%s7705 + $0x3c8] sm:$0xff]
  %v7828 = vld [vmem:[%s7705 + $0x3d0] sm:$0xff]
  %v7829 = vld [vmem:[%s7705 + $0x3d8] sm:$0xff]
  %v7830 = vld [vmem:[%s7705 + $0x3e0] sm:$0xff]
  %v7831 = vld [vmem:[%s7705 + $0x3e8] sm:$0xff]
  %v7832 = vld [vmem:[%s7705 + $0x3f0] sm:$0xff]
  %v7833 = vld [vmem:[%s7705 + $0x3f8] sm:$0xff]
  %7834 = vmatprep.subr.mxu0 %v7767
  %7835 = vmatpush1.msra.mxu0 %v7766
  %7836 = vmatprep.subr.mxu0 %v7763
  %7837 = vmatpush1.msra.mxu0 %v7762
  %7838 = vmatprep.subr.mxu0 %v7759
  %7839 = vmatpush1.msra.mxu0 %v7758
  %7840 = vmatprep.subr.mxu0 %v7755
  %7841 = vmatpush1.msra.mxu0 %v7754
  %7842 = vmatprep.subr.mxu0 %v7751
  %7843 = vmatpush1.msra.mxu0 %v7750
  %7844 = vmatprep.subr.mxu0 %v7747
  %7845 = vmatpush1.msra.mxu0 %v7746
  %7846 = vmatprep.subr.mxu0 %v7743
  %7847 = vmatpush1.msra.mxu0 %v7742
  %7848 = vmatprep.subr.mxu0 %v7739
  %7849 = vmatpush1.msra.mxu0 %v7738
  %7850 = vmatprep.subr.mxu0 %v7735
  %7851 = vmatpush1.msra.mxu0 %v7734
  %7852 = vmatprep.subr.mxu0 %v7731
  %7853 = vmatpush1.msra.mxu0 %v7730
  %7854 = vmatprep.subr.mxu0 %v7727
  %7855 = vmatpush1.msra.mxu0 %v7726
  %7856 = vmatprep.subr.mxu0 %v7723
  %7857 = vmatpush1.msra.mxu0 %v7722
  %7858 = vmatprep.subr.mxu0 %v7719
  %7859 = vmatpush1.msra.mxu0 %v7718
  %7860 = vmatprep.subr.mxu0 %v7715
  %7861 = vmatpush1.msra.mxu0 %v7714
  %7862 = vmatprep.subr.mxu0 %v7711
  %7863 = vmatpush1.msra.mxu0 %v7710
  %7864 = vmatprep.subr.mxu0 %v7707
  %7865 = vmatpush1.msra.mxu0 %v7706
  %7866 = vmatprep.subr.mxu0 %v7831
  %7867 = vmatpush2.msra.mxu0 %v7830
  %7868 = vmatprep.subr.mxu0 %v7827
  %7869 = vmatpush2.msra.mxu0 %v7826
  %7870 = vmatprep.subr.mxu0 %v7823
  %7871 = vmatpush2.msra.mxu0 %v7822
  %7872 = vmatprep.subr.mxu0 %v7819
  %7873 = vmatpush2.msra.mxu0 %v7818
  %7874 = vmatprep.subr.mxu0 %v7815
  %7875 = vmatpush2.msra.mxu0 %v7814
  %7876 = vmatprep.subr.mxu0 %v7811
  %7877 = vmatpush2.msra.mxu0 %v7810
  %7878 = vmatprep.subr.mxu0 %v7807
  %7879 = vmatpush2.msra.mxu0 %v7806
  %7880 = vmatprep.subr.mxu0 %v7803
  %7881 = vmatpush2.msra.mxu0 %v7802
  %7882 = vmatprep.subr.mxu0 %v7799
  %7883 = vmatpush2.msra.mxu0 %v7798
  %7884 = vmatprep.subr.mxu0 %v7795
  %7885 = vmatpush2.msra.mxu0 %v7794
  %7886 = vmatprep.subr.mxu0 %v7791
  %7887 = vmatpush2.msra.mxu0 %v7790
  %7888 = vmatprep.subr.mxu0 %v7787
  %7889 = vmatpush2.msra.mxu0 %v7786
  %7890 = vmatprep.subr.mxu0 %v7783
  %7891 = vmatpush2.msra.mxu0 %v7782
  %7892 = vmatprep.subr.mxu0 %v7779
  %7893 = vmatpush2.msra.mxu0 %v7778
  %7894 = vmatprep.subr.mxu0 %v7775
  %7895 = vmatpush2.msra.mxu0 %v7774
  %7896 = vmatprep.subr.mxu0 %v7771
  %7897 = vmatpush2.msra.mxu0 %v7770
  %7898 = vmatprep.mubr.f32.mxu0 %v7404
  %7899 = vmatmul.mubr.f32.gmra.mxu0 %v7403
  %v7900 = vpop.f32.mrf.mxu0
  %v7901 = vadd.f32 0.0, %v7900
  %v7902 = vpop.f32.mrf.mxu0
  %v7903 = vadd.f32 0.0, %v7902
  %7904 = vdwg.mxu0
  %7905 = vmatprep.subr.mxu0 %v7769
  %7906 = vmatpush1.msra.mxu0 %v7768
  %7907 = vmatprep.subr.mxu0 %v7765
  %7908 = vmatpush1.msra.mxu0 %v7764
  %7909 = vmatprep.subr.mxu0 %v7761
  %7910 = vmatpush1.msra.mxu0 %v7760
  %7911 = vmatprep.subr.mxu0 %v7757
  %7912 = vmatpush1.msra.mxu0 %v7756
  %7913 = vmatprep.subr.mxu0 %v7753
  %7914 = vmatpush1.msra.mxu0 %v7752
  %7915 = vmatprep.subr.mxu0 %v7749
  %7916 = vmatpush1.msra.mxu0 %v7748
  %7917 = vmatprep.subr.mxu0 %v7745
  %7918 = vmatpush1.msra.mxu0 %v7744
  %7919 = vmatprep.subr.mxu0 %v7741
  %7920 = vmatpush1.msra.mxu0 %v7740
  %7921 = vmatprep.subr.mxu0 %v7737
  %7922 = vmatpush1.msra.mxu0 %v7736
  %7923 = vmatprep.subr.mxu0 %v7733
  %7924 = vmatpush1.msra.mxu0 %v7732
  %7925 = vmatprep.subr.mxu0 %v7729
  %7926 = vmatpush1.msra.mxu0 %v7728
  %7927 = vmatprep.subr.mxu0 %v7725
  %7928 = vmatpush1.msra.mxu0 %v7724
  %7929 = vmatprep.subr.mxu0 %v7721
  %7930 = vmatpush1.msra.mxu0 %v7720
  %7931 = vmatprep.subr.mxu0 %v7717
  %7932 = vmatpush1.msra.mxu0 %v7716
  %7933 = vmatprep.subr.mxu0 %v7713
  %7934 = vmatpush1.msra.mxu0 %v7712
  %7935 = vmatprep.subr.mxu0 %v7709
  %7936 = vmatpush1.msra.mxu0 %v7708
  %7937 = vmatprep.subr.mxu0 %v7833
  %7938 = vmatpush2.msra.mxu0 %v7832
  %7939 = vmatprep.subr.mxu0 %v7829
  %7940 = vmatpush2.msra.mxu0 %v7828
  %7941 = vmatprep.subr.mxu0 %v7825
  %7942 = vmatpush2.msra.mxu0 %v7824
  %7943 = vmatprep.subr.mxu0 %v7821
  %7944 = vmatpush2.msra.mxu0 %v7820
  %7945 = vmatprep.subr.mxu0 %v7817
  %7946 = vmatpush2.msra.mxu0 %v7816
  %7947 = vmatprep.subr.mxu0 %v7813
  %7948 = vmatpush2.msra.mxu0 %v7812
  %7949 = vmatprep.subr.mxu0 %v7809
  %7950 = vmatpush2.msra.mxu0 %v7808
  %7951 = vmatprep.subr.mxu0 %v7805
  %7952 = vmatpush2.msra.mxu0 %v7804
  %7953 = vmatprep.subr.mxu0 %v7801
  %7954 = vmatpush2.msra.mxu0 %v7800
  %7955 = vmatprep.subr.mxu0 %v7797
  %7956 = vmatpush2.msra.mxu0 %v7796
  %7957 = vmatprep.subr.mxu0 %v7793
  %7958 = vmatpush2.msra.mxu0 %v7792
  %7959 = vmatprep.subr.mxu0 %v7789
  %7960 = vmatpush2.msra.mxu0 %v7788
  %7961 = vmatprep.subr.mxu0 %v7785
  %7962 = vmatpush2.msra.mxu0 %v7784
  %7963 = vmatprep.subr.mxu0 %v7781
  %7964 = vmatpush2.msra.mxu0 %v7780
  %7965 = vmatprep.subr.mxu0 %v7777
  %7966 = vmatpush2.msra.mxu0 %v7776
  %7967 = vmatprep.subr.mxu0 %v7773
  %7968 = vmatpush2.msra.mxu0 %v7772
  %7969 = vmatprep.mubr.f32.mxu0 %v7404
  %7970 = vmatmul.mubr.f32.gmra.mxu0 %v7403
  %v7971 = vpop.f32.mrf.mxu0
  %v7972 = vadd.f32 0.0, %v7971
  %v7973 = vpop.f32.mrf.mxu0
  %v7974 = vadd.f32 0.0, %v7973
  %7975 = vdwg.mxu0
  %v7976 = vadd.f32 %v7701, %v7901
  %v7977 = vadd.f32 %v7702, %v7903
  %v7978 = vadd.f32 %v7703, %v7972
  %v7979 = vadd.f32 %v7704, %v7974
  %s7980 = scalar_lea.vmem %s5, 2048
  %v7981 = vld [vmem:[%s7980] sm:$0xff]
  %v7982 = vld [vmem:[%s7980 + $0x8] sm:$0xff]
  %v7983 = vld [vmem:[%s7980 + $0x10] sm:$0xff]
  %v7984 = vld [vmem:[%s7980 + $0x18] sm:$0xff]
  %v7985 = vld [vmem:[%s7980 + $0x20] sm:$0xff]
  %v7986 = vld [vmem:[%s7980 + $0x28] sm:$0xff]
  %v7987 = vld [vmem:[%s7980 + $0x30] sm:$0xff]
  %v7988 = vld [vmem:[%s7980 + $0x38] sm:$0xff]
  %v7989 = vld [vmem:[%s7980 + $0x40] sm:$0xff]
  %v7990 = vld [vmem:[%s7980 + $0x48] sm:$0xff]
  %v7991 = vld [vmem:[%s7980 + $0x50] sm:$0xff]
  %v7992 = vld [vmem:[%s7980 + $0x58] sm:$0xff]
  %v7993 = vld [vmem:[%s7980 + $0x60] sm:$0xff]
  %v7994 = vld [vmem:[%s7980 + $0x68] sm:$0xff]
  %v7995 = vld [vmem:[%s7980 + $0x70] sm:$0xff]
  %v7996 = vld [vmem:[%s7980 + $0x78] sm:$0xff]
  %v7997 = vld [vmem:[%s7980 + $0x80] sm:$0xff]
  %v7998 = vld [vmem:[%s7980 + $0x88] sm:$0xff]
  %v7999 = vld [vmem:[%s7980 + $0x90] sm:$0xff]
  %v8000 = vld [vmem:[%s7980 + $0x98] sm:$0xff]
  %v8001 = vld [vmem:[%s7980 + $0xa0] sm:$0xff]
  %v8002 = vld [vmem:[%s7980 + $0xa8] sm:$0xff]
  %v8003 = vld [vmem:[%s7980 + $0xb0] sm:$0xff]
  %v8004 = vld [vmem:[%s7980 + $0xb8] sm:$0xff]
  %v8005 = vld [vmem:[%s7980 + $0xc0] sm:$0xff]
  %v8006 = vld [vmem:[%s7980 + $0xc8] sm:$0xff]
  %v8007 = vld [vmem:[%s7980 + $0xd0] sm:$0xff]
  %v8008 = vld [vmem:[%s7980 + $0xd8] sm:$0xff]
  %v8009 = vld [vmem:[%s7980 + $0xe0] sm:$0xff]
  %v8010 = vld [vmem:[%s7980 + $0xe8] sm:$0xff]
  %v8011 = vld [vmem:[%s7980 + $0xf0] sm:$0xff]
  %v8012 = vld [vmem:[%s7980 + $0xf8] sm:$0xff]
  %v8013 = vld [vmem:[%s7980 + $0x100] sm:$0xff]
  %v8014 = vld [vmem:[%s7980 + $0x108] sm:$0xff]
  %v8015 = vld [vmem:[%s7980 + $0x110] sm:$0xff]
  %v8016 = vld [vmem:[%s7980 + $0x118] sm:$0xff]
  %v8017 = vld [vmem:[%s7980 + $0x120] sm:$0xff]
  %v8018 = vld [vmem:[%s7980 + $0x128] sm:$0xff]
  %v8019 = vld [vmem:[%s7980 + $0x130] sm:$0xff]
  %v8020 = vld [vmem:[%s7980 + $0x138] sm:$0xff]
  %v8021 = vld [vmem:[%s7980 + $0x140] sm:$0xff]
  %v8022 = vld [vmem:[%s7980 + $0x148] sm:$0xff]
  %v8023 = vld [vmem:[%s7980 + $0x150] sm:$0xff]
  %v8024 = vld [vmem:[%s7980 + $0x158] sm:$0xff]
  %v8025 = vld [vmem:[%s7980 + $0x160] sm:$0xff]
  %v8026 = vld [vmem:[%s7980 + $0x168] sm:$0xff]
  %v8027 = vld [vmem:[%s7980 + $0x170] sm:$0xff]
  %v8028 = vld [vmem:[%s7980 + $0x178] sm:$0xff]
  %v8029 = vld [vmem:[%s7980 + $0x180] sm:$0xff]
  %v8030 = vld [vmem:[%s7980 + $0x188] sm:$0xff]
  %v8031 = vld [vmem:[%s7980 + $0x190] sm:$0xff]
  %v8032 = vld [vmem:[%s7980 + $0x198] sm:$0xff]
  %v8033 = vld [vmem:[%s7980 + $0x1a0] sm:$0xff]
  %v8034 = vld [vmem:[%s7980 + $0x1a8] sm:$0xff]
  %v8035 = vld [vmem:[%s7980 + $0x1b0] sm:$0xff]
  %v8036 = vld [vmem:[%s7980 + $0x1b8] sm:$0xff]
  %v8037 = vld [vmem:[%s7980 + $0x1c0] sm:$0xff]
  %v8038 = vld [vmem:[%s7980 + $0x1c8] sm:$0xff]
  %v8039 = vld [vmem:[%s7980 + $0x1d0] sm:$0xff]
  %v8040 = vld [vmem:[%s7980 + $0x1d8] sm:$0xff]
  %v8041 = vld [vmem:[%s7980 + $0x1e0] sm:$0xff]
  %v8042 = vld [vmem:[%s7980 + $0x1e8] sm:$0xff]
  %v8043 = vld [vmem:[%s7980 + $0x1f0] sm:$0xff]
  %v8044 = vld [vmem:[%s7980 + $0x1f8] sm:$0xff]
  %v8045 = vld [vmem:[%s7980 + $0x200] sm:$0xff]
  %v8046 = vld [vmem:[%s7980 + $0x208] sm:$0xff]
  %v8047 = vld [vmem:[%s7980 + $0x210] sm:$0xff]
  %v8048 = vld [vmem:[%s7980 + $0x218] sm:$0xff]
  %v8049 = vld [vmem:[%s7980 + $0x220] sm:$0xff]
  %v8050 = vld [vmem:[%s7980 + $0x228] sm:$0xff]
  %v8051 = vld [vmem:[%s7980 + $0x230] sm:$0xff]
  %v8052 = vld [vmem:[%s7980 + $0x238] sm:$0xff]
  %v8053 = vld [vmem:[%s7980 + $0x240] sm:$0xff]
  %v8054 = vld [vmem:[%s7980 + $0x248] sm:$0xff]
  %v8055 = vld [vmem:[%s7980 + $0x250] sm:$0xff]
  %v8056 = vld [vmem:[%s7980 + $0x258] sm:$0xff]
  %v8057 = vld [vmem:[%s7980 + $0x260] sm:$0xff]
  %v8058 = vld [vmem:[%s7980 + $0x268] sm:$0xff]
  %v8059 = vld [vmem:[%s7980 + $0x270] sm:$0xff]
  %v8060 = vld [vmem:[%s7980 + $0x278] sm:$0xff]
  %v8061 = vld [vmem:[%s7980 + $0x280] sm:$0xff]
  %v8062 = vld [vmem:[%s7980 + $0x288] sm:$0xff]
  %v8063 = vld [vmem:[%s7980 + $0x290] sm:$0xff]
  %v8064 = vld [vmem:[%s7980 + $0x298] sm:$0xff]
  %v8065 = vld [vmem:[%s7980 + $0x2a0] sm:$0xff]
  %v8066 = vld [vmem:[%s7980 + $0x2a8] sm:$0xff]
  %v8067 = vld [vmem:[%s7980 + $0x2b0] sm:$0xff]
  %v8068 = vld [vmem:[%s7980 + $0x2b8] sm:$0xff]
  %v8069 = vld [vmem:[%s7980 + $0x2c0] sm:$0xff]
  %v8070 = vld [vmem:[%s7980 + $0x2c8] sm:$0xff]
  %v8071 = vld [vmem:[%s7980 + $0x2d0] sm:$0xff]
  %v8072 = vld [vmem:[%s7980 + $0x2d8] sm:$0xff]
  %v8073 = vld [vmem:[%s7980 + $0x2e0] sm:$0xff]
  %v8074 = vld [vmem:[%s7980 + $0x2e8] sm:$0xff]
  %v8075 = vld [vmem:[%s7980 + $0x2f0] sm:$0xff]
  %v8076 = vld [vmem:[%s7980 + $0x2f8] sm:$0xff]
  %v8077 = vld [vmem:[%s7980 + $0x300] sm:$0xff]
  %v8078 = vld [vmem:[%s7980 + $0x308] sm:$0xff]
  %v8079 = vld [vmem:[%s7980 + $0x310] sm:$0xff]
  %v8080 = vld [vmem:[%s7980 + $0x318] sm:$0xff]
  %v8081 = vld [vmem:[%s7980 + $0x320] sm:$0xff]
  %v8082 = vld [vmem:[%s7980 + $0x328] sm:$0xff]
  %v8083 = vld [vmem:[%s7980 + $0x330] sm:$0xff]
  %v8084 = vld [vmem:[%s7980 + $0x338] sm:$0xff]
  %v8085 = vld [vmem:[%s7980 + $0x340] sm:$0xff]
  %v8086 = vld [vmem:[%s7980 + $0x348] sm:$0xff]
  %v8087 = vld [vmem:[%s7980 + $0x350] sm:$0xff]
  %v8088 = vld [vmem:[%s7980 + $0x358] sm:$0xff]
  %v8089 = vld [vmem:[%s7980 + $0x360] sm:$0xff]
  %v8090 = vld [vmem:[%s7980 + $0x368] sm:$0xff]
  %v8091 = vld [vmem:[%s7980 + $0x370] sm:$0xff]
  %v8092 = vld [vmem:[%s7980 + $0x378] sm:$0xff]
  %v8093 = vld [vmem:[%s7980 + $0x380] sm:$0xff]
  %v8094 = vld [vmem:[%s7980 + $0x388] sm:$0xff]
  %v8095 = vld [vmem:[%s7980 + $0x390] sm:$0xff]
  %v8096 = vld [vmem:[%s7980 + $0x398] sm:$0xff]
  %v8097 = vld [vmem:[%s7980 + $0x3a0] sm:$0xff]
  %v8098 = vld [vmem:[%s7980 + $0x3a8] sm:$0xff]
  %v8099 = vld [vmem:[%s7980 + $0x3b0] sm:$0xff]
  %v8100 = vld [vmem:[%s7980 + $0x3b8] sm:$0xff]
  %v8101 = vld [vmem:[%s7980 + $0x3c0] sm:$0xff]
  %v8102 = vld [vmem:[%s7980 + $0x3c8] sm:$0xff]
  %v8103 = vld [vmem:[%s7980 + $0x3d0] sm:$0xff]
  %v8104 = vld [vmem:[%s7980 + $0x3d8] sm:$0xff]
  %v8105 = vld [vmem:[%s7980 + $0x3e0] sm:$0xff]
  %v8106 = vld [vmem:[%s7980 + $0x3e8] sm:$0xff]
  %v8107 = vld [vmem:[%s7980 + $0x3f0] sm:$0xff]
  %v8108 = vld [vmem:[%s7980 + $0x3f8] sm:$0xff]
  %8109 = vmatprep.subr.mxu0 %v8042
  %8110 = vmatpush1.msra.mxu0 %v8041
  %8111 = vmatprep.subr.mxu0 %v8038
  %8112 = vmatpush1.msra.mxu0 %v8037
  %8113 = vmatprep.subr.mxu0 %v8034
  %8114 = vmatpush1.msra.mxu0 %v8033
  %8115 = vmatprep.subr.mxu0 %v8030
  %8116 = vmatpush1.msra.mxu0 %v8029
  %8117 = vmatprep.subr.mxu0 %v8026
  %8118 = vmatpush1.msra.mxu0 %v8025
  %8119 = vmatprep.subr.mxu0 %v8022
  %8120 = vmatpush1.msra.mxu0 %v8021
  %8121 = vmatprep.subr.mxu0 %v8018
  %8122 = vmatpush1.msra.mxu0 %v8017
  %8123 = vmatprep.subr.mxu0 %v8014
  %8124 = vmatpush1.msra.mxu0 %v8013
  %8125 = vmatprep.subr.mxu0 %v8010
  %8126 = vmatpush1.msra.mxu0 %v8009
  %8127 = vmatprep.subr.mxu0 %v8006
  %8128 = vmatpush1.msra.mxu0 %v8005
  %8129 = vmatprep.subr.mxu0 %v8002
  %8130 = vmatpush1.msra.mxu0 %v8001
  %8131 = vmatprep.subr.mxu0 %v7998
  %8132 = vmatpush1.msra.mxu0 %v7997
  %8133 = vmatprep.subr.mxu0 %v7994
  %8134 = vmatpush1.msra.mxu0 %v7993
  %8135 = vmatprep.subr.mxu0 %v7990
  %8136 = vmatpush1.msra.mxu0 %v7989
  %8137 = vmatprep.subr.mxu0 %v7986
  %8138 = vmatpush1.msra.mxu0 %v7985
  %8139 = vmatprep.subr.mxu0 %v7982
  %8140 = vmatpush1.msra.mxu0 %v7981
  %8141 = vmatprep.subr.mxu0 %v8106
  %8142 = vmatpush2.msra.mxu0 %v8105
  %8143 = vmatprep.subr.mxu0 %v8102
  %8144 = vmatpush2.msra.mxu0 %v8101
  %8145 = vmatprep.subr.mxu0 %v8098
  %8146 = vmatpush2.msra.mxu0 %v8097
  %8147 = vmatprep.subr.mxu0 %v8094
  %8148 = vmatpush2.msra.mxu0 %v8093
  %8149 = vmatprep.subr.mxu0 %v8090
  %8150 = vmatpush2.msra.mxu0 %v8089
  %8151 = vmatprep.subr.mxu0 %v8086
  %8152 = vmatpush2.msra.mxu0 %v8085
  %8153 = vmatprep.subr.mxu0 %v8082
  %8154 = vmatpush2.msra.mxu0 %v8081
  %8155 = vmatprep.subr.mxu0 %v8078
  %8156 = vmatpush2.msra.mxu0 %v8077
  %8157 = vmatprep.subr.mxu0 %v8074
  %8158 = vmatpush2.msra.mxu0 %v8073
  %8159 = vmatprep.subr.mxu0 %v8070
  %8160 = vmatpush2.msra.mxu0 %v8069
  %8161 = vmatprep.subr.mxu0 %v8066
  %8162 = vmatpush2.msra.mxu0 %v8065
  %8163 = vmatprep.subr.mxu0 %v8062
  %8164 = vmatpush2.msra.mxu0 %v8061
  %8165 = vmatprep.subr.mxu0 %v8058
  %8166 = vmatpush2.msra.mxu0 %v8057
  %8167 = vmatprep.subr.mxu0 %v8054
  %8168 = vmatpush2.msra.mxu0 %v8053
  %8169 = vmatprep.subr.mxu0 %v8050
  %8170 = vmatpush2.msra.mxu0 %v8049
  %8171 = vmatprep.subr.mxu0 %v8046
  %8172 = vmatpush2.msra.mxu0 %v8045
  %8173 = vmatprep.mubr.f32.mxu0 %v7406
  %8174 = vmatmul.mubr.f32.gmra.mxu0 %v7405
  %v8175 = vpop.f32.mrf.mxu0
  %v8176 = vadd.f32 0.0, %v8175
  %v8177 = vpop.f32.mrf.mxu0
  %v8178 = vadd.f32 0.0, %v8177
  %8179 = vdwg.mxu0
  %8180 = vmatprep.subr.mxu0 %v8044
  %8181 = vmatpush1.msra.mxu0 %v8043
  %8182 = vmatprep.subr.mxu0 %v8040
  %8183 = vmatpush1.msra.mxu0 %v8039
  %8184 = vmatprep.subr.mxu0 %v8036
  %8185 = vmatpush1.msra.mxu0 %v8035
  %8186 = vmatprep.subr.mxu0 %v8032
  %8187 = vmatpush1.msra.mxu0 %v8031
  %8188 = vmatprep.subr.mxu0 %v8028
  %8189 = vmatpush1.msra.mxu0 %v8027
  %8190 = vmatprep.subr.mxu0 %v8024
  %8191 = vmatpush1.msra.mxu0 %v8023
  %8192 = vmatprep.subr.mxu0 %v8020
  %8193 = vmatpush1.msra.mxu0 %v8019
  %8194 = vmatprep.subr.mxu0 %v8016
  %8195 = vmatpush1.msra.mxu0 %v8015
  %8196 = vmatprep.subr.mxu0 %v8012
  %8197 = vmatpush1.msra.mxu0 %v8011
  %8198 = vmatprep.subr.mxu0 %v8008
  %8199 = vmatpush1.msra.mxu0 %v8007
  %8200 = vmatprep.subr.mxu0 %v8004
  %8201 = vmatpush1.msra.mxu0 %v8003
  %8202 = vmatprep.subr.mxu0 %v8000
  %8203 = vmatpush1.msra.mxu0 %v7999
  %8204 = vmatprep.subr.mxu0 %v7996
  %8205 = vmatpush1.msra.mxu0 %v7995
  %8206 = vmatprep.subr.mxu0 %v7992
  %8207 = vmatpush1.msra.mxu0 %v7991
  %8208 = vmatprep.subr.mxu0 %v7988
  %8209 = vmatpush1.msra.mxu0 %v7987
  %8210 = vmatprep.subr.mxu0 %v7984
  %8211 = vmatpush1.msra.mxu0 %v7983
  %8212 = vmatprep.subr.mxu0 %v8108
  %8213 = vmatpush2.msra.mxu0 %v8107
  %8214 = vmatprep.subr.mxu0 %v8104
  %8215 = vmatpush2.msra.mxu0 %v8103
  %8216 = vmatprep.subr.mxu0 %v8100
  %8217 = vmatpush2.msra.mxu0 %v8099
  %8218 = vmatprep.subr.mxu0 %v8096
  %8219 = vmatpush2.msra.mxu0 %v8095
  %8220 = vmatprep.subr.mxu0 %v8092
  %8221 = vmatpush2.msra.mxu0 %v8091
  %8222 = vmatprep.subr.mxu0 %v8088
  %8223 = vmatpush2.msra.mxu0 %v8087
  %8224 = vmatprep.subr.mxu0 %v8084
  %8225 = vmatpush2.msra.mxu0 %v8083
  %8226 = vmatprep.subr.mxu0 %v8080
  %8227 = vmatpush2.msra.mxu0 %v8079
  %8228 = vmatprep.subr.mxu0 %v8076
  %8229 = vmatpush2.msra.mxu0 %v8075
  %8230 = vmatprep.subr.mxu0 %v8072
  %8231 = vmatpush2.msra.mxu0 %v8071
  %8232 = vmatprep.subr.mxu0 %v8068
  %8233 = vmatpush2.msra.mxu0 %v8067
  %8234 = vmatprep.subr.mxu0 %v8064
  %8235 = vmatpush2.msra.mxu0 %v8063
  %8236 = vmatprep.subr.mxu0 %v8060
  %8237 = vmatpush2.msra.mxu0 %v8059
  %8238 = vmatprep.subr.mxu0 %v8056
  %8239 = vmatpush2.msra.mxu0 %v8055
  %8240 = vmatprep.subr.mxu0 %v8052
  %8241 = vmatpush2.msra.mxu0 %v8051
  %8242 = vmatprep.subr.mxu0 %v8048
  %8243 = vmatpush2.msra.mxu0 %v8047
  %8244 = vmatprep.mubr.f32.mxu0 %v7406
  %8245 = vmatmul.mubr.f32.gmra.mxu0 %v7405
  %v8246 = vpop.f32.mrf.mxu0
  %v8247 = vadd.f32 0.0, %v8246
  %v8248 = vpop.f32.mrf.mxu0
  %v8249 = vadd.f32 0.0, %v8248
  %8250 = vdwg.mxu0
  %v8251 = vadd.f32 %v7976, %v8176
  %v8252 = vadd.f32 %v7977, %v8178
  %v8253 = vadd.f32 %v7978, %v8247
  %v8254 = vadd.f32 %v7979, %v8249
  %s8255 = scalar_lea.vmem %s5, 3072
  %v8256 = vld [vmem:[%s8255] sm:$0xff]
  %v8257 = vld [vmem:[%s8255 + $0x8] sm:$0xff]
  %v8258 = vld [vmem:[%s8255 + $0x10] sm:$0xff]
  %v8259 = vld [vmem:[%s8255 + $0x18] sm:$0xff]
  %v8260 = vld [vmem:[%s8255 + $0x20] sm:$0xff]
  %v8261 = vld [vmem:[%s8255 + $0x28] sm:$0xff]
  %v8262 = vld [vmem:[%s8255 + $0x30] sm:$0xff]
  %v8263 = vld [vmem:[%s8255 + $0x38] sm:$0xff]
  %v8264 = vld [vmem:[%s8255 + $0x40] sm:$0xff]
  %v8265 = vld [vmem:[%s8255 + $0x48] sm:$0xff]
  %v8266 = vld [vmem:[%s8255 + $0x50] sm:$0xff]
  %v8267 = vld [vmem:[%s8255 + $0x58] sm:$0xff]
  %v8268 = vld [vmem:[%s8255 + $0x60] sm:$0xff]
  %v8269 = vld [vmem:[%s8255 + $0x68] sm:$0xff]
  %v8270 = vld [vmem:[%s8255 + $0x70] sm:$0xff]
  %v8271 = vld [vmem:[%s8255 + $0x78] sm:$0xff]
  %v8272 = vld [vmem:[%s8255 + $0x80] sm:$0xff]
  %v8273 = vld [vmem:[%s8255 + $0x88] sm:$0xff]
  %v8274 = vld [vmem:[%s8255 + $0x90] sm:$0xff]
  %v8275 = vld [vmem:[%s8255 + $0x98] sm:$0xff]
  %v8276 = vld [vmem:[%s8255 + $0xa0] sm:$0xff]
  %v8277 = vld [vmem:[%s8255 + $0xa8] sm:$0xff]
  %v8278 = vld [vmem:[%s8255 + $0xb0] sm:$0xff]
  %v8279 = vld [vmem:[%s8255 + $0xb8] sm:$0xff]
  %v8280 = vld [vmem:[%s8255 + $0xc0] sm:$0xff]
  %v8281 = vld [vmem:[%s8255 + $0xc8] sm:$0xff]
  %v8282 = vld [vmem:[%s8255 + $0xd0] sm:$0xff]
  %v8283 = vld [vmem:[%s8255 + $0xd8] sm:$0xff]
  %v8284 = vld [vmem:[%s8255 + $0xe0] sm:$0xff]
  %v8285 = vld [vmem:[%s8255 + $0xe8] sm:$0xff]
  %v8286 = vld [vmem:[%s8255 + $0xf0] sm:$0xff]
  %v8287 = vld [vmem:[%s8255 + $0xf8] sm:$0xff]
  %v8288 = vld [vmem:[%s8255 + $0x100] sm:$0xff]
  %v8289 = vld [vmem:[%s8255 + $0x108] sm:$0xff]
  %v8290 = vld [vmem:[%s8255 + $0x110] sm:$0xff]
  %v8291 = vld [vmem:[%s8255 + $0x118] sm:$0xff]
  %v8292 = vld [vmem:[%s8255 + $0x120] sm:$0xff]
  %v8293 = vld [vmem:[%s8255 + $0x128] sm:$0xff]
  %v8294 = vld [vmem:[%s8255 + $0x130] sm:$0xff]
  %v8295 = vld [vmem:[%s8255 + $0x138] sm:$0xff]
  %v8296 = vld [vmem:[%s8255 + $0x140] sm:$0xff]
  %v8297 = vld [vmem:[%s8255 + $0x148] sm:$0xff]
  %v8298 = vld [vmem:[%s8255 + $0x150] sm:$0xff]
  %v8299 = vld [vmem:[%s8255 + $0x158] sm:$0xff]
  %v8300 = vld [vmem:[%s8255 + $0x160] sm:$0xff]
  %v8301 = vld [vmem:[%s8255 + $0x168] sm:$0xff]
  %v8302 = vld [vmem:[%s8255 + $0x170] sm:$0xff]
  %v8303 = vld [vmem:[%s8255 + $0x178] sm:$0xff]
  %v8304 = vld [vmem:[%s8255 + $0x180] sm:$0xff]
  %v8305 = vld [vmem:[%s8255 + $0x188] sm:$0xff]
  %v8306 = vld [vmem:[%s8255 + $0x190] sm:$0xff]
  %v8307 = vld [vmem:[%s8255 + $0x198] sm:$0xff]
  %v8308 = vld [vmem:[%s8255 + $0x1a0] sm:$0xff]
  %v8309 = vld [vmem:[%s8255 + $0x1a8] sm:$0xff]
  %v8310 = vld [vmem:[%s8255 + $0x1b0] sm:$0xff]
  %v8311 = vld [vmem:[%s8255 + $0x1b8] sm:$0xff]
  %v8312 = vld [vmem:[%s8255 + $0x1c0] sm:$0xff]
  %v8313 = vld [vmem:[%s8255 + $0x1c8] sm:$0xff]
  %v8314 = vld [vmem:[%s8255 + $0x1d0] sm:$0xff]
  %v8315 = vld [vmem:[%s8255 + $0x1d8] sm:$0xff]
  %v8316 = vld [vmem:[%s8255 + $0x1e0] sm:$0xff]
  %v8317 = vld [vmem:[%s8255 + $0x1e8] sm:$0xff]
  %v8318 = vld [vmem:[%s8255 + $0x1f0] sm:$0xff]
  %v8319 = vld [vmem:[%s8255 + $0x1f8] sm:$0xff]
  %v8320 = vld [vmem:[%s8255 + $0x200] sm:$0xff]
  %v8321 = vld [vmem:[%s8255 + $0x208] sm:$0xff]
  %v8322 = vld [vmem:[%s8255 + $0x210] sm:$0xff]
  %v8323 = vld [vmem:[%s8255 + $0x218] sm:$0xff]
  %v8324 = vld [vmem:[%s8255 + $0x220] sm:$0xff]
  %v8325 = vld [vmem:[%s8255 + $0x228] sm:$0xff]
  %v8326 = vld [vmem:[%s8255 + $0x230] sm:$0xff]
  %v8327 = vld [vmem:[%s8255 + $0x238] sm:$0xff]
  %v8328 = vld [vmem:[%s8255 + $0x240] sm:$0xff]
  %v8329 = vld [vmem:[%s8255 + $0x248] sm:$0xff]
  %v8330 = vld [vmem:[%s8255 + $0x250] sm:$0xff]
  %v8331 = vld [vmem:[%s8255 + $0x258] sm:$0xff]
  %v8332 = vld [vmem:[%s8255 + $0x260] sm:$0xff]
  %v8333 = vld [vmem:[%s8255 + $0x268] sm:$0xff]
  %v8334 = vld [vmem:[%s8255 + $0x270] sm:$0xff]
  %v8335 = vld [vmem:[%s8255 + $0x278] sm:$0xff]
  %v8336 = vld [vmem:[%s8255 + $0x280] sm:$0xff]
  %v8337 = vld [vmem:[%s8255 + $0x288] sm:$0xff]
  %v8338 = vld [vmem:[%s8255 + $0x290] sm:$0xff]
  %v8339 = vld [vmem:[%s8255 + $0x298] sm:$0xff]
  %v8340 = vld [vmem:[%s8255 + $0x2a0] sm:$0xff]
  %v8341 = vld [vmem:[%s8255 + $0x2a8] sm:$0xff]
  %v8342 = vld [vmem:[%s8255 + $0x2b0] sm:$0xff]
  %v8343 = vld [vmem:[%s8255 + $0x2b8] sm:$0xff]
  %v8344 = vld [vmem:[%s8255 + $0x2c0] sm:$0xff]
  %v8345 = vld [vmem:[%s8255 + $0x2c8] sm:$0xff]
  %v8346 = vld [vmem:[%s8255 + $0x2d0] sm:$0xff]
  %v8347 = vld [vmem:[%s8255 + $0x2d8] sm:$0xff]
  %v8348 = vld [vmem:[%s8255 + $0x2e0] sm:$0xff]
  %v8349 = vld [vmem:[%s8255 + $0x2e8] sm:$0xff]
  %v8350 = vld [vmem:[%s8255 + $0x2f0] sm:$0xff]
  %v8351 = vld [vmem:[%s8255 + $0x2f8] sm:$0xff]
  %v8352 = vld [vmem:[%s8255 + $0x300] sm:$0xff]
  %v8353 = vld [vmem:[%s8255 + $0x308] sm:$0xff]
  %v8354 = vld [vmem:[%s8255 + $0x310] sm:$0xff]
  %v8355 = vld [vmem:[%s8255 + $0x318] sm:$0xff]
  %v8356 = vld [vmem:[%s8255 + $0x320] sm:$0xff]
  %v8357 = vld [vmem:[%s8255 + $0x328] sm:$0xff]
  %v8358 = vld [vmem:[%s8255 + $0x330] sm:$0xff]
  %v8359 = vld [vmem:[%s8255 + $0x338] sm:$0xff]
  %v8360 = vld [vmem:[%s8255 + $0x340] sm:$0xff]
  %v8361 = vld [vmem:[%s8255 + $0x348] sm:$0xff]
  %v8362 = vld [vmem:[%s8255 + $0x350] sm:$0xff]
  %v8363 = vld [vmem:[%s8255 + $0x358] sm:$0xff]
  %v8364 = vld [vmem:[%s8255 + $0x360] sm:$0xff]
  %v8365 = vld [vmem:[%s8255 + $0x368] sm:$0xff]
  %v8366 = vld [vmem:[%s8255 + $0x370] sm:$0xff]
  %v8367 = vld [vmem:[%s8255 + $0x378] sm:$0xff]
  %v8368 = vld [vmem:[%s8255 + $0x380] sm:$0xff]
  %v8369 = vld [vmem:[%s8255 + $0x388] sm:$0xff]
  %v8370 = vld [vmem:[%s8255 + $0x390] sm:$0xff]
  %v8371 = vld [vmem:[%s8255 + $0x398] sm:$0xff]
  %v8372 = vld [vmem:[%s8255 + $0x3a0] sm:$0xff]
  %v8373 = vld [vmem:[%s8255 + $0x3a8] sm:$0xff]
  %v8374 = vld [vmem:[%s8255 + $0x3b0] sm:$0xff]
  %v8375 = vld [vmem:[%s8255 + $0x3b8] sm:$0xff]
  %v8376 = vld [vmem:[%s8255 + $0x3c0] sm:$0xff]
  %v8377 = vld [vmem:[%s8255 + $0x3c8] sm:$0xff]
  %v8378 = vld [vmem:[%s8255 + $0x3d0] sm:$0xff]
  %v8379 = vld [vmem:[%s8255 + $0x3d8] sm:$0xff]
  %v8380 = vld [vmem:[%s8255 + $0x3e0] sm:$0xff]
  %v8381 = vld [vmem:[%s8255 + $0x3e8] sm:$0xff]
  %v8382 = vld [vmem:[%s8255 + $0x3f0] sm:$0xff]
  %v8383 = vld [vmem:[%s8255 + $0x3f8] sm:$0xff]
  %8384 = vmatprep.subr.mxu0 %v8317
  %8385 = vmatpush1.msra.mxu0 %v8316
  %8386 = vmatprep.subr.mxu0 %v8313
  %8387 = vmatpush1.msra.mxu0 %v8312
  %8388 = vmatprep.subr.mxu0 %v8309
  %8389 = vmatpush1.msra.mxu0 %v8308
  %8390 = vmatprep.subr.mxu0 %v8305
  %8391 = vmatpush1.msra.mxu0 %v8304
  %8392 = vmatprep.subr.mxu0 %v8301
  %8393 = vmatpush1.msra.mxu0 %v8300
  %8394 = vmatprep.subr.mxu0 %v8297
  %8395 = vmatpush1.msra.mxu0 %v8296
  %8396 = vmatprep.subr.mxu0 %v8293
  %8397 = vmatpush1.msra.mxu0 %v8292
  %8398 = vmatprep.subr.mxu0 %v8289
  %8399 = vmatpush1.msra.mxu0 %v8288
  %8400 = vmatprep.subr.mxu0 %v8285
  %8401 = vmatpush1.msra.mxu0 %v8284
  %8402 = vmatprep.subr.mxu0 %v8281
  %8403 = vmatpush1.msra.mxu0 %v8280
  %8404 = vmatprep.subr.mxu0 %v8277
  %8405 = vmatpush1.msra.mxu0 %v8276
  %8406 = vmatprep.subr.mxu0 %v8273
  %8407 = vmatpush1.msra.mxu0 %v8272
  %8408 = vmatprep.subr.mxu0 %v8269
  %8409 = vmatpush1.msra.mxu0 %v8268
  %8410 = vmatprep.subr.mxu0 %v8265
  %8411 = vmatpush1.msra.mxu0 %v8264
  %8412 = vmatprep.subr.mxu0 %v8261
  %8413 = vmatpush1.msra.mxu0 %v8260
  %8414 = vmatprep.subr.mxu0 %v8257
  %8415 = vmatpush1.msra.mxu0 %v8256
  %8416 = vmatprep.subr.mxu0 %v8381
  %8417 = vmatpush2.msra.mxu0 %v8380
  %8418 = vmatprep.subr.mxu0 %v8377
  %8419 = vmatpush2.msra.mxu0 %v8376
  %8420 = vmatprep.subr.mxu0 %v8373
  %8421 = vmatpush2.msra.mxu0 %v8372
  %8422 = vmatprep.subr.mxu0 %v8369
  %8423 = vmatpush2.msra.mxu0 %v8368
  %8424 = vmatprep.subr.mxu0 %v8365
  %8425 = vmatpush2.msra.mxu0 %v8364
  %8426 = vmatprep.subr.mxu0 %v8361
  %8427 = vmatpush2.msra.mxu0 %v8360
  %8428 = vmatprep.subr.mxu0 %v8357
  %8429 = vmatpush2.msra.mxu0 %v8356
  %8430 = vmatprep.subr.mxu0 %v8353
  %8431 = vmatpush2.msra.mxu0 %v8352
  %8432 = vmatprep.subr.mxu0 %v8349
  %8433 = vmatpush2.msra.mxu0 %v8348
  %8434 = vmatprep.subr.mxu0 %v8345
  %8435 = vmatpush2.msra.mxu0 %v8344
  %8436 = vmatprep.subr.mxu0 %v8341
  %8437 = vmatpush2.msra.mxu0 %v8340
  %8438 = vmatprep.subr.mxu0 %v8337
  %8439 = vmatpush2.msra.mxu0 %v8336
  %8440 = vmatprep.subr.mxu0 %v8333
  %8441 = vmatpush2.msra.mxu0 %v8332
  %8442 = vmatprep.subr.mxu0 %v8329
  %8443 = vmatpush2.msra.mxu0 %v8328
  %8444 = vmatprep.subr.mxu0 %v8325
  %8445 = vmatpush2.msra.mxu0 %v8324
  %8446 = vmatprep.subr.mxu0 %v8321
  %8447 = vmatpush2.msra.mxu0 %v8320
  %8448 = vmatprep.mubr.f32.mxu0 %v7408
  %8449 = vmatmul.mubr.f32.gmra.mxu0 %v7407
  %v8450 = vpop.f32.mrf.mxu0
  %v8451 = vadd.f32 0.0, %v8450
  %v8452 = vpop.f32.mrf.mxu0
  %v8453 = vadd.f32 0.0, %v8452
  %8454 = vdwg.mxu0
  %8455 = vmatprep.subr.mxu0 %v8319
  %8456 = vmatpush1.msra.mxu0 %v8318
  %8457 = vmatprep.subr.mxu0 %v8315
  %8458 = vmatpush1.msra.mxu0 %v8314
  %8459 = vmatprep.subr.mxu0 %v8311
  %8460 = vmatpush1.msra.mxu0 %v8310
  %8461 = vmatprep.subr.mxu0 %v8307
  %8462 = vmatpush1.msra.mxu0 %v8306
  %8463 = vmatprep.subr.mxu0 %v8303
  %8464 = vmatpush1.msra.mxu0 %v8302
  %8465 = vmatprep.subr.mxu0 %v8299
  %8466 = vmatpush1.msra.mxu0 %v8298
  %8467 = vmatprep.subr.mxu0 %v8295
  %8468 = vmatpush1.msra.mxu0 %v8294
  %8469 = vmatprep.subr.mxu0 %v8291
  %8470 = vmatpush1.msra.mxu0 %v8290
  %8471 = vmatprep.subr.mxu0 %v8287
  %8472 = vmatpush1.msra.mxu0 %v8286
  %8473 = vmatprep.subr.mxu0 %v8283
  %8474 = vmatpush1.msra.mxu0 %v8282
  %8475 = vmatprep.subr.mxu0 %v8279
  %8476 = vmatpush1.msra.mxu0 %v8278
  %8477 = vmatprep.subr.mxu0 %v8275
  %8478 = vmatpush1.msra.mxu0 %v8274
  %8479 = vmatprep.subr.mxu0 %v8271
  %8480 = vmatpush1.msra.mxu0 %v8270
  %8481 = vmatprep.subr.mxu0 %v8267
  %8482 = vmatpush1.msra.mxu0 %v8266
  %8483 = vmatprep.subr.mxu0 %v8263
  %8484 = vmatpush1.msra.mxu0 %v8262
  %8485 = vmatprep.subr.mxu0 %v8259
  %8486 = vmatpush1.msra.mxu0 %v8258
  %8487 = vmatprep.subr.mxu0 %v8383
  %8488 = vmatpush2.msra.mxu0 %v8382
  %8489 = vmatprep.subr.mxu0 %v8379
  %8490 = vmatpush2.msra.mxu0 %v8378
  %8491 = vmatprep.subr.mxu0 %v8375
  %8492 = vmatpush2.msra.mxu0 %v8374
  %8493 = vmatprep.subr.mxu0 %v8371
  %8494 = vmatpush2.msra.mxu0 %v8370
  %8495 = vmatprep.subr.mxu0 %v8367
  %8496 = vmatpush2.msra.mxu0 %v8366
  %8497 = vmatprep.subr.mxu0 %v8363
  %8498 = vmatpush2.msra.mxu0 %v8362
  %8499 = vmatprep.subr.mxu0 %v8359
  %8500 = vmatpush2.msra.mxu0 %v8358
  %8501 = vmatprep.subr.mxu0 %v8355
  %8502 = vmatpush2.msra.mxu0 %v8354
  %8503 = vmatprep.subr.mxu0 %v8351
  %8504 = vmatpush2.msra.mxu0 %v8350
  %8505 = vmatprep.subr.mxu0 %v8347
  %8506 = vmatpush2.msra.mxu0 %v8346
  %8507 = vmatprep.subr.mxu0 %v8343
  %8508 = vmatpush2.msra.mxu0 %v8342
  %8509 = vmatprep.subr.mxu0 %v8339
  %8510 = vmatpush2.msra.mxu0 %v8338
  %8511 = vmatprep.subr.mxu0 %v8335
  %8512 = vmatpush2.msra.mxu0 %v8334
  %8513 = vmatprep.subr.mxu0 %v8331
  %8514 = vmatpush2.msra.mxu0 %v8330
  %8515 = vmatprep.subr.mxu0 %v8327
  %8516 = vmatpush2.msra.mxu0 %v8326
  %8517 = vmatprep.subr.mxu0 %v8323
  %8518 = vmatpush2.msra.mxu0 %v8322
  %8519 = vmatprep.mubr.f32.mxu0 %v7408
  %8520 = vmatmul.mubr.f32.gmra.mxu0 %v7407
  %v8521 = vpop.f32.mrf.mxu0
  %v8522 = vadd.f32 0.0, %v8521
  %v8523 = vpop.f32.mrf.mxu0
  %v8524 = vadd.f32 0.0, %v8523
  %8525 = vdwg.mxu0
  %v8526 = vadd.f32 %v8251, %v8451
  %v8527 = vadd.f32 %v8252, %v8453
  %v8528 = vadd.f32 %v8253, %v8522
  %v8529 = vadd.f32 %v8254, %v8524
  %v8530 = vmax.f32 %v8526, 0.0
  %v8531 = vmax.f32 %v8527, 0.0
  %v8532 = vmax.f32 %v8528, 0.0
  %v8533 = vmax.f32 %v8529, 0.0
  %v8534 = vld [vmem:[%s7] sm:$0xff]
  %v8535 = vld [vmem:[%s7 + $0x8] sm:$0xff]
  %v8536 = vld [vmem:[%s7 + $0x10] sm:$0xff]
  %v8537 = vld [vmem:[%s7 + $0x18] sm:$0xff]
  %v8538 = vld [vmem:[%s7 + $0x20] sm:$0xff]
  %v8539 = vld [vmem:[%s7 + $0x28] sm:$0xff]
  %v8540 = vld [vmem:[%s7 + $0x30] sm:$0xff]
  %v8541 = vld [vmem:[%s7 + $0x38] sm:$0xff]
  %v8542 = vld [vmem:[%s7 + $0x40] sm:$0xff]
  %v8543 = vld [vmem:[%s7 + $0x48] sm:$0xff]
  %v8544 = vld [vmem:[%s7 + $0x50] sm:$0xff]
  %v8545 = vld [vmem:[%s7 + $0x58] sm:$0xff]
  %v8546 = vld [vmem:[%s7 + $0x60] sm:$0xff]
  %v8547 = vld [vmem:[%s7 + $0x68] sm:$0xff]
  %v8548 = vld [vmem:[%s7 + $0x70] sm:$0xff]
  %v8549 = vld [vmem:[%s7 + $0x78] sm:$0xff]
  %v8550 = vld [vmem:[%s7 + $0x80] sm:$0xff]
  %v8551 = vld [vmem:[%s7 + $0x88] sm:$0xff]
  %v8552 = vld [vmem:[%s7 + $0x90] sm:$0xff]
  %v8553 = vld [vmem:[%s7 + $0x98] sm:$0xff]
  %v8554 = vld [vmem:[%s7 + $0xa0] sm:$0xff]
  %v8555 = vld [vmem:[%s7 + $0xa8] sm:$0xff]
  %v8556 = vld [vmem:[%s7 + $0xb0] sm:$0xff]
  %v8557 = vld [vmem:[%s7 + $0xb8] sm:$0xff]
  %v8558 = vld [vmem:[%s7 + $0xc0] sm:$0xff]
  %v8559 = vld [vmem:[%s7 + $0xc8] sm:$0xff]
  %v8560 = vld [vmem:[%s7 + $0xd0] sm:$0xff]
  %v8561 = vld [vmem:[%s7 + $0xd8] sm:$0xff]
  %v8562 = vld [vmem:[%s7 + $0xe0] sm:$0xff]
  %v8563 = vld [vmem:[%s7 + $0xe8] sm:$0xff]
  %v8564 = vld [vmem:[%s7 + $0xf0] sm:$0xff]
  %v8565 = vld [vmem:[%s7 + $0xf8] sm:$0xff]
  %v8566 = vld [vmem:[%s7 + $0x100] sm:$0xff]
  %v8567 = vld [vmem:[%s7 + $0x108] sm:$0xff]
  %v8568 = vld [vmem:[%s7 + $0x110] sm:$0xff]
  %v8569 = vld [vmem:[%s7 + $0x118] sm:$0xff]
  %v8570 = vld [vmem:[%s7 + $0x120] sm:$0xff]
  %v8571 = vld [vmem:[%s7 + $0x128] sm:$0xff]
  %v8572 = vld [vmem:[%s7 + $0x130] sm:$0xff]
  %v8573 = vld [vmem:[%s7 + $0x138] sm:$0xff]
  %v8574 = vld [vmem:[%s7 + $0x140] sm:$0xff]
  %v8575 = vld [vmem:[%s7 + $0x148] sm:$0xff]
  %v8576 = vld [vmem:[%s7 + $0x150] sm:$0xff]
  %v8577 = vld [vmem:[%s7 + $0x158] sm:$0xff]
  %v8578 = vld [vmem:[%s7 + $0x160] sm:$0xff]
  %v8579 = vld [vmem:[%s7 + $0x168] sm:$0xff]
  %v8580 = vld [vmem:[%s7 + $0x170] sm:$0xff]
  %v8581 = vld [vmem:[%s7 + $0x178] sm:$0xff]
  %v8582 = vld [vmem:[%s7 + $0x180] sm:$0xff]
  %v8583 = vld [vmem:[%s7 + $0x188] sm:$0xff]
  %v8584 = vld [vmem:[%s7 + $0x190] sm:$0xff]
  %v8585 = vld [vmem:[%s7 + $0x198] sm:$0xff]
  %v8586 = vld [vmem:[%s7 + $0x1a0] sm:$0xff]
  %v8587 = vld [vmem:[%s7 + $0x1a8] sm:$0xff]
  %v8588 = vld [vmem:[%s7 + $0x1b0] sm:$0xff]
  %v8589 = vld [vmem:[%s7 + $0x1b8] sm:$0xff]
  %v8590 = vld [vmem:[%s7 + $0x1c0] sm:$0xff]
  %v8591 = vld [vmem:[%s7 + $0x1c8] sm:$0xff]
  %v8592 = vld [vmem:[%s7 + $0x1d0] sm:$0xff]
  %v8593 = vld [vmem:[%s7 + $0x1d8] sm:$0xff]
  %v8594 = vld [vmem:[%s7 + $0x1e0] sm:$0xff]
  %v8595 = vld [vmem:[%s7 + $0x1e8] sm:$0xff]
  %v8596 = vld [vmem:[%s7 + $0x1f0] sm:$0xf]
  %v8597 = vld [vmem:[%s8] sm:$0x1]
  %v8599 = vlaneseq
  %v8600 = vshrl.u32 %v8599, 7
  %v8601 = vsub.s32 0, %v8600
  %v8602 = vrot.slane %v8597, %v8601
  %vm8604 = vcmask 949248
  %v8606 = vsel %vm8604, %v8533, 0
  %v8609 = vsel %vm97, %v8596, 0
  %8611 = vmatprep.subr.mxu0 0.0
  %8612 = vmatpush1.msra.mxu0 %v8549
  %8613 = vmatprep.subr.mxu0 0.0
  %8614 = vmatpush1.msra.mxu0 %v8548
  %8615 = vmatprep.subr.mxu0 0.0
  %8616 = vmatpush1.msra.mxu0 %v8547
  %8617 = vmatprep.subr.mxu0 0.0
  %8618 = vmatpush1.msra.mxu0 %v8546
  %8619 = vmatprep.subr.mxu0 0.0
  %8620 = vmatpush1.msra.mxu0 %v8545
  %8621 = vmatprep.subr.mxu0 0.0
  %8622 = vmatpush1.msra.mxu0 %v8544
  %8623 = vmatprep.subr.mxu0 0.0
  %8624 = vmatpush1.msra.mxu0 %v8543
  %8625 = vmatprep.subr.mxu0 0.0
  %8626 = vmatpush1.msra.mxu0 %v8542
  %8627 = vmatprep.subr.mxu0 0.0
  %8628 = vmatpush1.msra.mxu0 %v8541
  %8629 = vmatprep.subr.mxu0 0.0
  %8630 = vmatpush1.msra.mxu0 %v8540
  %8631 = vmatprep.subr.mxu0 0.0
  %8632 = vmatpush1.msra.mxu0 %v8539
  %8633 = vmatprep.subr.mxu0 0.0
  %8634 = vmatpush1.msra.mxu0 %v8538
  %8635 = vmatprep.subr.mxu0 0.0
  %8636 = vmatpush1.msra.mxu0 %v8537
  %8637 = vmatprep.subr.mxu0 0.0
  %8638 = vmatpush1.msra.mxu0 %v8536
  %8639 = vmatprep.subr.mxu0 0.0
  %8640 = vmatpush1.msra.mxu0 %v8535
  %8641 = vmatprep.subr.mxu0 0.0
  %8642 = vmatpush1.msra.mxu0 %v8534
  %8643 = vmatprep.subr.mxu0 0.0
  %8644 = vmatpush2.msra.mxu0 %v8565
  %8645 = vmatprep.subr.mxu0 0.0
  %8646 = vmatpush2.msra.mxu0 %v8564
  %8647 = vmatprep.subr.mxu0 0.0
  %8648 = vmatpush2.msra.mxu0 %v8563
  %8649 = vmatprep.subr.mxu0 0.0
  %8650 = vmatpush2.msra.mxu0 %v8562
  %8651 = vmatprep.subr.mxu0 0.0
  %8652 = vmatpush2.msra.mxu0 %v8561
  %8653 = vmatprep.subr.mxu0 0.0
  %8654 = vmatpush2.msra.mxu0 %v8560
  %8655 = vmatprep.subr.mxu0 0.0
  %8656 = vmatpush2.msra.mxu0 %v8559
  %8657 = vmatprep.subr.mxu0 0.0
  %8658 = vmatpush2.msra.mxu0 %v8558
  %8659 = vmatprep.subr.mxu0 0.0
  %8660 = vmatpush2.msra.mxu0 %v8557
  %8661 = vmatprep.subr.mxu0 0.0
  %8662 = vmatpush2.msra.mxu0 %v8556
  %8663 = vmatprep.subr.mxu0 0.0
  %8664 = vmatpush2.msra.mxu0 %v8555
  %8665 = vmatprep.subr.mxu0 0.0
  %8666 = vmatpush2.msra.mxu0 %v8554
  %8667 = vmatprep.subr.mxu0 0.0
  %8668 = vmatpush2.msra.mxu0 %v8553
  %8669 = vmatprep.subr.mxu0 0.0
  %8670 = vmatpush2.msra.mxu0 %v8552
  %8671 = vmatprep.subr.mxu0 0.0
  %8672 = vmatpush2.msra.mxu0 %v8551
  %8673 = vmatprep.subr.mxu0 0.0
  %8674 = vmatpush2.msra.mxu0 %v8550
  %8675 = vmatprep.mubr.f32.mxu0 %v8531
  %8676 = vmatmul.mubr.f32.gmra.mxu0 %v8530
  %v8677 = vpop.f32.mrf.mxu0
  %v8678 = vadd.f32 %v8602, %v8677
  %v8679 = vpop.f32.mrf.mxu0
  %8680 = vdwg.mxu0
  %8681 = vmatprep.subr.mxu0 0.0
  %8682 = vmatpush1.msra.mxu0 %v8581
  %8683 = vmatprep.subr.mxu0 0.0
  %8684 = vmatpush1.msra.mxu0 %v8580
  %8685 = vmatprep.subr.mxu0 0.0
  %8686 = vmatpush1.msra.mxu0 %v8579
  %8687 = vmatprep.subr.mxu0 0.0
  %8688 = vmatpush1.msra.mxu0 %v8578
  %8689 = vmatprep.subr.mxu0 0.0
  %8690 = vmatpush1.msra.mxu0 %v8577
  %8691 = vmatprep.subr.mxu0 0.0
  %8692 = vmatpush1.msra.mxu0 %v8576
  %8693 = vmatprep.subr.mxu0 0.0
  %8694 = vmatpush1.msra.mxu0 %v8575
  %8695 = vmatprep.subr.mxu0 0.0
  %8696 = vmatpush1.msra.mxu0 %v8574
  %8697 = vmatprep.subr.mxu0 0.0
  %8698 = vmatpush1.msra.mxu0 %v8573
  %8699 = vmatprep.subr.mxu0 0.0
  %8700 = vmatpush1.msra.mxu0 %v8572
  %8701 = vmatprep.subr.mxu0 0.0
  %8702 = vmatpush1.msra.mxu0 %v8571
  %8703 = vmatprep.subr.mxu0 0.0
  %8704 = vmatpush1.msra.mxu0 %v8570
  %8705 = vmatprep.subr.mxu0 0.0
  %8706 = vmatpush1.msra.mxu0 %v8569
  %8707 = vmatprep.subr.mxu0 0.0
  %8708 = vmatpush1.msra.mxu0 %v8568
  %8709 = vmatprep.subr.mxu0 0.0
  %8710 = vmatpush1.msra.mxu0 %v8567
  %8711 = vmatprep.subr.mxu0 0.0
  %8712 = vmatpush1.msra.mxu0 %v8566
  %8713 = vmatprep.subr.mxu0 0.0
  %8714 = vmatpush2.msra.mxu0 0.0
  %8715 = vmatprep.subr.mxu0 0.0
  %8716 = vmatpush2.msra.mxu0 %v8609
  %8717 = vmatprep.subr.mxu0 0.0
  %8718 = vmatpush2.msra.mxu0 %v8595
  %8719 = vmatprep.subr.mxu0 0.0
  %8720 = vmatpush2.msra.mxu0 %v8594
  %8721 = vmatprep.subr.mxu0 0.0
  %8722 = vmatpush2.msra.mxu0 %v8593
  %8723 = vmatprep.subr.mxu0 0.0
  %8724 = vmatpush2.msra.mxu0 %v8592
  %8725 = vmatprep.subr.mxu0 0.0
  %8726 = vmatpush2.msra.mxu0 %v8591
  %8727 = vmatprep.subr.mxu0 0.0
  %8728 = vmatpush2.msra.mxu0 %v8590
  %8729 = vmatprep.subr.mxu0 0.0
  %8730 = vmatpush2.msra.mxu0 %v8589
  %8731 = vmatprep.subr.mxu0 0.0
  %8732 = vmatpush2.msra.mxu0 %v8588
  %8733 = vmatprep.subr.mxu0 0.0
  %8734 = vmatpush2.msra.mxu0 %v8587
  %8735 = vmatprep.subr.mxu0 0.0
  %8736 = vmatpush2.msra.mxu0 %v8586
  %8737 = vmatprep.subr.mxu0 0.0
  %8738 = vmatpush2.msra.mxu0 %v8585
  %8739 = vmatprep.subr.mxu0 0.0
  %8740 = vmatpush2.msra.mxu0 %v8584
  %8741 = vmatprep.subr.mxu0 0.0
  %8742 = vmatpush2.msra.mxu0 %v8583
  %8743 = vmatprep.subr.mxu0 0.0
  %8744 = vmatpush2.msra.mxu0 %v8582
  %8745 = vmatprep.mubr.f32.mxu0 %v8606
  %8746 = vmatmul.mubr.f32.gmra.mxu0 %v8532
  %v8747 = vpop.f32.mrf.mxu0
  %v8748 = vadd.f32 %v8678, %v8747
  %v8749 = vpop.f32.mrf.mxu0
  %8750 = vdwg.mxu0
  %8751 = vmax.xlane.f32.xlu0 %v8748
  %v8752 = vpop.xlane.xlu0 %8751
  %v8753 = vsub.f32 %v8748, %v8752
  %v8754 = vmul.f32 %v8753, 1.442695
  %v8755 = vpow.pop %v8754
  %8756 = vadd.xlane.f32.xlu0 %v8755
  %v8757 = vpop.xlane.xlu0 %8756
  %v8758 = vlog2.pop %v8757
  %v8759 = vmul.f32 %v8758, 0.6931472
  %v8760 = vsub.f32 %v8753, %v8759
  %8761 = vst [vmem:[%s9] sm:$0xff] %v8760
  // Predicated region
  $region38: #{lenet_forward.1} parent=0 // pred_check
    _
  $region39: #{lenet_forward.1} parent=0 // pred_check_branch
    %8763 = sbr.rel (0) target = $region41
  $region40: #{lenet_forward.1} parent=0 // pred_region
    _
  $region41: #{lenet_forward.1} parent=0 // pred_fallthru
    _
  // Predicated region
  $region42: #{lenet_forward.1} parent=0 // pred_check
    _
  $region43: #{lenet_forward.1} parent=0 // pred_check_branch
    %8765 = sbr.rel (0) target = $region45
  $region44: #{lenet_forward.1} parent=0 // pred_region
    _
  $region45: #{lenet_forward.1} parent=0 // pred_fallthru
    _

</llo_original>
